<compile_context>
chip_gen: v7x
topology: tpu7x:2x2x1
jax: 0.10.0
libtpu: 0.0.40
codegen_flags: <defaults>
</compile_context>

<pallas_src>
import functools

import jax
import jax.numpy as jnp
from jax.experimental import pallas as pl
from jax.experimental.pallas import tpu as pltpu


# ---------------------------------------------------------------------------
# Fused forward kernel (one batch tile per grid step)
# ---------------------------------------------------------------------------
def _net_kernel(x_ref,                     # (Bt*32, 96)  bf16   raw input rows
                w1_ref, b1_ref,            # (96, 840) bf16, (1, 84) f32
                w2_ref, b2_ref,            # (84, 800) bf16, (1, 80) f32
                fw1_ref, fb1_ref,          # (400, 120) bf16, (1, 120) f32
                fw2_ref, fb2_ref,          # (120, 84) bf16,  (1, 84) f32
                fw3_ref, fb3_ref,          # (84, 10) bf16,   (1, 10) f32
                o_ref,                     # (Bt, 10) f32
                pA_scr,                    # VMEM (Bt, 28, 84) f32
                qA_scr):                   # VMEM (Bt, 10, 80) f32
    f32 = jnp.float32
    bf16 = jnp.bfloat16
    Bt = o_ref.shape[0]

    # ---- conv1 + pool1: one structured matmul over raw input rows -----------
    # Columns of w1 are ordered (dh, dj, j, cout); the conv column is 2*j + dj,
    # so both pool column-corners are produced side by side.
    part1 = jnp.dot(x_ref[...], w1_ref[...], preferred_element_type=f32)
    part1 = part1.reshape(Bt, 32, 5 * 168)                  # (b, h, dh*(dj,j,c))
    pre1 = part1[:, 0:28, 0:168]
    for dh in range(1, 5):                                  # shifted sum over row taps
        pre1 = pre1 + part1[:, dh:dh + 28, dh * 168:(dh + 1) * 168]
    # pool over the column corner dj (contiguous lane halves) ...
    pA_scr[...] = jnp.maximum(pre1[:, :, 0:84], pre1[:, :, 84:168])
    # ... and over the row corner di (stride-2 rows), then bias + ReLU
    p1 = jnp.maximum(pA_scr[:, pl.ds(0, 14, 2), :],
                     pA_scr[:, pl.ds(1, 14, 2), :])
    p1 = jnp.maximum(p1 + b1_ref[...], 0.0)                 # (Bt, 14, 84) f32

    # ---- conv2 + pool2 (same trick, single wide matmul) ----------------------
    part2 = jnp.dot(p1.reshape(Bt * 14, 84).astype(bf16), w2_ref[...],
                    preferred_element_type=f32)
    part2 = part2.reshape(Bt, 14, 5 * 160)
    pre2 = part2[:, 0:10, 0:160]
    for dh in range(1, 5):
        pre2 = pre2 + part2[:, dh:dh + 10, dh * 160:(dh + 1) * 160]
    qA_scr[...] = jnp.maximum(pre2[:, :, 0:80], pre2[:, :, 80:160])

    # ---- pool2 row-pairs + bias + ReLU fused with fc1 (5 K=80 block dots) ----
    acc = None
    for i2 in range(5):
        row = jnp.maximum(qA_scr[:, 2 * i2, :], qA_scr[:, 2 * i2 + 1, :])
        row = jnp.maximum(row + b2_ref[...], 0.0).astype(bf16)       # (Bt, 80)
        d = jnp.dot(row, fw1_ref[pl.ds(i2 * 80, 80), :],
                    preferred_element_type=f32)
        acc = d if acc is None else acc + d
    h1 = jnp.maximum(acc + fb1_ref[...], 0.0)                        # (Bt, 120)

    # ---- fc2 + ReLU, fc3 ------------------------------------------------------
    h2 = jnp.maximum(jnp.dot(h1.astype(bf16), fw2_ref[...],
                             preferred_element_type=f32) + fb2_ref[...], 0.0)
    out = jnp.dot(h2.astype(bf16), fw3_ref[...],
                  preferred_element_type=f32) + fb3_ref[...]
    o_ref[...] = out.astype(o_ref.dtype)                             # (Bt, 10)


# ---------------------------------------------------------------------------
# Wrapper: structured (Toeplitz) conv weights + batch-tiled pallas_call
# ---------------------------------------------------------------------------
def _toeplitz_conv_weight(w_oihw, in_w, out_w):
    """Build a (in_w*cin, 5*2*out_w*cout) matrix so one conv "row pass" is a
    single matmul against row-flattened inputs (w_in major, cin minor).
    Column order: (dh, dj, j_out, cout), true conv column = 2*j_out + dj."""
    cout, cin, kh, kw = w_oihw.shape
    w = jnp.transpose(w_oihw, (2, 3, 1, 0))                  # (dh, dw, cin, cout)
    n_wc = 2 * out_w                                         # pre-pool columns
    row_idx = jnp.arange(n_wc)[:, None] * cin + jnp.arange(kw * cin)[None, :]
    onehot = jax.nn.one_hot(row_idx, in_w * cin, dtype=w.dtype)   # (n_wc, kw*cin, in_w*cin)
    blocks = []
    for dh in range(kh):
        full = jnp.einsum('wkr,kc->rwc', onehot, w[dh].reshape(kw * cin, cout))
        full = full.reshape(in_w * cin, out_w, 2, cout)      # wc = 2*j + dj
        full = jnp.transpose(full, (0, 2, 1, 3)).reshape(in_w * cin,
                                                         2 * out_w * cout)
        blocks.append(full)
    return jnp.concatenate(blocks, axis=1)


@functools.partial(jax.jit, static_argnames=("batch_tile",))
def net_forward(params, x_nchw, batch_tile=32):
    f32, bf16 = jnp.float32, jnp.bfloat16
    B = x_nchw.shape[0]
    if B <= batch_tile:
        Bt, B_pad = B, B
    else:
        Bt = max(8, (batch_tile // 8) * 8)        # (8,128) block rule on output
        B_pad = pl.cdiv(B, Bt) * Bt
    grid = B_pad // Bt

    x = jnp.transpose(x_nchw.astype(f32), (0, 2, 3, 1))       # NCHW -> NHWC
    if B_pad != B:
        x = jnp.pad(x, ((0, B_pad - B), (0, 0), (0, 0), (0, 0)))
    x_rows = x.reshape(B_pad * 32, 32 * 3).astype(bf16)        # (B_pad*32, 96)

    w1 = _toeplitz_conv_weight(params["conv1_w"], in_w=32, out_w=14).astype(bf16)
    b1 = jnp.tile(params["conv1_b"], 14).reshape(1, 84).astype(f32)
    w2 = _toeplitz_conv_weight(params["conv2_w"], in_w=14, out_w=5).astype(bf16)
    b2 = jnp.tile(params["conv2_b"], 5).reshape(1, 80).astype(f32)
    # fc1 rows reordered from PyTorch NCHW flatten (c*25 + h*5 + w) to (h, w, c)
    fw1 = jnp.transpose(params["fc1_w"].reshape(16, 5, 5, 120),
                        (1, 2, 0, 3)).reshape(400, 120).astype(bf16)
    fb1 = params["fc1_b"].reshape(1, 120).astype(f32)
    fw2 = params["fc2_w"].astype(bf16)
    fb2 = params["fc2_b"].reshape(1, 84).astype(f32)
    fw3 = params["fc3_w"].astype(bf16)
    fb3 = params["fc3_b"].reshape(1, 10).astype(f32)

    operands = (x_rows, w1, b1, w2, b2, fw1, fb1, fw2, fb2, fw3, fb3)

    def const_spec(shape):
        return pl.BlockSpec(shape, lambda i: (0,) * len(shape))

    in_specs = [pl.BlockSpec((Bt * 32, 96), lambda i: (i, 0))]
    in_specs += [const_spec(op.shape) for op in operands[1:]]
    out_specs = pl.BlockSpec((Bt, 10), lambda i: (i, 0))

    flops = 2 * B_pad * (32 * 96 * 840 + 14 * 84 * 800
                         + 400 * 120 + 120 * 84 + 84 * 10)
    bytes_accessed = int(sum(op.size * op.dtype.itemsize for op in operands)
                         + 4 * B_pad * 10)

    out = pl.pallas_call(
        _net_kernel,
        grid=(grid,),
        in_specs=in_specs,
        out_specs=out_specs,
        out_shape=jax.ShapeDtypeStruct((B_pad, 10), f32),
        scratch_shapes=[pltpu.VMEM((Bt, 28, 84), f32),
                        pltpu.VMEM((Bt, 10, 80), f32)],
        compiler_params=pltpu.CompilerParams(
            dimension_semantics=("parallel",),
            vmem_limit_bytes=40 * 1024 * 1024),
        cost_estimate=pl.CostEstimate(flops=flops, transcendentals=0,
                                      bytes_accessed=bytes_accessed),
    )(*operands)
    return out[:B]


# ---------------------------------------------------------------------------
# Parameters (deterministic, PyTorch-like uniform(-1/sqrt(fan_in), ...))
# ---------------------------------------------------------------------------
def init_params(key):
    def u(k, shape, fan_in):
        bound = 1.0 / (fan_in ** 0.5)
        return jax.random.uniform(k, shape, jnp.float32, -bound, bound)

    ks = jax.random.split(key, 10)
    return {
        "conv1_w": u(ks[0], (6, 3, 5, 5), 3 * 5 * 5),
        "conv1_b": u(ks[1], (6,), 3 * 5 * 5),
        "conv2_w": u(ks[2], (16, 6, 5, 5), 6 * 5 * 5),
        "conv2_b": u(ks[3], (16,), 6 * 5 * 5),
        "fc1_w": u(ks[4], (400, 120), 400),
        "fc1_b": u(ks[5], (120,), 400),
        "fc2_w": u(ks[6], (120, 84), 120),
        "fc2_b": u(ks[7], (84,), 120),
        "fc3_w": u(ks[8], (84, 10), 84),
        "fc3_b": u(ks[9], (10,), 84),
    }


# ---------------------------------------------------------------------------
# Pure-JAX reference (same math as PyTorch forward) for a correctness check.
# ---------------------------------------------------------------------------
def _reference_forward(params, x_nchw):
    x = jnp.transpose(x_nchw, (0, 2, 3, 1))

    def conv(x, w, b):
        Bv, H, W, Cin = x.shape
        Cout, _, KH, KW = w.shape
        OH, OW = H - KH + 1, W - KW + 1
        cols = []
        for dh in range(KH):
            for dw in range(KW):
                cols.append(x[:, dh:dh + OH, dw:dw + OW, :])
        p = jnp.concatenate(cols, axis=-1).reshape(Bv, OH * OW, KH * KW * Cin)
        wm = jnp.transpose(w, (2, 3, 1, 0)).reshape(KH * KW * Cin, Cout)
        y = jnp.maximum(p @ wm + b, 0.0)
        return y.reshape(Bv, OH, OW, Cout)

    def pool(x):
        return jnp.maximum(
            jnp.maximum(x[:, 0::2, 0::2, :], x[:, 0::2, 1::2, :]),
            jnp.maximum(x[:, 1::2, 0::2, :], x[:, 1::2, 1::2, :]),
        )

    x = pool(conv(x, params["conv1_w"], params["conv1_b"]))
    x = pool(conv(x, params["conv2_w"], params["conv2_b"]))
    B = x.shape[0]
    # PyTorch flattens in (C, H, W) order: x.view(-1, 16*5*5)
    x = jnp.transpose(x, (0, 3, 1, 2)).reshape(B, 400)
    x = jnp.maximum(x @ params["fc1_w"] + params["fc1_b"], 0.0)
    x = jnp.maximum(x @ params["fc2_w"] + params["fc2_b"], 0.0)
    return x @ params["fc3_w"] + params["fc3_b"]


if __name__ == "__main__":
    key = jax.random.PRNGKey(0)
    k_param, k_x = jax.random.split(key)
    params = init_params(k_param)
    # LeNet-style Net requires 32x32 spatial input (flatten is 16*5*5).
    # B=20 with batch_tile=8 exercises the grid (3 tiles) and the padded tile.
    x = jax.random.normal(k_x, (20, 3, 32, 32), jnp.float32)

    out = jax.block_until_ready(net_forward(params, x, batch_tile=8))
    assert out.shape == (20, 10), out.shape

    ref = jax.block_until_ready(_reference_forward(params, x))
    # bf16 MXU operands with f32 accumulation -> allow a small absolute slack.
    max_err = float(jnp.max(jnp.abs(out - ref)))
    assert jnp.allclose(out, ref, atol=2e-2, rtol=2e-2), f"max_err={max_err}"

    print("KERNEL_OK")
</pallas_src>

<mosaic_0001>
module attributes {stable_mosaic.version = 11 : i64} {
  func.func @_net_kernel(%arg0: i32, %arg1: memref<256x96xbf16, #tpu.memory_space<vmem>>, %arg2: memref<96x840xbf16, #tpu.memory_space<vmem>>, %arg3: memref<1x84xf32, #tpu.memory_space<vmem>>, %arg4: memref<84x800xbf16, #tpu.memory_space<vmem>>, %arg5: memref<1x80xf32, #tpu.memory_space<vmem>>, %arg6: memref<400x120xbf16, #tpu.memory_space<vmem>>, %arg7: memref<1x120xf32, #tpu.memory_space<vmem>>, %arg8: memref<120x84xbf16, #tpu.memory_space<vmem>>, %arg9: memref<1x84xf32, #tpu.memory_space<vmem>>, %arg10: memref<84x10xbf16, #tpu.memory_space<vmem>>, %arg11: memref<1x10xf32, #tpu.memory_space<vmem>>, %arg12: memref<8x10xf32, #tpu.memory_space<vmem>>, %arg13: memref<8x28x84xf32, #tpu.memory_space<vmem>>, %arg14: memref<8x10x80xf32, #tpu.memory_space<vmem>>) attributes {dimension_semantics = [#tpu.dimension_semantics<parallel>], iteration_bounds = array<i64: 3>, scalar_prefetch = 0 : i64, scratch_operands = 2 : i64, tpu.core_type = #tpu.core_type<tc>, window_params = [{transform_indices = @transform_0, window_bounds = array<i64: 256, 96>}, {pipeline_mode = #tpu.pipeline_mode<synchronous>, transform_indices = @transform_1, window_bounds = array<i64: 96, 840>}, {pipeline_mode = #tpu.pipeline_mode<synchronous>, transform_indices = @transform_2, window_bounds = array<i64: 1, 84>}, {pipeline_mode = #tpu.pipeline_mode<synchronous>, transform_indices = @transform_3, window_bounds = array<i64: 84, 800>}, {pipeline_mode = #tpu.pipeline_mode<synchronous>, transform_indices = @transform_4, window_bounds = array<i64: 1, 80>}, {pipeline_mode = #tpu.pipeline_mode<synchronous>, transform_indices = @transform_5, window_bounds = array<i64: 400, 120>}, {pipeline_mode = #tpu.pipeline_mode<synchronous>, transform_indices = @transform_6, window_bounds = array<i64: 1, 120>}, {pipeline_mode = #tpu.pipeline_mode<synchronous>, transform_indices = @transform_7, window_bounds = array<i64: 120, 84>}, {pipeline_mode = #tpu.pipeline_mode<synchronous>, transform_indices = @transform_8, window_bounds = array<i64: 1, 84>}, {pipeline_mode = #tpu.pipeline_mode<synchronous>, transform_indices = @transform_9, window_bounds = array<i64: 84, 10>}, {pipeline_mode = #tpu.pipeline_mode<synchronous>, transform_indices = @transform_10, window_bounds = array<i64: 1, 10>}, {transform_indices = @transform_11, window_bounds = array<i64: 8, 10>}]} {
    %c0 = arith.constant 0 : index
    %c0_0 = arith.constant 0 : index
    %0 = vector.load %arg1[%c0, %c0_0] : memref<256x96xbf16, #tpu.memory_space<vmem>>, vector<256x96xbf16>
    %c0_1 = arith.constant 0 : index
    %c0_2 = arith.constant 0 : index
    %1 = vector.load %arg2[%c0_1, %c0_2] : memref<96x840xbf16, #tpu.memory_space<vmem>>, vector<96x840xbf16>
    %cst = arith.constant dense<0.000000e+00> : vector<256x840xf32>
    %2 = tpu.matmul %0, %1, %cst {dimension_numbers = #tpu.dot_dimension_numbers<[1], [0], [0], [1], [0, 0, 1, 1], [], []>} : vector<256x96xbf16>, vector<96x840xbf16>, vector<256x840xf32> -> vector<256x840xf32>
    %3 = vector.shape_cast %2 : vector<256x840xf32> to vector<8x32x840xf32>
    %4 = vector.extract_strided_slice %3 {offsets = [0, 0, 0], sizes = [8, 28, 168], strides = [1, 1, 1]} : vector<8x32x840xf32> to vector<8x28x168xf32>
    %5 = vector.extract_strided_slice %3 {offsets = [0, 1, 168], sizes = [8, 28, 168], strides = [1, 1, 1]} : vector<8x32x840xf32> to vector<8x28x168xf32>
    %6 = arith.addf %4, %5 : vector<8x28x168xf32>
    %7 = vector.extract_strided_slice %3 {offsets = [0, 2, 336], sizes = [8, 28, 168], strides = [1, 1, 1]} : vector<8x32x840xf32> to vector<8x28x168xf32>
    %8 = arith.addf %6, %7 : vector<8x28x168xf32>
    %9 = vector.extract_strided_slice %3 {offsets = [0, 3, 504], sizes = [8, 28, 168], strides = [1, 1, 1]} : vector<8x32x840xf32> to vector<8x28x168xf32>
    %10 = arith.addf %8, %9 : vector<8x28x168xf32>
    %11 = vector.extract_strided_slice %3 {offsets = [0, 4, 672], sizes = [8, 28, 168], strides = [1, 1, 1]} : vector<8x32x840xf32> to vector<8x28x168xf32>
    %12 = arith.addf %10, %11 : vector<8x28x168xf32>
    %13 = vector.extract_strided_slice %12 {offsets = [0, 0, 0], sizes = [8, 28, 84], strides = [1, 1, 1]} : vector<8x28x168xf32> to vector<8x28x84xf32>
    %14 = vector.extract_strided_slice %12 {offsets = [0, 0, 84], sizes = [8, 28, 84], strides = [1, 1, 1]} : vector<8x28x168xf32> to vector<8x28x84xf32>
    %15 = arith.maximumf %13, %14 : vector<8x28x84xf32>
    %c0_3 = arith.constant 0 : index
    %c0_4 = arith.constant 0 : index
    %c0_5 = arith.constant 0 : index
    %16 = vector.load %arg13[%c0_3, %c0_4, %c0_5] : memref<8x28x84xf32, #tpu.memory_space<vmem>>, vector<8x28x84xf32>
    tpu.vector_store %arg13[%c0_3, %c0_4, %c0_5], %15 {strides = array<i32>} : memref<8x28x84xf32, #tpu.memory_space<vmem>>, vector<8x28x84xf32>,
    %c0_6 = arith.constant 0 : index
    %c0_7 = arith.constant 0 : index
    %c0_8 = arith.constant 0 : index
    %17 = tpu.strided_load %arg13[%c0_6, %c0_7, %c0_8] {strides = array<i32: 1, 2, 1>} : memref<8x28x84xf32, #tpu.memory_space<vmem>>, vector<8x14x84xf32>
    %c0_9 = arith.constant 0 : index
    %c1 = arith.constant 1 : index
    %c0_10 = arith.constant 0 : index
    %18 = tpu.strided_load %arg13[%c0_9, %c1, %c0_10] {strides = array<i32: 1, 2, 1>} : memref<8x28x84xf32, #tpu.memory_space<vmem>>, vector<8x14x84xf32>
    %19 = arith.maximumf %17, %18 : vector<8x14x84xf32>
    %c0_11 = arith.constant 0 : index
    %c0_12 = arith.constant 0 : index
    %20 = vector.load %arg3[%c0_11, %c0_12] : memref<1x84xf32, #tpu.memory_space<vmem>>, vector<1x84xf32>
    %21 = vector.shape_cast %20 : vector<1x84xf32> to vector<1x1x84xf32>
    %22 = vector.broadcast %21 : vector<1x1x84xf32> to vector<8x14x84xf32>
    %23 = arith.addf %19, %22 : vector<8x14x84xf32>
    %cst_13 = arith.constant 0.000000e+00 : f32
    %24 = vector.broadcast %cst_13 : f32 to vector<8x14x84xf32>
    %25 = arith.maximumf %23, %24 : vector<8x14x84xf32>
    %26 = vector.shape_cast %25 : vector<8x14x84xf32> to vector<112x84xf32>
    %27 = arith.truncf %26 : vector<112x84xf32> to vector<112x84xbf16>
    %c0_14 = arith.constant 0 : index
    %c0_15 = arith.constant 0 : index
    %28 = vector.load %arg4[%c0_14, %c0_15] : memref<84x800xbf16, #tpu.memory_space<vmem>>, vector<84x800xbf16>
    %cst_16 = arith.constant dense<0.000000e+00> : vector<112x800xf32>
    %29 = tpu.matmul %27, %28, %cst_16 {dimension_numbers = #tpu.dot_dimension_numbers<[1], [0], [0], [1], [0, 0, 1, 1], [], []>} : vector<112x84xbf16>, vector<84x800xbf16>, vector<112x800xf32> -> vector<112x800xf32>
    %30 = vector.shape_cast %29 : vector<112x800xf32> to vector<8x14x800xf32>
    %31 = vector.extract_strided_slice %30 {offsets = [0, 0, 0], sizes = [8, 10, 160], strides = [1, 1, 1]} : vector<8x14x800xf32> to vector<8x10x160xf32>
    %32 = vector.extract_strided_slice %30 {offsets = [0, 1, 160], sizes = [8, 10, 160], strides = [1, 1, 1]} : vector<8x14x800xf32> to vector<8x10x160xf32>
    %33 = arith.addf %31, %32 : vector<8x10x160xf32>
    %34 = vector.extract_strided_slice %30 {offsets = [0, 2, 320], sizes = [8, 10, 160], strides = [1, 1, 1]} : vector<8x14x800xf32> to vector<8x10x160xf32>
    %35 = arith.addf %33, %34 : vector<8x10x160xf32>
    %36 = vector.extract_strided_slice %30 {offsets = [0, 3, 480], sizes = [8, 10, 160], strides = [1, 1, 1]} : vector<8x14x800xf32> to vector<8x10x160xf32>
    %37 = arith.addf %35, %36 : vector<8x10x160xf32>
    %38 = vector.extract_strided_slice %30 {offsets = [0, 4, 640], sizes = [8, 10, 160], strides = [1, 1, 1]} : vector<8x14x800xf32> to vector<8x10x160xf32>
    %39 = arith.addf %37, %38 : vector<8x10x160xf32>
    %40 = vector.extract_strided_slice %39 {offsets = [0, 0, 0], sizes = [8, 10, 80], strides = [1, 1, 1]} : vector<8x10x160xf32> to vector<8x10x80xf32>
    %41 = vector.extract_strided_slice %39 {offsets = [0, 0, 80], sizes = [8, 10, 80], strides = [1, 1, 1]} : vector<8x10x160xf32> to vector<8x10x80xf32>
    %42 = arith.maximumf %40, %41 : vector<8x10x80xf32>
    %c0_17 = arith.constant 0 : index
    %c0_18 = arith.constant 0 : index
    %c0_19 = arith.constant 0 : index
    %43 = vector.load %arg14[%c0_17, %c0_18, %c0_19] : memref<8x10x80xf32, #tpu.memory_space<vmem>>, vector<8x10x80xf32>
    tpu.vector_store %arg14[%c0_17, %c0_18, %c0_19], %42 {strides = array<i32>} : memref<8x10x80xf32, #tpu.memory_space<vmem>>, vector<8x10x80xf32>,
    %c0_20 = arith.constant 0 : index
    %c0_21 = arith.constant 0 : index
    %c0_22 = arith.constant 0 : index
    %44 = vector.load %arg14[%c0_20, %c0_21, %c0_22] : memref<8x10x80xf32, #tpu.memory_space<vmem>>, vector<8x1x80xf32>
    %45 = vector.shape_cast %44 : vector<8x1x80xf32> to vector<8x80xf32>
    %c0_23 = arith.constant 0 : index
    %c1_24 = arith.constant 1 : index
    %c0_25 = arith.constant 0 : index
    %46 = vector.load %arg14[%c0_23, %c1_24, %c0_25] : memref<8x10x80xf32, #tpu.memory_space<vmem>>, vector<8x1x80xf32>
    %47 = vector.shape_cast %46 : vector<8x1x80xf32> to vector<8x80xf32>
    %48 = arith.maximumf %45, %47 : vector<8x80xf32>
    %c0_26 = arith.constant 0 : index
    %c0_27 = arith.constant 0 : index
    %49 = vector.load %arg5[%c0_26, %c0_27] : memref<1x80xf32, #tpu.memory_space<vmem>>, vector<1x80xf32>
    %50 = vector.broadcast %49 : vector<1x80xf32> to vector<8x80xf32>
    %51 = arith.addf %48, %50 : vector<8x80xf32>
    %cst_28 = arith.constant 0.000000e+00 : f32
    %52 = vector.broadcast %cst_28 : f32 to vector<8x80xf32>
    %53 = arith.maximumf %51, %52 : vector<8x80xf32>
    %54 = arith.truncf %53 : vector<8x80xf32> to vector<8x80xbf16>
    %c0_29 = arith.constant 0 : index
    %c0_30 = arith.constant 0 : index
    %55 = vector.load %arg6[%c0_29, %c0_30] : memref<400x120xbf16, #tpu.memory_space<vmem>>, vector<80x120xbf16>
    %cst_31 = arith.constant dense<0.000000e+00> : vector<8x120xf32>
    %56 = tpu.matmul %54, %55, %cst_31 {dimension_numbers = #tpu.dot_dimension_numbers<[1], [0], [0], [1], [0, 0, 1, 1], [], []>} : vector<8x80xbf16>, vector<80x120xbf16>, vector<8x120xf32> -> vector<8x120xf32>
    %c0_32 = arith.constant 0 : index
    %c2 = arith.constant 2 : index
    %c0_33 = arith.constant 0 : index
    %57 = vector.load %arg14[%c0_32, %c2, %c0_33] : memref<8x10x80xf32, #tpu.memory_space<vmem>>, vector<8x1x80xf32>
    %58 = vector.shape_cast %57 : vector<8x1x80xf32> to vector<8x80xf32>
    %c0_34 = arith.constant 0 : index
    %c3 = arith.constant 3 : index
    %c0_35 = arith.constant 0 : index
    %59 = vector.load %arg14[%c0_34, %c3, %c0_35] : memref<8x10x80xf32, #tpu.memory_space<vmem>>, vector<8x1x80xf32>
    %60 = vector.shape_cast %59 : vector<8x1x80xf32> to vector<8x80xf32>
    %61 = arith.maximumf %58, %60 : vector<8x80xf32>
    %c0_36 = arith.constant 0 : index
    %c0_37 = arith.constant 0 : index
    %62 = vector.load %arg5[%c0_36, %c0_37] : memref<1x80xf32, #tpu.memory_space<vmem>>, vector<1x80xf32>
    %63 = vector.broadcast %62 : vector<1x80xf32> to vector<8x80xf32>
    %64 = arith.addf %61, %63 : vector<8x80xf32>
    %cst_38 = arith.constant 0.000000e+00 : f32
    %65 = vector.broadcast %cst_38 : f32 to vector<8x80xf32>
    %66 = arith.maximumf %64, %65 : vector<8x80xf32>
    %67 = arith.truncf %66 : vector<8x80xf32> to vector<8x80xbf16>
    %c80 = arith.constant 80 : index
    %c0_39 = arith.constant 0 : index
    %68 = vector.load %arg6[%c80, %c0_39] : memref<400x120xbf16, #tpu.memory_space<vmem>>, vector<80x120xbf16>
    %cst_40 = arith.constant dense<0.000000e+00> : vector<8x120xf32>
    %69 = tpu.matmul %67, %68, %cst_40 {dimension_numbers = #tpu.dot_dimension_numbers<[1], [0], [0], [1], [0, 0, 1, 1], [], []>} : vector<8x80xbf16>, vector<80x120xbf16>, vector<8x120xf32> -> vector<8x120xf32>
    %70 = arith.addf %56, %69 : vector<8x120xf32>
    %c0_41 = arith.constant 0 : index
    %c4 = arith.constant 4 : index
    %c0_42 = arith.constant 0 : index
    %71 = vector.load %arg14[%c0_41, %c4, %c0_42] : memref<8x10x80xf32, #tpu.memory_space<vmem>>, vector<8x1x80xf32>
    %72 = vector.shape_cast %71 : vector<8x1x80xf32> to vector<8x80xf32>
    %c0_43 = arith.constant 0 : index
    %c5 = arith.constant 5 : index
    %c0_44 = arith.constant 0 : index
    %73 = vector.load %arg14[%c0_43, %c5, %c0_44] : memref<8x10x80xf32, #tpu.memory_space<vmem>>, vector<8x1x80xf32>
    %74 = vector.shape_cast %73 : vector<8x1x80xf32> to vector<8x80xf32>
    %75 = arith.maximumf %72, %74 : vector<8x80xf32>
    %c0_45 = arith.constant 0 : index
    %c0_46 = arith.constant 0 : index
    %76 = vector.load %arg5[%c0_45, %c0_46] : memref<1x80xf32, #tpu.memory_space<vmem>>, vector<1x80xf32>
    %77 = vector.broadcast %76 : vector<1x80xf32> to vector<8x80xf32>
    %78 = arith.addf %75, %77 : vector<8x80xf32>
    %cst_47 = arith.constant 0.000000e+00 : f32
    %79 = vector.broadcast %cst_47 : f32 to vector<8x80xf32>
    %80 = arith.maximumf %78, %79 : vector<8x80xf32>
    %81 = arith.truncf %80 : vector<8x80xf32> to vector<8x80xbf16>
    %c160 = arith.constant 160 : index
    %c0_48 = arith.constant 0 : index
    %82 = vector.load %arg6[%c160, %c0_48] : memref<400x120xbf16, #tpu.memory_space<vmem>>, vector<80x120xbf16>
    %cst_49 = arith.constant dense<0.000000e+00> : vector<8x120xf32>
    %83 = tpu.matmul %81, %82, %cst_49 {dimension_numbers = #tpu.dot_dimension_numbers<[1], [0], [0], [1], [0, 0, 1, 1], [], []>} : vector<8x80xbf16>, vector<80x120xbf16>, vector<8x120xf32> -> vector<8x120xf32>
    %84 = arith.addf %70, %83 : vector<8x120xf32>
    %c0_50 = arith.constant 0 : index
    %c6 = arith.constant 6 : index
    %c0_51 = arith.constant 0 : index
    %85 = vector.load %arg14[%c0_50, %c6, %c0_51] : memref<8x10x80xf32, #tpu.memory_space<vmem>>, vector<8x1x80xf32>
    %86 = vector.shape_cast %85 : vector<8x1x80xf32> to vector<8x80xf32>
    %c0_52 = arith.constant 0 : index
    %c7 = arith.constant 7 : index
    %c0_53 = arith.constant 0 : index
    %87 = vector.load %arg14[%c0_52, %c7, %c0_53] : memref<8x10x80xf32, #tpu.memory_space<vmem>>, vector<8x1x80xf32>
    %88 = vector.shape_cast %87 : vector<8x1x80xf32> to vector<8x80xf32>
    %89 = arith.maximumf %86, %88 : vector<8x80xf32>
    %c0_54 = arith.constant 0 : index
    %c0_55 = arith.constant 0 : index
    %90 = vector.load %arg5[%c0_54, %c0_55] : memref<1x80xf32, #tpu.memory_space<vmem>>, vector<1x80xf32>
    %91 = vector.broadcast %90 : vector<1x80xf32> to vector<8x80xf32>
    %92 = arith.addf %89, %91 : vector<8x80xf32>
    %cst_56 = arith.constant 0.000000e+00 : f32
    %93 = vector.broadcast %cst_56 : f32 to vector<8x80xf32>
    %94 = arith.maximumf %92, %93 : vector<8x80xf32>
    %95 = arith.truncf %94 : vector<8x80xf32> to vector<8x80xbf16>
    %c240 = arith.constant 240 : index
    %c0_57 = arith.constant 0 : index
    %96 = vector.load %arg6[%c240, %c0_57] : memref<400x120xbf16, #tpu.memory_space<vmem>>, vector<80x120xbf16>
    %cst_58 = arith.constant dense<0.000000e+00> : vector<8x120xf32>
    %97 = tpu.matmul %95, %96, %cst_58 {dimension_numbers = #tpu.dot_dimension_numbers<[1], [0], [0], [1], [0, 0, 1, 1], [], []>} : vector<8x80xbf16>, vector<80x120xbf16>, vector<8x120xf32> -> vector<8x120xf32>
    %98 = arith.addf %84, %97 : vector<8x120xf32>
    %c0_59 = arith.constant 0 : index
    %c8 = arith.constant 8 : index
    %c0_60 = arith.constant 0 : index
    %99 = vector.load %arg14[%c0_59, %c8, %c0_60] : memref<8x10x80xf32, #tpu.memory_space<vmem>>, vector<8x1x80xf32>
    %100 = vector.shape_cast %99 : vector<8x1x80xf32> to vector<8x80xf32>
    %c0_61 = arith.constant 0 : index
    %c9 = arith.constant 9 : index
    %c0_62 = arith.constant 0 : index
    %101 = vector.load %arg14[%c0_61, %c9, %c0_62] : memref<8x10x80xf32, #tpu.memory_space<vmem>>, vector<8x1x80xf32>
    %102 = vector.shape_cast %101 : vector<8x1x80xf32> to vector<8x80xf32>
    %103 = arith.maximumf %100, %102 : vector<8x80xf32>
    %c0_63 = arith.constant 0 : index
    %c0_64 = arith.constant 0 : index
    %104 = vector.load %arg5[%c0_63, %c0_64] : memref<1x80xf32, #tpu.memory_space<vmem>>, vector<1x80xf32>
    %105 = vector.broadcast %104 : vector<1x80xf32> to vector<8x80xf32>
    %106 = arith.addf %103, %105 : vector<8x80xf32>
    %cst_65 = arith.constant 0.000000e+00 : f32
    %107 = vector.broadcast %cst_65 : f32 to vector<8x80xf32>
    %108 = arith.maximumf %106, %107 : vector<8x80xf32>
    %109 = arith.truncf %108 : vector<8x80xf32> to vector<8x80xbf16>
    %c320 = arith.constant 320 : index
    %c0_66 = arith.constant 0 : index
    %110 = vector.load %arg6[%c320, %c0_66] : memref<400x120xbf16, #tpu.memory_space<vmem>>, vector<80x120xbf16>
    %cst_67 = arith.constant dense<0.000000e+00> : vector<8x120xf32>
    %111 = tpu.matmul %109, %110, %cst_67 {dimension_numbers = #tpu.dot_dimension_numbers<[1], [0], [0], [1], [0, 0, 1, 1], [], []>} : vector<8x80xbf16>, vector<80x120xbf16>, vector<8x120xf32> -> vector<8x120xf32>
    %112 = arith.addf %98, %111 : vector<8x120xf32>
    %c0_68 = arith.constant 0 : index
    %c0_69 = arith.constant 0 : index
    %113 = vector.load %arg7[%c0_68, %c0_69] : memref<1x120xf32, #tpu.memory_space<vmem>>, vector<1x120xf32>
    %114 = vector.broadcast %113 : vector<1x120xf32> to vector<8x120xf32>
    %115 = arith.addf %112, %114 : vector<8x120xf32>
    %cst_70 = arith.constant 0.000000e+00 : f32
    %116 = vector.broadcast %cst_70 : f32 to vector<8x120xf32>
    %117 = arith.maximumf %115, %116 : vector<8x120xf32>
    %118 = arith.truncf %117 : vector<8x120xf32> to vector<8x120xbf16>
    %c0_71 = arith.constant 0 : index
    %c0_72 = arith.constant 0 : index
    %119 = vector.load %arg8[%c0_71, %c0_72] : memref<120x84xbf16, #tpu.memory_space<vmem>>, vector<120x84xbf16>
    %cst_73 = arith.constant dense<0.000000e+00> : vector<8x84xf32>
    %120 = tpu.matmul %118, %119, %cst_73 {dimension_numbers = #tpu.dot_dimension_numbers<[1], [0], [0], [1], [0, 0, 1, 1], [], []>} : vector<8x120xbf16>, vector<120x84xbf16>, vector<8x84xf32> -> vector<8x84xf32>
    %c0_74 = arith.constant 0 : index
    %c0_75 = arith.constant 0 : index
    %121 = vector.load %arg9[%c0_74, %c0_75] : memref<1x84xf32, #tpu.memory_space<vmem>>, vector<1x84xf32>
    %122 = vector.broadcast %121 : vector<1x84xf32> to vector<8x84xf32>
    %123 = arith.addf %120, %122 : vector<8x84xf32>
    %cst_76 = arith.constant 0.000000e+00 : f32
    %124 = vector.broadcast %cst_76 : f32 to vector<8x84xf32>
    %125 = arith.maximumf %123, %124 : vector<8x84xf32>
    %126 = arith.truncf %125 : vector<8x84xf32> to vector<8x84xbf16>
    %c0_77 = arith.constant 0 : index
    %c0_78 = arith.constant 0 : index
    %127 = vector.load %arg10[%c0_77, %c0_78] : memref<84x10xbf16, #tpu.memory_space<vmem>>, vector<84x10xbf16>
    %cst_79 = arith.constant dense<0.000000e+00> : vector<8x10xf32>
    %128 = tpu.matmul %126, %127, %cst_79 {dimension_numbers = #tpu.dot_dimension_numbers<[1], [0], [0], [1], [0, 0, 1, 1], [], []>} : vector<8x84xbf16>, vector<84x10xbf16>, vector<8x10xf32> -> vector<8x10xf32>
    %c0_80 = arith.constant 0 : index
    %c0_81 = arith.constant 0 : index
    %129 = vector.load %arg11[%c0_80, %c0_81] : memref<1x10xf32, #tpu.memory_space<vmem>>, vector<1x10xf32>
    %130 = vector.broadcast %129 : vector<1x10xf32> to vector<8x10xf32>
    %131 = arith.addf %128, %130 : vector<8x10xf32>
    %c0_82 = arith.constant 0 : index
    %c0_83 = arith.constant 0 : index
    %132 = vector.load %arg12[%c0_82, %c0_83] : memref<8x10xf32, #tpu.memory_space<vmem>>, vector<8x10xf32>
    tpu.vector_store %arg12[%c0_82, %c0_83], %131 {strides = array<i32>} : memref<8x10xf32, #tpu.memory_space<vmem>>, vector<8x10xf32>,
    return
  }
  func.func @transform_0(%arg0: i32) -> (i32, i32) {
    %c0_i32 = arith.constant 0 : i32
    %c0_i32_0 = arith.constant 0 : i32
    return %arg0, %c0_i32 : i32, i32
  }
  func.func @transform_1(%arg0: i32) -> (i32, i32) {
    %c0_i32 = arith.constant 0 : i32
    %c0_i32_0 = arith.constant 0 : i32
    %c0_i32_1 = arith.constant 0 : i32
    return %c0_i32, %c0_i32_0 : i32, i32
  }
  func.func @transform_2(%arg0: i32) -> (i32, i32) {
    %c0_i32 = arith.constant 0 : i32
    %c0_i32_0 = arith.constant 0 : i32
    %c0_i32_1 = arith.constant 0 : i32
    return %c0_i32, %c0_i32_0 : i32, i32
  }
  func.func @transform_3(%arg0: i32) -> (i32, i32) {
    %c0_i32 = arith.constant 0 : i32
    %c0_i32_0 = arith.constant 0 : i32
    %c0_i32_1 = arith.constant 0 : i32
    return %c0_i32, %c0_i32_0 : i32, i32
  }
  func.func @transform_4(%arg0: i32) -> (i32, i32) {
    %c0_i32 = arith.constant 0 : i32
    %c0_i32_0 = arith.constant 0 : i32
    %c0_i32_1 = arith.constant 0 : i32
    return %c0_i32, %c0_i32_0 : i32, i32
  }
  func.func @transform_5(%arg0: i32) -> (i32, i32) {
    %c0_i32 = arith.constant 0 : i32
    %c0_i32_0 = arith.constant 0 : i32
    %c0_i32_1 = arith.constant 0 : i32
    return %c0_i32, %c0_i32_0 : i32, i32
  }
  func.func @transform_6(%arg0: i32) -> (i32, i32) {
    %c0_i32 = arith.constant 0 : i32
    %c0_i32_0 = arith.constant 0 : i32
    %c0_i32_1 = arith.constant 0 : i32
    return %c0_i32, %c0_i32_0 : i32, i32
  }
  func.func @transform_7(%arg0: i32) -> (i32, i32) {
    %c0_i32 = arith.constant 0 : i32
    %c0_i32_0 = arith.constant 0 : i32
    %c0_i32_1 = arith.constant 0 : i32
    return %c0_i32, %c0_i32_0 : i32, i32
  }
  func.func @transform_8(%arg0: i32) -> (i32, i32) {
    %c0_i32 = arith.constant 0 : i32
    %c0_i32_0 = arith.constant 0 : i32
    %c0_i32_1 = arith.constant 0 : i32
    return %c0_i32, %c0_i32_0 : i32, i32
  }
  func.func @transform_9(%arg0: i32) -> (i32, i32) {
    %c0_i32 = arith.constant 0 : i32
    %c0_i32_0 = arith.constant 0 : i32
    %c0_i32_1 = arith.constant 0 : i32
    return %c0_i32, %c0_i32_0 : i32, i32
  }
  func.func @transform_10(%arg0: i32) -> (i32, i32) {
    %c0_i32 = arith.constant 0 : i32
    %c0_i32_0 = arith.constant 0 : i32
    %c0_i32_1 = arith.constant 0 : i32
    return %c0_i32, %c0_i32_0 : i32, i32
  }
  func.func @transform_11(%arg0: i32) -> (i32, i32) {
    %c0_i32 = arith.constant 0 : i32
    %c0_i32_0 = arith.constant 0 : i32
    return %arg0, %c0_i32 : i32, i32
  }
}

</mosaic_0001>

<llo_original>
// kernel: squeeze.10
$region0: #{squeeze.10}
  %s0 = inlined_call_operand.vmem [shape: bf16[1,5,3,6], index: 0, kind: input, shape index: {}]
  %s1 = inlined_call_operand.vmem [shape: bf16[15,6], index: 1, kind: output, shape index: {}]
  $region1: #{squeeze.10} parent=0
    #allocation0 [shape = 'u8[8192]{0}', space=vmem, size = 0x2000, scoped, tag = 'scoped mem for output reshape']
    #allocation1 [shape = 'u8[20480]{0}', space=vmem, size = 0x5000, scoped, tag = 'scoped mem for input reshape']
    %s3 = smul.u32 2, 2
    %s4 = sshllo.u32 0, %s3
    %s5 = smul.addr 2, 4
    %s6 = scalar_lea.vmem %s0, %s5
    %s7 = sshrl.u32 %s4, 1
    %s8 = sor.u32 %s4, %s7
    %s9 = sand.u32 %s8, 85
    %s10 = sshrl.u32 %s9, 1
    %s11 = sor.u32 %s9, %s10
    %s12 = sand.u32 51, %s11
    %s13 = sshrl.u32 %s12, 2
    %s14 = sor.u32 %s12, %s13
    %s15 = sand.u32 15, %s14
    %v16 = vld [vmem:[%s6] sm:%s15]
    %v17 = vunpack.c.l.bf16 %v16
    %v18 = vunpack.c.h.bf16 %v16
    %s19 = scalar_lea.vmem [#allocation1], 32
    %20 = vst [vmem:[%s19] sm:%s4] %v17
    %s21 = smul.addr 2, 3
    %s22 = scalar_lea.vmem %s0, %s21
    %s23 = sshrl.u32 %s4, 1
    %s24 = sor.u32 %s4, %s23
    %s25 = sand.u32 %s24, 85
    %s26 = sshrl.u32 %s25, 1
    %s27 = sor.u32 %s25, %s26
    %s28 = sand.u32 51, %s27
    %s29 = sshrl.u32 %s28, 2
    %s30 = sor.u32 %s28, %s29
    %s31 = sand.u32 15, %s30
    %v32 = vld [vmem:[%s22] sm:%s31]
    %v33 = vunpack.c.l.bf16 %v32
    %v34 = vunpack.c.h.bf16 %v32
    %s35 = scalar_lea.vmem [#allocation1], 24
    %36 = vst [vmem:[%s35] sm:%s4] %v33
    %s37 = smul.addr 2, 2
    %s38 = scalar_lea.vmem %s0, %s37
    %s39 = sshrl.u32 %s4, 1
    %s40 = sor.u32 %s4, %s39
    %s41 = sand.u32 %s40, 85
    %s42 = sshrl.u32 %s41, 1
    %s43 = sor.u32 %s41, %s42
    %s44 = sand.u32 51, %s43
    %s45 = sshrl.u32 %s44, 2
    %s46 = sor.u32 %s44, %s45
    %s47 = sand.u32 15, %s46
    %v48 = vld [vmem:[%s38] sm:%s47]
    %v49 = vunpack.c.l.bf16 %v48
    %v50 = vunpack.c.h.bf16 %v48
    %s51 = scalar_lea.vmem [#allocation1], 16
    %52 = vst [vmem:[%s51] sm:%s4] %v49
    %s53 = scalar_lea.vmem %s0, 2
    %s54 = sshrl.u32 %s4, 1
    %s55 = sor.u32 %s4, %s54
    %s56 = sand.u32 %s55, 85
    %s57 = sshrl.u32 %s56, 1
    %s58 = sor.u32 %s56, %s57
    %s59 = sand.u32 51, %s58
    %s60 = sshrl.u32 %s59, 2
    %s61 = sor.u32 %s59, %s60
    %s62 = sand.u32 15, %s61
    %v63 = vld [vmem:[%s53] sm:%s62]
    %v64 = vunpack.c.l.bf16 %v63
    %v65 = vunpack.c.h.bf16 %v63
    %s66 = scalar_lea.vmem [#allocation1], 8
    %67 = vst [vmem:[%s66] sm:%s4] %v64
    %s68 = sshrl.u32 %s4, 1
    %s69 = sor.u32 %s4, %s68
    %s70 = sand.u32 %s69, 85
    %s71 = sshrl.u32 %s70, 1
    %s72 = sor.u32 %s70, %s71
    %s73 = sand.u32 51, %s72
    %s74 = sshrl.u32 %s73, 2
    %s75 = sor.u32 %s73, %s74
    %s76 = sand.u32 15, %s75
    %v77 = vld [vmem:[%s0] sm:%s76]
    %v78 = vunpack.c.l.bf16 %v77
    %v79 = vunpack.c.h.bf16 %v77
    %80 = vst [vmem:[#allocation1] sm:%s4] %v78
    %v81 = vld [vmem:[#allocation1] sm:$0x7]
    %vm82 = vcmask 48128
    %83 = vst.msk [vmem:[#allocation0] sm:$0x7] %vm82, %v81
    %s84 = scalar_lea.vmem [#allocation1], 8
    %v85 = vld [vmem:[%s84] sm:$0x7]
    %vm86 = vcmask 48128
    %s87 = scalar_lea.vmem [#allocation0], 3
    %88 = vst.msk [vmem:[%s87] sm:$0x7] %vm86, %v85
    %s89 = scalar_lea.vmem [#allocation1], 16
    %v90 = vld [vmem:[%s89] sm:$0x7]
    %vm91 = vcmask 48128
    %s92 = scalar_lea.vmem [#allocation0], 6
    %93 = vst.msk [vmem:[%s92] sm:$0x7] %vm91, %v90
    %s94 = scalar_lea.vmem [#allocation1], 24
    %v95 = vld [vmem:[%s94] sm:$0x7]
    %vm96 = vcmask 48128
    %s97 = scalar_lea.vmem [#allocation0], 9
    %98 = vst.msk [vmem:[%s97] sm:$0x7] %vm96, %v95
    %s99 = scalar_lea.vmem [#allocation1], 32
    %v100 = vld [vmem:[%s99] sm:$0x7]
    %vm101 = vcmask 48128
    %s102 = scalar_lea.vmem [#allocation0], 12
    %103 = vst.msk [vmem:[%s102] sm:$0x7] %vm101, %v100
    %s105 = smul.u32 4, 2
    %s106 = sshllo.u32 0, %s105
    %s107 = sshrl.u32 %s105, 1
    %v108 = vld [vmem:[#allocation0] sm:%s106]
    %v109 = vpack.c.bf16 0.0, %v108
    %s110 = sshllo.u32 0, %s107
    %111 = vst [vmem:[%s1] sm:%s110] %v109
    %s112 = scalar_lea.vmem [#allocation0], 8
    %v113 = vld [vmem:[%s112] sm:%s106]
    %v114 = vpack.c.bf16 0.0, %v113
    %s115 = sshllo.u32 0, %s107
    %s116 = scalar_lea.vmem %s1, 4
    %117 = vst [vmem:[%s116] sm:%s115] %v114

// kernel: tile.13
$region0: #{tile.13}
  #allocation0 [shape = 's32[1]{0}', space=sflag, size = 0x4, scoped, tag = 'scoped memory for tile.13']
  %s0 = inlined_call_operand.vmem [shape: f32[6], index: 0, kind: input, shape index: {}]
  %s1 = inlined_call_operand.vmem [shape: f32[14,6], index: 1, kind: output, shape index: {}]
  // Predicated region
  $region2: #{tile.13} parent=0 // pred_check
    _
  $region3: #{tile.13} parent=0 // pred_check_branch
    %3 = sbr.rel (0) target = $region5
  $region4: #{tile.13} parent=0 // pred_region
    _
  $region5: #{tile.13} parent=0 // pred_fallthru
    _
  %v4 = vld [vmem:[%s0] ss:$0 sm:$0xff]
  %5 = vst [vmem:[%s1] sm:$0xff] %v4
  %s6 = scalar_lea.vmem %s1, 8
  %7 = vst [vmem:[%s6] sm:$0xff] %v4

// kernel: tile.14
$region0: #{tile.14}
  %s0 = inlined_call_operand.vmem [shape: f32[14,6], index: 0, kind: input, shape index: {}]
  %s1 = inlined_call_operand.vmem [shape: f32[1,84], index: 1, kind: output, shape index: {}]
  $region1: #{tile.14} parent=0
    #allocation0 [shape = 'u8[4096]{0}', space=vmem, size = 0x1000, scoped, tag = 'scoped mem for output reshape']
    %v2 = vld [vmem:[%s0] sm:$0x1]
    %vm3 = vcmask 48128
    %4 = vst.msk [vmem:[#allocation0] sm:$0x1] %vm3, %v2
    %s5 = scalar_lea.vmem %s0, 13
    %v6 = vld [vmem:[%s5] sm:$0x1]
    %7 = vrot.lane.b32.xlu0 %v6, 78
    %v8 = vpop.permute.xlu0 %7
    %vm9 = vcmask 687728
    %10 = vst.msk [vmem:[#allocation0] sm:$0x1] %vm9, %v8
    %s11 = scalar_lea.vmem %s0, 12
    %v12 = vld [vmem:[%s11] sm:$0x1]
    %13 = vrot.lane.b32.xlu0 %v12, 72
    %v14 = vpop.permute.xlu0 %13
    %vm15 = vcmask 638528
    %16 = vst.msk [vmem:[#allocation0] sm:$0x1] %vm15, %v14
    %s17 = scalar_lea.vmem %s0, 11
    %v18 = vld [vmem:[%s17] sm:$0x1]
    %19 = vrot.lane.b32.xlu0 %v18, 66
    %v20 = vpop.permute.xlu0 %19
    %vm21 = vcmask 589328
    %22 = vst.msk [vmem:[#allocation0] sm:$0x1] %vm21, %v20
    %s23 = scalar_lea.vmem %s0, 10
    %v24 = vld [vmem:[%s23] sm:$0x1]
    %25 = vrot.lane.b32.xlu0 %v24, 60
    %v26 = vpop.permute.xlu0 %25
    %vm27 = vcmask 540128
    %28 = vst.msk [vmem:[#allocation0] sm:$0x1] %vm27, %v26
    %s29 = scalar_lea.vmem %s0, 9
    %v30 = vld [vmem:[%s29] sm:$0x1]
    %31 = vrot.lane.b32.xlu0 %v30, 54
    %v32 = vpop.permute.xlu0 %31
    %vm33 = vcmask 490928
    %34 = vst.msk [vmem:[#allocation0] sm:$0x1] %vm33, %v32
    %s35 = scalar_lea.vmem %s0, 8
    %v36 = vld [vmem:[%s35] sm:$0x1]
    %37 = vrot.lane.b32.xlu0 %v36, 48
    %v38 = vpop.permute.xlu0 %37
    %vm39 = vcmask 441728
    %40 = vst.msk [vmem:[#allocation0] sm:$0x1] %vm39, %v38
    %s41 = scalar_lea.vmem %s0, 7
    %v42 = vld [vmem:[%s41] sm:$0x1]
    %43 = vrot.lane.b32.xlu0 %v42, 42
    %v44 = vpop.permute.xlu0 %43
    %vm45 = vcmask 392528
    %46 = vst.msk [vmem:[#allocation0] sm:$0x1] %vm45, %v44
    %s47 = scalar_lea.vmem %s0, 6
    %v48 = vld [vmem:[%s47] sm:$0x1]
    %49 = vrot.lane.b32.xlu0 %v48, 36
    %v50 = vpop.permute.xlu0 %49
    %vm51 = vcmask 343328
    %52 = vst.msk [vmem:[#allocation0] sm:$0x1] %vm51, %v50
    %s53 = scalar_lea.vmem %s0, 5
    %v54 = vld [vmem:[%s53] sm:$0x1]
    %55 = vrot.lane.b32.xlu0 %v54, 30
    %v56 = vpop.permute.xlu0 %55
    %vm57 = vcmask 294128
    %58 = vst.msk [vmem:[#allocation0] sm:$0x1] %vm57, %v56
    %s59 = scalar_lea.vmem %s0, 4
    %v60 = vld [vmem:[%s59] sm:$0x1]
    %61 = vrot.lane.b32.xlu0 %v60, 24
    %v62 = vpop.permute.xlu0 %61
    %vm63 = vcmask 244928
    %64 = vst.msk [vmem:[#allocation0] sm:$0x1] %vm63, %v62
    %s65 = scalar_lea.vmem %s0, 3
    %v66 = vld [vmem:[%s65] sm:$0x1]
    %67 = vrot.lane.b32.xlu0 %v66, 18
    %v68 = vpop.permute.xlu0 %67
    %vm69 = vcmask 195728
    %70 = vst.msk [vmem:[#allocation0] sm:$0x1] %vm69, %v68
    %s71 = scalar_lea.vmem %s0, 2
    %v72 = vld [vmem:[%s71] sm:$0x1]
    %73 = vrot.lane.b32.xlu0 %v72, 12
    %v74 = vpop.permute.xlu0 %73
    %vm75 = vcmask 146528
    %76 = vst.msk [vmem:[#allocation0] sm:$0x1] %vm75, %v74
    %s77 = scalar_lea.vmem %s0, 1
    %v78 = vld [vmem:[%s77] sm:$0x1]
    %79 = vrot.lane.b32.xlu0 %v78, 6
    %v80 = vpop.permute.xlu0 %79
    %vm81 = vcmask 97328
    %82 = vst.msk [vmem:[#allocation0] sm:$0x1] %vm81, %v80
    %s84 = sshllo.u32 0, 1
    %v86 = vld [vmem:[#allocation0] sm:%s84]
    %s87 = sshllo.u32 0, 1
    %88 = vst [vmem:[%s1] sm:%s87] %v86

// kernel: squeeze.15
$region0: #{squeeze.15}
  %s0 = inlined_call_operand.vmem [shape: bf16[1,5,6,16], index: 0, kind: input, shape index: {}]
  %s1 = inlined_call_operand.vmem [shape: bf16[30,16], index: 1, kind: output, shape index: {}]
  $region1: #{squeeze.15} parent=0
    #allocation0 [shape = 'u8[16384]{0}', space=vmem, size = 0x4000, scoped, tag = 'scoped mem for output reshape']
    #allocation1 [shape = 'u8[20480]{0}', space=vmem, size = 0x5000, scoped, tag = 'scoped mem for input reshape']
    %s3 = smul.u32 4, 2
    %s4 = sshllo.u32 0, %s3
    %s5 = smul.addr 4, 4
    %s6 = scalar_lea.vmem %s0, %s5
    %s7 = sshrl.u32 %s4, 1
    %s8 = sor.u32 %s4, %s7
    %s9 = sand.u32 %s8, 85
    %s10 = sshrl.u32 %s9, 1
    %s11 = sor.u32 %s9, %s10
    %s12 = sand.u32 51, %s11
    %s13 = sshrl.u32 %s12, 2
    %s14 = sor.u32 %s12, %s13
    %s15 = sand.u32 15, %s14
    %v16 = vld [vmem:[%s6] sm:%s15]
    %v17 = vunpack.c.l.bf16 %v16
    %v18 = vunpack.c.h.bf16 %v16
    %s19 = scalar_lea.vmem [#allocation1], 32
    %20 = vst [vmem:[%s19] sm:%s4] %v17
    %s21 = smul.addr 4, 3
    %s22 = scalar_lea.vmem %s0, %s21
    %s23 = sshrl.u32 %s4, 1
    %s24 = sor.u32 %s4, %s23
    %s25 = sand.u32 %s24, 85
    %s26 = sshrl.u32 %s25, 1
    %s27 = sor.u32 %s25, %s26
    %s28 = sand.u32 51, %s27
    %s29 = sshrl.u32 %s28, 2
    %s30 = sor.u32 %s28, %s29
    %s31 = sand.u32 15, %s30
    %v32 = vld [vmem:[%s22] sm:%s31]
    %v33 = vunpack.c.l.bf16 %v32
    %v34 = vunpack.c.h.bf16 %v32
    %s35 = scalar_lea.vmem [#allocation1], 24
    %36 = vst [vmem:[%s35] sm:%s4] %v33
    %s37 = smul.addr 4, 2
    %s38 = scalar_lea.vmem %s0, %s37
    %s39 = sshrl.u32 %s4, 1
    %s40 = sor.u32 %s4, %s39
    %s41 = sand.u32 %s40, 85
    %s42 = sshrl.u32 %s41, 1
    %s43 = sor.u32 %s41, %s42
    %s44 = sand.u32 51, %s43
    %s45 = sshrl.u32 %s44, 2
    %s46 = sor.u32 %s44, %s45
    %s47 = sand.u32 15, %s46
    %v48 = vld [vmem:[%s38] sm:%s47]
    %v49 = vunpack.c.l.bf16 %v48
    %v50 = vunpack.c.h.bf16 %v48
    %s51 = scalar_lea.vmem [#allocation1], 16
    %52 = vst [vmem:[%s51] sm:%s4] %v49
    %s53 = scalar_lea.vmem %s0, 4
    %s54 = sshrl.u32 %s4, 1
    %s55 = sor.u32 %s4, %s54
    %s56 = sand.u32 %s55, 85
    %s57 = sshrl.u32 %s56, 1
    %s58 = sor.u32 %s56, %s57
    %s59 = sand.u32 51, %s58
    %s60 = sshrl.u32 %s59, 2
    %s61 = sor.u32 %s59, %s60
    %s62 = sand.u32 15, %s61
    %v63 = vld [vmem:[%s53] sm:%s62]
    %v64 = vunpack.c.l.bf16 %v63
    %v65 = vunpack.c.h.bf16 %v63
    %s66 = scalar_lea.vmem [#allocation1], 8
    %67 = vst [vmem:[%s66] sm:%s4] %v64
    %s68 = sshrl.u32 %s4, 1
    %s69 = sor.u32 %s4, %s68
    %s70 = sand.u32 %s69, 85
    %s71 = sshrl.u32 %s70, 1
    %s72 = sor.u32 %s70, %s71
    %s73 = sand.u32 51, %s72
    %s74 = sshrl.u32 %s73, 2
    %s75 = sor.u32 %s73, %s74
    %s76 = sand.u32 15, %s75
    %v77 = vld [vmem:[%s0] sm:%s76]
    %v78 = vunpack.c.l.bf16 %v77
    %v79 = vunpack.c.h.bf16 %v77
    %80 = vst [vmem:[#allocation1] sm:%s4] %v78
    %v81 = vld [vmem:[#allocation1] sm:$0x3f]
    %vm82 = vcmask 130048
    %83 = vst.msk [vmem:[#allocation0] sm:$0x3f] %vm82, %v81
    %s84 = scalar_lea.vmem [#allocation1], 8
    %v85 = vld [vmem:[%s84] sm:$0x3f]
    %vm86 = vcmask 130048
    %s87 = scalar_lea.vmem [#allocation0], 6
    %88 = vst.msk [vmem:[%s87] sm:$0x3f] %vm86, %v85
    %s89 = scalar_lea.vmem [#allocation1], 16
    %v90 = vld [vmem:[%s89] sm:$0x3f]
    %vm91 = vcmask 130048
    %s92 = scalar_lea.vmem [#allocation0], 12
    %93 = vst.msk [vmem:[%s92] sm:$0x3f] %vm91, %v90
    %s94 = scalar_lea.vmem [#allocation1], 24
    %v95 = vld [vmem:[%s94] sm:$0x3f]
    %vm96 = vcmask 130048
    %s97 = scalar_lea.vmem [#allocation0], 18
    %98 = vst.msk [vmem:[%s97] sm:$0x3f] %vm96, %v95
    %s99 = scalar_lea.vmem [#allocation1], 32
    %v100 = vld [vmem:[%s99] sm:$0x3f]
    %vm101 = vcmask 130048
    %s102 = scalar_lea.vmem [#allocation0], 24
    %103 = vst.msk [vmem:[%s102] sm:$0x3f] %vm101, %v100
    %s105 = smul.u32 4, 2
    %s106 = sshllo.u32 0, %s105
    %s107 = sshrl.u32 %s105, 1
    %v108 = vld [vmem:[#allocation0] sm:%s106]
    %v109 = vpack.c.bf16 0.0, %v108
    %s110 = sshllo.u32 0, %s107
    %111 = vst [vmem:[%s1] sm:%s110] %v109
    %s112 = scalar_lea.vmem [#allocation0], 8
    %v113 = vld [vmem:[%s112] sm:%s106]
    %v114 = vpack.c.bf16 0.0, %v113
    %s115 = sshllo.u32 0, %s107
    %s116 = scalar_lea.vmem %s1, 4
    %117 = vst [vmem:[%s116] sm:%s115] %v114
    %s118 = scalar_lea.vmem [#allocation0], 16
    %v119 = vld [vmem:[%s118] sm:%s106]
    %v120 = vpack.c.bf16 0.0, %v119
    %s121 = sshllo.u32 0, %s107
    %s122 = smul.addr 4, 2
    %s123 = scalar_lea.vmem %s1, %s122
    %124 = vst [vmem:[%s123] sm:%s121] %v120
    %s125 = scalar_lea.vmem [#allocation0], 24
    %v126 = vld [vmem:[%s125] sm:%s106]
    %v127 = vpack.c.bf16 0.0, %v126
    %s128 = sshllo.u32 0, %s107
    %s129 = smul.addr 4, 3
    %s130 = scalar_lea.vmem %s1, %s129
    %131 = vst [vmem:[%s130] sm:%s128] %v127

// kernel: tile.18
$region0: #{tile.18}
  #allocation0 [shape = 's32[1]{0}', space=sflag, size = 0x4, scoped, tag = 'scoped memory for tile.18']
  %s0 = inlined_call_operand.vmem [shape: f32[16], index: 0, kind: input, shape index: {}]
  %s1 = inlined_call_operand.vmem [shape: f32[5,16], index: 1, kind: output, shape index: {}]
  // Predicated region
  $region2: #{tile.18} parent=0 // pred_check
    _
  $region3: #{tile.18} parent=0 // pred_check_branch
    %3 = sbr.rel (0) target = $region5
  $region4: #{tile.18} parent=0 // pred_region
    _
  $region5: #{tile.18} parent=0 // pred_fallthru
    _
  %v4 = vld [vmem:[%s0] ss:$0 sm:$0xff]
  %5 = vst [vmem:[%s1] sm:$0xff] %v4

// kernel: tile.19
$region0: #{tile.19}
  %s0 = inlined_call_operand.vmem [shape: f32[5,16], index: 0, kind: input, shape index: {}]
  %s1 = inlined_call_operand.vmem [shape: f32[1,80], index: 1, kind: output, shape index: {}]
  $region1: #{tile.19} parent=0
    #allocation0 [shape = 'u8[4096]{0}', space=vmem, size = 0x1000, scoped, tag = 'scoped mem for output reshape']
    %v2 = vld [vmem:[%s0] sm:$0x1]
    %vm3 = vcmask 130048
    %4 = vst.msk [vmem:[#allocation0] sm:$0x1] %vm3, %v2
    %s5 = scalar_lea.vmem %s0, 4
    %v6 = vld [vmem:[%s5] sm:$0x1]
    %7 = vrot.lane.b32.xlu0 %v6, 64
    %v8 = vpop.permute.xlu0 %7
    %vm9 = vcmask 654848
    %10 = vst.msk [vmem:[#allocation0] sm:$0x1] %vm9, %v8
    %s11 = scalar_lea.vmem %s0, 3
    %v12 = vld [vmem:[%s11] sm:$0x1]
    %13 = vrot.lane.b32.xlu0 %v12, 48
    %v14 = vpop.permute.xlu0 %13
    %vm15 = vcmask 523648
    %16 = vst.msk [vmem:[#allocation0] sm:$0x1] %vm15, %v14
    %s17 = scalar_lea.vmem %s0, 2
    %v18 = vld [vmem:[%s17] sm:$0x1]
    %19 = vrot.lane.b32.xlu0 %v18, 32
    %v20 = vpop.permute.xlu0 %19
    %vm21 = vcmask 392448
    %22 = vst.msk [vmem:[#allocation0] sm:$0x1] %vm21, %v20
    %s23 = scalar_lea.vmem %s0, 1
    %v24 = vld [vmem:[%s23] sm:$0x1]
    %25 = vrot.lane.b32.xlu0 %v24, 16
    %v26 = vpop.permute.xlu0 %25
    %vm27 = vcmask 261248
    %28 = vst.msk [vmem:[#allocation0] sm:$0x1] %vm27, %v26
    %s30 = sshllo.u32 0, 1
    %v32 = vld [vmem:[#allocation0] sm:%s30]
    %s33 = sshllo.u32 0, 1
    %34 = vst [vmem:[%s1] sm:%s33] %v32

// kernel: net_forward.1
$region0: #{net_forward.1}
  #allocation0 [shape = 'u32[]', space=smem, size = 0x4, offset = 0x4, fixed_abs, tag = 'smem constant byte address 0x4 - core index']
  #allocation1 [shape = 'u32[144,128]{1,0:T(1,128)}', space=vmem, size = 0x12000, scoped, tag = 'internal scratch']
  #allocation2 [shape = 'f32[8,28,84]{2,1,0:T(8,128)}', space=vmem, size = 0x20000, scoped, tag = 'scratch operand']
  #allocation3 [shape = 'f32[8,10,80]{2,1,0:T(8,128)}', space=vmem, size = 0x10000, scoped, tag = 'scratch operand']
  %s0 = inlined_call_operand.vmem [shape: bf16[768,96], index: 0, kind: input, shape index: {}]
  %s1 = inlined_call_operand.vmem [shape: bf16[96,840], index: 1, kind: input, shape index: {}]
  %s2 = inlined_call_operand.vmem [shape: f32[1,84], index: 2, kind: input, shape index: {}]
  %s3 = inlined_call_operand.vmem [shape: bf16[84,800], index: 3, kind: input, shape index: {}]
  %s4 = inlined_call_operand.vmem [shape: f32[1,80], index: 4, kind: input, shape index: {}]
  %s5 = inlined_call_operand.vmem [shape: bf16[400,120], index: 5, kind: input, shape index: {}]
  %s6 = inlined_call_operand.vmem [shape: f32[1,120], index: 6, kind: input, shape index: {}]
  %s7 = inlined_call_operand.vmem [shape: bf16[120,84], index: 7, kind: input, shape index: {}]
  %s8 = inlined_call_operand.vmem [shape: f32[1,84], index: 8, kind: input, shape index: {}]
  %s9 = inlined_call_operand.vmem [shape: bf16[84,10], index: 9, kind: input, shape index: {}]
  %s10 = inlined_call_operand.vmem [shape: f32[1,10], index: 10, kind: input, shape index: {}]
  %s11 = inlined_call_operand.vmem [shape: f32[24,10], index: 11, kind: output, shape index: {}]
  %s12 = sld [smem:[#allocation0]]
  $region77: #{net_forward.1} parent=0
    _
  %s14 = ssub.s32 1, %s12
  %s15 = scalar_select 0, %s14, %s12
  loop: start=0, step=1, limit=5
  $region2: #{net_forward.1} parent=0 // loop_pre_header
    _
  $region3: #{net_forward.1} parent=0 // loop_header
    %s17 = sphi 0, %s21
    %p18 = scmp.ge.s32.totalorder %s17, 5
    %s27 = sphi 0, %s29
    %s30 = sphi 0, %s27
    %s31 = sphi 0, %s30
    %s47 = sphi 0, %s31
    %s51 = sphi 0, %s51
    %s53 = sphi 0, %s51
    %s54 = sphi 0, %s53
    %s68 = sphi 0, %s54
    %s72 = sphi 0, %s72
    %s74 = sphi 0, %s72
    %s75 = sphi 0, %s74
    %s89 = sphi 0, %s75
    %s93 = sphi 0, %s93
    %s95 = sphi 0, %s93
    %s96 = sphi 0, %s95
    %s110 = sphi 0, %s96
    %s114 = sphi 0, %s114
    %s116 = sphi 0, %s114
    %s117 = sphi 0, %s116
    %s131 = sphi 0, %s117
    %s135 = sphi 0, %s135
    %s137 = sphi 0, %s135
    %s138 = sphi 0, %s137
    %s152 = sphi 0, %s138
    %s156 = sphi 0, %s156
    %s158 = sphi 0, %s156
    %s159 = sphi 0, %s158
    %s173 = sphi 0, %s159
    %s177 = sphi 0, %s177
    %s179 = sphi 0, %s177
    %s180 = sphi 0, %s179
    %s194 = sphi 0, %s180
    %s198 = sphi 0, %s198
    %s200 = sphi 0, %s198
    %s201 = sphi 0, %s200
    %s215 = sphi 0, %s201
    %s219 = sphi 0, %s219
    %s221 = sphi 0, %s219
    %s222 = sphi 0, %s221
    %s236 = sphi 0, %s222
    %s240 = sphi 0, %s240
    %s242 = sphi 0, %s240
    %s243 = sphi 0, %s242
    %s257 = sphi 0, %s243
    %s263 = sphi 0, %s265
    %s266 = sphi 0, %s263
    %s267 = sphi 0, %s266
    %s283 = sphi 0, %s267
  $region4: #{net_forward.1} parent=0 // loop_header_branch
    %20 = sbr.rel (%p18) target = $region8
  $region5: #{net_forward.1} parent=0 // loop_body
    %s22 = ssub.s32 %s17, 1
    %s23 = ssub.s32 %s17, 2
    %s24 = sadd.s32 %s17, 1
    %s25 = ssub.s32 %s17, %s24
    %p26 = scmp.eq.s32.totalorder %s25, 0
    %s28 = sadd.s32 %s27, 1
    %s29 = scalar_select %p26, %s27, %s28
    %p32 = pneg %p26
    %p33 = scmp.eq.s32.totalorder %s17, 2
    %p34 = por %p32, %p33
    %p35 = scmp.ne.s32.totalorder %s27, %s30
    %p36 = scmp.eq.s32.totalorder %s17, 0
    %p37 = por %p35, %p36
    %p38 = scmp.ne.s32.totalorder %s27, %s30
    %p39 = scmp.eq.s32.totalorder %s22, 2
    %p40 = por %p38, %p39
    %p41 = scmp.ne.s32.totalorder %s30, %s31
    %p42 = scmp.eq.s32.totalorder %s22, 0
    %p43 = por %p41, %p42
    %p44 = scmp.ne.s32.totalorder %s30, %s31
    %p45 = scmp.eq.s32.totalorder %s23, 2
    %p46 = por %p44, %p45
    %p48 = scmp.ne.s32.totalorder %s31, %s47
    %p49 = scmp.eq.s32.totalorder %s23, 0
    %p50 = por %p48, %p49
    %s52 = sadd.s32 %s51, 1
    %p55 = scmp.eq.s32.totalorder %s17, 2
    %p56 = scmp.ne.s32.totalorder %s51, %s53
    %p57 = scmp.eq.s32.totalorder %s17, 0
    %p58 = por %p56, %p57
    %p59 = scmp.ne.s32.totalorder %s51, %s53
    %p60 = scmp.eq.s32.totalorder %s22, 2
    %p61 = por %p59, %p60
    %p62 = scmp.ne.s32.totalorder %s53, %s54
    %p63 = scmp.eq.s32.totalorder %s22, 0
    %p64 = por %p62, %p63
    %p65 = scmp.ne.s32.totalorder %s53, %s54
    %p66 = scmp.eq.s32.totalorder %s23, 2
    %p67 = por %p65, %p66
    %p69 = scmp.ne.s32.totalorder %s54, %s68
    %p70 = scmp.eq.s32.totalorder %s23, 0
    %p71 = por %p69, %p70
    %s73 = sadd.s32 %s72, 1
    %p76 = scmp.eq.s32.totalorder %s17, 2
    %p77 = scmp.ne.s32.totalorder %s72, %s74
    %p78 = scmp.eq.s32.totalorder %s17, 0
    %p79 = por %p77, %p78
    %p80 = scmp.ne.s32.totalorder %s72, %s74
    %p81 = scmp.eq.s32.totalorder %s22, 2
    %p82 = por %p80, %p81
    %p83 = scmp.ne.s32.totalorder %s74, %s75
    %p84 = scmp.eq.s32.totalorder %s22, 0
    %p85 = por %p83, %p84
    %p86 = scmp.ne.s32.totalorder %s74, %s75
    %p87 = scmp.eq.s32.totalorder %s23, 2
    %p88 = por %p86, %p87
    %p90 = scmp.ne.s32.totalorder %s75, %s89
    %p91 = scmp.eq.s32.totalorder %s23, 0
    %p92 = por %p90, %p91
    %s94 = sadd.s32 %s93, 1
    %p97 = scmp.eq.s32.totalorder %s17, 2
    %p98 = scmp.ne.s32.totalorder %s93, %s95
    %p99 = scmp.eq.s32.totalorder %s17, 0
    %p100 = por %p98, %p99
    %p101 = scmp.ne.s32.totalorder %s93, %s95
    %p102 = scmp.eq.s32.totalorder %s22, 2
    %p103 = por %p101, %p102
    %p104 = scmp.ne.s32.totalorder %s95, %s96
    %p105 = scmp.eq.s32.totalorder %s22, 0
    %p106 = por %p104, %p105
    %p107 = scmp.ne.s32.totalorder %s95, %s96
    %p108 = scmp.eq.s32.totalorder %s23, 2
    %p109 = por %p107, %p108
    %p111 = scmp.ne.s32.totalorder %s96, %s110
    %p112 = scmp.eq.s32.totalorder %s23, 0
    %p113 = por %p111, %p112
    %s115 = sadd.s32 %s114, 1
    %p118 = scmp.eq.s32.totalorder %s17, 2
    %p119 = scmp.ne.s32.totalorder %s114, %s116
    %p120 = scmp.eq.s32.totalorder %s17, 0
    %p121 = por %p119, %p120
    %p122 = scmp.ne.s32.totalorder %s114, %s116
    %p123 = scmp.eq.s32.totalorder %s22, 2
    %p124 = por %p122, %p123
    %p125 = scmp.ne.s32.totalorder %s116, %s117
    %p126 = scmp.eq.s32.totalorder %s22, 0
    %p127 = por %p125, %p126
    %p128 = scmp.ne.s32.totalorder %s116, %s117
    %p129 = scmp.eq.s32.totalorder %s23, 2
    %p130 = por %p128, %p129
    %p132 = scmp.ne.s32.totalorder %s117, %s131
    %p133 = scmp.eq.s32.totalorder %s23, 0
    %p134 = por %p132, %p133
    %s136 = sadd.s32 %s135, 1
    %p139 = scmp.eq.s32.totalorder %s17, 2
    %p140 = scmp.ne.s32.totalorder %s135, %s137
    %p141 = scmp.eq.s32.totalorder %s17, 0
    %p142 = por %p140, %p141
    %p143 = scmp.ne.s32.totalorder %s135, %s137
    %p144 = scmp.eq.s32.totalorder %s22, 2
    %p145 = por %p143, %p144
    %p146 = scmp.ne.s32.totalorder %s137, %s138
    %p147 = scmp.eq.s32.totalorder %s22, 0
    %p148 = por %p146, %p147
    %p149 = scmp.ne.s32.totalorder %s137, %s138
    %p150 = scmp.eq.s32.totalorder %s23, 2
    %p151 = por %p149, %p150
    %p153 = scmp.ne.s32.totalorder %s138, %s152
    %p154 = scmp.eq.s32.totalorder %s23, 0
    %p155 = por %p153, %p154
    %s157 = sadd.s32 %s156, 1
    %p160 = scmp.eq.s32.totalorder %s17, 2
    %p161 = scmp.ne.s32.totalorder %s156, %s158
    %p162 = scmp.eq.s32.totalorder %s17, 0
    %p163 = por %p161, %p162
    %p164 = scmp.ne.s32.totalorder %s156, %s158
    %p165 = scmp.eq.s32.totalorder %s22, 2
    %p166 = por %p164, %p165
    %p167 = scmp.ne.s32.totalorder %s158, %s159
    %p168 = scmp.eq.s32.totalorder %s22, 0
    %p169 = por %p167, %p168
    %p170 = scmp.ne.s32.totalorder %s158, %s159
    %p171 = scmp.eq.s32.totalorder %s23, 2
    %p172 = por %p170, %p171
    %p174 = scmp.ne.s32.totalorder %s159, %s173
    %p175 = scmp.eq.s32.totalorder %s23, 0
    %p176 = por %p174, %p175
    %s178 = sadd.s32 %s177, 1
    %p181 = scmp.eq.s32.totalorder %s17, 2
    %p182 = scmp.ne.s32.totalorder %s177, %s179
    %p183 = scmp.eq.s32.totalorder %s17, 0
    %p184 = por %p182, %p183
    %p185 = scmp.ne.s32.totalorder %s177, %s179
    %p186 = scmp.eq.s32.totalorder %s22, 2
    %p187 = por %p185, %p186
    %p188 = scmp.ne.s32.totalorder %s179, %s180
    %p189 = scmp.eq.s32.totalorder %s22, 0
    %p190 = por %p188, %p189
    %p191 = scmp.ne.s32.totalorder %s179, %s180
    %p192 = scmp.eq.s32.totalorder %s23, 2
    %p193 = por %p191, %p192
    %p195 = scmp.ne.s32.totalorder %s180, %s194
    %p196 = scmp.eq.s32.totalorder %s23, 0
    %p197 = por %p195, %p196
    %s199 = sadd.s32 %s198, 1
    %p202 = scmp.eq.s32.totalorder %s17, 2
    %p203 = scmp.ne.s32.totalorder %s198, %s200
    %p204 = scmp.eq.s32.totalorder %s17, 0
    %p205 = por %p203, %p204
    %p206 = scmp.ne.s32.totalorder %s198, %s200
    %p207 = scmp.eq.s32.totalorder %s22, 2
    %p208 = por %p206, %p207
    %p209 = scmp.ne.s32.totalorder %s200, %s201
    %p210 = scmp.eq.s32.totalorder %s22, 0
    %p211 = por %p209, %p210
    %p212 = scmp.ne.s32.totalorder %s200, %s201
    %p213 = scmp.eq.s32.totalorder %s23, 2
    %p214 = por %p212, %p213
    %p216 = scmp.ne.s32.totalorder %s201, %s215
    %p217 = scmp.eq.s32.totalorder %s23, 0
    %p218 = por %p216, %p217
    %s220 = sadd.s32 %s219, 1
    %p223 = scmp.eq.s32.totalorder %s17, 2
    %p224 = scmp.ne.s32.totalorder %s219, %s221
    %p225 = scmp.eq.s32.totalorder %s17, 0
    %p226 = por %p224, %p225
    %p227 = scmp.ne.s32.totalorder %s219, %s221
    %p228 = scmp.eq.s32.totalorder %s22, 2
    %p229 = por %p227, %p228
    %p230 = scmp.ne.s32.totalorder %s221, %s222
    %p231 = scmp.eq.s32.totalorder %s22, 0
    %p232 = por %p230, %p231
    %p233 = scmp.ne.s32.totalorder %s221, %s222
    %p234 = scmp.eq.s32.totalorder %s23, 2
    %p235 = por %p233, %p234
    %p237 = scmp.ne.s32.totalorder %s222, %s236
    %p238 = scmp.eq.s32.totalorder %s23, 0
    %p239 = por %p237, %p238
    %s241 = sadd.s32 %s240, 1
    %p244 = scmp.eq.s32.totalorder %s17, 2
    %p245 = scmp.ne.s32.totalorder %s240, %s242
    %p246 = scmp.eq.s32.totalorder %s17, 0
    %p247 = por %p245, %p246
    %p248 = scmp.ne.s32.totalorder %s240, %s242
    %p249 = scmp.eq.s32.totalorder %s22, 2
    %p250 = por %p248, %p249
    %p251 = scmp.ne.s32.totalorder %s242, %s243
    %p252 = scmp.eq.s32.totalorder %s22, 0
    %p253 = por %p251, %p252
    %p254 = scmp.ne.s32.totalorder %s242, %s243
    %p255 = scmp.eq.s32.totalorder %s23, 2
    %p256 = por %p254, %p255
    %p258 = scmp.ne.s32.totalorder %s243, %s257
    %p259 = scmp.eq.s32.totalorder %s23, 0
    %p260 = por %p258, %p259
    %s261 = ssub.s32 %s17, %s24
    %p262 = scmp.eq.s32.totalorder %s261, 0
    %s264 = sadd.s32 %s263, 1
    %s265 = scalar_select %p262, %s263, %s264
    %p268 = pneg %p262
    %p269 = scmp.eq.s32.totalorder %s17, 2
    %p270 = por %p268, %p269
    %p271 = scmp.ne.s32.totalorder %s263, %s266
    %p272 = scmp.eq.s32.totalorder %s17, 0
    %p273 = por %p271, %p272
    %p274 = scmp.ne.s32.totalorder %s263, %s266
    %p275 = scmp.eq.s32.totalorder %s22, 2
    %p276 = por %p274, %p275
    %p277 = scmp.ne.s32.totalorder %s266, %s267
    %p278 = scmp.eq.s32.totalorder %s22, 0
    %p279 = por %p277, %p278
    %p280 = scmp.ne.s32.totalorder %s266, %s267
    %p281 = scmp.eq.s32.totalorder %s23, 2
    %p282 = por %p280, %p281
    %p284 = scmp.ne.s32.totalorder %s267, %s283
    %p285 = scmp.eq.s32.totalorder %s23, 0
    %p286 = por %p284, %p285
    %p287 = scmp.le.s32.totalorder 1, %s17
    %p288 = scmp.lt.s32.totalorder %s17, 4
    %p289 = pnand %p287, %p288
    %p290 = pneg %p289
    // Predicated region
    $region9: #{net_forward.1} parent=5 // pred_check
      _
    $region10: #{net_forward.1} parent=5 // pred_check_branch
      %292 = sbr.rel (%p289) target = $region12
    $region11: #{net_forward.1} parent=5 // pred_region
      %s293 = ssub.s32 %s17, 1
      // Predicated region
      $region13: #{net_forward.1} parent=11 // pred_check
        %p294 = pneg %p64
      $region14: #{net_forward.1} parent=11 // pred_check_branch
        %296 = sbr.rel (%p294) target = $region16
      $region15: #{net_forward.1} parent=11 // pred_region
        _
      $region16: #{net_forward.1} parent=11 // pred_fallthru
        _
      // Predicated region
      $region17: #{net_forward.1} parent=11 // pred_check
        %p297 = pneg %p85
      $region18: #{net_forward.1} parent=11 // pred_check_branch
        %299 = sbr.rel (%p297) target = $region20
      $region19: #{net_forward.1} parent=11 // pred_region
        _
      $region20: #{net_forward.1} parent=11 // pred_fallthru
        _
      // Predicated region
      $region21: #{net_forward.1} parent=11 // pred_check
        %p300 = pneg %p106
      $region22: #{net_forward.1} parent=11 // pred_check_branch
        %302 = sbr.rel (%p300) target = $region24
      $region23: #{net_forward.1} parent=11 // pred_region
        _
      $region24: #{net_forward.1} parent=11 // pred_fallthru
        _
      // Predicated region
      $region25: #{net_forward.1} parent=11 // pred_check
        %p303 = pneg %p127
      $region26: #{net_forward.1} parent=11 // pred_check_branch
        %305 = sbr.rel (%p303) target = $region28
      $region27: #{net_forward.1} parent=11 // pred_region
        _
      $region28: #{net_forward.1} parent=11 // pred_fallthru
        _
      // Predicated region
      $region29: #{net_forward.1} parent=11 // pred_check
        %p306 = pneg %p148
      $region30: #{net_forward.1} parent=11 // pred_check_branch
        %308 = sbr.rel (%p306) target = $region32
      $region31: #{net_forward.1} parent=11 // pred_region
        _
      $region32: #{net_forward.1} parent=11 // pred_fallthru
        _
      // Predicated region
      $region33: #{net_forward.1} parent=11 // pred_check
        %p309 = pneg %p169
      $region34: #{net_forward.1} parent=11 // pred_check_branch
        %311 = sbr.rel (%p309) target = $region36
      $region35: #{net_forward.1} parent=11 // pred_region
        _
      $region36: #{net_forward.1} parent=11 // pred_fallthru
        _
      // Predicated region
      $region37: #{net_forward.1} parent=11 // pred_check
        %p312 = pneg %p190
      $region38: #{net_forward.1} parent=11 // pred_check_branch
        %314 = sbr.rel (%p312) target = $region40
      $region39: #{net_forward.1} parent=11 // pred_region
        _
      $region40: #{net_forward.1} parent=11 // pred_fallthru
        _
      // Predicated region
      $region41: #{net_forward.1} parent=11 // pred_check
        %p315 = pneg %p211
      $region42: #{net_forward.1} parent=11 // pred_check_branch
        %317 = sbr.rel (%p315) target = $region44
      $region43: #{net_forward.1} parent=11 // pred_region
        _
      $region44: #{net_forward.1} parent=11 // pred_fallthru
        _
      // Predicated region
      $region45: #{net_forward.1} parent=11 // pred_check
        %p318 = pneg %p232
      $region46: #{net_forward.1} parent=11 // pred_check_branch
        %320 = sbr.rel (%p318) target = $region48
      $region47: #{net_forward.1} parent=11 // pred_region
        _
      $region48: #{net_forward.1} parent=11 // pred_fallthru
        _
      // Predicated region
      $region49: #{net_forward.1} parent=11 // pred_check
        %p321 = pneg %p253
      $region50: #{net_forward.1} parent=11 // pred_check_branch
        %323 = sbr.rel (%p321) target = $region52
      $region51: #{net_forward.1} parent=11 // pred_region
        _
      $region52: #{net_forward.1} parent=11 // pred_fallthru
        _
    $region12: #{net_forward.1} parent=5 // pred_fallthru
      _
    %p324 = scmp.lt.s32.totalorder %s17, 3
    // Predicated region
    $region53: #{net_forward.1} parent=5 // pred_check
      %p325 = pneg %p324
    $region54: #{net_forward.1} parent=5 // pred_check_branch
      %327 = sbr.rel (%p325) target = $region56
    $region55: #{net_forward.1} parent=5 // pred_region
      // Predicated region
      $region57: #{net_forward.1} parent=55 // pred_check
        %p328 = pneg %p37
      $region58: #{net_forward.1} parent=55 // pred_check_branch
        %330 = sbr.rel (%p328) target = $region60
      $region59: #{net_forward.1} parent=55 // pred_region
        %s331 = smul.u32 32, %s17
        %p332 = scmp.lt.s32.totalorder %s331, 95
        %s333 = scalar_select %p332, %s331, 95
        %s334 = smul.addr %s333, 4
        %s335 = scalar_lea.vmem %s0, %s334
        %s336 = smul.u32 32, %s17
      $region60: #{net_forward.1} parent=55 // pred_fallthru
        _
    $region56: #{net_forward.1} parent=5 // pred_fallthru
      _
    %p337 = scmp.le.s32.totalorder 1, %s17
    %p338 = scmp.lt.s32.totalorder %s17, 4
    %p339 = pnand %p337, %p338
    %p340 = pneg %p339
    // Predicated region
    $region61: #{net_forward.1} parent=5 // pred_check
      _
    $region62: #{net_forward.1} parent=5 // pred_check_branch
      %342 = sbr.rel (%p339) target = $region64
    $region63: #{net_forward.1} parent=5 // pred_region
      %s343 = ssub.s32 %s17, 1
      %s344 = smul.u32 32, %s22
      %p345 = scmp.lt.s32.totalorder %s344, 95
      %s346 = scalar_select %p345, %s344, 95
      %s347 = smul.addr %s346, 4
      %s348 = scalar_lea.vmem %s0, %s347
      %p349 = pneg %p43
      %p350 = pneg %p40
      %p351 = pneg %p64
      %p352 = pneg %p61
      %p353 = pneg %p85
      %p354 = pneg %p82
      %p355 = pneg %p106
      %p356 = pneg %p103
      %p357 = pneg %p127
      %p358 = pneg %p124
      %p359 = pneg %p148
      %p360 = pneg %p145
      %p361 = pneg %p169
      %p362 = pneg %p166
      %p363 = pneg %p190
      %p364 = pneg %p187
      %p365 = pneg %p211
      %p366 = pneg %p208
      %p367 = pneg %p232
      %p368 = pneg %p229
      %p369 = pneg %p253
      %p370 = pneg %p250
      %p371 = pneg %p279
      %p372 = pneg %p276
      %p373 = scmp.lt.s32.totalorder %s22, 2
      %s374 = scalar_select %p373, %s22, 2
      %s375 = smul.addr %s374, 8
      %s376 = scalar_lea.vmem %s11, %s375
      %s377 = smul.u32 32, %s22
      %p378 = scmp.lt.s32.totalorder %s377, 95
      %s379 = scalar_select %p378, %s377, 95
      %s380 = smul.addr %s379, 4
      %s381 = scalar_lea.vmem %s0, %s380
      %s382 = smul.u32 32, %s22
      %p383 = scmp.lt.s32.totalorder %s22, 2
      %s384 = scalar_select %p383, %s22, 2
      %s385 = smul.addr %s384, 8
      %s386 = scalar_lea.vmem %s11, %s385
      %v388 = vld [vmem:[%s381] sm:$0xf]
      %v389 = vld [vmem:[%s381 + $0x4] sm:$0xf]
      %v390 = vld [vmem:[%s381 + $0x8] sm:$0xf]
      %v391 = vld [vmem:[%s381 + $0xc] sm:$0xf]
      %v392 = vld [vmem:[%s381 + $0x10] sm:$0xf]
      %v393 = vld [vmem:[%s381 + $0x14] sm:$0xf]
      %v394 = vld [vmem:[%s381 + $0x18] sm:$0xf]
      %v395 = vld [vmem:[%s381 + $0x1c] sm:$0xf]
      %v396 = vld [vmem:[%s381 + $0x20] sm:$0xf]
      %v397 = vld [vmem:[%s381 + $0x24] sm:$0xf]
      %v398 = vld [vmem:[%s381 + $0x28] sm:$0xf]
      %v399 = vld [vmem:[%s381 + $0x2c] sm:$0xf]
      %v400 = vld [vmem:[%s381 + $0x30] sm:$0xf]
      %v401 = vld [vmem:[%s381 + $0x34] sm:$0xf]
      %v402 = vld [vmem:[%s381 + $0x38] sm:$0xf]
      %v403 = vld [vmem:[%s381 + $0x3c] sm:$0xf]
      %v404 = vld [vmem:[%s381 + $0x40] sm:$0xf]
      %v405 = vld [vmem:[%s381 + $0x44] sm:$0xf]
      %v406 = vld [vmem:[%s381 + $0x48] sm:$0xf]
      %v407 = vld [vmem:[%s381 + $0x4c] sm:$0xf]
      %v408 = vld [vmem:[%s381 + $0x50] sm:$0xf]
      %v409 = vld [vmem:[%s381 + $0x54] sm:$0xf]
      %v410 = vld [vmem:[%s381 + $0x58] sm:$0xf]
      %v411 = vld [vmem:[%s381 + $0x5c] sm:$0xf]
      %v412 = vld [vmem:[%s381 + $0x60] sm:$0xf]
      %v413 = vld [vmem:[%s381 + $0x64] sm:$0xf]
      %v414 = vld [vmem:[%s381 + $0x68] sm:$0xf]
      %v415 = vld [vmem:[%s381 + $0x6c] sm:$0xf]
      %v416 = vld [vmem:[%s381 + $0x70] sm:$0xf]
      %v417 = vld [vmem:[%s381 + $0x74] sm:$0xf]
      %v418 = vld [vmem:[%s381 + $0x78] sm:$0xf]
      %v419 = vld [vmem:[%s381 + $0x7c] sm:$0xf]
      %v420 = vld [vmem:[%s1] sm:$0xff]
      %v421 = vld [vmem:[%s1 + $0x8] sm:$0xff]
      %v422 = vld [vmem:[%s1 + $0x10] sm:$0xff]
      %v423 = vld [vmem:[%s1 + $0x18] sm:$0xf]
      %v424 = vld [vmem:[%s1 + $0x1c] sm:$0xff]
      %v425 = vld [vmem:[%s1 + $0x24] sm:$0xff]
      %v426 = vld [vmem:[%s1 + $0x2c] sm:$0xff]
      %v427 = vld [vmem:[%s1 + $0x34] sm:$0xf]
      %v428 = vld [vmem:[%s1 + $0x38] sm:$0xff]
      %v429 = vld [vmem:[%s1 + $0x40] sm:$0xff]
      %v430 = vld [vmem:[%s1 + $0x48] sm:$0xff]
      %v431 = vld [vmem:[%s1 + $0x50] sm:$0xf]
      %v432 = vld [vmem:[%s1 + $0x54] sm:$0xff]
      %v433 = vld [vmem:[%s1 + $0x5c] sm:$0xff]
      %v434 = vld [vmem:[%s1 + $0x64] sm:$0xff]
      %v435 = vld [vmem:[%s1 + $0x6c] sm:$0xf]
      %v436 = vld [vmem:[%s1 + $0x70] sm:$0xff]
      %v437 = vld [vmem:[%s1 + $0x78] sm:$0xff]
      %v438 = vld [vmem:[%s1 + $0x80] sm:$0xff]
      %v439 = vld [vmem:[%s1 + $0x88] sm:$0xf]
      %v440 = vld [vmem:[%s1 + $0x8c] sm:$0xff]
      %v441 = vld [vmem:[%s1 + $0x94] sm:$0xff]
      %v442 = vld [vmem:[%s1 + $0x9c] sm:$0xff]
      %v443 = vld [vmem:[%s1 + $0xa4] sm:$0xf]
      %v444 = vld [vmem:[%s1 + $0xa8] sm:$0xff]
      %v445 = vld [vmem:[%s1 + $0xb0] sm:$0xff]
      %v446 = vld [vmem:[%s1 + $0xb8] sm:$0xff]
      %v447 = vld [vmem:[%s1 + $0xc0] sm:$0xf]
      %v448 = vld [vmem:[%s1 + $0xc4] sm:$0xff]
      %v449 = vld [vmem:[%s1 + $0xcc] sm:$0xff]
      %v450 = vld [vmem:[%s1 + $0xd4] sm:$0xff]
      %v451 = vld [vmem:[%s1 + $0xdc] sm:$0xf]
      %v452 = vld [vmem:[%s1 + $0xe0] sm:$0xff]
      %v453 = vld [vmem:[%s1 + $0xe8] sm:$0xff]
      %v454 = vld [vmem:[%s1 + $0xf0] sm:$0xff]
      %v455 = vld [vmem:[%s1 + $0xf8] sm:$0xf]
      %v456 = vld [vmem:[%s1 + $0xfc] sm:$0xff]
      %v457 = vld [vmem:[%s1 + $0x104] sm:$0xff]
      %v458 = vld [vmem:[%s1 + $0x10c] sm:$0xff]
      %v459 = vld [vmem:[%s1 + $0x114] sm:$0xf]
      %v460 = vld [vmem:[%s1 + $0x118] sm:$0xff]
      %v461 = vld [vmem:[%s1 + $0x120] sm:$0xff]
      %v462 = vld [vmem:[%s1 + $0x128] sm:$0xff]
      %v463 = vld [vmem:[%s1 + $0x130] sm:$0xf]
      %v464 = vld [vmem:[%s1 + $0x134] sm:$0xff]
      %v465 = vld [vmem:[%s1 + $0x13c] sm:$0xff]
      %v466 = vld [vmem:[%s1 + $0x144] sm:$0xff]
      %v467 = vld [vmem:[%s1 + $0x14c] sm:$0xf]
      %v500 = vunpack.c.l.b16 %v388
      %v501 = vunpack.c.l.b16 %v389
      %v502 = vunpack.c.l.b16 %v390
      %v503 = vunpack.c.l.b16 %v391
      %v504 = vunpack.c.l.b16 %v392
      %v505 = vunpack.c.l.b16 %v393
      %v506 = vunpack.c.l.b16 %v394
      %v507 = vunpack.c.l.b16 %v395
      %v508 = vunpack.c.l.b16 %v396
      %v509 = vunpack.c.l.b16 %v397
      %v510 = vunpack.c.l.b16 %v398
      %v511 = vunpack.c.l.b16 %v399
      %v512 = vunpack.c.l.b16 %v400
      %v513 = vunpack.c.l.b16 %v401
      %v514 = vunpack.c.l.b16 %v402
      %v515 = vunpack.c.l.b16 %v403
      %v516 = vunpack.c.l.b16 %v404
      %v517 = vunpack.c.l.b16 %v405
      %v518 = vunpack.c.l.b16 %v406
      %v519 = vunpack.c.l.b16 %v407
      %v520 = vunpack.c.l.b16 %v408
      %v521 = vunpack.c.l.b16 %v409
      %v522 = vunpack.c.l.b16 %v410
      %v523 = vunpack.c.l.b16 %v411
      %v524 = vunpack.c.l.b16 %v412
      %v525 = vunpack.c.l.b16 %v413
      %v526 = vunpack.c.l.b16 %v414
      %v527 = vunpack.c.l.b16 %v415
      %v528 = vunpack.c.l.b16 %v416
      %v529 = vunpack.c.l.b16 %v417
      %v530 = vunpack.c.l.b16 %v418
      %v531 = vunpack.c.l.b16 %v419
      %v532 = vpack.c.b16 %v501, %v500
      %v533 = vpack.c.b16 %v503, %v502
      %v534 = vpack.c.b16 %v505, %v504
      %v535 = vpack.c.b16 %v507, %v506
      %v536 = vpack.c.b16 %v509, %v508
      %v537 = vpack.c.b16 %v511, %v510
      %v538 = vpack.c.b16 %v513, %v512
      %v539 = vpack.c.b16 %v515, %v514
      %v540 = vpack.c.b16 %v517, %v516
      %v541 = vpack.c.b16 %v519, %v518
      %v542 = vpack.c.b16 %v521, %v520
      %v543 = vpack.c.b16 %v523, %v522
      %v544 = vpack.c.b16 %v525, %v524
      %v545 = vpack.c.b16 %v527, %v526
      %v546 = vpack.c.b16 %v529, %v528
      %v547 = vpack.c.b16 %v531, %v530
      %v596 = vunpack.c.l.b16 %v420
      %v597 = vunpack.c.h.b16 %v420
      %v598 = vunpack.c.l.b16 %v421
      %v599 = vunpack.c.h.b16 %v421
      %v600 = vunpack.c.l.b16 %v422
      %v601 = vunpack.c.h.b16 %v422
      %v602 = vunpack.c.l.b16 %v423
      %v603 = vunpack.c.l.b16 %v424
      %v604 = vunpack.c.h.b16 %v424
      %v605 = vunpack.c.l.b16 %v425
      %v606 = vunpack.c.h.b16 %v425
      %v607 = vunpack.c.l.b16 %v426
      %v608 = vunpack.c.h.b16 %v426
      %v609 = vunpack.c.l.b16 %v427
      %v610 = vunpack.c.l.b16 %v428
      %v611 = vunpack.c.h.b16 %v428
      %v612 = vunpack.c.l.b16 %v429
      %v613 = vunpack.c.h.b16 %v429
      %v614 = vunpack.c.l.b16 %v430
      %v615 = vunpack.c.h.b16 %v430
      %v616 = vunpack.c.l.b16 %v431
      %v617 = vunpack.c.l.b16 %v432
      %v618 = vunpack.c.h.b16 %v432
      %v619 = vunpack.c.l.b16 %v433
      %v620 = vunpack.c.h.b16 %v433
      %v621 = vunpack.c.l.b16 %v434
      %v622 = vunpack.c.h.b16 %v434
      %v623 = vunpack.c.l.b16 %v435
      %v624 = vunpack.c.l.b16 %v436
      %v625 = vunpack.c.h.b16 %v436
      %v626 = vunpack.c.l.b16 %v437
      %v627 = vunpack.c.h.b16 %v437
      %v628 = vunpack.c.l.b16 %v438
      %v629 = vunpack.c.h.b16 %v438
      %v630 = vunpack.c.l.b16 %v439
      %v631 = vunpack.c.l.b16 %v440
      %v632 = vunpack.c.h.b16 %v440
      %v633 = vunpack.c.l.b16 %v441
      %v634 = vunpack.c.h.b16 %v441
      %v635 = vunpack.c.l.b16 %v442
      %v636 = vunpack.c.h.b16 %v442
      %v637 = vunpack.c.l.b16 %v443
      %v638 = vunpack.c.l.b16 %v444
      %v639 = vunpack.c.h.b16 %v444
      %v640 = vunpack.c.l.b16 %v445
      %v641 = vunpack.c.h.b16 %v445
      %v642 = vunpack.c.l.b16 %v446
      %v643 = vunpack.c.h.b16 %v446
      %v644 = vunpack.c.l.b16 %v447
      %v645 = vunpack.c.l.b16 %v448
      %v646 = vunpack.c.h.b16 %v448
      %v647 = vunpack.c.l.b16 %v449
      %v648 = vunpack.c.h.b16 %v449
      %v649 = vunpack.c.l.b16 %v450
      %v650 = vunpack.c.h.b16 %v450
      %v651 = vunpack.c.l.b16 %v451
      %v652 = vunpack.c.l.b16 %v452
      %v653 = vunpack.c.h.b16 %v452
      %v654 = vunpack.c.l.b16 %v453
      %v655 = vunpack.c.h.b16 %v453
      %v656 = vunpack.c.l.b16 %v454
      %v657 = vunpack.c.h.b16 %v454
      %v658 = vunpack.c.l.b16 %v455
      %v659 = vunpack.c.l.b16 %v456
      %v660 = vunpack.c.h.b16 %v456
      %v661 = vunpack.c.l.b16 %v457
      %v662 = vunpack.c.h.b16 %v457
      %v663 = vunpack.c.l.b16 %v458
      %v664 = vunpack.c.h.b16 %v458
      %v665 = vunpack.c.l.b16 %v459
      %v666 = vunpack.c.l.b16 %v460
      %v667 = vunpack.c.h.b16 %v460
      %v668 = vunpack.c.l.b16 %v461
      %v669 = vunpack.c.h.b16 %v461
      %v670 = vunpack.c.l.b16 %v462
      %v671 = vunpack.c.h.b16 %v462
      %v672 = vunpack.c.l.b16 %v463
      %v673 = vunpack.c.l.b16 %v464
      %v674 = vunpack.c.h.b16 %v464
      %v675 = vunpack.c.l.b16 %v465
      %v676 = vunpack.c.h.b16 %v465
      %v677 = vunpack.c.l.b16 %v466
      %v678 = vunpack.c.h.b16 %v466
      %v679 = vunpack.c.l.b16 %v467
      %v680 = vpack.c.b16 %v603, %v596
      %v681 = vpack.c.b16 %v604, %v597
      %v682 = vpack.c.b16 %v605, %v598
      %v683 = vpack.c.b16 %v606, %v599
      %v684 = vpack.c.b16 %v607, %v600
      %v685 = vpack.c.b16 %v608, %v601
      %v686 = vpack.c.b16 %v609, %v602
      %v687 = vpack.c.b16 %v617, %v610
      %v688 = vpack.c.b16 %v618, %v611
      %v689 = vpack.c.b16 %v619, %v612
      %v690 = vpack.c.b16 %v620, %v613
      %v691 = vpack.c.b16 %v621, %v614
      %v692 = vpack.c.b16 %v622, %v615
      %v693 = vpack.c.b16 %v623, %v616
      %v694 = vpack.c.b16 %v631, %v624
      %v695 = vpack.c.b16 %v632, %v625
      %v696 = vpack.c.b16 %v633, %v626
      %v697 = vpack.c.b16 %v634, %v627
      %v698 = vpack.c.b16 %v635, %v628
      %v699 = vpack.c.b16 %v636, %v629
      %v700 = vpack.c.b16 %v637, %v630
      %v701 = vpack.c.b16 %v645, %v638
      %v702 = vpack.c.b16 %v646, %v639
      %v703 = vpack.c.b16 %v647, %v640
      %v704 = vpack.c.b16 %v648, %v641
      %v705 = vpack.c.b16 %v649, %v642
      %v706 = vpack.c.b16 %v650, %v643
      %v707 = vpack.c.b16 %v651, %v644
      %v708 = vpack.c.b16 %v659, %v652
      %v709 = vpack.c.b16 %v660, %v653
      %v710 = vpack.c.b16 %v661, %v654
      %v711 = vpack.c.b16 %v662, %v655
      %v712 = vpack.c.b16 %v663, %v656
      %v713 = vpack.c.b16 %v664, %v657
      %v714 = vpack.c.b16 %v665, %v658
      %v715 = vpack.c.b16 %v673, %v666
      %v716 = vpack.c.b16 %v674, %v667
      %v717 = vpack.c.b16 %v675, %v668
      %v718 = vpack.c.b16 %v676, %v669
      %v719 = vpack.c.b16 %v677, %v670
      %v720 = vpack.c.b16 %v678, %v671
      %v721 = vpack.c.b16 %v679, %v672
      %vm764 = vcmask 785408
      %v766 = vsel %vm764, %v532, 0
      %v769 = vsel %vm764, %v533, 0
      %v772 = vsel %vm764, %v534, 0
      %v775 = vsel %vm764, %v535, 0
      %v778 = vsel %vm764, %v536, 0
      %v781 = vsel %vm764, %v537, 0
      %v784 = vsel %vm764, %v538, 0
      %v787 = vsel %vm764, %v539, 0
      %v790 = vsel %vm764, %v540, 0
      %v793 = vsel %vm764, %v541, 0
      %v796 = vsel %vm764, %v542, 0
      %v799 = vsel %vm764, %v543, 0
      %v802 = vsel %vm764, %v544, 0
      %v805 = vsel %vm764, %v545, 0
      %v808 = vsel %vm764, %v546, 0
      %v811 = vsel %vm764, %v547, 0
      %813 = vmatprep.subr.bf16.mxu0 %v681
      %814 = vmatpush1.bf16.msra.mxu0 %v680
      %815 = vmatprep.subr.bf16.mxu0 %v688
      %816 = vmatpush1.bf16.msra.mxu0 %v687
      %817 = vmatprep.subr.bf16.mxu0 %v695
      %818 = vmatpush1.bf16.msra.mxu0 %v694
      %819 = vmatprep.subr.bf16.mxu0 %v702
      %820 = vmatpush1.bf16.msra.mxu0 %v701
      %821 = vmatprep.subr.bf16.mxu0 %v709
      %822 = vmatpush1.bf16.msra.mxu0 %v708
      %823 = vmatprep.subr.bf16.mxu0 %v716
      %824 = vmatpush1.bf16.msra.mxu0 %v715
      %825 = vmatprep.subr.bf16.mxu0 0
      %826 = vmatpush1.bf16.msra.mxu0 0
      %827 = vmatprep.subr.bf16.mxu0 0
      %828 = vmatpush1.bf16.msra.mxu0 0
      %829 = vmatprep.subr.bf16.mxu0 0
      %830 = vmatpush1.bf16.msra.mxu0 0
      %831 = vmatprep.subr.bf16.mxu0 0
      %832 = vmatpush1.bf16.msra.mxu0 0
      %833 = vmatprep.subr.bf16.mxu0 0
      %834 = vmatpush1.bf16.msra.mxu0 0
      %835 = vmatprep.subr.bf16.mxu0 0
      %836 = vmatpush1.bf16.msra.mxu0 0
      %837 = vmatprep.subr.bf16.mxu0 0
      %838 = vmatpush1.bf16.msra.mxu0 0
      %839 = vmatprep.subr.bf16.mxu0 0
      %840 = vmatpush1.bf16.msra.mxu0 0
      %841 = vmatprep.subr.bf16.mxu0 0
      %842 = vmatpush1.bf16.msra.mxu0 0
      %843 = vmatprep.subr.bf16.mxu0 0
      %844 = vmatpush1.bf16.msra.mxu0 0
      %845 = vmatprep.mubr.bf16.mxu0 0
      %846 = vmatmul.mubr.bf16.gmra.mrb[0].mxu0 %v766
      %v847 = vpop.f32.mrb[0].mxu0
      %v848 = vadd.f32 0.0, %v847
      %v849 = vpop.f32.mrb[0].mxu0
      %v850 = vadd.f32 0.0, %v849
      %v851 = vpop.f32.mrb[0].mxu0
      %v852 = vadd.f32 0.0, %v851
      %v853 = vpop.f32.mrb[0].mxu0
      %v854 = vadd.f32 0.0, %v853
      %855 = vmatprep.mubr.bf16.mxu0 0
      %856 = vmatmul.mubr.bf16.gmra.mrb[0].mxu0 %v769
      %v857 = vpop.f32.mrb[0].mxu0
      %v858 = vadd.f32 0.0, %v857
      %v859 = vpop.f32.mrb[0].mxu0
      %v860 = vadd.f32 0.0, %v859
      %v861 = vpop.f32.mrb[0].mxu0
      %v862 = vadd.f32 0.0, %v861
      %v863 = vpop.f32.mrb[0].mxu0
      %v864 = vadd.f32 0.0, %v863
      %865 = vmatprep.mubr.bf16.mxu0 0
      %866 = vmatmul.mubr.bf16.gmra.mrb[0].mxu0 %v772
      %v867 = vpop.f32.mrb[0].mxu0
      %v868 = vadd.f32 0.0, %v867
      %v869 = vpop.f32.mrb[0].mxu0
      %v870 = vadd.f32 0.0, %v869
      %v871 = vpop.f32.mrb[0].mxu0
      %v872 = vadd.f32 0.0, %v871
      %v873 = vpop.f32.mrb[0].mxu0
      %v874 = vadd.f32 0.0, %v873
      %875 = vmatprep.mubr.bf16.mxu0 0
      %876 = vmatmul.mubr.bf16.gmra.mrb[0].mxu0 %v775
      %v877 = vpop.f32.mrb[0].mxu0
      %v878 = vadd.f32 0.0, %v877
      %v879 = vpop.f32.mrb[0].mxu0
      %v880 = vadd.f32 0.0, %v879
      %v881 = vpop.f32.mrb[0].mxu0
      %v882 = vadd.f32 0.0, %v881
      %v883 = vpop.f32.mrb[0].mxu0
      %v884 = vadd.f32 0.0, %v883
      %885 = vmatprep.mubr.bf16.mxu0 0
      %886 = vmatmul.mubr.bf16.gmra.mrb[0].mxu0 %v778
      %v887 = vpop.f32.mrb[0].mxu0
      %v888 = vadd.f32 0.0, %v887
      %v889 = vpop.f32.mrb[0].mxu0
      %v890 = vadd.f32 0.0, %v889
      %v891 = vpop.f32.mrb[0].mxu0
      %v892 = vadd.f32 0.0, %v891
      %v893 = vpop.f32.mrb[0].mxu0
      %v894 = vadd.f32 0.0, %v893
      %895 = vmatprep.mubr.bf16.mxu0 0
      %896 = vmatmul.mubr.bf16.gmra.mrb[0].mxu0 %v781
      %v897 = vpop.f32.mrb[0].mxu0
      %v898 = vadd.f32 0.0, %v897
      %v899 = vpop.f32.mrb[0].mxu0
      %v900 = vadd.f32 0.0, %v899
      %v901 = vpop.f32.mrb[0].mxu0
      %v902 = vadd.f32 0.0, %v901
      %v903 = vpop.f32.mrb[0].mxu0
      %v904 = vadd.f32 0.0, %v903
      %905 = vmatprep.mubr.bf16.mxu0 0
      %906 = vmatmul.mubr.bf16.gmra.mrb[0].mxu0 %v784
      %v907 = vpop.f32.mrb[0].mxu0
      %v908 = vadd.f32 0.0, %v907
      %v909 = vpop.f32.mrb[0].mxu0
      %v910 = vadd.f32 0.0, %v909
      %v911 = vpop.f32.mrb[0].mxu0
      %v912 = vadd.f32 0.0, %v911
      %v913 = vpop.f32.mrb[0].mxu0
      %v914 = vadd.f32 0.0, %v913
      %915 = vmatprep.mubr.bf16.mxu0 0
      %916 = vmatmul.mubr.bf16.gmra.mrb[0].mxu0 %v787
      %v917 = vpop.f32.mrb[0].mxu0
      %v918 = vadd.f32 0.0, %v917
      %v919 = vpop.f32.mrb[0].mxu0
      %v920 = vadd.f32 0.0, %v919
      %v921 = vpop.f32.mrb[0].mxu0
      %v922 = vadd.f32 0.0, %v921
      %v923 = vpop.f32.mrb[0].mxu0
      %v924 = vadd.f32 0.0, %v923
      %925 = vmatprep.mubr.bf16.mxu0 0
      %926 = vmatmul.mubr.bf16.gmra.mrb[0].mxu0 %v790
      %v927 = vpop.f32.mrb[0].mxu0
      %v928 = vadd.f32 0.0, %v927
      %v929 = vpop.f32.mrb[0].mxu0
      %v930 = vadd.f32 0.0, %v929
      %v931 = vpop.f32.mrb[0].mxu0
      %v932 = vadd.f32 0.0, %v931
      %v933 = vpop.f32.mrb[0].mxu0
      %v934 = vadd.f32 0.0, %v933
      %935 = vmatprep.mubr.bf16.mxu0 0
      %936 = vmatmul.mubr.bf16.gmra.mrb[0].mxu0 %v793
      %v937 = vpop.f32.mrb[0].mxu0
      %v938 = vadd.f32 0.0, %v937
      %v939 = vpop.f32.mrb[0].mxu0
      %v940 = vadd.f32 0.0, %v939
      %v941 = vpop.f32.mrb[0].mxu0
      %v942 = vadd.f32 0.0, %v941
      %v943 = vpop.f32.mrb[0].mxu0
      %v944 = vadd.f32 0.0, %v943
      %945 = vmatprep.mubr.bf16.mxu0 0
      %946 = vmatmul.mubr.bf16.gmra.mrb[0].mxu0 %v796
      %v947 = vpop.f32.mrb[0].mxu0
      %v948 = vadd.f32 0.0, %v947
      %v949 = vpop.f32.mrb[0].mxu0
      %v950 = vadd.f32 0.0, %v949
      %v951 = vpop.f32.mrb[0].mxu0
      %v952 = vadd.f32 0.0, %v951
      %v953 = vpop.f32.mrb[0].mxu0
      %v954 = vadd.f32 0.0, %v953
      %955 = vmatprep.mubr.bf16.mxu0 0
      %956 = vmatmul.mubr.bf16.gmra.mrb[0].mxu0 %v799
      %v957 = vpop.f32.mrb[0].mxu0
      %v958 = vadd.f32 0.0, %v957
      %v959 = vpop.f32.mrb[0].mxu0
      %v960 = vadd.f32 0.0, %v959
      %v961 = vpop.f32.mrb[0].mxu0
      %v962 = vadd.f32 0.0, %v961
      %v963 = vpop.f32.mrb[0].mxu0
      %v964 = vadd.f32 0.0, %v963
      %965 = vmatprep.mubr.bf16.mxu0 0
      %966 = vmatmul.mubr.bf16.gmra.mrb[0].mxu0 %v802
      %v967 = vpop.f32.mrb[0].mxu0
      %v968 = vadd.f32 0.0, %v967
      %v969 = vpop.f32.mrb[0].mxu0
      %v970 = vadd.f32 0.0, %v969
      %v971 = vpop.f32.mrb[0].mxu0
      %v972 = vadd.f32 0.0, %v971
      %v973 = vpop.f32.mrb[0].mxu0
      %v974 = vadd.f32 0.0, %v973
      %975 = vmatprep.mubr.bf16.mxu0 0
      %976 = vmatmul.mubr.bf16.gmra.mrb[0].mxu0 %v805
      %v977 = vpop.f32.mrb[0].mxu0
      %v978 = vadd.f32 0.0, %v977
      %v979 = vpop.f32.mrb[0].mxu0
      %v980 = vadd.f32 0.0, %v979
      %v981 = vpop.f32.mrb[0].mxu0
      %v982 = vadd.f32 0.0, %v981
      %v983 = vpop.f32.mrb[0].mxu0
      %v984 = vadd.f32 0.0, %v983
      %985 = vmatprep.mubr.bf16.mxu0 0
      %986 = vmatmul.mubr.bf16.gmra.mrb[0].mxu0 %v808
      %v987 = vpop.f32.mrb[0].mxu0
      %v988 = vadd.f32 0.0, %v987
      %v989 = vpop.f32.mrb[0].mxu0
      %v990 = vadd.f32 0.0, %v989
      %v991 = vpop.f32.mrb[0].mxu0
      %v992 = vadd.f32 0.0, %v991
      %v993 = vpop.f32.mrb[0].mxu0
      %v994 = vadd.f32 0.0, %v993
      %995 = vmatprep.mubr.bf16.mxu0 0
      %996 = vmatmul.mubr.bf16.gmra.mrb[0].mxu0 %v811
      %v997 = vpop.f32.mrb[0].mxu0
      %v998 = vadd.f32 0.0, %v997
      %v999 = vpop.f32.mrb[0].mxu0
      %v1000 = vadd.f32 0.0, %v999
      %v1001 = vpop.f32.mrb[0].mxu0
      %v1002 = vadd.f32 0.0, %v1001
      %v1003 = vpop.f32.mrb[0].mxu0
      %v1004 = vadd.f32 0.0, %v1003
      %1005 = vdwg.mxu0
      %1006 = vmatprep.subr.bf16.mxu0 %v683
      %1007 = vmatpush1.bf16.msra.mxu0 %v682
      %1008 = vmatprep.subr.bf16.mxu0 %v690
      %1009 = vmatpush1.bf16.msra.mxu0 %v689
      %1010 = vmatprep.subr.bf16.mxu0 %v697
      %1011 = vmatpush1.bf16.msra.mxu0 %v696
      %1012 = vmatprep.subr.bf16.mxu0 %v704
      %1013 = vmatpush1.bf16.msra.mxu0 %v703
      %1014 = vmatprep.subr.bf16.mxu0 %v711
      %1015 = vmatpush1.bf16.msra.mxu0 %v710
      %1016 = vmatprep.subr.bf16.mxu0 %v718
      %1017 = vmatpush1.bf16.msra.mxu0 %v717
      %1018 = vmatprep.subr.bf16.mxu0 0
      %1019 = vmatpush1.bf16.msra.mxu0 0
      %1020 = vmatprep.subr.bf16.mxu0 0
      %1021 = vmatpush1.bf16.msra.mxu0 0
      %1022 = vmatprep.subr.bf16.mxu0 0
      %1023 = vmatpush1.bf16.msra.mxu0 0
      %1024 = vmatprep.subr.bf16.mxu0 0
      %1025 = vmatpush1.bf16.msra.mxu0 0
      %1026 = vmatprep.subr.bf16.mxu0 0
      %1027 = vmatpush1.bf16.msra.mxu0 0
      %1028 = vmatprep.subr.bf16.mxu0 0
      %1029 = vmatpush1.bf16.msra.mxu0 0
      %1030 = vmatprep.subr.bf16.mxu0 0
      %1031 = vmatpush1.bf16.msra.mxu0 0
      %1032 = vmatprep.subr.bf16.mxu0 0
      %1033 = vmatpush1.bf16.msra.mxu0 0
      %1034 = vmatprep.subr.bf16.mxu0 0
      %1035 = vmatpush1.bf16.msra.mxu0 0
      %1036 = vmatprep.subr.bf16.mxu0 0
      %1037 = vmatpush1.bf16.msra.mxu0 0
      %1038 = vmatprep.mubr.bf16.mxu0 0
      %1039 = vmatmul.mubr.bf16.gmra.mrb[0].mxu0 %v766
      %v1040 = vpop.f32.mrb[0].mxu0
      %v1041 = vadd.f32 0.0, %v1040
      %v1042 = vpop.f32.mrb[0].mxu0
      %v1043 = vadd.f32 0.0, %v1042
      %v1044 = vpop.f32.mrb[0].mxu0
      %v1045 = vadd.f32 0.0, %v1044
      %v1046 = vpop.f32.mrb[0].mxu0
      %v1047 = vadd.f32 0.0, %v1046
      %1048 = vmatprep.mubr.bf16.mxu0 0
      %1049 = vmatmul.mubr.bf16.gmra.mrb[0].mxu0 %v769
      %v1050 = vpop.f32.mrb[0].mxu0
      %v1051 = vadd.f32 0.0, %v1050
      %v1052 = vpop.f32.mrb[0].mxu0
      %v1053 = vadd.f32 0.0, %v1052
      %v1054 = vpop.f32.mrb[0].mxu0
      %v1055 = vadd.f32 0.0, %v1054
      %v1056 = vpop.f32.mrb[0].mxu0
      %v1057 = vadd.f32 0.0, %v1056
      %1058 = vmatprep.mubr.bf16.mxu0 0
      %1059 = vmatmul.mubr.bf16.gmra.mrb[0].mxu0 %v772
      %v1060 = vpop.f32.mrb[0].mxu0
      %v1061 = vadd.f32 0.0, %v1060
      %v1062 = vpop.f32.mrb[0].mxu0
      %v1063 = vadd.f32 0.0, %v1062
      %v1064 = vpop.f32.mrb[0].mxu0
      %v1065 = vadd.f32 0.0, %v1064
      %v1066 = vpop.f32.mrb[0].mxu0
      %v1067 = vadd.f32 0.0, %v1066
      %1068 = vmatprep.mubr.bf16.mxu0 0
      %1069 = vmatmul.mubr.bf16.gmra.mrb[0].mxu0 %v775
      %v1070 = vpop.f32.mrb[0].mxu0
      %v1071 = vadd.f32 0.0, %v1070
      %v1072 = vpop.f32.mrb[0].mxu0
      %v1073 = vadd.f32 0.0, %v1072
      %v1074 = vpop.f32.mrb[0].mxu0
      %v1075 = vadd.f32 0.0, %v1074
      %v1076 = vpop.f32.mrb[0].mxu0
      %v1077 = vadd.f32 0.0, %v1076
      %1078 = vmatprep.mubr.bf16.mxu0 0
      %1079 = vmatmul.mubr.bf16.gmra.mrb[0].mxu0 %v778
      %v1080 = vpop.f32.mrb[0].mxu0
      %v1081 = vadd.f32 0.0, %v1080
      %v1082 = vpop.f32.mrb[0].mxu0
      %v1083 = vadd.f32 0.0, %v1082
      %v1084 = vpop.f32.mrb[0].mxu0
      %v1085 = vadd.f32 0.0, %v1084
      %v1086 = vpop.f32.mrb[0].mxu0
      %v1087 = vadd.f32 0.0, %v1086
      %1088 = vmatprep.mubr.bf16.mxu0 0
      %1089 = vmatmul.mubr.bf16.gmra.mrb[0].mxu0 %v781
      %v1090 = vpop.f32.mrb[0].mxu0
      %v1091 = vadd.f32 0.0, %v1090
      %v1092 = vpop.f32.mrb[0].mxu0
      %v1093 = vadd.f32 0.0, %v1092
      %v1094 = vpop.f32.mrb[0].mxu0
      %v1095 = vadd.f32 0.0, %v1094
      %v1096 = vpop.f32.mrb[0].mxu0
      %v1097 = vadd.f32 0.0, %v1096
      %1098 = vmatprep.mubr.bf16.mxu0 0
      %1099 = vmatmul.mubr.bf16.gmra.mrb[0].mxu0 %v784
      %v1100 = vpop.f32.mrb[0].mxu0
      %v1101 = vadd.f32 0.0, %v1100
      %v1102 = vpop.f32.mrb[0].mxu0
      %v1103 = vadd.f32 0.0, %v1102
      %v1104 = vpop.f32.mrb[0].mxu0
      %v1105 = vadd.f32 0.0, %v1104
      %v1106 = vpop.f32.mrb[0].mxu0
      %v1107 = vadd.f32 0.0, %v1106
      %1108 = vmatprep.mubr.bf16.mxu0 0
      %1109 = vmatmul.mubr.bf16.gmra.mrb[0].mxu0 %v787
      %v1110 = vpop.f32.mrb[0].mxu0
      %v1111 = vadd.f32 0.0, %v1110
      %v1112 = vpop.f32.mrb[0].mxu0
      %v1113 = vadd.f32 0.0, %v1112
      %v1114 = vpop.f32.mrb[0].mxu0
      %v1115 = vadd.f32 0.0, %v1114
      %v1116 = vpop.f32.mrb[0].mxu0
      %v1117 = vadd.f32 0.0, %v1116
      %1118 = vmatprep.mubr.bf16.mxu0 0
      %1119 = vmatmul.mubr.bf16.gmra.mrb[0].mxu0 %v790
      %v1120 = vpop.f32.mrb[0].mxu0
      %v1121 = vadd.f32 0.0, %v1120
      %v1122 = vpop.f32.mrb[0].mxu0
      %v1123 = vadd.f32 0.0, %v1122
      %v1124 = vpop.f32.mrb[0].mxu0
      %v1125 = vadd.f32 0.0, %v1124
      %v1126 = vpop.f32.mrb[0].mxu0
      %v1127 = vadd.f32 0.0, %v1126
      %1128 = vmatprep.mubr.bf16.mxu0 0
      %1129 = vmatmul.mubr.bf16.gmra.mrb[0].mxu0 %v793
      %v1130 = vpop.f32.mrb[0].mxu0
      %v1131 = vadd.f32 0.0, %v1130
      %v1132 = vpop.f32.mrb[0].mxu0
      %v1133 = vadd.f32 0.0, %v1132
      %v1134 = vpop.f32.mrb[0].mxu0
      %v1135 = vadd.f32 0.0, %v1134
      %v1136 = vpop.f32.mrb[0].mxu0
      %v1137 = vadd.f32 0.0, %v1136
      %1138 = vmatprep.mubr.bf16.mxu0 0
      %1139 = vmatmul.mubr.bf16.gmra.mrb[0].mxu0 %v796
      %v1140 = vpop.f32.mrb[0].mxu0
      %v1141 = vadd.f32 0.0, %v1140
      %v1142 = vpop.f32.mrb[0].mxu0
      %v1143 = vadd.f32 0.0, %v1142
      %v1144 = vpop.f32.mrb[0].mxu0
      %v1145 = vadd.f32 0.0, %v1144
      %v1146 = vpop.f32.mrb[0].mxu0
      %v1147 = vadd.f32 0.0, %v1146
      %1148 = vmatprep.mubr.bf16.mxu0 0
      %1149 = vmatmul.mubr.bf16.gmra.mrb[0].mxu0 %v799
      %v1150 = vpop.f32.mrb[0].mxu0
      %v1151 = vadd.f32 0.0, %v1150
      %v1152 = vpop.f32.mrb[0].mxu0
      %v1153 = vadd.f32 0.0, %v1152
      %v1154 = vpop.f32.mrb[0].mxu0
      %v1155 = vadd.f32 0.0, %v1154
      %v1156 = vpop.f32.mrb[0].mxu0
      %v1157 = vadd.f32 0.0, %v1156
      %1158 = vmatprep.mubr.bf16.mxu0 0
      %1159 = vmatmul.mubr.bf16.gmra.mrb[0].mxu0 %v802
      %v1160 = vpop.f32.mrb[0].mxu0
      %v1161 = vadd.f32 0.0, %v1160
      %v1162 = vpop.f32.mrb[0].mxu0
      %v1163 = vadd.f32 0.0, %v1162
      %v1164 = vpop.f32.mrb[0].mxu0
      %v1165 = vadd.f32 0.0, %v1164
      %v1166 = vpop.f32.mrb[0].mxu0
      %v1167 = vadd.f32 0.0, %v1166
      %1168 = vmatprep.mubr.bf16.mxu0 0
      %1169 = vmatmul.mubr.bf16.gmra.mrb[0].mxu0 %v805
      %v1170 = vpop.f32.mrb[0].mxu0
      %v1171 = vadd.f32 0.0, %v1170
      %v1172 = vpop.f32.mrb[0].mxu0
      %v1173 = vadd.f32 0.0, %v1172
      %v1174 = vpop.f32.mrb[0].mxu0
      %v1175 = vadd.f32 0.0, %v1174
      %v1176 = vpop.f32.mrb[0].mxu0
      %v1177 = vadd.f32 0.0, %v1176
      %1178 = vmatprep.mubr.bf16.mxu0 0
      %1179 = vmatmul.mubr.bf16.gmra.mrb[0].mxu0 %v808
      %v1180 = vpop.f32.mrb[0].mxu0
      %v1181 = vadd.f32 0.0, %v1180
      %v1182 = vpop.f32.mrb[0].mxu0
      %v1183 = vadd.f32 0.0, %v1182
      %v1184 = vpop.f32.mrb[0].mxu0
      %v1185 = vadd.f32 0.0, %v1184
      %v1186 = vpop.f32.mrb[0].mxu0
      %v1187 = vadd.f32 0.0, %v1186
      %1188 = vmatprep.mubr.bf16.mxu0 0
      %1189 = vmatmul.mubr.bf16.gmra.mrb[0].mxu0 %v811
      %v1190 = vpop.f32.mrb[0].mxu0
      %v1191 = vadd.f32 0.0, %v1190
      %v1192 = vpop.f32.mrb[0].mxu0
      %v1193 = vadd.f32 0.0, %v1192
      %v1194 = vpop.f32.mrb[0].mxu0
      %v1195 = vadd.f32 0.0, %v1194
      %v1196 = vpop.f32.mrb[0].mxu0
      %v1197 = vadd.f32 0.0, %v1196
      %1198 = vdwg.mxu0
      %1199 = vmatprep.subr.bf16.mxu0 %v685
      %1200 = vmatpush1.bf16.msra.mxu0 %v684
      %1201 = vmatprep.subr.bf16.mxu0 %v692
      %1202 = vmatpush1.bf16.msra.mxu0 %v691
      %1203 = vmatprep.subr.bf16.mxu0 %v699
      %1204 = vmatpush1.bf16.msra.mxu0 %v698
      %1205 = vmatprep.subr.bf16.mxu0 %v706
      %1206 = vmatpush1.bf16.msra.mxu0 %v705
      %1207 = vmatprep.subr.bf16.mxu0 %v713
      %1208 = vmatpush1.bf16.msra.mxu0 %v712
      %1209 = vmatprep.subr.bf16.mxu0 %v720
      %1210 = vmatpush1.bf16.msra.mxu0 %v719
      %1211 = vmatprep.subr.bf16.mxu0 0
      %1212 = vmatpush1.bf16.msra.mxu0 0
      %1213 = vmatprep.subr.bf16.mxu0 0
      %1214 = vmatpush1.bf16.msra.mxu0 0
      %1215 = vmatprep.subr.bf16.mxu0 0
      %1216 = vmatpush1.bf16.msra.mxu0 0
      %1217 = vmatprep.subr.bf16.mxu0 0
      %1218 = vmatpush1.bf16.msra.mxu0 0
      %1219 = vmatprep.subr.bf16.mxu0 0
      %1220 = vmatpush1.bf16.msra.mxu0 0
      %1221 = vmatprep.subr.bf16.mxu0 0
      %1222 = vmatpush1.bf16.msra.mxu0 0
      %1223 = vmatprep.subr.bf16.mxu0 0
      %1224 = vmatpush1.bf16.msra.mxu0 0
      %1225 = vmatprep.subr.bf16.mxu0 0
      %1226 = vmatpush1.bf16.msra.mxu0 0
      %1227 = vmatprep.subr.bf16.mxu0 0
      %1228 = vmatpush1.bf16.msra.mxu0 0
      %1229 = vmatprep.subr.bf16.mxu0 0
      %1230 = vmatpush1.bf16.msra.mxu0 0
      %1231 = vmatprep.mubr.bf16.mxu0 0
      %1232 = vmatmul.mubr.bf16.gmra.mrb[0].mxu0 %v766
      %v1233 = vpop.f32.mrb[0].mxu0
      %v1234 = vadd.f32 0.0, %v1233
      %v1235 = vpop.f32.mrb[0].mxu0
      %v1236 = vadd.f32 0.0, %v1235
      %v1237 = vpop.f32.mrb[0].mxu0
      %v1238 = vadd.f32 0.0, %v1237
      %v1239 = vpop.f32.mrb[0].mxu0
      %v1240 = vadd.f32 0.0, %v1239
      %1241 = vmatprep.mubr.bf16.mxu0 0
      %1242 = vmatmul.mubr.bf16.gmra.mrb[0].mxu0 %v769
      %v1243 = vpop.f32.mrb[0].mxu0
      %v1244 = vadd.f32 0.0, %v1243
      %v1245 = vpop.f32.mrb[0].mxu0
      %v1246 = vadd.f32 0.0, %v1245
      %v1247 = vpop.f32.mrb[0].mxu0
      %v1248 = vadd.f32 0.0, %v1247
      %v1249 = vpop.f32.mrb[0].mxu0
      %v1250 = vadd.f32 0.0, %v1249
      %1251 = vmatprep.mubr.bf16.mxu0 0
      %1252 = vmatmul.mubr.bf16.gmra.mrb[0].mxu0 %v772
      %v1253 = vpop.f32.mrb[0].mxu0
      %v1254 = vadd.f32 0.0, %v1253
      %v1255 = vpop.f32.mrb[0].mxu0
      %v1256 = vadd.f32 0.0, %v1255
      %v1257 = vpop.f32.mrb[0].mxu0
      %v1258 = vadd.f32 0.0, %v1257
      %v1259 = vpop.f32.mrb[0].mxu0
      %v1260 = vadd.f32 0.0, %v1259
      %1261 = vmatprep.mubr.bf16.mxu0 0
      %1262 = vmatmul.mubr.bf16.gmra.mrb[0].mxu0 %v775
      %v1263 = vpop.f32.mrb[0].mxu0
      %v1264 = vadd.f32 0.0, %v1263
      %v1265 = vpop.f32.mrb[0].mxu0
      %v1266 = vadd.f32 0.0, %v1265
      %v1267 = vpop.f32.mrb[0].mxu0
      %v1268 = vadd.f32 0.0, %v1267
      %v1269 = vpop.f32.mrb[0].mxu0
      %v1270 = vadd.f32 0.0, %v1269
      %1271 = vmatprep.mubr.bf16.mxu0 0
      %1272 = vmatmul.mubr.bf16.gmra.mrb[0].mxu0 %v778
      %v1273 = vpop.f32.mrb[0].mxu0
      %v1274 = vadd.f32 0.0, %v1273
      %v1275 = vpop.f32.mrb[0].mxu0
      %v1276 = vadd.f32 0.0, %v1275
      %v1277 = vpop.f32.mrb[0].mxu0
      %v1278 = vadd.f32 0.0, %v1277
      %v1279 = vpop.f32.mrb[0].mxu0
      %v1280 = vadd.f32 0.0, %v1279
      %1281 = vmatprep.mubr.bf16.mxu0 0
      %1282 = vmatmul.mubr.bf16.gmra.mrb[0].mxu0 %v781
      %v1283 = vpop.f32.mrb[0].mxu0
      %v1284 = vadd.f32 0.0, %v1283
      %v1285 = vpop.f32.mrb[0].mxu0
      %v1286 = vadd.f32 0.0, %v1285
      %v1287 = vpop.f32.mrb[0].mxu0
      %v1288 = vadd.f32 0.0, %v1287
      %v1289 = vpop.f32.mrb[0].mxu0
      %v1290 = vadd.f32 0.0, %v1289
      %1291 = vmatprep.mubr.bf16.mxu0 0
      %1292 = vmatmul.mubr.bf16.gmra.mrb[0].mxu0 %v784
      %v1293 = vpop.f32.mrb[0].mxu0
      %v1294 = vadd.f32 0.0, %v1293
      %v1295 = vpop.f32.mrb[0].mxu0
      %v1296 = vadd.f32 0.0, %v1295
      %v1297 = vpop.f32.mrb[0].mxu0
      %v1298 = vadd.f32 0.0, %v1297
      %v1299 = vpop.f32.mrb[0].mxu0
      %v1300 = vadd.f32 0.0, %v1299
      %1301 = vmatprep.mubr.bf16.mxu0 0
      %1302 = vmatmul.mubr.bf16.gmra.mrb[0].mxu0 %v787
      %v1303 = vpop.f32.mrb[0].mxu0
      %v1304 = vadd.f32 0.0, %v1303
      %v1305 = vpop.f32.mrb[0].mxu0
      %v1306 = vadd.f32 0.0, %v1305
      %v1307 = vpop.f32.mrb[0].mxu0
      %v1308 = vadd.f32 0.0, %v1307
      %v1309 = vpop.f32.mrb[0].mxu0
      %v1310 = vadd.f32 0.0, %v1309
      %1311 = vmatprep.mubr.bf16.mxu0 0
      %1312 = vmatmul.mubr.bf16.gmra.mrb[0].mxu0 %v790
      %v1313 = vpop.f32.mrb[0].mxu0
      %v1314 = vadd.f32 0.0, %v1313
      %v1315 = vpop.f32.mrb[0].mxu0
      %v1316 = vadd.f32 0.0, %v1315
      %v1317 = vpop.f32.mrb[0].mxu0
      %v1318 = vadd.f32 0.0, %v1317
      %v1319 = vpop.f32.mrb[0].mxu0
      %v1320 = vadd.f32 0.0, %v1319
      %1321 = vmatprep.mubr.bf16.mxu0 0
      %1322 = vmatmul.mubr.bf16.gmra.mrb[0].mxu0 %v793
      %v1323 = vpop.f32.mrb[0].mxu0
      %v1324 = vadd.f32 0.0, %v1323
      %v1325 = vpop.f32.mrb[0].mxu0
      %v1326 = vadd.f32 0.0, %v1325
      %v1327 = vpop.f32.mrb[0].mxu0
      %v1328 = vadd.f32 0.0, %v1327
      %v1329 = vpop.f32.mrb[0].mxu0
      %v1330 = vadd.f32 0.0, %v1329
      %1331 = vmatprep.mubr.bf16.mxu0 0
      %1332 = vmatmul.mubr.bf16.gmra.mrb[0].mxu0 %v796
      %v1333 = vpop.f32.mrb[0].mxu0
      %v1334 = vadd.f32 0.0, %v1333
      %v1335 = vpop.f32.mrb[0].mxu0
      %v1336 = vadd.f32 0.0, %v1335
      %v1337 = vpop.f32.mrb[0].mxu0
      %v1338 = vadd.f32 0.0, %v1337
      %v1339 = vpop.f32.mrb[0].mxu0
      %v1340 = vadd.f32 0.0, %v1339
      %1341 = vmatprep.mubr.bf16.mxu0 0
      %1342 = vmatmul.mubr.bf16.gmra.mrb[0].mxu0 %v799
      %v1343 = vpop.f32.mrb[0].mxu0
      %v1344 = vadd.f32 0.0, %v1343
      %v1345 = vpop.f32.mrb[0].mxu0
      %v1346 = vadd.f32 0.0, %v1345
      %v1347 = vpop.f32.mrb[0].mxu0
      %v1348 = vadd.f32 0.0, %v1347
      %v1349 = vpop.f32.mrb[0].mxu0
      %v1350 = vadd.f32 0.0, %v1349
      %1351 = vmatprep.mubr.bf16.mxu0 0
      %1352 = vmatmul.mubr.bf16.gmra.mrb[0].mxu0 %v802
      %v1353 = vpop.f32.mrb[0].mxu0
      %v1354 = vadd.f32 0.0, %v1353
      %v1355 = vpop.f32.mrb[0].mxu0
      %v1356 = vadd.f32 0.0, %v1355
      %v1357 = vpop.f32.mrb[0].mxu0
      %v1358 = vadd.f32 0.0, %v1357
      %v1359 = vpop.f32.mrb[0].mxu0
      %v1360 = vadd.f32 0.0, %v1359
      %1361 = vmatprep.mubr.bf16.mxu0 0
      %1362 = vmatmul.mubr.bf16.gmra.mrb[0].mxu0 %v805
      %v1363 = vpop.f32.mrb[0].mxu0
      %v1364 = vadd.f32 0.0, %v1363
      %v1365 = vpop.f32.mrb[0].mxu0
      %v1366 = vadd.f32 0.0, %v1365
      %v1367 = vpop.f32.mrb[0].mxu0
      %v1368 = vadd.f32 0.0, %v1367
      %v1369 = vpop.f32.mrb[0].mxu0
      %v1370 = vadd.f32 0.0, %v1369
      %1371 = vmatprep.mubr.bf16.mxu0 0
      %1372 = vmatmul.mubr.bf16.gmra.mrb[0].mxu0 %v808
      %v1373 = vpop.f32.mrb[0].mxu0
      %v1374 = vadd.f32 0.0, %v1373
      %v1375 = vpop.f32.mrb[0].mxu0
      %v1376 = vadd.f32 0.0, %v1375
      %v1377 = vpop.f32.mrb[0].mxu0
      %v1378 = vadd.f32 0.0, %v1377
      %v1379 = vpop.f32.mrb[0].mxu0
      %v1380 = vadd.f32 0.0, %v1379
      %1381 = vmatprep.mubr.bf16.mxu0 0
      %1382 = vmatmul.mubr.bf16.gmra.mrb[0].mxu0 %v811
      %v1383 = vpop.f32.mrb[0].mxu0
      %v1384 = vadd.f32 0.0, %v1383
      %v1385 = vpop.f32.mrb[0].mxu0
      %v1386 = vadd.f32 0.0, %v1385
      %v1387 = vpop.f32.mrb[0].mxu0
      %v1388 = vadd.f32 0.0, %v1387
      %v1389 = vpop.f32.mrb[0].mxu0
      %v1390 = vadd.f32 0.0, %v1389
      %1391 = vdwg.mxu0
      %1392 = vmatprep.subr.bf16.mxu0 0
      %1393 = vmatpush1.bf16.msra.mxu0 %v686
      %1394 = vmatprep.subr.bf16.mxu0 0
      %1395 = vmatpush1.bf16.msra.mxu0 %v693
      %1396 = vmatprep.subr.bf16.mxu0 0
      %1397 = vmatpush1.bf16.msra.mxu0 %v700
      %1398 = vmatprep.subr.bf16.mxu0 0
      %1399 = vmatpush1.bf16.msra.mxu0 %v707
      %1400 = vmatprep.subr.bf16.mxu0 0
      %1401 = vmatpush1.bf16.msra.mxu0 %v714
      %1402 = vmatprep.subr.bf16.mxu0 0
      %1403 = vmatpush1.bf16.msra.mxu0 %v721
      %1404 = vmatprep.subr.bf16.mxu0 0
      %1405 = vmatpush1.bf16.msra.mxu0 0
      %1406 = vmatprep.subr.bf16.mxu0 0
      %1407 = vmatpush1.bf16.msra.mxu0 0
      %1408 = vmatprep.subr.bf16.mxu0 0
      %1409 = vmatpush1.bf16.msra.mxu0 0
      %1410 = vmatprep.subr.bf16.mxu0 0
      %1411 = vmatpush1.bf16.msra.mxu0 0
      %1412 = vmatprep.subr.bf16.mxu0 0
      %1413 = vmatpush1.bf16.msra.mxu0 0
      %1414 = vmatprep.subr.bf16.mxu0 0
      %1415 = vmatpush1.bf16.msra.mxu0 0
      %1416 = vmatprep.subr.bf16.mxu0 0
      %1417 = vmatpush1.bf16.msra.mxu0 0
      %1418 = vmatprep.subr.bf16.mxu0 0
      %1419 = vmatpush1.bf16.msra.mxu0 0
      %1420 = vmatprep.subr.bf16.mxu0 0
      %1421 = vmatpush1.bf16.msra.mxu0 0
      %1422 = vmatprep.subr.bf16.mxu0 0
      %1423 = vmatpush1.bf16.msra.mxu0 0
      %1424 = vmatprep.mubr.bf16.mxu0 0
      %1425 = vmatmul.mubr.bf16.gmra.mrb[0].mxu0 %v766
      %v1426 = vpop.f32.mrb[0].mxu0
      %v1427 = vadd.f32 0.0, %v1426
      %v1428 = vpop.f32.mrb[0].mxu0
      %v1429 = vpop.f32.mrb[0].mxu0
      %v1430 = vadd.f32 0.0, %v1429
      %v1431 = vpop.f32.mrb[0].mxu0
      %1432 = vmatprep.mubr.bf16.mxu0 0
      %1433 = vmatmul.mubr.bf16.gmra.mrb[0].mxu0 %v769
      %v1434 = vpop.f32.mrb[0].mxu0
      %v1435 = vadd.f32 0.0, %v1434
      %v1436 = vpop.f32.mrb[0].mxu0
      %v1437 = vpop.f32.mrb[0].mxu0
      %v1438 = vadd.f32 0.0, %v1437
      %v1439 = vpop.f32.mrb[0].mxu0
      %1440 = vmatprep.mubr.bf16.mxu0 0
      %1441 = vmatmul.mubr.bf16.gmra.mrb[0].mxu0 %v772
      %v1442 = vpop.f32.mrb[0].mxu0
      %v1443 = vadd.f32 0.0, %v1442
      %v1444 = vpop.f32.mrb[0].mxu0
      %v1445 = vpop.f32.mrb[0].mxu0
      %v1446 = vadd.f32 0.0, %v1445
      %v1447 = vpop.f32.mrb[0].mxu0
      %1448 = vmatprep.mubr.bf16.mxu0 0
      %1449 = vmatmul.mubr.bf16.gmra.mrb[0].mxu0 %v775
      %v1450 = vpop.f32.mrb[0].mxu0
      %v1451 = vadd.f32 0.0, %v1450
      %v1452 = vpop.f32.mrb[0].mxu0
      %v1453 = vpop.f32.mrb[0].mxu0
      %v1454 = vadd.f32 0.0, %v1453
      %v1455 = vpop.f32.mrb[0].mxu0
      %1456 = vmatprep.mubr.bf16.mxu0 0
      %1457 = vmatmul.mubr.bf16.gmra.mrb[0].mxu0 %v778
      %v1458 = vpop.f32.mrb[0].mxu0
      %v1459 = vadd.f32 0.0, %v1458
      %v1460 = vpop.f32.mrb[0].mxu0
      %v1461 = vpop.f32.mrb[0].mxu0
      %v1462 = vadd.f32 0.0, %v1461
      %v1463 = vpop.f32.mrb[0].mxu0
      %1464 = vmatprep.mubr.bf16.mxu0 0
      %1465 = vmatmul.mubr.bf16.gmra.mrb[0].mxu0 %v781
      %v1466 = vpop.f32.mrb[0].mxu0
      %v1467 = vadd.f32 0.0, %v1466
      %v1468 = vpop.f32.mrb[0].mxu0
      %v1469 = vpop.f32.mrb[0].mxu0
      %v1470 = vadd.f32 0.0, %v1469
      %v1471 = vpop.f32.mrb[0].mxu0
      %1472 = vmatprep.mubr.bf16.mxu0 0
      %1473 = vmatmul.mubr.bf16.gmra.mrb[0].mxu0 %v784
      %v1474 = vpop.f32.mrb[0].mxu0
      %v1475 = vadd.f32 0.0, %v1474
      %v1476 = vpop.f32.mrb[0].mxu0
      %v1477 = vpop.f32.mrb[0].mxu0
      %v1478 = vadd.f32 0.0, %v1477
      %v1479 = vpop.f32.mrb[0].mxu0
      %1480 = vmatprep.mubr.bf16.mxu0 0
      %1481 = vmatmul.mubr.bf16.gmra.mrb[0].mxu0 %v787
      %v1482 = vpop.f32.mrb[0].mxu0
      %v1483 = vadd.f32 0.0, %v1482
      %v1484 = vpop.f32.mrb[0].mxu0
      %v1485 = vpop.f32.mrb[0].mxu0
      %v1486 = vadd.f32 0.0, %v1485
      %v1487 = vpop.f32.mrb[0].mxu0
      %1488 = vmatprep.mubr.bf16.mxu0 0
      %1489 = vmatmul.mubr.bf16.gmra.mrb[0].mxu0 %v790
      %v1490 = vpop.f32.mrb[0].mxu0
      %v1491 = vadd.f32 0.0, %v1490
      %v1492 = vpop.f32.mrb[0].mxu0
      %v1493 = vpop.f32.mrb[0].mxu0
      %v1494 = vadd.f32 0.0, %v1493
      %v1495 = vpop.f32.mrb[0].mxu0
      %1496 = vmatprep.mubr.bf16.mxu0 0
      %1497 = vmatmul.mubr.bf16.gmra.mrb[0].mxu0 %v793
      %v1498 = vpop.f32.mrb[0].mxu0
      %v1499 = vadd.f32 0.0, %v1498
      %v1500 = vpop.f32.mrb[0].mxu0
      %v1501 = vpop.f32.mrb[0].mxu0
      %v1502 = vadd.f32 0.0, %v1501
      %v1503 = vpop.f32.mrb[0].mxu0
      %1504 = vmatprep.mubr.bf16.mxu0 0
      %1505 = vmatmul.mubr.bf16.gmra.mrb[0].mxu0 %v796
      %v1506 = vpop.f32.mrb[0].mxu0
      %v1507 = vadd.f32 0.0, %v1506
      %v1508 = vpop.f32.mrb[0].mxu0
      %v1509 = vpop.f32.mrb[0].mxu0
      %v1510 = vadd.f32 0.0, %v1509
      %v1511 = vpop.f32.mrb[0].mxu0
      %1512 = vmatprep.mubr.bf16.mxu0 0
      %1513 = vmatmul.mubr.bf16.gmra.mrb[0].mxu0 %v799
      %v1514 = vpop.f32.mrb[0].mxu0
      %v1515 = vadd.f32 0.0, %v1514
      %v1516 = vpop.f32.mrb[0].mxu0
      %v1517 = vpop.f32.mrb[0].mxu0
      %v1518 = vadd.f32 0.0, %v1517
      %v1519 = vpop.f32.mrb[0].mxu0
      %1520 = vmatprep.mubr.bf16.mxu0 0
      %1521 = vmatmul.mubr.bf16.gmra.mrb[0].mxu0 %v802
      %v1522 = vpop.f32.mrb[0].mxu0
      %v1523 = vadd.f32 0.0, %v1522
      %v1524 = vpop.f32.mrb[0].mxu0
      %v1525 = vpop.f32.mrb[0].mxu0
      %v1526 = vadd.f32 0.0, %v1525
      %v1527 = vpop.f32.mrb[0].mxu0
      %1528 = vmatprep.mubr.bf16.mxu0 0
      %1529 = vmatmul.mubr.bf16.gmra.mrb[0].mxu0 %v805
      %v1530 = vpop.f32.mrb[0].mxu0
      %v1531 = vadd.f32 0.0, %v1530
      %v1532 = vpop.f32.mrb[0].mxu0
      %v1533 = vpop.f32.mrb[0].mxu0
      %v1534 = vadd.f32 0.0, %v1533
      %v1535 = vpop.f32.mrb[0].mxu0
      %1536 = vmatprep.mubr.bf16.mxu0 0
      %1537 = vmatmul.mubr.bf16.gmra.mrb[0].mxu0 %v808
      %v1538 = vpop.f32.mrb[0].mxu0
      %v1539 = vadd.f32 0.0, %v1538
      %v1540 = vpop.f32.mrb[0].mxu0
      %v1541 = vpop.f32.mrb[0].mxu0
      %v1542 = vadd.f32 0.0, %v1541
      %v1543 = vpop.f32.mrb[0].mxu0
      %1544 = vmatprep.mubr.bf16.mxu0 0
      %1545 = vmatmul.mubr.bf16.gmra.mrb[0].mxu0 %v811
      %v1546 = vpop.f32.mrb[0].mxu0
      %v1547 = vadd.f32 0.0, %v1546
      %v1548 = vpop.f32.mrb[0].mxu0
      %v1549 = vpop.f32.mrb[0].mxu0
      %v1550 = vadd.f32 0.0, %v1549
      %v1551 = vpop.f32.mrb[0].mxu0
      %1552 = vdwg.mxu0
      %vm1617 = vcmask 1046528
      %v1618 = vrot.slane %v850, 1
      %v1619 = vrot.slane %v854, 1
      %v1620 = vsel %vm1617, %v1618, %v1619
      %v1621 = vrot.slane %v1041, 1
      %v1622 = vrot.slane %v1045, 1
      %v1623 = vsel %vm1617, %v1621, %v1622
      %v1624 = vrot.slane %v860, 1
      %v1625 = vsel %vm1617, %v1619, %v1624
      %v1626 = vrot.slane %v1051, 1
      %v1627 = vsel %vm1617, %v1622, %v1626
      %v1628 = vrot.slane %v864, 1
      %v1629 = vsel %vm1617, %v1624, %v1628
      %v1630 = vrot.slane %v1055, 1
      %v1631 = vsel %vm1617, %v1626, %v1630
      %v1632 = vrot.slane %v870, 1
      %v1633 = vrot.slane %v874, 1
      %v1634 = vsel %vm1617, %v1632, %v1633
      %v1635 = vrot.slane %v1061, 1
      %v1636 = vrot.slane %v1065, 1
      %v1637 = vsel %vm1617, %v1635, %v1636
      %v1638 = vrot.slane %v880, 1
      %v1639 = vsel %vm1617, %v1633, %v1638
      %v1640 = vrot.slane %v1071, 1
      %v1641 = vsel %vm1617, %v1636, %v1640
      %v1642 = vrot.slane %v884, 1
      %v1643 = vsel %vm1617, %v1638, %v1642
      %v1644 = vrot.slane %v1075, 1
      %v1645 = vsel %vm1617, %v1640, %v1644
      %v1646 = vrot.slane %v890, 1
      %v1647 = vrot.slane %v894, 1
      %v1648 = vsel %vm1617, %v1646, %v1647
      %v1649 = vrot.slane %v1081, 1
      %v1650 = vrot.slane %v1085, 1
      %v1651 = vsel %vm1617, %v1649, %v1650
      %v1652 = vrot.slane %v900, 1
      %v1653 = vsel %vm1617, %v1647, %v1652
      %v1654 = vrot.slane %v1091, 1
      %v1655 = vsel %vm1617, %v1650, %v1654
      %v1656 = vrot.slane %v904, 1
      %v1657 = vsel %vm1617, %v1652, %v1656
      %v1658 = vrot.slane %v1095, 1
      %v1659 = vsel %vm1617, %v1654, %v1658
      %v1660 = vrot.slane %v910, 1
      %v1661 = vrot.slane %v914, 1
      %v1662 = vsel %vm1617, %v1660, %v1661
      %v1663 = vrot.slane %v1101, 1
      %v1664 = vrot.slane %v1105, 1
      %v1665 = vsel %vm1617, %v1663, %v1664
      %v1666 = vrot.slane %v920, 1
      %v1667 = vsel %vm1617, %v1661, %v1666
      %v1668 = vrot.slane %v1111, 1
      %v1669 = vsel %vm1617, %v1664, %v1668
      %v1670 = vrot.slane %v924, 1
      %v1671 = vsel %vm1617, %v1666, %v1670
      %v1672 = vrot.slane %v1115, 1
      %v1673 = vsel %vm1617, %v1668, %v1672
      %v1674 = vrot.slane %v930, 1
      %v1675 = vrot.slane %v934, 1
      %v1676 = vsel %vm1617, %v1674, %v1675
      %v1677 = vrot.slane %v1121, 1
      %v1678 = vrot.slane %v1125, 1
      %v1679 = vsel %vm1617, %v1677, %v1678
      %v1680 = vrot.slane %v940, 1
      %v1681 = vsel %vm1617, %v1675, %v1680
      %v1682 = vrot.slane %v1131, 1
      %v1683 = vsel %vm1617, %v1678, %v1682
      %v1684 = vrot.slane %v944, 1
      %v1685 = vsel %vm1617, %v1680, %v1684
      %v1686 = vrot.slane %v1135, 1
      %v1687 = vsel %vm1617, %v1682, %v1686
      %v1688 = vrot.slane %v950, 1
      %v1689 = vrot.slane %v954, 1
      %v1690 = vsel %vm1617, %v1688, %v1689
      %v1691 = vrot.slane %v1141, 1
      %v1692 = vrot.slane %v1145, 1
      %v1693 = vsel %vm1617, %v1691, %v1692
      %v1694 = vrot.slane %v960, 1
      %v1695 = vsel %vm1617, %v1689, %v1694
      %v1696 = vrot.slane %v1151, 1
      %v1697 = vsel %vm1617, %v1692, %v1696
      %v1698 = vrot.slane %v964, 1
      %v1699 = vsel %vm1617, %v1694, %v1698
      %v1700 = vrot.slane %v1155, 1
      %v1701 = vsel %vm1617, %v1696, %v1700
      %v1702 = vrot.slane %v970, 1
      %v1703 = vrot.slane %v974, 1
      %v1704 = vsel %vm1617, %v1702, %v1703
      %v1705 = vrot.slane %v1161, 1
      %v1706 = vrot.slane %v1165, 1
      %v1707 = vsel %vm1617, %v1705, %v1706
      %v1708 = vrot.slane %v980, 1
      %v1709 = vsel %vm1617, %v1703, %v1708
      %v1710 = vrot.slane %v1171, 1
      %v1711 = vsel %vm1617, %v1706, %v1710
      %v1712 = vrot.slane %v984, 1
      %v1713 = vsel %vm1617, %v1708, %v1712
      %v1714 = vrot.slane %v1175, 1
      %v1715 = vsel %vm1617, %v1710, %v1714
      %v1716 = vrot.slane %v990, 1
      %v1717 = vrot.slane %v994, 1
      %v1718 = vsel %vm1617, %v1716, %v1717
      %v1719 = vrot.slane %v1181, 1
      %v1720 = vrot.slane %v1185, 1
      %v1721 = vsel %vm1617, %v1719, %v1720
      %v1722 = vrot.slane %v1000, 1
      %v1723 = vsel %vm1617, %v1717, %v1722
      %v1724 = vrot.slane %v1191, 1
      %v1725 = vsel %vm1617, %v1720, %v1724
      %v1726 = vrot.slane %v1004, 1
      %v1727 = vsel %vm1617, %v1722, %v1726
      %v1728 = vrot.slane %v1195, 1
      %v1729 = vsel %vm1617, %v1724, %v1728
      %1730 = vrot.lane.b32.xlu0 %v1620, 88
      %v1731 = vpop.permute.xlu0 %1730
      %1732 = vrot.lane.b32.xlu0 %v1623, 88
      %v1733 = vpop.permute.xlu0 %1732
      %1734 = vrot.lane.b32.xlu0 %v1625, 88
      %v1735 = vpop.permute.xlu0 %1734
      %1736 = vrot.lane.b32.xlu0 %v1627, 88
      %v1737 = vpop.permute.xlu0 %1736
      %1738 = vrot.lane.b32.xlu0 %v1629, 88
      %v1739 = vpop.permute.xlu0 %1738
      %1740 = vrot.lane.b32.xlu0 %v1631, 88
      %v1741 = vpop.permute.xlu0 %1740
      %1742 = vrot.lane.b32.xlu0 %v1628, 88
      %v1743 = vpop.permute.xlu0 %1742
      %1744 = vrot.lane.b32.xlu0 %v1630, 88
      %v1745 = vpop.permute.xlu0 %1744
      %1746 = vrot.lane.b32.xlu0 %v1634, 88
      %v1747 = vpop.permute.xlu0 %1746
      %1748 = vrot.lane.b32.xlu0 %v1637, 88
      %v1749 = vpop.permute.xlu0 %1748
      %1750 = vrot.lane.b32.xlu0 %v1639, 88
      %v1751 = vpop.permute.xlu0 %1750
      %1752 = vrot.lane.b32.xlu0 %v1641, 88
      %v1753 = vpop.permute.xlu0 %1752
      %1754 = vrot.lane.b32.xlu0 %v1643, 88
      %v1755 = vpop.permute.xlu0 %1754
      %1756 = vrot.lane.b32.xlu0 %v1645, 88
      %v1757 = vpop.permute.xlu0 %1756
      %1758 = vrot.lane.b32.xlu0 %v1642, 88
      %v1759 = vpop.permute.xlu0 %1758
      %1760 = vrot.lane.b32.xlu0 %v1644, 88
      %v1761 = vpop.permute.xlu0 %1760
      %1762 = vrot.lane.b32.xlu0 %v1648, 88
      %v1763 = vpop.permute.xlu0 %1762
      %1764 = vrot.lane.b32.xlu0 %v1651, 88
      %v1765 = vpop.permute.xlu0 %1764
      %1766 = vrot.lane.b32.xlu0 %v1653, 88
      %v1767 = vpop.permute.xlu0 %1766
      %1768 = vrot.lane.b32.xlu0 %v1655, 88
      %v1769 = vpop.permute.xlu0 %1768
      %1770 = vrot.lane.b32.xlu0 %v1657, 88
      %v1771 = vpop.permute.xlu0 %1770
      %1772 = vrot.lane.b32.xlu0 %v1659, 88
      %v1773 = vpop.permute.xlu0 %1772
      %1774 = vrot.lane.b32.xlu0 %v1656, 88
      %v1775 = vpop.permute.xlu0 %1774
      %1776 = vrot.lane.b32.xlu0 %v1658, 88
      %v1777 = vpop.permute.xlu0 %1776
      %1778 = vrot.lane.b32.xlu0 %v1662, 88
      %v1779 = vpop.permute.xlu0 %1778
      %1780 = vrot.lane.b32.xlu0 %v1665, 88
      %v1781 = vpop.permute.xlu0 %1780
      %1782 = vrot.lane.b32.xlu0 %v1667, 88
      %v1783 = vpop.permute.xlu0 %1782
      %1784 = vrot.lane.b32.xlu0 %v1669, 88
      %v1785 = vpop.permute.xlu0 %1784
      %1786 = vrot.lane.b32.xlu0 %v1671, 88
      %v1787 = vpop.permute.xlu0 %1786
      %1788 = vrot.lane.b32.xlu0 %v1673, 88
      %v1789 = vpop.permute.xlu0 %1788
      %1790 = vrot.lane.b32.xlu0 %v1670, 88
      %v1791 = vpop.permute.xlu0 %1790
      %1792 = vrot.lane.b32.xlu0 %v1672, 88
      %v1793 = vpop.permute.xlu0 %1792
      %1794 = vrot.lane.b32.xlu0 %v1676, 88
      %v1795 = vpop.permute.xlu0 %1794
      %1796 = vrot.lane.b32.xlu0 %v1679, 88
      %v1797 = vpop.permute.xlu0 %1796
      %1798 = vrot.lane.b32.xlu0 %v1681, 88
      %v1799 = vpop.permute.xlu0 %1798
      %1800 = vrot.lane.b32.xlu0 %v1683, 88
      %v1801 = vpop.permute.xlu0 %1800
      %1802 = vrot.lane.b32.xlu0 %v1685, 88
      %v1803 = vpop.permute.xlu0 %1802
      %1804 = vrot.lane.b32.xlu0 %v1687, 88
      %v1805 = vpop.permute.xlu0 %1804
      %1806 = vrot.lane.b32.xlu0 %v1684, 88
      %v1807 = vpop.permute.xlu0 %1806
      %1808 = vrot.lane.b32.xlu0 %v1686, 88
      %v1809 = vpop.permute.xlu0 %1808
      %1810 = vrot.lane.b32.xlu0 %v1690, 88
      %v1811 = vpop.permute.xlu0 %1810
      %1812 = vrot.lane.b32.xlu0 %v1693, 88
      %v1813 = vpop.permute.xlu0 %1812
      %1814 = vrot.lane.b32.xlu0 %v1695, 88
      %v1815 = vpop.permute.xlu0 %1814
      %1816 = vrot.lane.b32.xlu0 %v1697, 88
      %v1817 = vpop.permute.xlu0 %1816
      %1818 = vrot.lane.b32.xlu0 %v1699, 88
      %v1819 = vpop.permute.xlu0 %1818
      %1820 = vrot.lane.b32.xlu0 %v1701, 88
      %v1821 = vpop.permute.xlu0 %1820
      %1822 = vrot.lane.b32.xlu0 %v1698, 88
      %v1823 = vpop.permute.xlu0 %1822
      %1824 = vrot.lane.b32.xlu0 %v1700, 88
      %v1825 = vpop.permute.xlu0 %1824
      %1826 = vrot.lane.b32.xlu0 %v1704, 88
      %v1827 = vpop.permute.xlu0 %1826
      %1828 = vrot.lane.b32.xlu0 %v1707, 88
      %v1829 = vpop.permute.xlu0 %1828
      %1830 = vrot.lane.b32.xlu0 %v1709, 88
      %v1831 = vpop.permute.xlu0 %1830
      %1832 = vrot.lane.b32.xlu0 %v1711, 88
      %v1833 = vpop.permute.xlu0 %1832
      %1834 = vrot.lane.b32.xlu0 %v1713, 88
      %v1835 = vpop.permute.xlu0 %1834
      %1836 = vrot.lane.b32.xlu0 %v1715, 88
      %v1837 = vpop.permute.xlu0 %1836
      %1838 = vrot.lane.b32.xlu0 %v1712, 88
      %v1839 = vpop.permute.xlu0 %1838
      %1840 = vrot.lane.b32.xlu0 %v1714, 88
      %v1841 = vpop.permute.xlu0 %1840
      %1842 = vrot.lane.b32.xlu0 %v1718, 88
      %v1843 = vpop.permute.xlu0 %1842
      %1844 = vrot.lane.b32.xlu0 %v1721, 88
      %v1845 = vpop.permute.xlu0 %1844
      %1846 = vrot.lane.b32.xlu0 %v1723, 88
      %v1847 = vpop.permute.xlu0 %1846
      %1848 = vrot.lane.b32.xlu0 %v1725, 88
      %v1849 = vpop.permute.xlu0 %1848
      %1850 = vrot.lane.b32.xlu0 %v1727, 88
      %v1851 = vpop.permute.xlu0 %1850
      %1852 = vrot.lane.b32.xlu0 %v1729, 88
      %v1853 = vpop.permute.xlu0 %1852
      %1854 = vrot.lane.b32.xlu0 %v1726, 88
      %v1855 = vpop.permute.xlu0 %1854
      %1856 = vrot.lane.b32.xlu0 %v1728, 88
      %v1857 = vpop.permute.xlu0 %1856
      %vm1858 = vcmask 719872
      %v1859 = vsel %vm1858, %v1731, %v1733
      %v1860 = vsel %vm1858, %v1735, %v1737
      %v1861 = vsel %vm1858, %v1739, %v1741
      %v1862 = vsel %vm1858, %v1743, %v1745
      %v1863 = vsel %vm1858, %v1747, %v1749
      %v1864 = vsel %vm1858, %v1751, %v1753
      %v1865 = vsel %vm1858, %v1755, %v1757
      %v1866 = vsel %vm1858, %v1759, %v1761
      %v1867 = vsel %vm1858, %v1763, %v1765
      %v1868 = vsel %vm1858, %v1767, %v1769
      %v1869 = vsel %vm1858, %v1771, %v1773
      %v1870 = vsel %vm1858, %v1775, %v1777
      %v1871 = vsel %vm1858, %v1779, %v1781
      %v1872 = vsel %vm1858, %v1783, %v1785
      %v1873 = vsel %vm1858, %v1787, %v1789
      %v1874 = vsel %vm1858, %v1791, %v1793
      %v1875 = vsel %vm1858, %v1795, %v1797
      %v1876 = vsel %vm1858, %v1799, %v1801
      %v1877 = vsel %vm1858, %v1803, %v1805
      %v1878 = vsel %vm1858, %v1807, %v1809
      %v1879 = vsel %vm1858, %v1811, %v1813
      %v1880 = vsel %vm1858, %v1815, %v1817
      %v1881 = vsel %vm1858, %v1819, %v1821
      %v1882 = vsel %vm1858, %v1823, %v1825
      %v1883 = vsel %vm1858, %v1827, %v1829
      %v1884 = vsel %vm1858, %v1831, %v1833
      %v1885 = vsel %vm1858, %v1835, %v1837
      %v1886 = vsel %vm1858, %v1839, %v1841
      %v1887 = vsel %vm1858, %v1843, %v1845
      %v1888 = vsel %vm1858, %v1847, %v1849
      %v1889 = vsel %vm1858, %v1851, %v1853
      %v1890 = vsel %vm1858, %v1855, %v1857
      %v1955 = vadd.f32 %v848, %v1859
      %v1956 = vadd.f32 %v850, %v1733
      %v1957 = vadd.f32 %v852, %v1860
      %v1958 = vadd.f32 %v854, %v1737
      %v1959 = vadd.f32 %v858, %v1861
      %v1960 = vadd.f32 %v860, %v1741
      %v1961 = vadd.f32 %v862, %v1862
      %v1962 = vadd.f32 %v864, %v1745
      %v1963 = vadd.f32 %v868, %v1863
      %v1964 = vadd.f32 %v870, %v1749
      %v1965 = vadd.f32 %v872, %v1864
      %v1966 = vadd.f32 %v874, %v1753
      %v1967 = vadd.f32 %v878, %v1865
      %v1968 = vadd.f32 %v880, %v1757
      %v1969 = vadd.f32 %v882, %v1866
      %v1970 = vadd.f32 %v884, %v1761
      %v1971 = vadd.f32 %v888, %v1867
      %v1972 = vadd.f32 %v890, %v1765
      %v1973 = vadd.f32 %v892, %v1868
      %v1974 = vadd.f32 %v894, %v1769
      %v1975 = vadd.f32 %v898, %v1869
      %v1976 = vadd.f32 %v900, %v1773
      %v1977 = vadd.f32 %v902, %v1870
      %v1978 = vadd.f32 %v904, %v1777
      %v1979 = vadd.f32 %v908, %v1871
      %v1980 = vadd.f32 %v910, %v1781
      %v1981 = vadd.f32 %v912, %v1872
      %v1982 = vadd.f32 %v914, %v1785
      %v1983 = vadd.f32 %v918, %v1873
      %v1984 = vadd.f32 %v920, %v1789
      %v1985 = vadd.f32 %v922, %v1874
      %v1986 = vadd.f32 %v924, %v1793
      %v1987 = vadd.f32 %v928, %v1875
      %v1988 = vadd.f32 %v930, %v1797
      %v1989 = vadd.f32 %v932, %v1876
      %v1990 = vadd.f32 %v934, %v1801
      %v1991 = vadd.f32 %v938, %v1877
      %v1992 = vadd.f32 %v940, %v1805
      %v1993 = vadd.f32 %v942, %v1878
      %v1994 = vadd.f32 %v944, %v1809
      %v1995 = vadd.f32 %v948, %v1879
      %v1996 = vadd.f32 %v950, %v1813
      %v1997 = vadd.f32 %v952, %v1880
      %v1998 = vadd.f32 %v954, %v1817
      %v1999 = vadd.f32 %v958, %v1881
      %v2000 = vadd.f32 %v960, %v1821
      %v2001 = vadd.f32 %v962, %v1882
      %v2002 = vadd.f32 %v964, %v1825
      %v2003 = vadd.f32 %v968, %v1883
      %v2004 = vadd.f32 %v970, %v1829
      %v2005 = vadd.f32 %v972, %v1884
      %v2006 = vadd.f32 %v974, %v1833
      %v2007 = vadd.f32 %v978, %v1885
      %v2008 = vadd.f32 %v980, %v1837
      %v2009 = vadd.f32 %v982, %v1886
      %v2010 = vadd.f32 %v984, %v1841
      %v2011 = vadd.f32 %v988, %v1887
      %v2012 = vadd.f32 %v990, %v1845
      %v2013 = vadd.f32 %v992, %v1888
      %v2014 = vadd.f32 %v994, %v1849
      %v2015 = vadd.f32 %v998, %v1889
      %v2016 = vadd.f32 %v1000, %v1853
      %v2017 = vadd.f32 %v1002, %v1890
      %v2018 = vadd.f32 %v1004, %v1857
      %vm2051 = vcmask 1045504
      %v2052 = vrot.slane %v1041, 2
      %v2053 = vrot.slane %v1045, 2
      %v2054 = vsel %vm2051, %v2052, %v2053
      %v2055 = vrot.slane %v1043, 2
      %v2056 = vrot.slane %v1047, 2
      %v2057 = vsel %vm2051, %v2055, %v2056
      %v2058 = vrot.slane %v1051, 2
      %v2059 = vsel %vm2051, %v2053, %v2058
      %v2060 = vrot.slane %v1053, 2
      %v2061 = vsel %vm2051, %v2056, %v2060
      %v2062 = vrot.slane %v1055, 2
      %v2063 = vsel %vm2051, %v2058, %v2062
      %v2064 = vrot.slane %v1057, 2
      %v2065 = vsel %vm2051, %v2060, %v2064
      %v2066 = vrot.slane %v1061, 2
      %v2067 = vrot.slane %v1065, 2
      %v2068 = vsel %vm2051, %v2066, %v2067
      %v2069 = vrot.slane %v1063, 2
      %v2070 = vrot.slane %v1067, 2
      %v2071 = vsel %vm2051, %v2069, %v2070
      %v2072 = vrot.slane %v1071, 2
      %v2073 = vsel %vm2051, %v2067, %v2072
      %v2074 = vrot.slane %v1073, 2
      %v2075 = vsel %vm2051, %v2070, %v2074
      %v2076 = vrot.slane %v1075, 2
      %v2077 = vsel %vm2051, %v2072, %v2076
      %v2078 = vrot.slane %v1077, 2
      %v2079 = vsel %vm2051, %v2074, %v2078
      %v2080 = vrot.slane %v1081, 2
      %v2081 = vrot.slane %v1085, 2
      %v2082 = vsel %vm2051, %v2080, %v2081
      %v2083 = vrot.slane %v1083, 2
      %v2084 = vrot.slane %v1087, 2
      %v2085 = vsel %vm2051, %v2083, %v2084
      %v2086 = vrot.slane %v1091, 2
      %v2087 = vsel %vm2051, %v2081, %v2086
      %v2088 = vrot.slane %v1093, 2
      %v2089 = vsel %vm2051, %v2084, %v2088
      %v2090 = vrot.slane %v1095, 2
      %v2091 = vsel %vm2051, %v2086, %v2090
      %v2092 = vrot.slane %v1097, 2
      %v2093 = vsel %vm2051, %v2088, %v2092
      %v2094 = vrot.slane %v1101, 2
      %v2095 = vrot.slane %v1105, 2
      %v2096 = vsel %vm2051, %v2094, %v2095
      %v2097 = vrot.slane %v1103, 2
      %v2098 = vrot.slane %v1107, 2
      %v2099 = vsel %vm2051, %v2097, %v2098
      %v2100 = vrot.slane %v1111, 2
      %v2101 = vsel %vm2051, %v2095, %v2100
      %v2102 = vrot.slane %v1113, 2
      %v2103 = vsel %vm2051, %v2098, %v2102
      %v2104 = vrot.slane %v1115, 2
      %v2105 = vsel %vm2051, %v2100, %v2104
      %v2106 = vrot.slane %v1117, 2
      %v2107 = vsel %vm2051, %v2102, %v2106
      %v2108 = vrot.slane %v1121, 2
      %v2109 = vrot.slane %v1125, 2
      %v2110 = vsel %vm2051, %v2108, %v2109
      %v2111 = vrot.slane %v1123, 2
      %v2112 = vrot.slane %v1127, 2
      %v2113 = vsel %vm2051, %v2111, %v2112
      %v2114 = vrot.slane %v1131, 2
      %v2115 = vsel %vm2051, %v2109, %v2114
      %v2116 = vrot.slane %v1133, 2
      %v2117 = vsel %vm2051, %v2112, %v2116
      %v2118 = vrot.slane %v1135, 2
      %v2119 = vsel %vm2051, %v2114, %v2118
      %v2120 = vrot.slane %v1137, 2
      %v2121 = vsel %vm2051, %v2116, %v2120
      %v2122 = vrot.slane %v1141, 2
      %v2123 = vrot.slane %v1145, 2
      %v2124 = vsel %vm2051, %v2122, %v2123
      %v2125 = vrot.slane %v1143, 2
      %v2126 = vrot.slane %v1147, 2
      %v2127 = vsel %vm2051, %v2125, %v2126
      %v2128 = vrot.slane %v1151, 2
      %v2129 = vsel %vm2051, %v2123, %v2128
      %v2130 = vrot.slane %v1153, 2
      %v2131 = vsel %vm2051, %v2126, %v2130
      %v2132 = vrot.slane %v1155, 2
      %v2133 = vsel %vm2051, %v2128, %v2132
      %v2134 = vrot.slane %v1157, 2
      %v2135 = vsel %vm2051, %v2130, %v2134
      %v2136 = vrot.slane %v1161, 2
      %v2137 = vrot.slane %v1165, 2
      %v2138 = vsel %vm2051, %v2136, %v2137
      %v2139 = vrot.slane %v1163, 2
      %v2140 = vrot.slane %v1167, 2
      %v2141 = vsel %vm2051, %v2139, %v2140
      %v2142 = vrot.slane %v1171, 2
      %v2143 = vsel %vm2051, %v2137, %v2142
      %v2144 = vrot.slane %v1173, 2
      %v2145 = vsel %vm2051, %v2140, %v2144
      %v2146 = vrot.slane %v1175, 2
      %v2147 = vsel %vm2051, %v2142, %v2146
      %v2148 = vrot.slane %v1177, 2
      %v2149 = vsel %vm2051, %v2144, %v2148
      %v2150 = vrot.slane %v1181, 2
      %v2151 = vrot.slane %v1185, 2
      %v2152 = vsel %vm2051, %v2150, %v2151
      %v2153 = vrot.slane %v1183, 2
      %v2154 = vrot.slane %v1187, 2
      %v2155 = vsel %vm2051, %v2153, %v2154
      %v2156 = vrot.slane %v1191, 2
      %v2157 = vsel %vm2051, %v2151, %v2156
      %v2158 = vrot.slane %v1193, 2
      %v2159 = vsel %vm2051, %v2154, %v2158
      %v2160 = vrot.slane %v1195, 2
      %v2161 = vsel %vm2051, %v2156, %v2160
      %v2162 = vrot.slane %v1197, 2
      %v2163 = vsel %vm2051, %v2158, %v2162
      %2164 = vrot.lane.b32.xlu0 %v2054, 48
      %v2165 = vpop.permute.xlu0 %2164
      %2166 = vrot.lane.b32.xlu0 %v2057, 48
      %v2167 = vpop.permute.xlu0 %2166
      %2168 = vrot.lane.b32.xlu0 %v2059, 48
      %v2169 = vpop.permute.xlu0 %2168
      %2170 = vrot.lane.b32.xlu0 %v2061, 48
      %v2171 = vpop.permute.xlu0 %2170
      %2172 = vrot.lane.b32.xlu0 %v2063, 48
      %v2173 = vpop.permute.xlu0 %2172
      %2174 = vrot.lane.b32.xlu0 %v2065, 48
      %v2175 = vpop.permute.xlu0 %2174
      %2176 = vrot.lane.b32.xlu0 %v2062, 48
      %v2177 = vpop.permute.xlu0 %2176
      %2178 = vrot.lane.b32.xlu0 %v2064, 48
      %v2179 = vpop.permute.xlu0 %2178
      %2180 = vrot.lane.b32.xlu0 %v2068, 48
      %v2181 = vpop.permute.xlu0 %2180
      %2182 = vrot.lane.b32.xlu0 %v2071, 48
      %v2183 = vpop.permute.xlu0 %2182
      %2184 = vrot.lane.b32.xlu0 %v2073, 48
      %v2185 = vpop.permute.xlu0 %2184
      %2186 = vrot.lane.b32.xlu0 %v2075, 48
      %v2187 = vpop.permute.xlu0 %2186
      %2188 = vrot.lane.b32.xlu0 %v2077, 48
      %v2189 = vpop.permute.xlu0 %2188
      %2190 = vrot.lane.b32.xlu0 %v2079, 48
      %v2191 = vpop.permute.xlu0 %2190
      %2192 = vrot.lane.b32.xlu0 %v2076, 48
      %v2193 = vpop.permute.xlu0 %2192
      %2194 = vrot.lane.b32.xlu0 %v2078, 48
      %v2195 = vpop.permute.xlu0 %2194
      %2196 = vrot.lane.b32.xlu0 %v2082, 48
      %v2197 = vpop.permute.xlu0 %2196
      %2198 = vrot.lane.b32.xlu0 %v2085, 48
      %v2199 = vpop.permute.xlu0 %2198
      %2200 = vrot.lane.b32.xlu0 %v2087, 48
      %v2201 = vpop.permute.xlu0 %2200
      %2202 = vrot.lane.b32.xlu0 %v2089, 48
      %v2203 = vpop.permute.xlu0 %2202
      %2204 = vrot.lane.b32.xlu0 %v2091, 48
      %v2205 = vpop.permute.xlu0 %2204
      %2206 = vrot.lane.b32.xlu0 %v2093, 48
      %v2207 = vpop.permute.xlu0 %2206
      %2208 = vrot.lane.b32.xlu0 %v2090, 48
      %v2209 = vpop.permute.xlu0 %2208
      %2210 = vrot.lane.b32.xlu0 %v2092, 48
      %v2211 = vpop.permute.xlu0 %2210
      %2212 = vrot.lane.b32.xlu0 %v2096, 48
      %v2213 = vpop.permute.xlu0 %2212
      %2214 = vrot.lane.b32.xlu0 %v2099, 48
      %v2215 = vpop.permute.xlu0 %2214
      %2216 = vrot.lane.b32.xlu0 %v2101, 48
      %v2217 = vpop.permute.xlu0 %2216
      %2218 = vrot.lane.b32.xlu0 %v2103, 48
      %v2219 = vpop.permute.xlu0 %2218
      %2220 = vrot.lane.b32.xlu0 %v2105, 48
      %v2221 = vpop.permute.xlu0 %2220
      %2222 = vrot.lane.b32.xlu0 %v2107, 48
      %v2223 = vpop.permute.xlu0 %2222
      %2224 = vrot.lane.b32.xlu0 %v2104, 48
      %v2225 = vpop.permute.xlu0 %2224
      %2226 = vrot.lane.b32.xlu0 %v2106, 48
      %v2227 = vpop.permute.xlu0 %2226
      %2228 = vrot.lane.b32.xlu0 %v2110, 48
      %v2229 = vpop.permute.xlu0 %2228
      %2230 = vrot.lane.b32.xlu0 %v2113, 48
      %v2231 = vpop.permute.xlu0 %2230
      %2232 = vrot.lane.b32.xlu0 %v2115, 48
      %v2233 = vpop.permute.xlu0 %2232
      %2234 = vrot.lane.b32.xlu0 %v2117, 48
      %v2235 = vpop.permute.xlu0 %2234
      %2236 = vrot.lane.b32.xlu0 %v2119, 48
      %v2237 = vpop.permute.xlu0 %2236
      %2238 = vrot.lane.b32.xlu0 %v2121, 48
      %v2239 = vpop.permute.xlu0 %2238
      %2240 = vrot.lane.b32.xlu0 %v2118, 48
      %v2241 = vpop.permute.xlu0 %2240
      %2242 = vrot.lane.b32.xlu0 %v2120, 48
      %v2243 = vpop.permute.xlu0 %2242
      %2244 = vrot.lane.b32.xlu0 %v2124, 48
      %v2245 = vpop.permute.xlu0 %2244
      %2246 = vrot.lane.b32.xlu0 %v2127, 48
      %v2247 = vpop.permute.xlu0 %2246
      %2248 = vrot.lane.b32.xlu0 %v2129, 48
      %v2249 = vpop.permute.xlu0 %2248
      %2250 = vrot.lane.b32.xlu0 %v2131, 48
      %v2251 = vpop.permute.xlu0 %2250
      %2252 = vrot.lane.b32.xlu0 %v2133, 48
      %v2253 = vpop.permute.xlu0 %2252
      %2254 = vrot.lane.b32.xlu0 %v2135, 48
      %v2255 = vpop.permute.xlu0 %2254
      %2256 = vrot.lane.b32.xlu0 %v2132, 48
      %v2257 = vpop.permute.xlu0 %2256
      %2258 = vrot.lane.b32.xlu0 %v2134, 48
      %v2259 = vpop.permute.xlu0 %2258
      %2260 = vrot.lane.b32.xlu0 %v2138, 48
      %v2261 = vpop.permute.xlu0 %2260
      %2262 = vrot.lane.b32.xlu0 %v2141, 48
      %v2263 = vpop.permute.xlu0 %2262
      %2264 = vrot.lane.b32.xlu0 %v2143, 48
      %v2265 = vpop.permute.xlu0 %2264
      %2266 = vrot.lane.b32.xlu0 %v2145, 48
      %v2267 = vpop.permute.xlu0 %2266
      %2268 = vrot.lane.b32.xlu0 %v2147, 48
      %v2269 = vpop.permute.xlu0 %2268
      %2270 = vrot.lane.b32.xlu0 %v2149, 48
      %v2271 = vpop.permute.xlu0 %2270
      %2272 = vrot.lane.b32.xlu0 %v2146, 48
      %v2273 = vpop.permute.xlu0 %2272
      %2274 = vrot.lane.b32.xlu0 %v2148, 48
      %v2275 = vpop.permute.xlu0 %2274
      %2276 = vrot.lane.b32.xlu0 %v2152, 48
      %v2277 = vpop.permute.xlu0 %2276
      %2278 = vrot.lane.b32.xlu0 %v2155, 48
      %v2279 = vpop.permute.xlu0 %2278
      %2280 = vrot.lane.b32.xlu0 %v2157, 48
      %v2281 = vpop.permute.xlu0 %2280
      %2282 = vrot.lane.b32.xlu0 %v2159, 48
      %v2283 = vpop.permute.xlu0 %2282
      %2284 = vrot.lane.b32.xlu0 %v2161, 48
      %v2285 = vpop.permute.xlu0 %2284
      %2286 = vrot.lane.b32.xlu0 %v2163, 48
      %v2287 = vpop.permute.xlu0 %2286
      %2288 = vrot.lane.b32.xlu0 %v2160, 48
      %v2289 = vpop.permute.xlu0 %2288
      %2290 = vrot.lane.b32.xlu0 %v2162, 48
      %v2291 = vpop.permute.xlu0 %2290
      %vm2292 = vcmask 392192
      %v2293 = vsel %vm2292, %v2165, %v2167
      %v2294 = vsel %vm2292, %v2169, %v2171
      %v2295 = vsel %vm2292, %v2173, %v2175
      %v2296 = vsel %vm2292, %v2177, %v2179
      %v2297 = vsel %vm2292, %v2181, %v2183
      %v2298 = vsel %vm2292, %v2185, %v2187
      %v2299 = vsel %vm2292, %v2189, %v2191
      %v2300 = vsel %vm2292, %v2193, %v2195
      %v2301 = vsel %vm2292, %v2197, %v2199
      %v2302 = vsel %vm2292, %v2201, %v2203
      %v2303 = vsel %vm2292, %v2205, %v2207
      %v2304 = vsel %vm2292, %v2209, %v2211
      %v2305 = vsel %vm2292, %v2213, %v2215
      %v2306 = vsel %vm2292, %v2217, %v2219
      %v2307 = vsel %vm2292, %v2221, %v2223
      %v2308 = vsel %vm2292, %v2225, %v2227
      %v2309 = vsel %vm2292, %v2229, %v2231
      %v2310 = vsel %vm2292, %v2233, %v2235
      %v2311 = vsel %vm2292, %v2237, %v2239
      %v2312 = vsel %vm2292, %v2241, %v2243
      %v2313 = vsel %vm2292, %v2245, %v2247
      %v2314 = vsel %vm2292, %v2249, %v2251
      %v2315 = vsel %vm2292, %v2253, %v2255
      %v2316 = vsel %vm2292, %v2257, %v2259
      %v2317 = vsel %vm2292, %v2261, %v2263
      %v2318 = vsel %vm2292, %v2265, %v2267
      %v2319 = vsel %vm2292, %v2269, %v2271
      %v2320 = vsel %vm2292, %v2273, %v2275
      %v2321 = vsel %vm2292, %v2277, %v2279
      %v2322 = vsel %vm2292, %v2281, %v2283
      %v2323 = vsel %vm2292, %v2285, %v2287
      %v2324 = vsel %vm2292, %v2289, %v2291
      %v2389 = vadd.f32 %v1955, %v2293
      %v2390 = vadd.f32 %v1956, %v2167
      %v2391 = vadd.f32 %v1957, %v2294
      %v2392 = vadd.f32 %v1958, %v2171
      %v2393 = vadd.f32 %v1959, %v2295
      %v2394 = vadd.f32 %v1960, %v2175
      %v2395 = vadd.f32 %v1961, %v2296
      %v2396 = vadd.f32 %v1962, %v2179
      %v2397 = vadd.f32 %v1963, %v2297
      %v2398 = vadd.f32 %v1964, %v2183
      %v2399 = vadd.f32 %v1965, %v2298
      %v2400 = vadd.f32 %v1966, %v2187
      %v2401 = vadd.f32 %v1967, %v2299
      %v2402 = vadd.f32 %v1968, %v2191
      %v2403 = vadd.f32 %v1969, %v2300
      %v2404 = vadd.f32 %v1970, %v2195
      %v2405 = vadd.f32 %v1971, %v2301
      %v2406 = vadd.f32 %v1972, %v2199
      %v2407 = vadd.f32 %v1973, %v2302
      %v2408 = vadd.f32 %v1974, %v2203
      %v2409 = vadd.f32 %v1975, %v2303
      %v2410 = vadd.f32 %v1976, %v2207
      %v2411 = vadd.f32 %v1977, %v2304
      %v2412 = vadd.f32 %v1978, %v2211
      %v2413 = vadd.f32 %v1979, %v2305
      %v2414 = vadd.f32 %v1980, %v2215
      %v2415 = vadd.f32 %v1981, %v2306
      %v2416 = vadd.f32 %v1982, %v2219
      %v2417 = vadd.f32 %v1983, %v2307
      %v2418 = vadd.f32 %v1984, %v2223
      %v2419 = vadd.f32 %v1985, %v2308
      %v2420 = vadd.f32 %v1986, %v2227
      %v2421 = vadd.f32 %v1987, %v2309
      %v2422 = vadd.f32 %v1988, %v2231
      %v2423 = vadd.f32 %v1989, %v2310
      %v2424 = vadd.f32 %v1990, %v2235
      %v2425 = vadd.f32 %v1991, %v2311
      %v2426 = vadd.f32 %v1992, %v2239
      %v2427 = vadd.f32 %v1993, %v2312
      %v2428 = vadd.f32 %v1994, %v2243
      %v2429 = vadd.f32 %v1995, %v2313
      %v2430 = vadd.f32 %v1996, %v2247
      %v2431 = vadd.f32 %v1997, %v2314
      %v2432 = vadd.f32 %v1998, %v2251
      %v2433 = vadd.f32 %v1999, %v2315
      %v2434 = vadd.f32 %v2000, %v2255
      %v2435 = vadd.f32 %v2001, %v2316
      %v2436 = vadd.f32 %v2002, %v2259
      %v2437 = vadd.f32 %v2003, %v2317
      %v2438 = vadd.f32 %v2004, %v2263
      %v2439 = vadd.f32 %v2005, %v2318
      %v2440 = vadd.f32 %v2006, %v2267
      %v2441 = vadd.f32 %v2007, %v2319
      %v2442 = vadd.f32 %v2008, %v2271
      %v2443 = vadd.f32 %v2009, %v2320
      %v2444 = vadd.f32 %v2010, %v2275
      %v2445 = vadd.f32 %v2011, %v2321
      %v2446 = vadd.f32 %v2012, %v2279
      %v2447 = vadd.f32 %v2013, %v2322
      %v2448 = vadd.f32 %v2014, %v2283
      %v2449 = vadd.f32 %v2015, %v2323
      %v2450 = vadd.f32 %v2016, %v2287
      %v2451 = vadd.f32 %v2017, %v2324
      %v2452 = vadd.f32 %v2018, %v2291
      %vm2517 = vcmask 1044480
      %v2518 = vrot.slane %v1043, 3
      %v2519 = vrot.slane %v1047, 3
      %v2520 = vsel %vm2517, %v2518, %v2519
      %v2521 = vrot.slane %v1234, 3
      %v2522 = vrot.slane %v1238, 3
      %v2523 = vsel %vm2517, %v2521, %v2522
      %v2524 = vrot.slane %v1236, 3
      %v2525 = vrot.slane %v1240, 3
      %v2526 = vsel %vm2517, %v2524, %v2525
      %v2527 = vrot.slane %v1053, 3
      %v2528 = vsel %vm2517, %v2519, %v2527
      %v2529 = vrot.slane %v1244, 3
      %v2530 = vsel %vm2517, %v2522, %v2529
      %v2531 = vrot.slane %v1246, 3
      %v2532 = vsel %vm2517, %v2525, %v2531
      %v2533 = vrot.slane %v1057, 3
      %v2534 = vsel %vm2517, %v2527, %v2533
      %v2535 = vrot.slane %v1248, 3
      %v2536 = vsel %vm2517, %v2529, %v2535
      %v2537 = vrot.slane %v1250, 3
      %v2538 = vsel %vm2517, %v2531, %v2537
      %v2539 = vrot.slane %v1063, 3
      %v2540 = vrot.slane %v1067, 3
      %v2541 = vsel %vm2517, %v2539, %v2540
      %v2542 = vrot.slane %v1254, 3
      %v2543 = vrot.slane %v1258, 3
      %v2544 = vsel %vm2517, %v2542, %v2543
      %v2545 = vrot.slane %v1256, 3
      %v2546 = vrot.slane %v1260, 3
      %v2547 = vsel %vm2517, %v2545, %v2546
      %v2548 = vrot.slane %v1073, 3
      %v2549 = vsel %vm2517, %v2540, %v2548
      %v2550 = vrot.slane %v1264, 3
      %v2551 = vsel %vm2517, %v2543, %v2550
      %v2552 = vrot.slane %v1266, 3
      %v2553 = vsel %vm2517, %v2546, %v2552
      %v2554 = vrot.slane %v1077, 3
      %v2555 = vsel %vm2517, %v2548, %v2554
      %v2556 = vrot.slane %v1268, 3
      %v2557 = vsel %vm2517, %v2550, %v2556
      %v2558 = vrot.slane %v1270, 3
      %v2559 = vsel %vm2517, %v2552, %v2558
      %v2560 = vrot.slane %v1083, 3
      %v2561 = vrot.slane %v1087, 3
      %v2562 = vsel %vm2517, %v2560, %v2561
      %v2563 = vrot.slane %v1274, 3
      %v2564 = vrot.slane %v1278, 3
      %v2565 = vsel %vm2517, %v2563, %v2564
      %v2566 = vrot.slane %v1276, 3
      %v2567 = vrot.slane %v1280, 3
      %v2568 = vsel %vm2517, %v2566, %v2567
      %v2569 = vrot.slane %v1093, 3
      %v2570 = vsel %vm2517, %v2561, %v2569
      %v2571 = vrot.slane %v1284, 3
      %v2572 = vsel %vm2517, %v2564, %v2571
      %v2573 = vrot.slane %v1286, 3
      %v2574 = vsel %vm2517, %v2567, %v2573
      %v2575 = vrot.slane %v1097, 3
      %v2576 = vsel %vm2517, %v2569, %v2575
      %v2577 = vrot.slane %v1288, 3
      %v2578 = vsel %vm2517, %v2571, %v2577
      %v2579 = vrot.slane %v1290, 3
      %v2580 = vsel %vm2517, %v2573, %v2579
      %v2581 = vrot.slane %v1103, 3
      %v2582 = vrot.slane %v1107, 3
      %v2583 = vsel %vm2517, %v2581, %v2582
      %v2584 = vrot.slane %v1294, 3
      %v2585 = vrot.slane %v1298, 3
      %v2586 = vsel %vm2517, %v2584, %v2585
      %v2587 = vrot.slane %v1296, 3
      %v2588 = vrot.slane %v1300, 3
      %v2589 = vsel %vm2517, %v2587, %v2588
      %v2590 = vrot.slane %v1113, 3
      %v2591 = vsel %vm2517, %v2582, %v2590
      %v2592 = vrot.slane %v1304, 3
      %v2593 = vsel %vm2517, %v2585, %v2592
      %v2594 = vrot.slane %v1306, 3
      %v2595 = vsel %vm2517, %v2588, %v2594
      %v2596 = vrot.slane %v1117, 3
      %v2597 = vsel %vm2517, %v2590, %v2596
      %v2598 = vrot.slane %v1308, 3
      %v2599 = vsel %vm2517, %v2592, %v2598
      %v2600 = vrot.slane %v1310, 3
      %v2601 = vsel %vm2517, %v2594, %v2600
      %v2602 = vrot.slane %v1123, 3
      %v2603 = vrot.slane %v1127, 3
      %v2604 = vsel %vm2517, %v2602, %v2603
      %v2605 = vrot.slane %v1314, 3
      %v2606 = vrot.slane %v1318, 3
      %v2607 = vsel %vm2517, %v2605, %v2606
      %v2608 = vrot.slane %v1316, 3
      %v2609 = vrot.slane %v1320, 3
      %v2610 = vsel %vm2517, %v2608, %v2609
      %v2611 = vrot.slane %v1133, 3
      %v2612 = vsel %vm2517, %v2603, %v2611
      %v2613 = vrot.slane %v1324, 3
      %v2614 = vsel %vm2517, %v2606, %v2613
      %v2615 = vrot.slane %v1326, 3
      %v2616 = vsel %vm2517, %v2609, %v2615
      %v2617 = vrot.slane %v1137, 3
      %v2618 = vsel %vm2517, %v2611, %v2617
      %v2619 = vrot.slane %v1328, 3
      %v2620 = vsel %vm2517, %v2613, %v2619
      %v2621 = vrot.slane %v1330, 3
      %v2622 = vsel %vm2517, %v2615, %v2621
      %v2623 = vrot.slane %v1143, 3
      %v2624 = vrot.slane %v1147, 3
      %v2625 = vsel %vm2517, %v2623, %v2624
      %v2626 = vrot.slane %v1334, 3
      %v2627 = vrot.slane %v1338, 3
      %v2628 = vsel %vm2517, %v2626, %v2627
      %v2629 = vrot.slane %v1336, 3
      %v2630 = vrot.slane %v1340, 3
      %v2631 = vsel %vm2517, %v2629, %v2630
      %v2632 = vrot.slane %v1153, 3
      %v2633 = vsel %vm2517, %v2624, %v2632
      %v2634 = vrot.slane %v1344, 3
      %v2635 = vsel %vm2517, %v2627, %v2634
      %v2636 = vrot.slane %v1346, 3
      %v2637 = vsel %vm2517, %v2630, %v2636
      %v2638 = vrot.slane %v1157, 3
      %v2639 = vsel %vm2517, %v2632, %v2638
      %v2640 = vrot.slane %v1348, 3
      %v2641 = vsel %vm2517, %v2634, %v2640
      %v2642 = vrot.slane %v1350, 3
      %v2643 = vsel %vm2517, %v2636, %v2642
      %v2644 = vrot.slane %v1163, 3
      %v2645 = vrot.slane %v1167, 3
      %v2646 = vsel %vm2517, %v2644, %v2645
      %v2647 = vrot.slane %v1354, 3
      %v2648 = vrot.slane %v1358, 3
      %v2649 = vsel %vm2517, %v2647, %v2648
      %v2650 = vrot.slane %v1356, 3
      %v2651 = vrot.slane %v1360, 3
      %v2652 = vsel %vm2517, %v2650, %v2651
      %v2653 = vrot.slane %v1173, 3
      %v2654 = vsel %vm2517, %v2645, %v2653
      %v2655 = vrot.slane %v1364, 3
      %v2656 = vsel %vm2517, %v2648, %v2655
      %v2657 = vrot.slane %v1366, 3
      %v2658 = vsel %vm2517, %v2651, %v2657
      %v2659 = vrot.slane %v1177, 3
      %v2660 = vsel %vm2517, %v2653, %v2659
      %v2661 = vrot.slane %v1368, 3
      %v2662 = vsel %vm2517, %v2655, %v2661
      %v2663 = vrot.slane %v1370, 3
      %v2664 = vsel %vm2517, %v2657, %v2663
      %v2665 = vrot.slane %v1183, 3
      %v2666 = vrot.slane %v1187, 3
      %v2667 = vsel %vm2517, %v2665, %v2666
      %v2668 = vrot.slane %v1374, 3
      %v2669 = vrot.slane %v1378, 3
      %v2670 = vsel %vm2517, %v2668, %v2669
      %v2671 = vrot.slane %v1376, 3
      %v2672 = vrot.slane %v1380, 3
      %v2673 = vsel %vm2517, %v2671, %v2672
      %v2674 = vrot.slane %v1193, 3
      %v2675 = vsel %vm2517, %v2666, %v2674
      %v2676 = vrot.slane %v1384, 3
      %v2677 = vsel %vm2517, %v2669, %v2676
      %v2678 = vrot.slane %v1386, 3
      %v2679 = vsel %vm2517, %v2672, %v2678
      %v2680 = vrot.slane %v1197, 3
      %v2681 = vsel %vm2517, %v2674, %v2680
      %v2682 = vrot.slane %v1388, 3
      %v2683 = vsel %vm2517, %v2676, %v2682
      %v2684 = vrot.slane %v1390, 3
      %v2685 = vsel %vm2517, %v2678, %v2684
      %2686 = vrot.lane.b32.xlu0 %v2520, 8
      %v2687 = vpop.permute.xlu0 %2686
      %2688 = vrot.lane.b32.xlu0 %v2523, 8
      %v2689 = vpop.permute.xlu0 %2688
      %2690 = vrot.lane.b32.xlu0 %v2526, 8
      %v2691 = vpop.permute.xlu0 %2690
      %2692 = vrot.lane.b32.xlu0 %v2528, 8
      %v2693 = vpop.permute.xlu0 %2692
      %2694 = vrot.lane.b32.xlu0 %v2530, 8
      %v2695 = vpop.permute.xlu0 %2694
      %2696 = vrot.lane.b32.xlu0 %v2532, 8
      %v2697 = vpop.permute.xlu0 %2696
      %2698 = vrot.lane.b32.xlu0 %v2534, 8
      %v2699 = vpop.permute.xlu0 %2698
      %2700 = vrot.lane.b32.xlu0 %v2536, 8
      %v2701 = vpop.permute.xlu0 %2700
      %2702 = vrot.lane.b32.xlu0 %v2538, 8
      %v2703 = vpop.permute.xlu0 %2702
      %2704 = vrot.lane.b32.xlu0 %v2533, 8
      %v2705 = vpop.permute.xlu0 %2704
      %2706 = vrot.lane.b32.xlu0 %v2535, 8
      %v2707 = vpop.permute.xlu0 %2706
      %2708 = vrot.lane.b32.xlu0 %v2537, 8
      %v2709 = vpop.permute.xlu0 %2708
      %2710 = vrot.lane.b32.xlu0 %v2541, 8
      %v2711 = vpop.permute.xlu0 %2710
      %2712 = vrot.lane.b32.xlu0 %v2544, 8
      %v2713 = vpop.permute.xlu0 %2712
      %2714 = vrot.lane.b32.xlu0 %v2547, 8
      %v2715 = vpop.permute.xlu0 %2714
      %2716 = vrot.lane.b32.xlu0 %v2549, 8
      %v2717 = vpop.permute.xlu0 %2716
      %2718 = vrot.lane.b32.xlu0 %v2551, 8
      %v2719 = vpop.permute.xlu0 %2718
      %2720 = vrot.lane.b32.xlu0 %v2553, 8
      %v2721 = vpop.permute.xlu0 %2720
      %2722 = vrot.lane.b32.xlu0 %v2555, 8
      %v2723 = vpop.permute.xlu0 %2722
      %2724 = vrot.lane.b32.xlu0 %v2557, 8
      %v2725 = vpop.permute.xlu0 %2724
      %2726 = vrot.lane.b32.xlu0 %v2559, 8
      %v2727 = vpop.permute.xlu0 %2726
      %2728 = vrot.lane.b32.xlu0 %v2554, 8
      %v2729 = vpop.permute.xlu0 %2728
      %2730 = vrot.lane.b32.xlu0 %v2556, 8
      %v2731 = vpop.permute.xlu0 %2730
      %2732 = vrot.lane.b32.xlu0 %v2558, 8
      %v2733 = vpop.permute.xlu0 %2732
      %2734 = vrot.lane.b32.xlu0 %v2562, 8
      %v2735 = vpop.permute.xlu0 %2734
      %2736 = vrot.lane.b32.xlu0 %v2565, 8
      %v2737 = vpop.permute.xlu0 %2736
      %2738 = vrot.lane.b32.xlu0 %v2568, 8
      %v2739 = vpop.permute.xlu0 %2738
      %2740 = vrot.lane.b32.xlu0 %v2570, 8
      %v2741 = vpop.permute.xlu0 %2740
      %2742 = vrot.lane.b32.xlu0 %v2572, 8
      %v2743 = vpop.permute.xlu0 %2742
      %2744 = vrot.lane.b32.xlu0 %v2574, 8
      %v2745 = vpop.permute.xlu0 %2744
      %2746 = vrot.lane.b32.xlu0 %v2576, 8
      %v2747 = vpop.permute.xlu0 %2746
      %2748 = vrot.lane.b32.xlu0 %v2578, 8
      %v2749 = vpop.permute.xlu0 %2748
      %2750 = vrot.lane.b32.xlu0 %v2580, 8
      %v2751 = vpop.permute.xlu0 %2750
      %2752 = vrot.lane.b32.xlu0 %v2575, 8
      %v2753 = vpop.permute.xlu0 %2752
      %2754 = vrot.lane.b32.xlu0 %v2577, 8
      %v2755 = vpop.permute.xlu0 %2754
      %2756 = vrot.lane.b32.xlu0 %v2579, 8
      %v2757 = vpop.permute.xlu0 %2756
      %2758 = vrot.lane.b32.xlu0 %v2583, 8
      %v2759 = vpop.permute.xlu0 %2758
      %2760 = vrot.lane.b32.xlu0 %v2586, 8
      %v2761 = vpop.permute.xlu0 %2760
      %2762 = vrot.lane.b32.xlu0 %v2589, 8
      %v2763 = vpop.permute.xlu0 %2762
      %2764 = vrot.lane.b32.xlu0 %v2591, 8
      %v2765 = vpop.permute.xlu0 %2764
      %2766 = vrot.lane.b32.xlu0 %v2593, 8
      %v2767 = vpop.permute.xlu0 %2766
      %2768 = vrot.lane.b32.xlu0 %v2595, 8
      %v2769 = vpop.permute.xlu0 %2768
      %2770 = vrot.lane.b32.xlu0 %v2597, 8
      %v2771 = vpop.permute.xlu0 %2770
      %2772 = vrot.lane.b32.xlu0 %v2599, 8
      %v2773 = vpop.permute.xlu0 %2772
      %2774 = vrot.lane.b32.xlu0 %v2601, 8
      %v2775 = vpop.permute.xlu0 %2774
      %2776 = vrot.lane.b32.xlu0 %v2596, 8
      %v2777 = vpop.permute.xlu0 %2776
      %2778 = vrot.lane.b32.xlu0 %v2598, 8
      %v2779 = vpop.permute.xlu0 %2778
      %2780 = vrot.lane.b32.xlu0 %v2600, 8
      %v2781 = vpop.permute.xlu0 %2780
      %2782 = vrot.lane.b32.xlu0 %v2604, 8
      %v2783 = vpop.permute.xlu0 %2782
      %2784 = vrot.lane.b32.xlu0 %v2607, 8
      %v2785 = vpop.permute.xlu0 %2784
      %2786 = vrot.lane.b32.xlu0 %v2610, 8
      %v2787 = vpop.permute.xlu0 %2786
      %2788 = vrot.lane.b32.xlu0 %v2612, 8
      %v2789 = vpop.permute.xlu0 %2788
      %2790 = vrot.lane.b32.xlu0 %v2614, 8
      %v2791 = vpop.permute.xlu0 %2790
      %2792 = vrot.lane.b32.xlu0 %v2616, 8
      %v2793 = vpop.permute.xlu0 %2792
      %2794 = vrot.lane.b32.xlu0 %v2618, 8
      %v2795 = vpop.permute.xlu0 %2794
      %2796 = vrot.lane.b32.xlu0 %v2620, 8
      %v2797 = vpop.permute.xlu0 %2796
      %2798 = vrot.lane.b32.xlu0 %v2622, 8
      %v2799 = vpop.permute.xlu0 %2798
      %2800 = vrot.lane.b32.xlu0 %v2617, 8
      %v2801 = vpop.permute.xlu0 %2800
      %2802 = vrot.lane.b32.xlu0 %v2619, 8
      %v2803 = vpop.permute.xlu0 %2802
      %2804 = vrot.lane.b32.xlu0 %v2621, 8
      %v2805 = vpop.permute.xlu0 %2804
      %2806 = vrot.lane.b32.xlu0 %v2625, 8
      %v2807 = vpop.permute.xlu0 %2806
      %2808 = vrot.lane.b32.xlu0 %v2628, 8
      %v2809 = vpop.permute.xlu0 %2808
      %2810 = vrot.lane.b32.xlu0 %v2631, 8
      %v2811 = vpop.permute.xlu0 %2810
      %2812 = vrot.lane.b32.xlu0 %v2633, 8
      %v2813 = vpop.permute.xlu0 %2812
      %2814 = vrot.lane.b32.xlu0 %v2635, 8
      %v2815 = vpop.permute.xlu0 %2814
      %2816 = vrot.lane.b32.xlu0 %v2637, 8
      %v2817 = vpop.permute.xlu0 %2816
      %2818 = vrot.lane.b32.xlu0 %v2639, 8
      %v2819 = vpop.permute.xlu0 %2818
      %2820 = vrot.lane.b32.xlu0 %v2641, 8
      %v2821 = vpop.permute.xlu0 %2820
      %2822 = vrot.lane.b32.xlu0 %v2643, 8
      %v2823 = vpop.permute.xlu0 %2822
      %2824 = vrot.lane.b32.xlu0 %v2638, 8
      %v2825 = vpop.permute.xlu0 %2824
      %2826 = vrot.lane.b32.xlu0 %v2640, 8
      %v2827 = vpop.permute.xlu0 %2826
      %2828 = vrot.lane.b32.xlu0 %v2642, 8
      %v2829 = vpop.permute.xlu0 %2828
      %2830 = vrot.lane.b32.xlu0 %v2646, 8
      %v2831 = vpop.permute.xlu0 %2830
      %2832 = vrot.lane.b32.xlu0 %v2649, 8
      %v2833 = vpop.permute.xlu0 %2832
      %2834 = vrot.lane.b32.xlu0 %v2652, 8
      %v2835 = vpop.permute.xlu0 %2834
      %2836 = vrot.lane.b32.xlu0 %v2654, 8
      %v2837 = vpop.permute.xlu0 %2836
      %2838 = vrot.lane.b32.xlu0 %v2656, 8
      %v2839 = vpop.permute.xlu0 %2838
      %2840 = vrot.lane.b32.xlu0 %v2658, 8
      %v2841 = vpop.permute.xlu0 %2840
      %2842 = vrot.lane.b32.xlu0 %v2660, 8
      %v2843 = vpop.permute.xlu0 %2842
      %2844 = vrot.lane.b32.xlu0 %v2662, 8
      %v2845 = vpop.permute.xlu0 %2844
      %2846 = vrot.lane.b32.xlu0 %v2664, 8
      %v2847 = vpop.permute.xlu0 %2846
      %2848 = vrot.lane.b32.xlu0 %v2659, 8
      %v2849 = vpop.permute.xlu0 %2848
      %2850 = vrot.lane.b32.xlu0 %v2661, 8
      %v2851 = vpop.permute.xlu0 %2850
      %2852 = vrot.lane.b32.xlu0 %v2663, 8
      %v2853 = vpop.permute.xlu0 %2852
      %2854 = vrot.lane.b32.xlu0 %v2667, 8
      %v2855 = vpop.permute.xlu0 %2854
      %2856 = vrot.lane.b32.xlu0 %v2670, 8
      %v2857 = vpop.permute.xlu0 %2856
      %2858 = vrot.lane.b32.xlu0 %v2673, 8
      %v2859 = vpop.permute.xlu0 %2858
      %2860 = vrot.lane.b32.xlu0 %v2675, 8
      %v2861 = vpop.permute.xlu0 %2860
      %2862 = vrot.lane.b32.xlu0 %v2677, 8
      %v2863 = vpop.permute.xlu0 %2862
      %2864 = vrot.lane.b32.xlu0 %v2679, 8
      %v2865 = vpop.permute.xlu0 %2864
      %2866 = vrot.lane.b32.xlu0 %v2681, 8
      %v2867 = vpop.permute.xlu0 %2866
      %2868 = vrot.lane.b32.xlu0 %v2683, 8
      %v2869 = vpop.permute.xlu0 %2868
      %2870 = vrot.lane.b32.xlu0 %v2685, 8
      %v2871 = vpop.permute.xlu0 %2870
      %2872 = vrot.lane.b32.xlu0 %v2680, 8
      %v2873 = vpop.permute.xlu0 %2872
      %2874 = vrot.lane.b32.xlu0 %v2682, 8
      %v2875 = vpop.permute.xlu0 %2874
      %2876 = vrot.lane.b32.xlu0 %v2684, 8
      %v2877 = vpop.permute.xlu0 %2876
      %vm2878 = vcmask 64512
      %v2879 = vsel %vm2878, %v2687, %v2689
      %v2880 = vsel %vm2878, %v2689, %v2691
      %v2881 = vsel %vm2878, %v2693, %v2695
      %v2882 = vsel %vm2878, %v2695, %v2697
      %v2883 = vsel %vm2878, %v2699, %v2701
      %v2884 = vsel %vm2878, %v2701, %v2703
      %v2885 = vsel %vm2878, %v2705, %v2707
      %v2886 = vsel %vm2878, %v2707, %v2709
      %v2887 = vsel %vm2878, %v2711, %v2713
      %v2888 = vsel %vm2878, %v2713, %v2715
      %v2889 = vsel %vm2878, %v2717, %v2719
      %v2890 = vsel %vm2878, %v2719, %v2721
      %v2891 = vsel %vm2878, %v2723, %v2725
      %v2892 = vsel %vm2878, %v2725, %v2727
      %v2893 = vsel %vm2878, %v2729, %v2731
      %v2894 = vsel %vm2878, %v2731, %v2733
      %v2895 = vsel %vm2878, %v2735, %v2737
      %v2896 = vsel %vm2878, %v2737, %v2739
      %v2897 = vsel %vm2878, %v2741, %v2743
      %v2898 = vsel %vm2878, %v2743, %v2745
      %v2899 = vsel %vm2878, %v2747, %v2749
      %v2900 = vsel %vm2878, %v2749, %v2751
      %v2901 = vsel %vm2878, %v2753, %v2755
      %v2902 = vsel %vm2878, %v2755, %v2757
      %v2903 = vsel %vm2878, %v2759, %v2761
      %v2904 = vsel %vm2878, %v2761, %v2763
      %v2905 = vsel %vm2878, %v2765, %v2767
      %v2906 = vsel %vm2878, %v2767, %v2769
      %v2907 = vsel %vm2878, %v2771, %v2773
      %v2908 = vsel %vm2878, %v2773, %v2775
      %v2909 = vsel %vm2878, %v2777, %v2779
      %v2910 = vsel %vm2878, %v2779, %v2781
      %v2911 = vsel %vm2878, %v2783, %v2785
      %v2912 = vsel %vm2878, %v2785, %v2787
      %v2913 = vsel %vm2878, %v2789, %v2791
      %v2914 = vsel %vm2878, %v2791, %v2793
      %v2915 = vsel %vm2878, %v2795, %v2797
      %v2916 = vsel %vm2878, %v2797, %v2799
      %v2917 = vsel %vm2878, %v2801, %v2803
      %v2918 = vsel %vm2878, %v2803, %v2805
      %v2919 = vsel %vm2878, %v2807, %v2809
      %v2920 = vsel %vm2878, %v2809, %v2811
      %v2921 = vsel %vm2878, %v2813, %v2815
      %v2922 = vsel %vm2878, %v2815, %v2817
      %v2923 = vsel %vm2878, %v2819, %v2821
      %v2924 = vsel %vm2878, %v2821, %v2823
      %v2925 = vsel %vm2878, %v2825, %v2827
      %v2926 = vsel %vm2878, %v2827, %v2829
      %v2927 = vsel %vm2878, %v2831, %v2833
      %v2928 = vsel %vm2878, %v2833, %v2835
      %v2929 = vsel %vm2878, %v2837, %v2839
      %v2930 = vsel %vm2878, %v2839, %v2841
      %v2931 = vsel %vm2878, %v2843, %v2845
      %v2932 = vsel %vm2878, %v2845, %v2847
      %v2933 = vsel %vm2878, %v2849, %v2851
      %v2934 = vsel %vm2878, %v2851, %v2853
      %v2935 = vsel %vm2878, %v2855, %v2857
      %v2936 = vsel %vm2878, %v2857, %v2859
      %v2937 = vsel %vm2878, %v2861, %v2863
      %v2938 = vsel %vm2878, %v2863, %v2865
      %v2939 = vsel %vm2878, %v2867, %v2869
      %v2940 = vsel %vm2878, %v2869, %v2871
      %v2941 = vsel %vm2878, %v2873, %v2875
      %v2942 = vsel %vm2878, %v2875, %v2877
      %v3007 = vadd.f32 %v2389, %v2879
      %v3008 = vadd.f32 %v2390, %v2880
      %v3009 = vadd.f32 %v2391, %v2881
      %v3010 = vadd.f32 %v2392, %v2882
      %v3011 = vadd.f32 %v2393, %v2883
      %v3012 = vadd.f32 %v2394, %v2884
      %v3013 = vadd.f32 %v2395, %v2885
      %v3014 = vadd.f32 %v2396, %v2886
      %v3015 = vadd.f32 %v2397, %v2887
      %v3016 = vadd.f32 %v2398, %v2888
      %v3017 = vadd.f32 %v2399, %v2889
      %v3018 = vadd.f32 %v2400, %v2890
      %v3019 = vadd.f32 %v2401, %v2891
      %v3020 = vadd.f32 %v2402, %v2892
      %v3021 = vadd.f32 %v2403, %v2893
      %v3022 = vadd.f32 %v2404, %v2894
      %v3023 = vadd.f32 %v2405, %v2895
      %v3024 = vadd.f32 %v2406, %v2896
      %v3025 = vadd.f32 %v2407, %v2897
      %v3026 = vadd.f32 %v2408, %v2898
      %v3027 = vadd.f32 %v2409, %v2899
      %v3028 = vadd.f32 %v2410, %v2900
      %v3029 = vadd.f32 %v2411, %v2901
      %v3030 = vadd.f32 %v2412, %v2902
      %v3031 = vadd.f32 %v2413, %v2903
      %v3032 = vadd.f32 %v2414, %v2904
      %v3033 = vadd.f32 %v2415, %v2905
      %v3034 = vadd.f32 %v2416, %v2906
      %v3035 = vadd.f32 %v2417, %v2907
      %v3036 = vadd.f32 %v2418, %v2908
      %v3037 = vadd.f32 %v2419, %v2909
      %v3038 = vadd.f32 %v2420, %v2910
      %v3039 = vadd.f32 %v2421, %v2911
      %v3040 = vadd.f32 %v2422, %v2912
      %v3041 = vadd.f32 %v2423, %v2913
      %v3042 = vadd.f32 %v2424, %v2914
      %v3043 = vadd.f32 %v2425, %v2915
      %v3044 = vadd.f32 %v2426, %v2916
      %v3045 = vadd.f32 %v2427, %v2917
      %v3046 = vadd.f32 %v2428, %v2918
      %v3047 = vadd.f32 %v2429, %v2919
      %v3048 = vadd.f32 %v2430, %v2920
      %v3049 = vadd.f32 %v2431, %v2921
      %v3050 = vadd.f32 %v2432, %v2922
      %v3051 = vadd.f32 %v2433, %v2923
      %v3052 = vadd.f32 %v2434, %v2924
      %v3053 = vadd.f32 %v2435, %v2925
      %v3054 = vadd.f32 %v2436, %v2926
      %v3055 = vadd.f32 %v2437, %v2927
      %v3056 = vadd.f32 %v2438, %v2928
      %v3057 = vadd.f32 %v2439, %v2929
      %v3058 = vadd.f32 %v2440, %v2930
      %v3059 = vadd.f32 %v2441, %v2931
      %v3060 = vadd.f32 %v2442, %v2932
      %v3061 = vadd.f32 %v2443, %v2933
      %v3062 = vadd.f32 %v2444, %v2934
      %v3063 = vadd.f32 %v2445, %v2935
      %v3064 = vadd.f32 %v2446, %v2936
      %v3065 = vadd.f32 %v2447, %v2937
      %v3066 = vadd.f32 %v2448, %v2938
      %v3067 = vadd.f32 %v2449, %v2939
      %v3068 = vadd.f32 %v2450, %v2940
      %v3069 = vadd.f32 %v2451, %v2941
      %v3070 = vadd.f32 %v2452, %v2942
      %vm3103 = vcmask 1043456
      %v3104 = vrot.slane %v1236, 4
      %v3105 = vrot.slane %v1240, 4
      %v3106 = vsel %vm3103, %v3104, %v3105
      %v3107 = vrot.slane %v1427, 4
      %v3108 = vrot.slane %v1430, 4
      %v3109 = vsel %vm3103, %v3107, %v3108
      %v3110 = vrot.slane %v1246, 4
      %v3111 = vsel %vm3103, %v3105, %v3110
      %v3112 = vrot.slane %v1435, 4
      %v3113 = vsel %vm3103, %v3108, %v3112
      %v3114 = vrot.slane %v1250, 4
      %v3115 = vsel %vm3103, %v3110, %v3114
      %v3116 = vrot.slane %v1438, 4
      %v3117 = vsel %vm3103, %v3112, %v3116
      %v3118 = vrot.slane %v1256, 4
      %v3119 = vrot.slane %v1260, 4
      %v3120 = vsel %vm3103, %v3118, %v3119
      %v3121 = vrot.slane %v1443, 4
      %v3122 = vrot.slane %v1446, 4
      %v3123 = vsel %vm3103, %v3121, %v3122
      %v3124 = vrot.slane %v1266, 4
      %v3125 = vsel %vm3103, %v3119, %v3124
      %v3126 = vrot.slane %v1451, 4
      %v3127 = vsel %vm3103, %v3122, %v3126
      %v3128 = vrot.slane %v1270, 4
      %v3129 = vsel %vm3103, %v3124, %v3128
      %v3130 = vrot.slane %v1454, 4
      %v3131 = vsel %vm3103, %v3126, %v3130
      %v3132 = vrot.slane %v1276, 4
      %v3133 = vrot.slane %v1280, 4
      %v3134 = vsel %vm3103, %v3132, %v3133
      %v3135 = vrot.slane %v1459, 4
      %v3136 = vrot.slane %v1462, 4
      %v3137 = vsel %vm3103, %v3135, %v3136
      %v3138 = vrot.slane %v1286, 4
      %v3139 = vsel %vm3103, %v3133, %v3138
      %v3140 = vrot.slane %v1467, 4
      %v3141 = vsel %vm3103, %v3136, %v3140
      %v3142 = vrot.slane %v1290, 4
      %v3143 = vsel %vm3103, %v3138, %v3142
      %v3144 = vrot.slane %v1470, 4
      %v3145 = vsel %vm3103, %v3140, %v3144
      %v3146 = vrot.slane %v1296, 4
      %v3147 = vrot.slane %v1300, 4
      %v3148 = vsel %vm3103, %v3146, %v3147
      %v3149 = vrot.slane %v1475, 4
      %v3150 = vrot.slane %v1478, 4
      %v3151 = vsel %vm3103, %v3149, %v3150
      %v3152 = vrot.slane %v1306, 4
      %v3153 = vsel %vm3103, %v3147, %v3152
      %v3154 = vrot.slane %v1483, 4
      %v3155 = vsel %vm3103, %v3150, %v3154
      %v3156 = vrot.slane %v1310, 4
      %v3157 = vsel %vm3103, %v3152, %v3156
      %v3158 = vrot.slane %v1486, 4
      %v3159 = vsel %vm3103, %v3154, %v3158
      %v3160 = vrot.slane %v1316, 4
      %v3161 = vrot.slane %v1320, 4
      %v3162 = vsel %vm3103, %v3160, %v3161
      %v3163 = vrot.slane %v1491, 4
      %v3164 = vrot.slane %v1494, 4
      %v3165 = vsel %vm3103, %v3163, %v3164
      %v3166 = vrot.slane %v1326, 4
      %v3167 = vsel %vm3103, %v3161, %v3166
      %v3168 = vrot.slane %v1499, 4
      %v3169 = vsel %vm3103, %v3164, %v3168
      %v3170 = vrot.slane %v1330, 4
      %v3171 = vsel %vm3103, %v3166, %v3170
      %v3172 = vrot.slane %v1502, 4
      %v3173 = vsel %vm3103, %v3168, %v3172
      %v3174 = vrot.slane %v1336, 4
      %v3175 = vrot.slane %v1340, 4
      %v3176 = vsel %vm3103, %v3174, %v3175
      %v3177 = vrot.slane %v1507, 4
      %v3178 = vrot.slane %v1510, 4
      %v3179 = vsel %vm3103, %v3177, %v3178
      %v3180 = vrot.slane %v1346, 4
      %v3181 = vsel %vm3103, %v3175, %v3180
      %v3182 = vrot.slane %v1515, 4
      %v3183 = vsel %vm3103, %v3178, %v3182
      %v3184 = vrot.slane %v1350, 4
      %v3185 = vsel %vm3103, %v3180, %v3184
      %v3186 = vrot.slane %v1518, 4
      %v3187 = vsel %vm3103, %v3182, %v3186
      %v3188 = vrot.slane %v1356, 4
      %v3189 = vrot.slane %v1360, 4
      %v3190 = vsel %vm3103, %v3188, %v3189
      %v3191 = vrot.slane %v1523, 4
      %v3192 = vrot.slane %v1526, 4
      %v3193 = vsel %vm3103, %v3191, %v3192
      %v3194 = vrot.slane %v1366, 4
      %v3195 = vsel %vm3103, %v3189, %v3194
      %v3196 = vrot.slane %v1531, 4
      %v3197 = vsel %vm3103, %v3192, %v3196
      %v3198 = vrot.slane %v1370, 4
      %v3199 = vsel %vm3103, %v3194, %v3198
      %v3200 = vrot.slane %v1534, 4
      %v3201 = vsel %vm3103, %v3196, %v3200
      %v3202 = vrot.slane %v1376, 4
      %v3203 = vrot.slane %v1380, 4
      %v3204 = vsel %vm3103, %v3202, %v3203
      %v3205 = vrot.slane %v1539, 4
      %v3206 = vrot.slane %v1542, 4
      %v3207 = vsel %vm3103, %v3205, %v3206
      %v3208 = vrot.slane %v1386, 4
      %v3209 = vsel %vm3103, %v3203, %v3208
      %v3210 = vrot.slane %v1547, 4
      %v3211 = vsel %vm3103, %v3206, %v3210
      %v3212 = vrot.slane %v1390, 4
      %v3213 = vsel %vm3103, %v3208, %v3212
      %v3214 = vrot.slane %v1550, 4
      %v3215 = vsel %vm3103, %v3210, %v3214
      %3216 = vrot.lane.b32.xlu0 %v3106, 96
      %v3217 = vpop.permute.xlu0 %3216
      %3218 = vrot.lane.b32.xlu0 %v3109, 96
      %v3219 = vpop.permute.xlu0 %3218
      %3220 = vrot.lane.b32.xlu0 %v3111, 96
      %v3221 = vpop.permute.xlu0 %3220
      %3222 = vrot.lane.b32.xlu0 %v3113, 96
      %v3223 = vpop.permute.xlu0 %3222
      %3224 = vrot.lane.b32.xlu0 %v3115, 96
      %v3225 = vpop.permute.xlu0 %3224
      %3226 = vrot.lane.b32.xlu0 %v3117, 96
      %v3227 = vpop.permute.xlu0 %3226
      %3228 = vrot.lane.b32.xlu0 %v3114, 96
      %v3229 = vpop.permute.xlu0 %3228
      %3230 = vrot.lane.b32.xlu0 %v3116, 96
      %v3231 = vpop.permute.xlu0 %3230
      %3232 = vrot.lane.b32.xlu0 %v3120, 96
      %v3233 = vpop.permute.xlu0 %3232
      %3234 = vrot.lane.b32.xlu0 %v3123, 96
      %v3235 = vpop.permute.xlu0 %3234
      %3236 = vrot.lane.b32.xlu0 %v3125, 96
      %v3237 = vpop.permute.xlu0 %3236
      %3238 = vrot.lane.b32.xlu0 %v3127, 96
      %v3239 = vpop.permute.xlu0 %3238
      %3240 = vrot.lane.b32.xlu0 %v3129, 96
      %v3241 = vpop.permute.xlu0 %3240
      %3242 = vrot.lane.b32.xlu0 %v3131, 96
      %v3243 = vpop.permute.xlu0 %3242
      %3244 = vrot.lane.b32.xlu0 %v3128, 96
      %v3245 = vpop.permute.xlu0 %3244
      %3246 = vrot.lane.b32.xlu0 %v3130, 96
      %v3247 = vpop.permute.xlu0 %3246
      %3248 = vrot.lane.b32.xlu0 %v3134, 96
      %v3249 = vpop.permute.xlu0 %3248
      %3250 = vrot.lane.b32.xlu0 %v3137, 96
      %v3251 = vpop.permute.xlu0 %3250
      %3252 = vrot.lane.b32.xlu0 %v3139, 96
      %v3253 = vpop.permute.xlu0 %3252
      %3254 = vrot.lane.b32.xlu0 %v3141, 96
      %v3255 = vpop.permute.xlu0 %3254
      %3256 = vrot.lane.b32.xlu0 %v3143, 96
      %v3257 = vpop.permute.xlu0 %3256
      %3258 = vrot.lane.b32.xlu0 %v3145, 96
      %v3259 = vpop.permute.xlu0 %3258
      %3260 = vrot.lane.b32.xlu0 %v3142, 96
      %v3261 = vpop.permute.xlu0 %3260
      %3262 = vrot.lane.b32.xlu0 %v3144, 96
      %v3263 = vpop.permute.xlu0 %3262
      %3264 = vrot.lane.b32.xlu0 %v3148, 96
      %v3265 = vpop.permute.xlu0 %3264
      %3266 = vrot.lane.b32.xlu0 %v3151, 96
      %v3267 = vpop.permute.xlu0 %3266
      %3268 = vrot.lane.b32.xlu0 %v3153, 96
      %v3269 = vpop.permute.xlu0 %3268
      %3270 = vrot.lane.b32.xlu0 %v3155, 96
      %v3271 = vpop.permute.xlu0 %3270
      %3272 = vrot.lane.b32.xlu0 %v3157, 96
      %v3273 = vpop.permute.xlu0 %3272
      %3274 = vrot.lane.b32.xlu0 %v3159, 96
      %v3275 = vpop.permute.xlu0 %3274
      %3276 = vrot.lane.b32.xlu0 %v3156, 96
      %v3277 = vpop.permute.xlu0 %3276
      %3278 = vrot.lane.b32.xlu0 %v3158, 96
      %v3279 = vpop.permute.xlu0 %3278
      %3280 = vrot.lane.b32.xlu0 %v3162, 96
      %v3281 = vpop.permute.xlu0 %3280
      %3282 = vrot.lane.b32.xlu0 %v3165, 96
      %v3283 = vpop.permute.xlu0 %3282
      %3284 = vrot.lane.b32.xlu0 %v3167, 96
      %v3285 = vpop.permute.xlu0 %3284
      %3286 = vrot.lane.b32.xlu0 %v3169, 96
      %v3287 = vpop.permute.xlu0 %3286
      %3288 = vrot.lane.b32.xlu0 %v3171, 96
      %v3289 = vpop.permute.xlu0 %3288
      %3290 = vrot.lane.b32.xlu0 %v3173, 96
      %v3291 = vpop.permute.xlu0 %3290
      %3292 = vrot.lane.b32.xlu0 %v3170, 96
      %v3293 = vpop.permute.xlu0 %3292
      %3294 = vrot.lane.b32.xlu0 %v3172, 96
      %v3295 = vpop.permute.xlu0 %3294
      %3296 = vrot.lane.b32.xlu0 %v3176, 96
      %v3297 = vpop.permute.xlu0 %3296
      %3298 = vrot.lane.b32.xlu0 %v3179, 96
      %v3299 = vpop.permute.xlu0 %3298
      %3300 = vrot.lane.b32.xlu0 %v3181, 96
      %v3301 = vpop.permute.xlu0 %3300
      %3302 = vrot.lane.b32.xlu0 %v3183, 96
      %v3303 = vpop.permute.xlu0 %3302
      %3304 = vrot.lane.b32.xlu0 %v3185, 96
      %v3305 = vpop.permute.xlu0 %3304
      %3306 = vrot.lane.b32.xlu0 %v3187, 96
      %v3307 = vpop.permute.xlu0 %3306
      %3308 = vrot.lane.b32.xlu0 %v3184, 96
      %v3309 = vpop.permute.xlu0 %3308
      %3310 = vrot.lane.b32.xlu0 %v3186, 96
      %v3311 = vpop.permute.xlu0 %3310
      %3312 = vrot.lane.b32.xlu0 %v3190, 96
      %v3313 = vpop.permute.xlu0 %3312
      %3314 = vrot.lane.b32.xlu0 %v3193, 96
      %v3315 = vpop.permute.xlu0 %3314
      %3316 = vrot.lane.b32.xlu0 %v3195, 96
      %v3317 = vpop.permute.xlu0 %3316
      %3318 = vrot.lane.b32.xlu0 %v3197, 96
      %v3319 = vpop.permute.xlu0 %3318
      %3320 = vrot.lane.b32.xlu0 %v3199, 96
      %v3321 = vpop.permute.xlu0 %3320
      %3322 = vrot.lane.b32.xlu0 %v3201, 96
      %v3323 = vpop.permute.xlu0 %3322
      %3324 = vrot.lane.b32.xlu0 %v3198, 96
      %v3325 = vpop.permute.xlu0 %3324
      %3326 = vrot.lane.b32.xlu0 %v3200, 96
      %v3327 = vpop.permute.xlu0 %3326
      %3328 = vrot.lane.b32.xlu0 %v3204, 96
      %v3329 = vpop.permute.xlu0 %3328
      %3330 = vrot.lane.b32.xlu0 %v3207, 96
      %v3331 = vpop.permute.xlu0 %3330
      %3332 = vrot.lane.b32.xlu0 %v3209, 96
      %v3333 = vpop.permute.xlu0 %3332
      %3334 = vrot.lane.b32.xlu0 %v3211, 96
      %v3335 = vpop.permute.xlu0 %3334
      %3336 = vrot.lane.b32.xlu0 %v3213, 96
      %v3337 = vpop.permute.xlu0 %3336
      %3338 = vrot.lane.b32.xlu0 %v3215, 96
      %v3339 = vpop.permute.xlu0 %3338
      %3340 = vrot.lane.b32.xlu0 %v3212, 96
      %v3341 = vpop.permute.xlu0 %3340
      %3342 = vrot.lane.b32.xlu0 %v3214, 96
      %v3343 = vpop.permute.xlu0 %3342
      %v3344 = vsel %vm764, %v3217, %v3219
      %v3345 = vsel %vm764, %v3221, %v3223
      %v3346 = vsel %vm764, %v3225, %v3227
      %v3347 = vsel %vm764, %v3229, %v3231
      %v3348 = vsel %vm764, %v3233, %v3235
      %v3349 = vsel %vm764, %v3237, %v3239
      %v3350 = vsel %vm764, %v3241, %v3243
      %v3351 = vsel %vm764, %v3245, %v3247
      %v3352 = vsel %vm764, %v3249, %v3251
      %v3353 = vsel %vm764, %v3253, %v3255
      %v3354 = vsel %vm764, %v3257, %v3259
      %v3355 = vsel %vm764, %v3261, %v3263
      %v3356 = vsel %vm764, %v3265, %v3267
      %v3357 = vsel %vm764, %v3269, %v3271
      %v3358 = vsel %vm764, %v3273, %v3275
      %v3359 = vsel %vm764, %v3277, %v3279
      %v3360 = vsel %vm764, %v3281, %v3283
      %v3361 = vsel %vm764, %v3285, %v3287
      %v3362 = vsel %vm764, %v3289, %v3291
      %v3363 = vsel %vm764, %v3293, %v3295
      %v3364 = vsel %vm764, %v3297, %v3299
      %v3365 = vsel %vm764, %v3301, %v3303
      %v3366 = vsel %vm764, %v3305, %v3307
      %v3367 = vsel %vm764, %v3309, %v3311
      %v3368 = vsel %vm764, %v3313, %v3315
      %v3369 = vsel %vm764, %v3317, %v3319
      %v3370 = vsel %vm764, %v3321, %v3323
      %v3371 = vsel %vm764, %v3325, %v3327
      %v3372 = vsel %vm764, %v3329, %v3331
      %v3373 = vsel %vm764, %v3333, %v3335
      %v3374 = vsel %vm764, %v3337, %v3339
      %v3375 = vsel %vm764, %v3341, %v3343
      %v3440 = vadd.f32 %v3007, %v3344
      %v3441 = vadd.f32 %v3008, %v3219
      %v3442 = vadd.f32 %v3009, %v3345
      %v3443 = vadd.f32 %v3010, %v3223
      %v3444 = vadd.f32 %v3011, %v3346
      %v3445 = vadd.f32 %v3012, %v3227
      %v3446 = vadd.f32 %v3013, %v3347
      %v3447 = vadd.f32 %v3014, %v3231
      %v3448 = vadd.f32 %v3015, %v3348
      %v3449 = vadd.f32 %v3016, %v3235
      %v3450 = vadd.f32 %v3017, %v3349
      %v3451 = vadd.f32 %v3018, %v3239
      %v3452 = vadd.f32 %v3019, %v3350
      %v3453 = vadd.f32 %v3020, %v3243
      %v3454 = vadd.f32 %v3021, %v3351
      %v3455 = vadd.f32 %v3022, %v3247
      %v3456 = vadd.f32 %v3023, %v3352
      %v3457 = vadd.f32 %v3024, %v3251
      %v3458 = vadd.f32 %v3025, %v3353
      %v3459 = vadd.f32 %v3026, %v3255
      %v3460 = vadd.f32 %v3027, %v3354
      %v3461 = vadd.f32 %v3028, %v3259
      %v3462 = vadd.f32 %v3029, %v3355
      %v3463 = vadd.f32 %v3030, %v3263
      %v3464 = vadd.f32 %v3031, %v3356
      %v3465 = vadd.f32 %v3032, %v3267
      %v3466 = vadd.f32 %v3033, %v3357
      %v3467 = vadd.f32 %v3034, %v3271
      %v3468 = vadd.f32 %v3035, %v3358
      %v3469 = vadd.f32 %v3036, %v3275
      %v3470 = vadd.f32 %v3037, %v3359
      %v3471 = vadd.f32 %v3038, %v3279
      %v3472 = vadd.f32 %v3039, %v3360
      %v3473 = vadd.f32 %v3040, %v3283
      %v3474 = vadd.f32 %v3041, %v3361
      %v3475 = vadd.f32 %v3042, %v3287
      %v3476 = vadd.f32 %v3043, %v3362
      %v3477 = vadd.f32 %v3044, %v3291
      %v3478 = vadd.f32 %v3045, %v3363
      %v3479 = vadd.f32 %v3046, %v3295
      %v3480 = vadd.f32 %v3047, %v3364
      %v3481 = vadd.f32 %v3048, %v3299
      %v3482 = vadd.f32 %v3049, %v3365
      %v3483 = vadd.f32 %v3050, %v3303
      %v3484 = vadd.f32 %v3051, %v3366
      %v3485 = vadd.f32 %v3052, %v3307
      %v3486 = vadd.f32 %v3053, %v3367
      %v3487 = vadd.f32 %v3054, %v3311
      %v3488 = vadd.f32 %v3055, %v3368
      %v3489 = vadd.f32 %v3056, %v3315
      %v3490 = vadd.f32 %v3057, %v3369
      %v3491 = vadd.f32 %v3058, %v3319
      %v3492 = vadd.f32 %v3059, %v3370
      %v3493 = vadd.f32 %v3060, %v3323
      %v3494 = vadd.f32 %v3061, %v3371
      %v3495 = vadd.f32 %v3062, %v3327
      %v3496 = vadd.f32 %v3063, %v3372
      %v3497 = vadd.f32 %v3064, %v3331
      %v3498 = vadd.f32 %v3065, %v3373
      %v3499 = vadd.f32 %v3066, %v3335
      %v3500 = vadd.f32 %v3067, %v3374
      %v3501 = vadd.f32 %v3068, %v3339
      %v3502 = vadd.f32 %v3069, %v3375
      %v3503 = vadd.f32 %v3070, %v3343
      %3568 = vrot.lane.b32.xlu0 %v3440, 44
      %v3569 = vpop.permute.xlu0 %3568
      %3570 = vrot.lane.b32.xlu0 %v3441, 44
      %v3571 = vpop.permute.xlu0 %3570
      %3572 = vrot.lane.b32.xlu0 %v3442, 44
      %v3573 = vpop.permute.xlu0 %3572
      %3574 = vrot.lane.b32.xlu0 %v3443, 44
      %v3575 = vpop.permute.xlu0 %3574
      %3576 = vrot.lane.b32.xlu0 %v3444, 44
      %v3577 = vpop.permute.xlu0 %3576
      %3578 = vrot.lane.b32.xlu0 %v3445, 44
      %v3579 = vpop.permute.xlu0 %3578
      %3580 = vrot.lane.b32.xlu0 %v3446, 44
      %v3581 = vpop.permute.xlu0 %3580
      %3582 = vrot.lane.b32.xlu0 %v3447, 44
      %v3583 = vpop.permute.xlu0 %3582
      %3584 = vrot.lane.b32.xlu0 %v3448, 44
      %v3585 = vpop.permute.xlu0 %3584
      %3586 = vrot.lane.b32.xlu0 %v3449, 44
      %v3587 = vpop.permute.xlu0 %3586
      %3588 = vrot.lane.b32.xlu0 %v3450, 44
      %v3589 = vpop.permute.xlu0 %3588
      %3590 = vrot.lane.b32.xlu0 %v3451, 44
      %v3591 = vpop.permute.xlu0 %3590
      %3592 = vrot.lane.b32.xlu0 %v3452, 44
      %v3593 = vpop.permute.xlu0 %3592
      %3594 = vrot.lane.b32.xlu0 %v3453, 44
      %v3595 = vpop.permute.xlu0 %3594
      %3596 = vrot.lane.b32.xlu0 %v3454, 44
      %v3597 = vpop.permute.xlu0 %3596
      %3598 = vrot.lane.b32.xlu0 %v3455, 44
      %v3599 = vpop.permute.xlu0 %3598
      %3600 = vrot.lane.b32.xlu0 %v3456, 44
      %v3601 = vpop.permute.xlu0 %3600
      %3602 = vrot.lane.b32.xlu0 %v3457, 44
      %v3603 = vpop.permute.xlu0 %3602
      %3604 = vrot.lane.b32.xlu0 %v3458, 44
      %v3605 = vpop.permute.xlu0 %3604
      %3606 = vrot.lane.b32.xlu0 %v3459, 44
      %v3607 = vpop.permute.xlu0 %3606
      %3608 = vrot.lane.b32.xlu0 %v3460, 44
      %v3609 = vpop.permute.xlu0 %3608
      %3610 = vrot.lane.b32.xlu0 %v3461, 44
      %v3611 = vpop.permute.xlu0 %3610
      %3612 = vrot.lane.b32.xlu0 %v3462, 44
      %v3613 = vpop.permute.xlu0 %3612
      %3614 = vrot.lane.b32.xlu0 %v3463, 44
      %v3615 = vpop.permute.xlu0 %3614
      %3616 = vrot.lane.b32.xlu0 %v3464, 44
      %v3617 = vpop.permute.xlu0 %3616
      %3618 = vrot.lane.b32.xlu0 %v3465, 44
      %v3619 = vpop.permute.xlu0 %3618
      %3620 = vrot.lane.b32.xlu0 %v3466, 44
      %v3621 = vpop.permute.xlu0 %3620
      %3622 = vrot.lane.b32.xlu0 %v3467, 44
      %v3623 = vpop.permute.xlu0 %3622
      %3624 = vrot.lane.b32.xlu0 %v3468, 44
      %v3625 = vpop.permute.xlu0 %3624
      %3626 = vrot.lane.b32.xlu0 %v3469, 44
      %v3627 = vpop.permute.xlu0 %3626
      %3628 = vrot.lane.b32.xlu0 %v3470, 44
      %v3629 = vpop.permute.xlu0 %3628
      %3630 = vrot.lane.b32.xlu0 %v3471, 44
      %v3631 = vpop.permute.xlu0 %3630
      %3632 = vrot.lane.b32.xlu0 %v3472, 44
      %v3633 = vpop.permute.xlu0 %3632
      %3634 = vrot.lane.b32.xlu0 %v3473, 44
      %v3635 = vpop.permute.xlu0 %3634
      %3636 = vrot.lane.b32.xlu0 %v3474, 44
      %v3637 = vpop.permute.xlu0 %3636
      %3638 = vrot.lane.b32.xlu0 %v3475, 44
      %v3639 = vpop.permute.xlu0 %3638
      %3640 = vrot.lane.b32.xlu0 %v3476, 44
      %v3641 = vpop.permute.xlu0 %3640
      %3642 = vrot.lane.b32.xlu0 %v3477, 44
      %v3643 = vpop.permute.xlu0 %3642
      %3644 = vrot.lane.b32.xlu0 %v3478, 44
      %v3645 = vpop.permute.xlu0 %3644
      %3646 = vrot.lane.b32.xlu0 %v3479, 44
      %v3647 = vpop.permute.xlu0 %3646
      %3648 = vrot.lane.b32.xlu0 %v3480, 44
      %v3649 = vpop.permute.xlu0 %3648
      %3650 = vrot.lane.b32.xlu0 %v3481, 44
      %v3651 = vpop.permute.xlu0 %3650
      %3652 = vrot.lane.b32.xlu0 %v3482, 44
      %v3653 = vpop.permute.xlu0 %3652
      %3654 = vrot.lane.b32.xlu0 %v3483, 44
      %v3655 = vpop.permute.xlu0 %3654
      %3656 = vrot.lane.b32.xlu0 %v3484, 44
      %v3657 = vpop.permute.xlu0 %3656
      %3658 = vrot.lane.b32.xlu0 %v3485, 44
      %v3659 = vpop.permute.xlu0 %3658
      %3660 = vrot.lane.b32.xlu0 %v3486, 44
      %v3661 = vpop.permute.xlu0 %3660
      %3662 = vrot.lane.b32.xlu0 %v3487, 44
      %v3663 = vpop.permute.xlu0 %3662
      %3664 = vrot.lane.b32.xlu0 %v3488, 44
      %v3665 = vpop.permute.xlu0 %3664
      %3666 = vrot.lane.b32.xlu0 %v3489, 44
      %v3667 = vpop.permute.xlu0 %3666
      %3668 = vrot.lane.b32.xlu0 %v3490, 44
      %v3669 = vpop.permute.xlu0 %3668
      %3670 = vrot.lane.b32.xlu0 %v3491, 44
      %v3671 = vpop.permute.xlu0 %3670
      %3672 = vrot.lane.b32.xlu0 %v3492, 44
      %v3673 = vpop.permute.xlu0 %3672
      %3674 = vrot.lane.b32.xlu0 %v3493, 44
      %v3675 = vpop.permute.xlu0 %3674
      %3676 = vrot.lane.b32.xlu0 %v3494, 44
      %v3677 = vpop.permute.xlu0 %3676
      %3678 = vrot.lane.b32.xlu0 %v3495, 44
      %v3679 = vpop.permute.xlu0 %3678
      %3680 = vrot.lane.b32.xlu0 %v3496, 44
      %v3681 = vpop.permute.xlu0 %3680
      %3682 = vrot.lane.b32.xlu0 %v3497, 44
      %v3683 = vpop.permute.xlu0 %3682
      %3684 = vrot.lane.b32.xlu0 %v3498, 44
      %v3685 = vpop.permute.xlu0 %3684
      %3686 = vrot.lane.b32.xlu0 %v3499, 44
      %v3687 = vpop.permute.xlu0 %3686
      %3688 = vrot.lane.b32.xlu0 %v3500, 44
      %v3689 = vpop.permute.xlu0 %3688
      %3690 = vrot.lane.b32.xlu0 %v3501, 44
      %v3691 = vpop.permute.xlu0 %3690
      %3692 = vrot.lane.b32.xlu0 %v3502, 44
      %v3693 = vpop.permute.xlu0 %3692
      %3694 = vrot.lane.b32.xlu0 %v3503, 44
      %v3695 = vpop.permute.xlu0 %3694
      %vm3696 = vcmask 359424
      %v3697 = vsel %vm3696, %v3569, %v3571
      %v3698 = vsel %vm3696, %v3573, %v3575
      %v3699 = vsel %vm3696, %v3577, %v3579
      %v3700 = vsel %vm3696, %v3581, %v3583
      %v3701 = vsel %vm3696, %v3585, %v3587
      %v3702 = vsel %vm3696, %v3589, %v3591
      %v3703 = vsel %vm3696, %v3593, %v3595
      %v3704 = vsel %vm3696, %v3597, %v3599
      %v3705 = vsel %vm3696, %v3601, %v3603
      %v3706 = vsel %vm3696, %v3605, %v3607
      %v3707 = vsel %vm3696, %v3609, %v3611
      %v3708 = vsel %vm3696, %v3613, %v3615
      %v3709 = vsel %vm3696, %v3617, %v3619
      %v3710 = vsel %vm3696, %v3621, %v3623
      %v3711 = vsel %vm3696, %v3625, %v3627
      %v3712 = vsel %vm3696, %v3629, %v3631
      %v3713 = vsel %vm3696, %v3633, %v3635
      %v3714 = vsel %vm3696, %v3637, %v3639
      %v3715 = vsel %vm3696, %v3641, %v3643
      %v3716 = vsel %vm3696, %v3645, %v3647
      %v3717 = vsel %vm3696, %v3649, %v3651
      %v3718 = vsel %vm3696, %v3653, %v3655
      %v3719 = vsel %vm3696, %v3657, %v3659
      %v3720 = vsel %vm3696, %v3661, %v3663
      %v3721 = vsel %vm3696, %v3665, %v3667
      %v3722 = vsel %vm3696, %v3669, %v3671
      %v3723 = vsel %vm3696, %v3673, %v3675
      %v3724 = vsel %vm3696, %v3677, %v3679
      %v3725 = vsel %vm3696, %v3681, %v3683
      %v3726 = vsel %vm3696, %v3685, %v3687
      %v3727 = vsel %vm3696, %v3689, %v3691
      %v3728 = vsel %vm3696, %v3693, %v3695
      %v3761 = vmax.f32 %v3440, %v3697
      %v3762 = vmax.f32 %v3442, %v3698
      %v3763 = vmax.f32 %v3444, %v3699
      %v3764 = vmax.f32 %v3446, %v3700
      %v3765 = vmax.f32 %v3448, %v3701
      %v3766 = vmax.f32 %v3450, %v3702
      %v3767 = vmax.f32 %v3452, %v3703
      %v3768 = vmax.f32 %v3454, %v3704
      %v3769 = vmax.f32 %v3456, %v3705
      %v3770 = vmax.f32 %v3458, %v3706
      %v3771 = vmax.f32 %v3460, %v3707
      %v3772 = vmax.f32 %v3462, %v3708
      %v3773 = vmax.f32 %v3464, %v3709
      %v3774 = vmax.f32 %v3466, %v3710
      %v3775 = vmax.f32 %v3468, %v3711
      %v3776 = vmax.f32 %v3470, %v3712
      %v3777 = vmax.f32 %v3472, %v3713
      %v3778 = vmax.f32 %v3474, %v3714
      %v3779 = vmax.f32 %v3476, %v3715
      %v3780 = vmax.f32 %v3478, %v3716
      %v3781 = vmax.f32 %v3480, %v3717
      %v3782 = vmax.f32 %v3482, %v3718
      %v3783 = vmax.f32 %v3484, %v3719
      %v3784 = vmax.f32 %v3486, %v3720
      %v3785 = vmax.f32 %v3488, %v3721
      %v3786 = vmax.f32 %v3490, %v3722
      %v3787 = vmax.f32 %v3492, %v3723
      %v3788 = vmax.f32 %v3494, %v3724
      %v3789 = vmax.f32 %v3496, %v3725
      %v3790 = vmax.f32 %v3498, %v3726
      %v3791 = vmax.f32 %v3500, %v3727
      %v3792 = vmax.f32 %v3502, %v3728
      %vm3793 = vcmask 687104
      %3794 = vst.msk [vmem:[#allocation2] sm:$0xff] %vm3793, %v3761
      %3795 = vst.msk [vmem:[#allocation2 + $0x8] sm:$0xff] %vm3793, %v3762
      %3796 = vst.msk [vmem:[#allocation2 + $0x10] sm:$0xff] %vm3793, %v3763
      %vm3797 = vcmask 683008
      %3798 = vst.msk [vmem:[#allocation2 + $0x18] sm:$0xf] %vm3797, %v3764
      %3799 = vst.msk [vmem:[#allocation2 + $0x20] sm:$0xff] %vm3793, %v3765
      %3800 = vst.msk [vmem:[#allocation2 + $0x28] sm:$0xff] %vm3793, %v3766
      %3801 = vst.msk [vmem:[#allocation2 + $0x30] sm:$0xff] %vm3793, %v3767
      %3802 = vst.msk [vmem:[#allocation2 + $0x38] sm:$0xf] %vm3797, %v3768
      %3803 = vst.msk [vmem:[#allocation2 + $0x40] sm:$0xff] %vm3793, %v3769
      %3804 = vst.msk [vmem:[#allocation2 + $0x48] sm:$0xff] %vm3793, %v3770
      %3805 = vst.msk [vmem:[#allocation2 + $0x50] sm:$0xff] %vm3793, %v3771
      %3806 = vst.msk [vmem:[#allocation2 + $0x58] sm:$0xf] %vm3797, %v3772
      %3807 = vst.msk [vmem:[#allocation2 + $0x60] sm:$0xff] %vm3793, %v3773
      %3808 = vst.msk [vmem:[#allocation2 + $0x68] sm:$0xff] %vm3793, %v3774
      %3809 = vst.msk [vmem:[#allocation2 + $0x70] sm:$0xff] %vm3793, %v3775
      %3810 = vst.msk [vmem:[#allocation2 + $0x78] sm:$0xf] %vm3797, %v3776
      %3811 = vst.msk [vmem:[#allocation2 + $0x80] sm:$0xff] %vm3793, %v3777
      %3812 = vst.msk [vmem:[#allocation2 + $0x88] sm:$0xff] %vm3793, %v3778
      %3813 = vst.msk [vmem:[#allocation2 + $0x90] sm:$0xff] %vm3793, %v3779
      %3814 = vst.msk [vmem:[#allocation2 + $0x98] sm:$0xf] %vm3797, %v3780
      %3815 = vst.msk [vmem:[#allocation2 + $0xa0] sm:$0xff] %vm3793, %v3781
      %3816 = vst.msk [vmem:[#allocation2 + $0xa8] sm:$0xff] %vm3793, %v3782
      %3817 = vst.msk [vmem:[#allocation2 + $0xb0] sm:$0xff] %vm3793, %v3783
      %3818 = vst.msk [vmem:[#allocation2 + $0xb8] sm:$0xf] %vm3797, %v3784
      %3819 = vst.msk [vmem:[#allocation2 + $0xc0] sm:$0xff] %vm3793, %v3785
      %3820 = vst.msk [vmem:[#allocation2 + $0xc8] sm:$0xff] %vm3793, %v3786
      %3821 = vst.msk [vmem:[#allocation2 + $0xd0] sm:$0xff] %vm3793, %v3787
      %3822 = vst.msk [vmem:[#allocation2 + $0xd8] sm:$0xf] %vm3797, %v3788
      %3823 = vst.msk [vmem:[#allocation2 + $0xe0] sm:$0xff] %vm3793, %v3789
      %3824 = vst.msk [vmem:[#allocation2 + $0xe8] sm:$0xff] %vm3793, %v3790
      %3825 = vst.msk [vmem:[#allocation2 + $0xf0] sm:$0xff] %vm3793, %v3791
      %3826 = vst.msk [vmem:[#allocation2 + $0xf8] sm:$0xf] %vm3797, %v3792
      %v3827 = vld [vmem:[#allocation2] ss:$2 sm:$0xff]
      %s3828 = scalar_lea.vmem [#allocation2], 16
      %v3829 = vld [vmem:[%s3828] ss:$2 sm:$0x3f]
      %s3830 = scalar_lea.vmem [#allocation2], 32
      %v3831 = vld [vmem:[%s3830] ss:$2 sm:$0xff]
      %s3832 = scalar_lea.vmem [#allocation2], 48
      %v3833 = vld [vmem:[%s3832] ss:$2 sm:$0x3f]
      %s3834 = scalar_lea.vmem [#allocation2], 64
      %v3835 = vld [vmem:[%s3834] ss:$2 sm:$0xff]
      %s3836 = scalar_lea.vmem [#allocation2], 80
      %v3837 = vld [vmem:[%s3836] ss:$2 sm:$0x3f]
      %s3838 = scalar_lea.vmem [#allocation2], 96
      %v3839 = vld [vmem:[%s3838] ss:$2 sm:$0xff]
      %s3840 = scalar_lea.vmem [#allocation2], 112
      %v3841 = vld [vmem:[%s3840] ss:$2 sm:$0x3f]
      %s3842 = scalar_lea.vmem [#allocation2], 128
      %v3843 = vld [vmem:[%s3842] ss:$2 sm:$0xff]
      %s3844 = scalar_lea.vmem [#allocation2], 144
      %v3845 = vld [vmem:[%s3844] ss:$2 sm:$0x3f]
      %s3846 = scalar_lea.vmem [#allocation2], 160
      %v3847 = vld [vmem:[%s3846] ss:$2 sm:$0xff]
      %s3848 = scalar_lea.vmem [#allocation2], 176
      %v3849 = vld [vmem:[%s3848] ss:$2 sm:$0x3f]
      %s3850 = scalar_lea.vmem [#allocation2], 192
      %v3851 = vld [vmem:[%s3850] ss:$2 sm:$0xff]
      %s3852 = scalar_lea.vmem [#allocation2], 208
      %v3853 = vld [vmem:[%s3852] ss:$2 sm:$0x3f]
      %s3854 = scalar_lea.vmem [#allocation2], 224
      %v3855 = vld [vmem:[%s3854] ss:$2 sm:$0xff]
      %s3856 = scalar_lea.vmem [#allocation2], 240
      %v3857 = vld [vmem:[%s3856] ss:$2 sm:$0x3f]
      %s3858 = scalar_lea.vmem [#allocation2], 1
      %v3859 = vld [vmem:[%s3858] ss:$2 sm:$0xff]
      %s3860 = scalar_lea.vmem [#allocation2], 17
      %v3861 = vld [vmem:[%s3860] ss:$2 sm:$0x3f]
      %s3862 = scalar_lea.vmem [#allocation2], 33
      %v3863 = vld [vmem:[%s3862] ss:$2 sm:$0xff]
      %s3864 = scalar_lea.vmem [#allocation2], 49
      %v3865 = vld [vmem:[%s3864] ss:$2 sm:$0x3f]
      %s3866 = scalar_lea.vmem [#allocation2], 65
      %v3867 = vld [vmem:[%s3866] ss:$2 sm:$0xff]
      %s3868 = scalar_lea.vmem [#allocation2], 81
      %v3869 = vld [vmem:[%s3868] ss:$2 sm:$0x3f]
      %s3870 = scalar_lea.vmem [#allocation2], 97
      %v3871 = vld [vmem:[%s3870] ss:$2 sm:$0xff]
      %s3872 = scalar_lea.vmem [#allocation2], 113
      %v3873 = vld [vmem:[%s3872] ss:$2 sm:$0x3f]
      %s3874 = scalar_lea.vmem [#allocation2], 129
      %v3875 = vld [vmem:[%s3874] ss:$2 sm:$0xff]
      %s3876 = scalar_lea.vmem [#allocation2], 145
      %v3877 = vld [vmem:[%s3876] ss:$2 sm:$0x3f]
      %s3878 = scalar_lea.vmem [#allocation2], 161
      %v3879 = vld [vmem:[%s3878] ss:$2 sm:$0xff]
      %s3880 = scalar_lea.vmem [#allocation2], 177
      %v3881 = vld [vmem:[%s3880] ss:$2 sm:$0x3f]
      %s3882 = scalar_lea.vmem [#allocation2], 193
      %v3883 = vld [vmem:[%s3882] ss:$2 sm:$0xff]
      %s3884 = scalar_lea.vmem [#allocation2], 209
      %v3885 = vld [vmem:[%s3884] ss:$2 sm:$0x3f]
      %s3886 = scalar_lea.vmem [#allocation2], 225
      %v3887 = vld [vmem:[%s3886] ss:$2 sm:$0xff]
      %s3888 = scalar_lea.vmem [#allocation2], 241
      %v3889 = vld [vmem:[%s3888] ss:$2 sm:$0x3f]
      %v3890 = vmax.f32 %v3827, %v3859
      %v3891 = vmax.f32 %v3829, %v3861
      %v3892 = vmax.f32 %v3831, %v3863
      %v3893 = vmax.f32 %v3833, %v3865
      %v3894 = vmax.f32 %v3835, %v3867
      %v3895 = vmax.f32 %v3837, %v3869
      %v3896 = vmax.f32 %v3839, %v3871
      %v3897 = vmax.f32 %v3841, %v3873
      %v3898 = vmax.f32 %v3843, %v3875
      %v3899 = vmax.f32 %v3845, %v3877
      %v3900 = vmax.f32 %v3847, %v3879
      %v3901 = vmax.f32 %v3849, %v3881
      %v3902 = vmax.f32 %v3851, %v3883
      %v3903 = vmax.f32 %v3853, %v3885
      %v3904 = vmax.f32 %v3855, %v3887
      %v3905 = vmax.f32 %v3857, %v3889
      %v3906 = vld [vmem:[%s2] sm:$0x1]
      %v3908 = vlaneseq
      %v3909 = vshrl.u32 %v3908, 7
      %v3910 = vsub.s32 0, %v3909
      %v3911 = vrot.slane %v3906, %v3910
      %v3913 = vadd.f32 %v3890, %v3911
      %v3914 = vadd.f32 %v3891, %v3911
      %v3915 = vadd.f32 %v3892, %v3911
      %v3916 = vadd.f32 %v3893, %v3911
      %v3917 = vadd.f32 %v3894, %v3911
      %v3918 = vadd.f32 %v3895, %v3911
      %v3919 = vadd.f32 %v3896, %v3911
      %v3920 = vadd.f32 %v3897, %v3911
      %v3921 = vadd.f32 %v3898, %v3911
      %v3922 = vadd.f32 %v3899, %v3911
      %v3923 = vadd.f32 %v3900, %v3911
      %v3924 = vadd.f32 %v3901, %v3911
      %v3925 = vadd.f32 %v3902, %v3911
      %v3926 = vadd.f32 %v3903, %v3911
      %v3927 = vadd.f32 %v3904, %v3911
      %v3928 = vadd.f32 %v3905, %v3911
      %v3929 = vmax.f32 %v3913, 0.0
      %v3930 = vmax.f32 %v3914, 0.0
      %v3931 = vmax.f32 %v3915, 0.0
      %v3932 = vmax.f32 %v3916, 0.0
      %v3933 = vmax.f32 %v3917, 0.0
      %v3934 = vmax.f32 %v3918, 0.0
      %v3935 = vmax.f32 %v3919, 0.0
      %v3936 = vmax.f32 %v3920, 0.0
      %v3937 = vmax.f32 %v3921, 0.0
      %v3938 = vmax.f32 %v3922, 0.0
      %v3939 = vmax.f32 %v3923, 0.0
      %v3940 = vmax.f32 %v3924, 0.0
      %v3941 = vmax.f32 %v3925, 0.0
      %v3942 = vmax.f32 %v3926, 0.0
      %v3943 = vmax.f32 %v3927, 0.0
      %v3944 = vmax.f32 %v3928, 0.0
      %v3961 = vcombine.high %v3929, %v3929
      %v3963 = vunpack.c.l.s4 1983009808
      %v3964 = vunpack.c.0.s8 %v3963
      %v3965 = vlaneseq
      %v3966 = vshrl.u32 %v3965, 7
      %v3967 = vsub.s32 %v3964, %v3966
      %v3968 = vrot.slane %v3929, %v3967
      %v3970 = vunpack.c.l.s4 1983009808
      %v3971 = vunpack.c.0.s8 %v3970
      %v3972 = vlaneseq
      %v3973 = vshrl.u32 %v3972, 7
      %v3974 = vsub.s32 %v3971, %v3973
      %v3975 = vrot.slane %v3961, %v3974
      %v3976 = vcombine.high %v3968, %v3968
      %v3977 = vcombine.high %v3975, %v3975
      %v3978 = vcombine.high %v3930, %v3930
      %v3980 = vunpack.c.l.s4 1983009808
      %v3981 = vunpack.c.0.s8 %v3980
      %v3982 = vlaneseq
      %v3983 = vshrl.u32 %v3982, 7
      %v3984 = vsub.s32 %v3981, %v3983
      %v3985 = vrot.slane %v3930, %v3984
      %v3987 = vunpack.c.l.s4 1983009808
      %v3988 = vunpack.c.0.s8 %v3987
      %v3989 = vlaneseq
      %v3990 = vshrl.u32 %v3989, 7
      %v3991 = vsub.s32 %v3988, %v3990
      %v3992 = vrot.slane %v3978, %v3991
      %v3993 = vcombine.high %v3985, %v3985
      %v3994 = vcombine.high %v3931, %v3931
      %v3996 = vunpack.c.l.s4 1983009808
      %v3997 = vunpack.c.0.s8 %v3996
      %v3998 = vlaneseq
      %v3999 = vshrl.u32 %v3998, 7
      %v4000 = vsub.s32 %v3997, %v3999
      %v4001 = vrot.slane %v3931, %v4000
      %v4003 = vunpack.c.l.s4 1983009808
      %v4004 = vunpack.c.0.s8 %v4003
      %v4005 = vlaneseq
      %v4006 = vshrl.u32 %v4005, 7
      %v4007 = vsub.s32 %v4004, %v4006
      %v4008 = vrot.slane %v3994, %v4007
      %v4009 = vcombine.high %v4001, %v4001
      %v4010 = vcombine.high %v4008, %v4008
      %v4011 = vcombine.high %v3932, %v3932
      %v4013 = vunpack.c.l.s4 1983009808
      %v4014 = vunpack.c.0.s8 %v4013
      %v4015 = vlaneseq
      %v4016 = vshrl.u32 %v4015, 7
      %v4017 = vsub.s32 %v4014, %v4016
      %v4018 = vrot.slane %v3932, %v4017
      %v4020 = vunpack.c.l.s4 1983009808
      %v4021 = vunpack.c.0.s8 %v4020
      %v4022 = vlaneseq
      %v4023 = vshrl.u32 %v4022, 7
      %v4024 = vsub.s32 %v4021, %v4023
      %v4025 = vrot.slane %v4011, %v4024
      %v4026 = vcombine.high %v4018, %v4018
      %v4027 = vcombine.high %v3933, %v3933
      %v4029 = vunpack.c.l.s4 1983009808
      %v4030 = vunpack.c.0.s8 %v4029
      %v4031 = vlaneseq
      %v4032 = vshrl.u32 %v4031, 7
      %v4033 = vsub.s32 %v4030, %v4032
      %v4034 = vrot.slane %v3933, %v4033
      %v4036 = vunpack.c.l.s4 1983009808
      %v4037 = vunpack.c.0.s8 %v4036
      %v4038 = vlaneseq
      %v4039 = vshrl.u32 %v4038, 7
      %v4040 = vsub.s32 %v4037, %v4039
      %v4041 = vrot.slane %v4027, %v4040
      %v4042 = vcombine.high %v4034, %v4034
      %v4043 = vcombine.high %v4041, %v4041
      %v4044 = vcombine.high %v3934, %v3934
      %v4046 = vunpack.c.l.s4 1983009808
      %v4047 = vunpack.c.0.s8 %v4046
      %v4048 = vlaneseq
      %v4049 = vshrl.u32 %v4048, 7
      %v4050 = vsub.s32 %v4047, %v4049
      %v4051 = vrot.slane %v3934, %v4050
      %v4053 = vunpack.c.l.s4 1983009808
      %v4054 = vunpack.c.0.s8 %v4053
      %v4055 = vlaneseq
      %v4056 = vshrl.u32 %v4055, 7
      %v4057 = vsub.s32 %v4054, %v4056
      %v4058 = vrot.slane %v4044, %v4057
      %v4059 = vcombine.high %v4051, %v4051
      %v4060 = vcombine.high %v3935, %v3935
      %v4062 = vunpack.c.l.s4 1983009808
      %v4063 = vunpack.c.0.s8 %v4062
      %v4064 = vlaneseq
      %v4065 = vshrl.u32 %v4064, 7
      %v4066 = vsub.s32 %v4063, %v4065
      %v4067 = vrot.slane %v3935, %v4066
      %v4069 = vunpack.c.l.s4 1983009808
      %v4070 = vunpack.c.0.s8 %v4069
      %v4071 = vlaneseq
      %v4072 = vshrl.u32 %v4071, 7
      %v4073 = vsub.s32 %v4070, %v4072
      %v4074 = vrot.slane %v4060, %v4073
      %v4075 = vcombine.high %v4067, %v4067
      %v4076 = vcombine.high %v4074, %v4074
      %v4077 = vcombine.high %v3936, %v3936
      %v4079 = vunpack.c.l.s4 1983009808
      %v4080 = vunpack.c.0.s8 %v4079
      %v4081 = vlaneseq
      %v4082 = vshrl.u32 %v4081, 7
      %v4083 = vsub.s32 %v4080, %v4082
      %v4084 = vrot.slane %v3936, %v4083
      %v4086 = vunpack.c.l.s4 1983009808
      %v4087 = vunpack.c.0.s8 %v4086
      %v4088 = vlaneseq
      %v4089 = vshrl.u32 %v4088, 7
      %v4090 = vsub.s32 %v4087, %v4089
      %v4091 = vrot.slane %v4077, %v4090
      %v4092 = vcombine.high %v4084, %v4084
      %v4093 = vcombine.high %v3937, %v3937
      %v4095 = vunpack.c.l.s4 1983009808
      %v4096 = vunpack.c.0.s8 %v4095
      %v4097 = vlaneseq
      %v4098 = vshrl.u32 %v4097, 7
      %v4099 = vsub.s32 %v4096, %v4098
      %v4100 = vrot.slane %v3937, %v4099
      %v4102 = vunpack.c.l.s4 1983009808
      %v4103 = vunpack.c.0.s8 %v4102
      %v4104 = vlaneseq
      %v4105 = vshrl.u32 %v4104, 7
      %v4106 = vsub.s32 %v4103, %v4105
      %v4107 = vrot.slane %v4093, %v4106
      %v4108 = vcombine.high %v4100, %v4100
      %v4109 = vcombine.high %v4107, %v4107
      %v4110 = vcombine.high %v3938, %v3938
      %v4112 = vunpack.c.l.s4 1983009808
      %v4113 = vunpack.c.0.s8 %v4112
      %v4114 = vlaneseq
      %v4115 = vshrl.u32 %v4114, 7
      %v4116 = vsub.s32 %v4113, %v4115
      %v4117 = vrot.slane %v3938, %v4116
      %v4119 = vunpack.c.l.s4 1983009808
      %v4120 = vunpack.c.0.s8 %v4119
      %v4121 = vlaneseq
      %v4122 = vshrl.u32 %v4121, 7
      %v4123 = vsub.s32 %v4120, %v4122
      %v4124 = vrot.slane %v4110, %v4123
      %v4125 = vcombine.high %v4117, %v4117
      %v4126 = vcombine.high %v3939, %v3939
      %v4128 = vunpack.c.l.s4 1983009808
      %v4129 = vunpack.c.0.s8 %v4128
      %v4130 = vlaneseq
      %v4131 = vshrl.u32 %v4130, 7
      %v4132 = vsub.s32 %v4129, %v4131
      %v4133 = vrot.slane %v3939, %v4132
      %v4135 = vunpack.c.l.s4 1983009808
      %v4136 = vunpack.c.0.s8 %v4135
      %v4137 = vlaneseq
      %v4138 = vshrl.u32 %v4137, 7
      %v4139 = vsub.s32 %v4136, %v4138
      %v4140 = vrot.slane %v4126, %v4139
      %v4141 = vcombine.high %v4133, %v4133
      %v4142 = vcombine.high %v4140, %v4140
      %v4143 = vcombine.high %v3940, %v3940
      %v4145 = vunpack.c.l.s4 1983009808
      %v4146 = vunpack.c.0.s8 %v4145
      %v4147 = vlaneseq
      %v4148 = vshrl.u32 %v4147, 7
      %v4149 = vsub.s32 %v4146, %v4148
      %v4150 = vrot.slane %v3940, %v4149
      %v4152 = vunpack.c.l.s4 1983009808
      %v4153 = vunpack.c.0.s8 %v4152
      %v4154 = vlaneseq
      %v4155 = vshrl.u32 %v4154, 7
      %v4156 = vsub.s32 %v4153, %v4155
      %v4157 = vrot.slane %v4143, %v4156
      %v4158 = vcombine.high %v4150, %v4150
      %v4159 = vcombine.high %v3941, %v3941
      %v4161 = vunpack.c.l.s4 1983009808
      %v4162 = vunpack.c.0.s8 %v4161
      %v4163 = vlaneseq
      %v4164 = vshrl.u32 %v4163, 7
      %v4165 = vsub.s32 %v4162, %v4164
      %v4166 = vrot.slane %v3941, %v4165
      %v4168 = vunpack.c.l.s4 1983009808
      %v4169 = vunpack.c.0.s8 %v4168
      %v4170 = vlaneseq
      %v4171 = vshrl.u32 %v4170, 7
      %v4172 = vsub.s32 %v4169, %v4171
      %v4173 = vrot.slane %v4159, %v4172
      %v4174 = vcombine.high %v4166, %v4166
      %v4175 = vcombine.high %v4173, %v4173
      %v4176 = vcombine.high %v3942, %v3942
      %v4178 = vunpack.c.l.s4 1983009808
      %v4179 = vunpack.c.0.s8 %v4178
      %v4180 = vlaneseq
      %v4181 = vshrl.u32 %v4180, 7
      %v4182 = vsub.s32 %v4179, %v4181
      %v4183 = vrot.slane %v3942, %v4182
      %v4185 = vunpack.c.l.s4 1983009808
      %v4186 = vunpack.c.0.s8 %v4185
      %v4187 = vlaneseq
      %v4188 = vshrl.u32 %v4187, 7
      %v4189 = vsub.s32 %v4186, %v4188
      %v4190 = vrot.slane %v4176, %v4189
      %v4191 = vcombine.high %v4183, %v4183
      %v4192 = vcombine.high %v3943, %v3943
      %v4194 = vunpack.c.l.s4 1983009808
      %v4195 = vunpack.c.0.s8 %v4194
      %v4196 = vlaneseq
      %v4197 = vshrl.u32 %v4196, 7
      %v4198 = vsub.s32 %v4195, %v4197
      %v4199 = vrot.slane %v3943, %v4198
      %v4201 = vunpack.c.l.s4 1983009808
      %v4202 = vunpack.c.0.s8 %v4201
      %v4203 = vlaneseq
      %v4204 = vshrl.u32 %v4203, 7
      %v4205 = vsub.s32 %v4202, %v4204
      %v4206 = vrot.slane %v4192, %v4205
      %v4207 = vcombine.high %v4199, %v4199
      %v4208 = vcombine.high %v4206, %v4206
      %v4209 = vcombine.high %v3944, %v3944
      %v4211 = vunpack.c.l.s4 1983009808
      %v4212 = vunpack.c.0.s8 %v4211
      %v4213 = vlaneseq
      %v4214 = vshrl.u32 %v4213, 7
      %v4215 = vsub.s32 %v4212, %v4214
      %v4216 = vrot.slane %v3944, %v4215
      %v4218 = vunpack.c.l.s4 1983009808
      %v4219 = vunpack.c.0.s8 %v4218
      %v4220 = vlaneseq
      %v4221 = vshrl.u32 %v4220, 7
      %v4222 = vsub.s32 %v4219, %v4221
      %v4223 = vrot.slane %v4209, %v4222
      %v4224 = vcombine.high %v4216, %v4216
      %v4225 = vcombine.low %v3968, %v3976
      %v4226 = vcombine.low %v3975, %v3977
      %v4228 = vunpack.c.l.s4 1983009808
      %v4229 = vunpack.c.0.s8 %v4228
      %v4230 = vlaneseq
      %v4231 = vshrl.u32 %v4230, 7
      %v4232 = vsub.s32 %v4229, %v4231
      %v4233 = vrot.slane %v4225, %v4232
      %v4235 = vunpack.c.l.s4 1983009808
      %v4236 = vunpack.c.0.s8 %v4235
      %v4237 = vlaneseq
      %v4238 = vshrl.u32 %v4237, 7
      %v4239 = vsub.s32 %v4236, %v4238
      %v4240 = vrot.slane %v4226, %v4239
      %v4241 = vcombine.low %v4233, %v4240
      %v4242 = vcombine.low %v3985, %v3993
      %v4243 = vcombine.low %v3992, %v4001
      %v4245 = vunpack.c.l.s4 1983009808
      %v4246 = vunpack.c.0.s8 %v4245
      %v4247 = vlaneseq
      %v4248 = vshrl.u32 %v4247, 7
      %v4249 = vsub.s32 %v4246, %v4248
      %v4250 = vrot.slane %v4242, %v4249
      %v4252 = vunpack.c.l.s4 1983009808
      %v4253 = vunpack.c.0.s8 %v4252
      %v4254 = vlaneseq
      %v4255 = vshrl.u32 %v4254, 7
      %v4256 = vsub.s32 %v4253, %v4255
      %v4257 = vrot.slane %v4243, %v4256
      %v4258 = vcombine.low %v4250, %v4257
      %v4259 = vcombine.low %v4009, %v4008
      %v4260 = vcombine.low %v4010, %v4018
      %v4262 = vunpack.c.l.s4 1983009808
      %v4263 = vunpack.c.0.s8 %v4262
      %v4264 = vlaneseq
      %v4265 = vshrl.u32 %v4264, 7
      %v4266 = vsub.s32 %v4263, %v4265
      %v4267 = vrot.slane %v4259, %v4266
      %v4269 = vunpack.c.l.s4 1983009808
      %v4270 = vunpack.c.0.s8 %v4269
      %v4271 = vlaneseq
      %v4272 = vshrl.u32 %v4271, 7
      %v4273 = vsub.s32 %v4270, %v4272
      %v4274 = vrot.slane %v4260, %v4273
      %v4275 = vcombine.low %v4267, %v4274
      %v4276 = vcombine.low %v4026, %v4025
      %v4277 = vcombine.low %v4034, %v4042
      %v4279 = vunpack.c.l.s4 1983009808
      %v4280 = vunpack.c.0.s8 %v4279
      %v4281 = vlaneseq
      %v4282 = vshrl.u32 %v4281, 7
      %v4283 = vsub.s32 %v4280, %v4282
      %v4284 = vrot.slane %v4276, %v4283
      %v4286 = vunpack.c.l.s4 1983009808
      %v4287 = vunpack.c.0.s8 %v4286
      %v4288 = vlaneseq
      %v4289 = vshrl.u32 %v4288, 7
      %v4290 = vsub.s32 %v4287, %v4289
      %v4291 = vrot.slane %v4277, %v4290
      %v4292 = vcombine.low %v4284, %v4291
      %v4293 = vcombine.low %v4041, %v4043
      %v4294 = vcombine.low %v4051, %v4059
      %v4296 = vunpack.c.l.s4 1983009808
      %v4297 = vunpack.c.0.s8 %v4296
      %v4298 = vlaneseq
      %v4299 = vshrl.u32 %v4298, 7
      %v4300 = vsub.s32 %v4297, %v4299
      %v4301 = vrot.slane %v4293, %v4300
      %v4303 = vunpack.c.l.s4 1983009808
      %v4304 = vunpack.c.0.s8 %v4303
      %v4305 = vlaneseq
      %v4306 = vshrl.u32 %v4305, 7
      %v4307 = vsub.s32 %v4304, %v4306
      %v4308 = vrot.slane %v4294, %v4307
      %v4309 = vcombine.low %v4301, %v4308
      %v4310 = vcombine.low %v4058, %v4067
      %v4311 = vcombine.low %v4075, %v4074
      %v4313 = vunpack.c.l.s4 1983009808
      %v4314 = vunpack.c.0.s8 %v4313
      %v4315 = vlaneseq
      %v4316 = vshrl.u32 %v4315, 7
      %v4317 = vsub.s32 %v4314, %v4316
      %v4318 = vrot.slane %v4310, %v4317
      %v4320 = vunpack.c.l.s4 1983009808
      %v4321 = vunpack.c.0.s8 %v4320
      %v4322 = vlaneseq
      %v4323 = vshrl.u32 %v4322, 7
      %v4324 = vsub.s32 %v4321, %v4323
      %v4325 = vrot.slane %v4311, %v4324
      %v4326 = vcombine.low %v4318, %v4325
      %v4327 = vcombine.low %v4076, %v4084
      %v4328 = vcombine.low %v4092, %v4091
      %v4330 = vunpack.c.l.s4 1983009808
      %v4331 = vunpack.c.0.s8 %v4330
      %v4332 = vlaneseq
      %v4333 = vshrl.u32 %v4332, 7
      %v4334 = vsub.s32 %v4331, %v4333
      %v4335 = vrot.slane %v4327, %v4334
      %v4337 = vunpack.c.l.s4 1983009808
      %v4338 = vunpack.c.0.s8 %v4337
      %v4339 = vlaneseq
      %v4340 = vshrl.u32 %v4339, 7
      %v4341 = vsub.s32 %v4338, %v4340
      %v4342 = vrot.slane %v4328, %v4341
      %v4343 = vcombine.low %v4335, %v4342
      %v4344 = vcombine.low %v4100, %v4108
      %v4345 = vcombine.low %v4107, %v4109
      %v4347 = vunpack.c.l.s4 1983009808
      %v4348 = vunpack.c.0.s8 %v4347
      %v4349 = vlaneseq
      %v4350 = vshrl.u32 %v4349, 7
      %v4351 = vsub.s32 %v4348, %v4350
      %v4352 = vrot.slane %v4344, %v4351
      %v4354 = vunpack.c.l.s4 1983009808
      %v4355 = vunpack.c.0.s8 %v4354
      %v4356 = vlaneseq
      %v4357 = vshrl.u32 %v4356, 7
      %v4358 = vsub.s32 %v4355, %v4357
      %v4359 = vrot.slane %v4345, %v4358
      %v4360 = vcombine.low %v4352, %v4359
      %v4361 = vcombine.low %v4117, %v4125
      %v4362 = vcombine.low %v4124, %v4133
      %v4364 = vunpack.c.l.s4 1983009808
      %v4365 = vunpack.c.0.s8 %v4364
      %v4366 = vlaneseq
      %v4367 = vshrl.u32 %v4366, 7
      %v4368 = vsub.s32 %v4365, %v4367
      %v4369 = vrot.slane %v4361, %v4368
      %v4371 = vunpack.c.l.s4 1983009808
      %v4372 = vunpack.c.0.s8 %v4371
      %v4373 = vlaneseq
      %v4374 = vshrl.u32 %v4373, 7
      %v4375 = vsub.s32 %v4372, %v4374
      %v4376 = vrot.slane %v4362, %v4375
      %v4377 = vcombine.low %v4369, %v4376
      %v4378 = vcombine.low %v4141, %v4140
      %v4379 = vcombine.low %v4142, %v4150
      %v4381 = vunpack.c.l.s4 1983009808
      %v4382 = vunpack.c.0.s8 %v4381
      %v4383 = vlaneseq
      %v4384 = vshrl.u32 %v4383, 7
      %v4385 = vsub.s32 %v4382, %v4384
      %v4386 = vrot.slane %v4378, %v4385
      %v4388 = vunpack.c.l.s4 1983009808
      %v4389 = vunpack.c.0.s8 %v4388
      %v4390 = vlaneseq
      %v4391 = vshrl.u32 %v4390, 7
      %v4392 = vsub.s32 %v4389, %v4391
      %v4393 = vrot.slane %v4379, %v4392
      %v4394 = vcombine.low %v4386, %v4393
      %v4395 = vcombine.low %v4158, %v4157
      %v4396 = vcombine.low %v4166, %v4174
      %v4398 = vunpack.c.l.s4 1983009808
      %v4399 = vunpack.c.0.s8 %v4398
      %v4400 = vlaneseq
      %v4401 = vshrl.u32 %v4400, 7
      %v4402 = vsub.s32 %v4399, %v4401
      %v4403 = vrot.slane %v4395, %v4402
      %v4405 = vunpack.c.l.s4 1983009808
      %v4406 = vunpack.c.0.s8 %v4405
      %v4407 = vlaneseq
      %v4408 = vshrl.u32 %v4407, 7
      %v4409 = vsub.s32 %v4406, %v4408
      %v4410 = vrot.slane %v4396, %v4409
      %v4411 = vcombine.low %v4403, %v4410
      %v4412 = vcombine.low %v4173, %v4175
      %v4413 = vcombine.low %v4183, %v4191
      %v4415 = vunpack.c.l.s4 1983009808
      %v4416 = vunpack.c.0.s8 %v4415
      %v4417 = vlaneseq
      %v4418 = vshrl.u32 %v4417, 7
      %v4419 = vsub.s32 %v4416, %v4418
      %v4420 = vrot.slane %v4412, %v4419
      %v4422 = vunpack.c.l.s4 1983009808
      %v4423 = vunpack.c.0.s8 %v4422
      %v4424 = vlaneseq
      %v4425 = vshrl.u32 %v4424, 7
      %v4426 = vsub.s32 %v4423, %v4425
      %v4427 = vrot.slane %v4413, %v4426
      %v4428 = vcombine.low %v4420, %v4427
      %v4429 = vcombine.low %v4190, %v4199
      %v4430 = vcombine.low %v4207, %v4206
      %v4432 = vunpack.c.l.s4 1983009808
      %v4433 = vunpack.c.0.s8 %v4432
      %v4434 = vlaneseq
      %v4435 = vshrl.u32 %v4434, 7
      %v4436 = vsub.s32 %v4433, %v4435
      %v4437 = vrot.slane %v4429, %v4436
      %v4439 = vunpack.c.l.s4 1983009808
      %v4440 = vunpack.c.0.s8 %v4439
      %v4441 = vlaneseq
      %v4442 = vshrl.u32 %v4441, 7
      %v4443 = vsub.s32 %v4440, %v4442
      %v4444 = vrot.slane %v4430, %v4443
      %v4445 = vcombine.low %v4437, %v4444
      %v4446 = vcombine.low %v4208, %v4216
      %v4447 = vcombine.low %v4224, %v4223
      %v4449 = vunpack.c.l.s4 1983009808
      %v4450 = vunpack.c.0.s8 %v4449
      %v4451 = vlaneseq
      %v4452 = vshrl.u32 %v4451, 7
      %v4453 = vsub.s32 %v4450, %v4452
      %v4454 = vrot.slane %v4446, %v4453
      %v4456 = vunpack.c.l.s4 1983009808
      %v4457 = vunpack.c.0.s8 %v4456
      %v4458 = vlaneseq
      %v4459 = vshrl.u32 %v4458, 7
      %v4460 = vsub.s32 %v4457, %v4459
      %v4461 = vrot.slane %v4447, %v4460
      %v4462 = vcombine.low %v4454, %v4461
      %v4477 = vpack.c.bf16 %v4258, %v4241
      %v4478 = vpack.c.bf16 %v4292, %v4275
      %v4479 = vpack.c.bf16 %v4326, %v4309
      %v4480 = vpack.c.bf16 %v4360, %v4343
      %v4481 = vpack.c.bf16 %v4394, %v4377
      %v4482 = vpack.c.bf16 %v4428, %v4411
      %v4483 = vpack.c.bf16 %v4462, %v4445
      %v4484 = vld [vmem:[%s3] sm:$0xff]
      %v4485 = vld [vmem:[%s3 + $0x8] sm:$0xff]
      %v4486 = vld [vmem:[%s3 + $0x10] sm:$0xff]
      %v4487 = vld [vmem:[%s3 + $0x18] sm:$0xf]
      %v4488 = vld [vmem:[%s3 + $0x1c] sm:$0xff]
      %v4489 = vld [vmem:[%s3 + $0x24] sm:$0xff]
      %v4490 = vld [vmem:[%s3 + $0x2c] sm:$0xff]
      %v4491 = vld [vmem:[%s3 + $0x34] sm:$0xf]
      %v4492 = vld [vmem:[%s3 + $0x38] sm:$0xff]
      %v4493 = vld [vmem:[%s3 + $0x40] sm:$0xff]
      %v4494 = vld [vmem:[%s3 + $0x48] sm:$0xff]
      %v4495 = vld [vmem:[%s3 + $0x50] sm:$0xf]
      %v4496 = vld [vmem:[%s3 + $0x54] sm:$0xff]
      %v4497 = vld [vmem:[%s3 + $0x5c] sm:$0xff]
      %v4498 = vld [vmem:[%s3 + $0x64] sm:$0xff]
      %v4499 = vld [vmem:[%s3 + $0x6c] sm:$0xf]
      %v4500 = vld [vmem:[%s3 + $0x70] sm:$0xff]
      %v4501 = vld [vmem:[%s3 + $0x78] sm:$0xff]
      %v4502 = vld [vmem:[%s3 + $0x80] sm:$0xff]
      %v4503 = vld [vmem:[%s3 + $0x88] sm:$0xf]
      %v4504 = vld [vmem:[%s3 + $0x8c] sm:$0xff]
      %v4505 = vld [vmem:[%s3 + $0x94] sm:$0xff]
      %v4506 = vld [vmem:[%s3 + $0x9c] sm:$0xff]
      %v4507 = vld [vmem:[%s3 + $0xa4] sm:$0xf]
      %v4508 = vld [vmem:[%s3 + $0xa8] sm:$0xff]
      %v4509 = vld [vmem:[%s3 + $0xb0] sm:$0xff]
      %v4510 = vld [vmem:[%s3 + $0xb8] sm:$0xff]
      %v4511 = vld [vmem:[%s3 + $0xc0] sm:$0xf]
      %v4512 = vld [vmem:[%s3 + $0xc4] sm:$0xff]
      %v4513 = vld [vmem:[%s3 + $0xcc] sm:$0xff]
      %v4514 = vld [vmem:[%s3 + $0xd4] sm:$0xff]
      %v4515 = vld [vmem:[%s3 + $0xdc] sm:$0xf]
      %v4516 = vld [vmem:[%s3 + $0xe0] sm:$0xff]
      %v4517 = vld [vmem:[%s3 + $0xe8] sm:$0xff]
      %v4518 = vld [vmem:[%s3 + $0xf0] sm:$0xff]
      %v4519 = vld [vmem:[%s3 + $0xf8] sm:$0xf]
      %v4520 = vld [vmem:[%s3 + $0xfc] sm:$0xff]
      %v4521 = vld [vmem:[%s3 + $0x104] sm:$0xff]
      %v4522 = vld [vmem:[%s3 + $0x10c] sm:$0xff]
      %v4523 = vld [vmem:[%s3 + $0x114] sm:$0xf]
      %v4524 = vld [vmem:[%s3 + $0x118] sm:$0x33]
      %v4525 = vld [vmem:[%s3 + $0x120] sm:$0x33]
      %v4526 = vld [vmem:[%s3 + $0x128] sm:$0x33]
      %v4527 = vld [vmem:[%s3 + $0x130] sm:$0x3]
      %v4572 = vunpack.c.l.b16 %v4484
      %v4573 = vunpack.c.h.b16 %v4484
      %v4574 = vunpack.c.l.b16 %v4485
      %v4575 = vunpack.c.h.b16 %v4485
      %v4576 = vunpack.c.l.b16 %v4486
      %v4577 = vunpack.c.h.b16 %v4486
      %v4578 = vunpack.c.l.b16 %v4487
      %v4579 = vunpack.c.l.b16 %v4488
      %v4580 = vunpack.c.h.b16 %v4488
      %v4581 = vunpack.c.l.b16 %v4489
      %v4582 = vunpack.c.h.b16 %v4489
      %v4583 = vunpack.c.l.b16 %v4490
      %v4584 = vunpack.c.h.b16 %v4490
      %v4585 = vunpack.c.l.b16 %v4491
      %v4586 = vunpack.c.l.b16 %v4492
      %v4587 = vunpack.c.h.b16 %v4492
      %v4588 = vunpack.c.l.b16 %v4493
      %v4589 = vunpack.c.h.b16 %v4493
      %v4590 = vunpack.c.l.b16 %v4494
      %v4591 = vunpack.c.h.b16 %v4494
      %v4592 = vunpack.c.l.b16 %v4495
      %v4593 = vunpack.c.l.b16 %v4496
      %v4594 = vunpack.c.h.b16 %v4496
      %v4595 = vunpack.c.l.b16 %v4497
      %v4596 = vunpack.c.h.b16 %v4497
      %v4597 = vunpack.c.l.b16 %v4498
      %v4598 = vunpack.c.h.b16 %v4498
      %v4599 = vunpack.c.l.b16 %v4499
      %v4600 = vunpack.c.l.b16 %v4500
      %v4601 = vunpack.c.h.b16 %v4500
      %v4602 = vunpack.c.l.b16 %v4501
      %v4603 = vunpack.c.h.b16 %v4501
      %v4604 = vunpack.c.l.b16 %v4502
      %v4605 = vunpack.c.h.b16 %v4502
      %v4606 = vunpack.c.l.b16 %v4503
      %v4607 = vunpack.c.l.b16 %v4504
      %v4608 = vunpack.c.h.b16 %v4504
      %v4609 = vunpack.c.l.b16 %v4505
      %v4610 = vunpack.c.h.b16 %v4505
      %v4611 = vunpack.c.l.b16 %v4506
      %v4612 = vunpack.c.h.b16 %v4506
      %v4613 = vunpack.c.l.b16 %v4507
      %v4614 = vunpack.c.l.b16 %v4508
      %v4615 = vunpack.c.h.b16 %v4508
      %v4616 = vunpack.c.l.b16 %v4509
      %v4617 = vunpack.c.h.b16 %v4509
      %v4618 = vunpack.c.l.b16 %v4510
      %v4619 = vunpack.c.h.b16 %v4510
      %v4620 = vunpack.c.l.b16 %v4511
      %v4621 = vunpack.c.l.b16 %v4512
      %v4622 = vunpack.c.h.b16 %v4512
      %v4623 = vunpack.c.l.b16 %v4513
      %v4624 = vunpack.c.h.b16 %v4513
      %v4625 = vunpack.c.l.b16 %v4514
      %v4626 = vunpack.c.h.b16 %v4514
      %v4627 = vunpack.c.l.b16 %v4515
      %v4628 = vunpack.c.l.b16 %v4516
      %v4629 = vunpack.c.h.b16 %v4516
      %v4630 = vunpack.c.l.b16 %v4517
      %v4631 = vunpack.c.h.b16 %v4517
      %v4632 = vunpack.c.l.b16 %v4518
      %v4633 = vunpack.c.h.b16 %v4518
      %v4634 = vunpack.c.l.b16 %v4519
      %v4635 = vunpack.c.l.b16 %v4520
      %v4636 = vunpack.c.h.b16 %v4520
      %v4637 = vunpack.c.l.b16 %v4521
      %v4638 = vunpack.c.h.b16 %v4521
      %v4639 = vunpack.c.l.b16 %v4522
      %v4640 = vunpack.c.h.b16 %v4522
      %v4641 = vunpack.c.l.b16 %v4523
      %v4642 = vunpack.c.l.b16 %v4524
      %v4643 = vunpack.c.h.b16 %v4524
      %v4644 = vunpack.c.l.b16 %v4525
      %v4645 = vunpack.c.h.b16 %v4525
      %v4646 = vunpack.c.l.b16 %v4526
      %v4647 = vunpack.c.h.b16 %v4526
      %v4648 = vunpack.c.l.b16 %v4527
      %v4649 = vpack.c.b16 %v4579, %v4572
      %v4650 = vpack.c.b16 %v4580, %v4573
      %v4651 = vpack.c.b16 %v4581, %v4574
      %v4652 = vpack.c.b16 %v4582, %v4575
      %v4653 = vpack.c.b16 %v4583, %v4576
      %v4654 = vpack.c.b16 %v4584, %v4577
      %v4655 = vpack.c.b16 %v4585, %v4578
      %v4656 = vpack.c.b16 %v4593, %v4586
      %v4657 = vpack.c.b16 %v4594, %v4587
      %v4658 = vpack.c.b16 %v4595, %v4588
      %v4659 = vpack.c.b16 %v4596, %v4589
      %v4660 = vpack.c.b16 %v4597, %v4590
      %v4661 = vpack.c.b16 %v4598, %v4591
      %v4662 = vpack.c.b16 %v4599, %v4592
      %v4663 = vpack.c.b16 %v4607, %v4600
      %v4664 = vpack.c.b16 %v4608, %v4601
      %v4665 = vpack.c.b16 %v4609, %v4602
      %v4666 = vpack.c.b16 %v4610, %v4603
      %v4667 = vpack.c.b16 %v4611, %v4604
      %v4668 = vpack.c.b16 %v4612, %v4605
      %v4669 = vpack.c.b16 %v4613, %v4606
      %v4670 = vpack.c.b16 %v4621, %v4614
      %v4671 = vpack.c.b16 %v4622, %v4615
      %v4672 = vpack.c.b16 %v4623, %v4616
      %v4673 = vpack.c.b16 %v4624, %v4617
      %v4674 = vpack.c.b16 %v4625, %v4618
      %v4675 = vpack.c.b16 %v4626, %v4619
      %v4676 = vpack.c.b16 %v4627, %v4620
      %v4677 = vpack.c.b16 %v4635, %v4628
      %v4678 = vpack.c.b16 %v4636, %v4629
      %v4679 = vpack.c.b16 %v4637, %v4630
      %v4680 = vpack.c.b16 %v4638, %v4631
      %v4681 = vpack.c.b16 %v4639, %v4632
      %v4682 = vpack.c.b16 %v4640, %v4633
      %v4683 = vpack.c.b16 %v4641, %v4634
      %v4684 = vpack.c.b16 %v4642, %v4642
      %v4685 = vpack.c.b16 %v4643, %v4643
      %v4686 = vpack.c.b16 %v4644, %v4644
      %v4687 = vpack.c.b16 %v4645, %v4645
      %v4688 = vpack.c.b16 %v4646, %v4646
      %v4689 = vpack.c.b16 %v4647, %v4647
      %v4690 = vpack.c.b16 %v4648, %v4648
      %v4727 = vsel %vm3793, %v4477, 0
      %v4730 = vsel %vm3793, %v4478, 0
      %v4733 = vsel %vm3793, %v4479, 0
      %v4736 = vsel %vm3793, %v4480, 0
      %v4739 = vsel %vm3793, %v4481, 0
      %v4742 = vsel %vm3793, %v4482, 0
      %v4745 = vsel %vm3793, %v4483, 0
      %vm4747 = vcmask 1041408
      %v4749 = vsel %vm4747, %v4684, 0
      %v4752 = vsel %vm4747, %v4685, 0
      %v4755 = vsel %vm4747, %v4686, 0
      %v4758 = vsel %vm4747, %v4687, 0
      %v4761 = vsel %vm4747, %v4688, 0
      %v4764 = vsel %vm4747, %v4689, 0
      %v4767 = vsel %vm4747, %v4690, 0
      %4769 = vmatprep.subr.bf16.mxu0 %v4650
      %4770 = vmatpush1.bf16.msra.mxu0 %v4649
      %4771 = vmatprep.subr.bf16.mxu0 %v4657
      %4772 = vmatpush1.bf16.msra.mxu0 %v4656
      %4773 = vmatprep.subr.bf16.mxu0 %v4664
      %4774 = vmatpush1.bf16.msra.mxu0 %v4663
      %4775 = vmatprep.subr.bf16.mxu0 %v4671
      %4776 = vmatpush1.bf16.msra.mxu0 %v4670
      %4777 = vmatprep.subr.bf16.mxu0 %v4678
      %4778 = vmatpush1.bf16.msra.mxu0 %v4677
      %4779 = vmatprep.subr.bf16.mxu0 %v4752
      %4780 = vmatpush1.bf16.msra.mxu0 %v4749
      %4781 = vmatprep.subr.bf16.mxu0 0
      %4782 = vmatpush1.bf16.msra.mxu0 0
      %4783 = vmatprep.subr.bf16.mxu0 0
      %4784 = vmatpush1.bf16.msra.mxu0 0
      %4785 = vmatprep.subr.bf16.mxu0 0
      %4786 = vmatpush1.bf16.msra.mxu0 0
      %4787 = vmatprep.subr.bf16.mxu0 0
      %4788 = vmatpush1.bf16.msra.mxu0 0
      %4789 = vmatprep.subr.bf16.mxu0 0
      %4790 = vmatpush1.bf16.msra.mxu0 0
      %4791 = vmatprep.subr.bf16.mxu0 0
      %4792 = vmatpush1.bf16.msra.mxu0 0
      %4793 = vmatprep.subr.bf16.mxu0 0
      %4794 = vmatpush1.bf16.msra.mxu0 0
      %4795 = vmatprep.subr.bf16.mxu0 0
      %4796 = vmatpush1.bf16.msra.mxu0 0
      %4797 = vmatprep.subr.bf16.mxu0 0
      %4798 = vmatpush1.bf16.msra.mxu0 0
      %4799 = vmatprep.subr.bf16.mxu0 0
      %4800 = vmatpush1.bf16.msra.mxu0 0
      %4801 = vmatprep.mubr.bf16.mxu0 0
      %4802 = vmatmul.mubr.bf16.gmra.mrb[0].mxu0 %v4727
      %v4803 = vpop.f32.mrb[0].mxu0
      %v4804 = vadd.f32 0.0, %v4803
      %v4805 = vpop.f32.mrb[0].mxu0
      %v4806 = vadd.f32 0.0, %v4805
      %v4807 = vpop.f32.mrb[0].mxu0
      %v4808 = vadd.f32 0.0, %v4807
      %v4809 = vpop.f32.mrb[0].mxu0
      %v4810 = vadd.f32 0.0, %v4809
      %4811 = vmatprep.mubr.bf16.mxu0 0
      %4812 = vmatmul.mubr.bf16.gmra.mrb[0].mxu0 %v4730
      %v4813 = vpop.f32.mrb[0].mxu0
      %v4814 = vadd.f32 0.0, %v4813
      %v4815 = vpop.f32.mrb[0].mxu0
      %v4816 = vadd.f32 0.0, %v4815
      %v4817 = vpop.f32.mrb[0].mxu0
      %v4818 = vadd.f32 0.0, %v4817
      %v4819 = vpop.f32.mrb[0].mxu0
      %v4820 = vadd.f32 0.0, %v4819
      %4821 = vmatprep.mubr.bf16.mxu0 0
      %4822 = vmatmul.mubr.bf16.gmra.mrb[0].mxu0 %v4733
      %v4823 = vpop.f32.mrb[0].mxu0
      %v4824 = vadd.f32 0.0, %v4823
      %v4825 = vpop.f32.mrb[0].mxu0
      %v4826 = vadd.f32 0.0, %v4825
      %v4827 = vpop.f32.mrb[0].mxu0
      %v4828 = vadd.f32 0.0, %v4827
      %v4829 = vpop.f32.mrb[0].mxu0
      %v4830 = vadd.f32 0.0, %v4829
      %4831 = vmatprep.mubr.bf16.mxu0 0
      %4832 = vmatmul.mubr.bf16.gmra.mrb[0].mxu0 %v4736
      %v4833 = vpop.f32.mrb[0].mxu0
      %v4834 = vadd.f32 0.0, %v4833
      %v4835 = vpop.f32.mrb[0].mxu0
      %v4836 = vadd.f32 0.0, %v4835
      %v4837 = vpop.f32.mrb[0].mxu0
      %v4838 = vadd.f32 0.0, %v4837
      %v4839 = vpop.f32.mrb[0].mxu0
      %v4840 = vadd.f32 0.0, %v4839
      %4841 = vmatprep.mubr.bf16.mxu0 0
      %4842 = vmatmul.mubr.bf16.gmra.mrb[0].mxu0 %v4739
      %v4843 = vpop.f32.mrb[0].mxu0
      %v4844 = vadd.f32 0.0, %v4843
      %v4845 = vpop.f32.mrb[0].mxu0
      %v4846 = vadd.f32 0.0, %v4845
      %v4847 = vpop.f32.mrb[0].mxu0
      %v4848 = vadd.f32 0.0, %v4847
      %v4849 = vpop.f32.mrb[0].mxu0
      %v4850 = vadd.f32 0.0, %v4849
      %4851 = vmatprep.mubr.bf16.mxu0 0
      %4852 = vmatmul.mubr.bf16.gmra.mrb[0].mxu0 %v4742
      %v4853 = vpop.f32.mrb[0].mxu0
      %v4854 = vadd.f32 0.0, %v4853
      %v4855 = vpop.f32.mrb[0].mxu0
      %v4856 = vadd.f32 0.0, %v4855
      %v4857 = vpop.f32.mrb[0].mxu0
      %v4858 = vadd.f32 0.0, %v4857
      %v4859 = vpop.f32.mrb[0].mxu0
      %v4860 = vadd.f32 0.0, %v4859
      %4861 = vmatprep.mubr.bf16.mxu0 0
      %4862 = vmatmul.mubr.bf16.gmra.mrb[0].mxu0 %v4745
      %v4863 = vpop.f32.mrb[0].mxu0
      %v4864 = vadd.f32 0.0, %v4863
      %v4865 = vpop.f32.mrb[0].mxu0
      %v4866 = vadd.f32 0.0, %v4865
      %v4867 = vpop.f32.mrb[0].mxu0
      %v4868 = vadd.f32 0.0, %v4867
      %v4869 = vpop.f32.mrb[0].mxu0
      %v4870 = vadd.f32 0.0, %v4869
      %4871 = vdwg.mxu0
      %4872 = vmatprep.subr.bf16.mxu0 %v4652
      %4873 = vmatpush1.bf16.msra.mxu0 %v4651
      %4874 = vmatprep.subr.bf16.mxu0 %v4659
      %4875 = vmatpush1.bf16.msra.mxu0 %v4658
      %4876 = vmatprep.subr.bf16.mxu0 %v4666
      %4877 = vmatpush1.bf16.msra.mxu0 %v4665
      %4878 = vmatprep.subr.bf16.mxu0 %v4673
      %4879 = vmatpush1.bf16.msra.mxu0 %v4672
      %4880 = vmatprep.subr.bf16.mxu0 %v4680
      %4881 = vmatpush1.bf16.msra.mxu0 %v4679
      %4882 = vmatprep.subr.bf16.mxu0 %v4758
      %4883 = vmatpush1.bf16.msra.mxu0 %v4755
      %4884 = vmatprep.subr.bf16.mxu0 0
      %4885 = vmatpush1.bf16.msra.mxu0 0
      %4886 = vmatprep.subr.bf16.mxu0 0
      %4887 = vmatpush1.bf16.msra.mxu0 0
      %4888 = vmatprep.subr.bf16.mxu0 0
      %4889 = vmatpush1.bf16.msra.mxu0 0
      %4890 = vmatprep.subr.bf16.mxu0 0
      %4891 = vmatpush1.bf16.msra.mxu0 0
      %4892 = vmatprep.subr.bf16.mxu0 0
      %4893 = vmatpush1.bf16.msra.mxu0 0
      %4894 = vmatprep.subr.bf16.mxu0 0
      %4895 = vmatpush1.bf16.msra.mxu0 0
      %4896 = vmatprep.subr.bf16.mxu0 0
      %4897 = vmatpush1.bf16.msra.mxu0 0
      %4898 = vmatprep.subr.bf16.mxu0 0
      %4899 = vmatpush1.bf16.msra.mxu0 0
      %4900 = vmatprep.subr.bf16.mxu0 0
      %4901 = vmatpush1.bf16.msra.mxu0 0
      %4902 = vmatprep.subr.bf16.mxu0 0
      %4903 = vmatpush1.bf16.msra.mxu0 0
      %4904 = vmatprep.mubr.bf16.mxu0 0
      %4905 = vmatmul.mubr.bf16.gmra.mrb[0].mxu0 %v4727
      %v4906 = vpop.f32.mrb[0].mxu0
      %v4907 = vadd.f32 0.0, %v4906
      %v4908 = vpop.f32.mrb[0].mxu0
      %v4909 = vadd.f32 0.0, %v4908
      %v4910 = vpop.f32.mrb[0].mxu0
      %v4911 = vadd.f32 0.0, %v4910
      %v4912 = vpop.f32.mrb[0].mxu0
      %v4913 = vadd.f32 0.0, %v4912
      %4914 = vmatprep.mubr.bf16.mxu0 0
      %4915 = vmatmul.mubr.bf16.gmra.mrb[0].mxu0 %v4730
      %v4916 = vpop.f32.mrb[0].mxu0
      %v4917 = vadd.f32 0.0, %v4916
      %v4918 = vpop.f32.mrb[0].mxu0
      %v4919 = vadd.f32 0.0, %v4918
      %v4920 = vpop.f32.mrb[0].mxu0
      %v4921 = vadd.f32 0.0, %v4920
      %v4922 = vpop.f32.mrb[0].mxu0
      %v4923 = vadd.f32 0.0, %v4922
      %4924 = vmatprep.mubr.bf16.mxu0 0
      %4925 = vmatmul.mubr.bf16.gmra.mrb[0].mxu0 %v4733
      %v4926 = vpop.f32.mrb[0].mxu0
      %v4927 = vadd.f32 0.0, %v4926
      %v4928 = vpop.f32.mrb[0].mxu0
      %v4929 = vadd.f32 0.0, %v4928
      %v4930 = vpop.f32.mrb[0].mxu0
      %v4931 = vadd.f32 0.0, %v4930
      %v4932 = vpop.f32.mrb[0].mxu0
      %v4933 = vadd.f32 0.0, %v4932
      %4934 = vmatprep.mubr.bf16.mxu0 0
      %4935 = vmatmul.mubr.bf16.gmra.mrb[0].mxu0 %v4736
      %v4936 = vpop.f32.mrb[0].mxu0
      %v4937 = vadd.f32 0.0, %v4936
      %v4938 = vpop.f32.mrb[0].mxu0
      %v4939 = vadd.f32 0.0, %v4938
      %v4940 = vpop.f32.mrb[0].mxu0
      %v4941 = vadd.f32 0.0, %v4940
      %v4942 = vpop.f32.mrb[0].mxu0
      %v4943 = vadd.f32 0.0, %v4942
      %4944 = vmatprep.mubr.bf16.mxu0 0
      %4945 = vmatmul.mubr.bf16.gmra.mrb[0].mxu0 %v4739
      %v4946 = vpop.f32.mrb[0].mxu0
      %v4947 = vadd.f32 0.0, %v4946
      %v4948 = vpop.f32.mrb[0].mxu0
      %v4949 = vadd.f32 0.0, %v4948
      %v4950 = vpop.f32.mrb[0].mxu0
      %v4951 = vadd.f32 0.0, %v4950
      %v4952 = vpop.f32.mrb[0].mxu0
      %v4953 = vadd.f32 0.0, %v4952
      %4954 = vmatprep.mubr.bf16.mxu0 0
      %4955 = vmatmul.mubr.bf16.gmra.mrb[0].mxu0 %v4742
      %v4956 = vpop.f32.mrb[0].mxu0
      %v4957 = vadd.f32 0.0, %v4956
      %v4958 = vpop.f32.mrb[0].mxu0
      %v4959 = vadd.f32 0.0, %v4958
      %v4960 = vpop.f32.mrb[0].mxu0
      %v4961 = vadd.f32 0.0, %v4960
      %v4962 = vpop.f32.mrb[0].mxu0
      %v4963 = vadd.f32 0.0, %v4962
      %4964 = vmatprep.mubr.bf16.mxu0 0
      %4965 = vmatmul.mubr.bf16.gmra.mrb[0].mxu0 %v4745
      %v4966 = vpop.f32.mrb[0].mxu0
      %v4967 = vadd.f32 0.0, %v4966
      %v4968 = vpop.f32.mrb[0].mxu0
      %v4969 = vadd.f32 0.0, %v4968
      %v4970 = vpop.f32.mrb[0].mxu0
      %v4971 = vadd.f32 0.0, %v4970
      %v4972 = vpop.f32.mrb[0].mxu0
      %v4973 = vadd.f32 0.0, %v4972
      %4974 = vdwg.mxu0
      %4975 = vmatprep.subr.bf16.mxu0 %v4654
      %4976 = vmatpush1.bf16.msra.mxu0 %v4653
      %4977 = vmatprep.subr.bf16.mxu0 %v4661
      %4978 = vmatpush1.bf16.msra.mxu0 %v4660
      %4979 = vmatprep.subr.bf16.mxu0 %v4668
      %4980 = vmatpush1.bf16.msra.mxu0 %v4667
      %4981 = vmatprep.subr.bf16.mxu0 %v4675
      %4982 = vmatpush1.bf16.msra.mxu0 %v4674
      %4983 = vmatprep.subr.bf16.mxu0 %v4682
      %4984 = vmatpush1.bf16.msra.mxu0 %v4681
      %4985 = vmatprep.subr.bf16.mxu0 %v4764
      %4986 = vmatpush1.bf16.msra.mxu0 %v4761
      %4987 = vmatprep.subr.bf16.mxu0 0
      %4988 = vmatpush1.bf16.msra.mxu0 0
      %4989 = vmatprep.subr.bf16.mxu0 0
      %4990 = vmatpush1.bf16.msra.mxu0 0
      %4991 = vmatprep.subr.bf16.mxu0 0
      %4992 = vmatpush1.bf16.msra.mxu0 0
      %4993 = vmatprep.subr.bf16.mxu0 0
      %4994 = vmatpush1.bf16.msra.mxu0 0
      %4995 = vmatprep.subr.bf16.mxu0 0
      %4996 = vmatpush1.bf16.msra.mxu0 0
      %4997 = vmatprep.subr.bf16.mxu0 0
      %4998 = vmatpush1.bf16.msra.mxu0 0
      %4999 = vmatprep.subr.bf16.mxu0 0
      %5000 = vmatpush1.bf16.msra.mxu0 0
      %5001 = vmatprep.subr.bf16.mxu0 0
      %5002 = vmatpush1.bf16.msra.mxu0 0
      %5003 = vmatprep.subr.bf16.mxu0 0
      %5004 = vmatpush1.bf16.msra.mxu0 0
      %5005 = vmatprep.subr.bf16.mxu0 0
      %5006 = vmatpush1.bf16.msra.mxu0 0
      %5007 = vmatprep.mubr.bf16.mxu0 0
      %5008 = vmatmul.mubr.bf16.gmra.mrb[0].mxu0 %v4727
      %v5009 = vpop.f32.mrb[0].mxu0
      %v5010 = vadd.f32 0.0, %v5009
      %v5011 = vpop.f32.mrb[0].mxu0
      %v5012 = vadd.f32 0.0, %v5011
      %v5013 = vpop.f32.mrb[0].mxu0
      %v5014 = vadd.f32 0.0, %v5013
      %v5015 = vpop.f32.mrb[0].mxu0
      %v5016 = vadd.f32 0.0, %v5015
      %5017 = vmatprep.mubr.bf16.mxu0 0
      %5018 = vmatmul.mubr.bf16.gmra.mrb[0].mxu0 %v4730
      %v5019 = vpop.f32.mrb[0].mxu0
      %v5020 = vadd.f32 0.0, %v5019
      %v5021 = vpop.f32.mrb[0].mxu0
      %v5022 = vadd.f32 0.0, %v5021
      %v5023 = vpop.f32.mrb[0].mxu0
      %v5024 = vadd.f32 0.0, %v5023
      %v5025 = vpop.f32.mrb[0].mxu0
      %v5026 = vadd.f32 0.0, %v5025
      %5027 = vmatprep.mubr.bf16.mxu0 0
      %5028 = vmatmul.mubr.bf16.gmra.mrb[0].mxu0 %v4733
      %v5029 = vpop.f32.mrb[0].mxu0
      %v5030 = vadd.f32 0.0, %v5029
      %v5031 = vpop.f32.mrb[0].mxu0
      %v5032 = vadd.f32 0.0, %v5031
      %v5033 = vpop.f32.mrb[0].mxu0
      %v5034 = vadd.f32 0.0, %v5033
      %v5035 = vpop.f32.mrb[0].mxu0
      %v5036 = vadd.f32 0.0, %v5035
      %5037 = vmatprep.mubr.bf16.mxu0 0
      %5038 = vmatmul.mubr.bf16.gmra.mrb[0].mxu0 %v4736
      %v5039 = vpop.f32.mrb[0].mxu0
      %v5040 = vadd.f32 0.0, %v5039
      %v5041 = vpop.f32.mrb[0].mxu0
      %v5042 = vadd.f32 0.0, %v5041
      %v5043 = vpop.f32.mrb[0].mxu0
      %v5044 = vadd.f32 0.0, %v5043
      %v5045 = vpop.f32.mrb[0].mxu0
      %v5046 = vadd.f32 0.0, %v5045
      %5047 = vmatprep.mubr.bf16.mxu0 0
      %5048 = vmatmul.mubr.bf16.gmra.mrb[0].mxu0 %v4739
      %v5049 = vpop.f32.mrb[0].mxu0
      %v5050 = vadd.f32 0.0, %v5049
      %v5051 = vpop.f32.mrb[0].mxu0
      %v5052 = vadd.f32 0.0, %v5051
      %v5053 = vpop.f32.mrb[0].mxu0
      %v5054 = vadd.f32 0.0, %v5053
      %v5055 = vpop.f32.mrb[0].mxu0
      %v5056 = vadd.f32 0.0, %v5055
      %5057 = vmatprep.mubr.bf16.mxu0 0
      %5058 = vmatmul.mubr.bf16.gmra.mrb[0].mxu0 %v4742
      %v5059 = vpop.f32.mrb[0].mxu0
      %v5060 = vadd.f32 0.0, %v5059
      %v5061 = vpop.f32.mrb[0].mxu0
      %v5062 = vadd.f32 0.0, %v5061
      %v5063 = vpop.f32.mrb[0].mxu0
      %v5064 = vadd.f32 0.0, %v5063
      %v5065 = vpop.f32.mrb[0].mxu0
      %v5066 = vadd.f32 0.0, %v5065
      %5067 = vmatprep.mubr.bf16.mxu0 0
      %5068 = vmatmul.mubr.bf16.gmra.mrb[0].mxu0 %v4745
      %v5069 = vpop.f32.mrb[0].mxu0
      %v5070 = vadd.f32 0.0, %v5069
      %v5071 = vpop.f32.mrb[0].mxu0
      %v5072 = vadd.f32 0.0, %v5071
      %v5073 = vpop.f32.mrb[0].mxu0
      %v5074 = vadd.f32 0.0, %v5073
      %v5075 = vpop.f32.mrb[0].mxu0
      %v5076 = vadd.f32 0.0, %v5075
      %5077 = vdwg.mxu0
      %5078 = vmatprep.subr.bf16.mxu0 0
      %5079 = vmatpush1.bf16.msra.mxu0 %v4655
      %5080 = vmatprep.subr.bf16.mxu0 0
      %5081 = vmatpush1.bf16.msra.mxu0 %v4662
      %5082 = vmatprep.subr.bf16.mxu0 0
      %5083 = vmatpush1.bf16.msra.mxu0 %v4669
      %5084 = vmatprep.subr.bf16.mxu0 0
      %5085 = vmatpush1.bf16.msra.mxu0 %v4676
      %5086 = vmatprep.subr.bf16.mxu0 0
      %5087 = vmatpush1.bf16.msra.mxu0 %v4683
      %5088 = vmatprep.subr.bf16.mxu0 0
      %5089 = vmatpush1.bf16.msra.mxu0 %v4767
      %5090 = vmatprep.subr.bf16.mxu0 0
      %5091 = vmatpush1.bf16.msra.mxu0 0
      %5092 = vmatprep.subr.bf16.mxu0 0
      %5093 = vmatpush1.bf16.msra.mxu0 0
      %5094 = vmatprep.subr.bf16.mxu0 0
      %5095 = vmatpush1.bf16.msra.mxu0 0
      %5096 = vmatprep.subr.bf16.mxu0 0
      %5097 = vmatpush1.bf16.msra.mxu0 0
      %5098 = vmatprep.subr.bf16.mxu0 0
      %5099 = vmatpush1.bf16.msra.mxu0 0
      %5100 = vmatprep.subr.bf16.mxu0 0
      %5101 = vmatpush1.bf16.msra.mxu0 0
      %5102 = vmatprep.subr.bf16.mxu0 0
      %5103 = vmatpush1.bf16.msra.mxu0 0
      %5104 = vmatprep.subr.bf16.mxu0 0
      %5105 = vmatpush1.bf16.msra.mxu0 0
      %5106 = vmatprep.subr.bf16.mxu0 0
      %5107 = vmatpush1.bf16.msra.mxu0 0
      %5108 = vmatprep.subr.bf16.mxu0 0
      %5109 = vmatpush1.bf16.msra.mxu0 0
      %5110 = vmatprep.mubr.bf16.mxu0 0
      %5111 = vmatmul.mubr.bf16.gmra.mrb[0].mxu0 %v4727
      %v5112 = vpop.f32.mrb[0].mxu0
      %v5113 = vadd.f32 0.0, %v5112
      %v5114 = vpop.f32.mrb[0].mxu0
      %v5115 = vpop.f32.mrb[0].mxu0
      %v5116 = vadd.f32 0.0, %v5115
      %v5117 = vpop.f32.mrb[0].mxu0
      %5118 = vmatprep.mubr.bf16.mxu0 0
      %5119 = vmatmul.mubr.bf16.gmra.mrb[0].mxu0 %v4730
      %v5120 = vpop.f32.mrb[0].mxu0
      %v5121 = vadd.f32 0.0, %v5120
      %v5122 = vpop.f32.mrb[0].mxu0
      %v5123 = vpop.f32.mrb[0].mxu0
      %v5124 = vadd.f32 0.0, %v5123
      %v5125 = vpop.f32.mrb[0].mxu0
      %5126 = vmatprep.mubr.bf16.mxu0 0
      %5127 = vmatmul.mubr.bf16.gmra.mrb[0].mxu0 %v4733
      %v5128 = vpop.f32.mrb[0].mxu0
      %v5129 = vadd.f32 0.0, %v5128
      %v5130 = vpop.f32.mrb[0].mxu0
      %v5131 = vpop.f32.mrb[0].mxu0
      %v5132 = vadd.f32 0.0, %v5131
      %v5133 = vpop.f32.mrb[0].mxu0
      %5134 = vmatprep.mubr.bf16.mxu0 0
      %5135 = vmatmul.mubr.bf16.gmra.mrb[0].mxu0 %v4736
      %v5136 = vpop.f32.mrb[0].mxu0
      %v5137 = vadd.f32 0.0, %v5136
      %v5138 = vpop.f32.mrb[0].mxu0
      %v5139 = vpop.f32.mrb[0].mxu0
      %v5140 = vadd.f32 0.0, %v5139
      %v5141 = vpop.f32.mrb[0].mxu0
      %5142 = vmatprep.mubr.bf16.mxu0 0
      %5143 = vmatmul.mubr.bf16.gmra.mrb[0].mxu0 %v4739
      %v5144 = vpop.f32.mrb[0].mxu0
      %v5145 = vadd.f32 0.0, %v5144
      %v5146 = vpop.f32.mrb[0].mxu0
      %v5147 = vpop.f32.mrb[0].mxu0
      %v5148 = vadd.f32 0.0, %v5147
      %v5149 = vpop.f32.mrb[0].mxu0
      %5150 = vmatprep.mubr.bf16.mxu0 0
      %5151 = vmatmul.mubr.bf16.gmra.mrb[0].mxu0 %v4742
      %v5152 = vpop.f32.mrb[0].mxu0
      %v5153 = vadd.f32 0.0, %v5152
      %v5154 = vpop.f32.mrb[0].mxu0
      %v5155 = vpop.f32.mrb[0].mxu0
      %v5156 = vadd.f32 0.0, %v5155
      %v5157 = vpop.f32.mrb[0].mxu0
      %5158 = vmatprep.mubr.bf16.mxu0 0
      %5159 = vmatmul.mubr.bf16.gmra.mrb[0].mxu0 %v4745
      %v5160 = vpop.f32.mrb[0].mxu0
      %v5161 = vadd.f32 0.0, %v5160
      %v5162 = vpop.f32.mrb[0].mxu0
      %v5163 = vpop.f32.mrb[0].mxu0
      %v5164 = vadd.f32 0.0, %v5163
      %v5165 = vpop.f32.mrb[0].mxu0
      %5166 = vdwg.mxu0
      %v5265 = vcombine.low %v4804, %v4806
      %v5266 = vcombine.high %v4804, %v4806
      %v5267 = vcombine.low %v4907, %v4909
      %v5268 = vcombine.high %v4907, %v4909
      %v5270 = vunpack.c.l.s4 1983009808
      %v5271 = vunpack.c.0.s8 %v5270
      %v5272 = vlaneseq
      %v5273 = vshrl.u32 %v5272, 7
      %v5274 = vsub.s32 %v5271, %v5273
      %v5275 = vrot.slane %v5265, %v5274
      %v5277 = vunpack.c.l.s4 1983009808
      %v5278 = vunpack.c.0.s8 %v5277
      %v5279 = vlaneseq
      %v5280 = vshrl.u32 %v5279, 7
      %v5281 = vsub.s32 %v5278, %v5280
      %v5282 = vrot.slane %v5266, %v5281
      %v5284 = vunpack.c.l.s4 1983009808
      %v5285 = vunpack.c.0.s8 %v5284
      %v5286 = vlaneseq
      %v5287 = vshrl.u32 %v5286, 7
      %v5288 = vsub.s32 %v5285, %v5287
      %v5289 = vrot.slane %v5267, %v5288
      %v5291 = vunpack.c.l.s4 1983009808
      %v5292 = vunpack.c.0.s8 %v5291
      %v5293 = vlaneseq
      %v5294 = vshrl.u32 %v5293, 7
      %v5295 = vsub.s32 %v5292, %v5294
      %v5296 = vrot.slane %v5268, %v5295
      %v5297 = vcombine.low %v5275, %v5289
      %v5298 = vcombine.high %v5275, %v5289
      %v5299 = vcombine.low %v5282, %v5296
      %v5300 = vcombine.high %v5282, %v5296
      %v5301 = vcombine.low %v5010, %v5012
      %v5302 = vcombine.high %v5010, %v5012
      %v5303 = vcombine.high %v5113, %v5113
      %v5305 = vunpack.c.l.s4 1983009808
      %v5306 = vunpack.c.0.s8 %v5305
      %v5307 = vlaneseq
      %v5308 = vshrl.u32 %v5307, 7
      %v5309 = vsub.s32 %v5306, %v5308
      %v5310 = vrot.slane %v5301, %v5309
      %v5312 = vunpack.c.l.s4 1983009808
      %v5313 = vunpack.c.0.s8 %v5312
      %v5314 = vlaneseq
      %v5315 = vshrl.u32 %v5314, 7
      %v5316 = vsub.s32 %v5313, %v5315
      %v5317 = vrot.slane %v5302, %v5316
      %v5319 = vunpack.c.l.s4 1983009808
      %v5320 = vunpack.c.0.s8 %v5319
      %v5321 = vlaneseq
      %v5322 = vshrl.u32 %v5321, 7
      %v5323 = vsub.s32 %v5320, %v5322
      %v5324 = vrot.slane %v5113, %v5323
      %v5326 = vunpack.c.l.s4 1983009808
      %v5327 = vunpack.c.0.s8 %v5326
      %v5328 = vlaneseq
      %v5329 = vshrl.u32 %v5328, 7
      %v5330 = vsub.s32 %v5327, %v5329
      %v5331 = vrot.slane %v5303, %v5330
      %v5332 = vcombine.high %v5310, %v5324
      %v5333 = vcombine.low %v5317, %v5331
      %v5334 = vcombine.high %v5317, %v5331
      %v5335 = vcombine.low %v4808, %v4810
      %v5336 = vcombine.high %v4808, %v4810
      %v5337 = vcombine.low %v4911, %v4913
      %v5338 = vcombine.high %v4911, %v4913
      %v5340 = vunpack.c.l.s4 1983009808
      %v5341 = vunpack.c.0.s8 %v5340
      %v5342 = vlaneseq
      %v5343 = vshrl.u32 %v5342, 7
      %v5344 = vsub.s32 %v5341, %v5343
      %v5345 = vrot.slane %v5335, %v5344
      %v5347 = vunpack.c.l.s4 1983009808
      %v5348 = vunpack.c.0.s8 %v5347
      %v5349 = vlaneseq
      %v5350 = vshrl.u32 %v5349, 7
      %v5351 = vsub.s32 %v5348, %v5350
      %v5352 = vrot.slane %v5336, %v5351
      %v5354 = vunpack.c.l.s4 1983009808
      %v5355 = vunpack.c.0.s8 %v5354
      %v5356 = vlaneseq
      %v5357 = vshrl.u32 %v5356, 7
      %v5358 = vsub.s32 %v5355, %v5357
      %v5359 = vrot.slane %v5337, %v5358
      %v5361 = vunpack.c.l.s4 1983009808
      %v5362 = vunpack.c.0.s8 %v5361
      %v5363 = vlaneseq
      %v5364 = vshrl.u32 %v5363, 7
      %v5365 = vsub.s32 %v5362, %v5364
      %v5366 = vrot.slane %v5338, %v5365
      %v5367 = vcombine.low %v5345, %v5359
      %v5368 = vcombine.high %v5345, %v5359
      %v5369 = vcombine.low %v5352, %v5366
      %v5370 = vcombine.high %v5352, %v5366
      %v5371 = vcombine.low %v5014, %v5016
      %v5372 = vcombine.high %v5014, %v5016
      %v5373 = vcombine.high %v5116, %v5116
      %v5375 = vunpack.c.l.s4 1983009808
      %v5376 = vunpack.c.0.s8 %v5375
      %v5377 = vlaneseq
      %v5378 = vshrl.u32 %v5377, 7
      %v5379 = vsub.s32 %v5376, %v5378
      %v5380 = vrot.slane %v5371, %v5379
      %v5382 = vunpack.c.l.s4 1983009808
      %v5383 = vunpack.c.0.s8 %v5382
      %v5384 = vlaneseq
      %v5385 = vshrl.u32 %v5384, 7
      %v5386 = vsub.s32 %v5383, %v5385
      %v5387 = vrot.slane %v5372, %v5386
      %v5389 = vunpack.c.l.s4 1983009808
      %v5390 = vunpack.c.0.s8 %v5389
      %v5391 = vlaneseq
      %v5392 = vshrl.u32 %v5391, 7
      %v5393 = vsub.s32 %v5390, %v5392
      %v5394 = vrot.slane %v5116, %v5393
      %v5396 = vunpack.c.l.s4 1983009808
      %v5397 = vunpack.c.0.s8 %v5396
      %v5398 = vlaneseq
      %v5399 = vshrl.u32 %v5398, 7
      %v5400 = vsub.s32 %v5397, %v5399
      %v5401 = vrot.slane %v5373, %v5400
      %v5402 = vcombine.low %v5380, %v5394
      %v5403 = vcombine.high %v5380, %v5394
      %v5404 = vcombine.low %v5387, %v5401
      %v5405 = vcombine.low %v4814, %v4816
      %v5406 = vcombine.high %v4814, %v4816
      %v5407 = vcombine.low %v4917, %v4919
      %v5408 = vcombine.high %v4917, %v4919
      %v5410 = vunpack.c.l.s4 1983009808
      %v5411 = vunpack.c.0.s8 %v5410
      %v5412 = vlaneseq
      %v5413 = vshrl.u32 %v5412, 7
      %v5414 = vsub.s32 %v5411, %v5413
      %v5415 = vrot.slane %v5405, %v5414
      %v5417 = vunpack.c.l.s4 1983009808
      %v5418 = vunpack.c.0.s8 %v5417
      %v5419 = vlaneseq
      %v5420 = vshrl.u32 %v5419, 7
      %v5421 = vsub.s32 %v5418, %v5420
      %v5422 = vrot.slane %v5406, %v5421
      %v5424 = vunpack.c.l.s4 1983009808
      %v5425 = vunpack.c.0.s8 %v5424
      %v5426 = vlaneseq
      %v5427 = vshrl.u32 %v5426, 7
      %v5428 = vsub.s32 %v5425, %v5427
      %v5429 = vrot.slane %v5407, %v5428
      %v5431 = vunpack.c.l.s4 1983009808
      %v5432 = vunpack.c.0.s8 %v5431
      %v5433 = vlaneseq
      %v5434 = vshrl.u32 %v5433, 7
      %v5435 = vsub.s32 %v5432, %v5434
      %v5436 = vrot.slane %v5408, %v5435
      %v5437 = vcombine.low %v5415, %v5429
      %v5438 = vcombine.high %v5415, %v5429
      %v5439 = vcombine.low %v5422, %v5436
      %v5440 = vcombine.high %v5422, %v5436
      %v5441 = vcombine.low %v5020, %v5022
      %v5442 = vcombine.high %v5020, %v5022
      %v5443 = vcombine.high %v5121, %v5121
      %v5445 = vunpack.c.l.s4 1983009808
      %v5446 = vunpack.c.0.s8 %v5445
      %v5447 = vlaneseq
      %v5448 = vshrl.u32 %v5447, 7
      %v5449 = vsub.s32 %v5446, %v5448
      %v5450 = vrot.slane %v5441, %v5449
      %v5452 = vunpack.c.l.s4 1983009808
      %v5453 = vunpack.c.0.s8 %v5452
      %v5454 = vlaneseq
      %v5455 = vshrl.u32 %v5454, 7
      %v5456 = vsub.s32 %v5453, %v5455
      %v5457 = vrot.slane %v5442, %v5456
      %v5459 = vunpack.c.l.s4 1983009808
      %v5460 = vunpack.c.0.s8 %v5459
      %v5461 = vlaneseq
      %v5462 = vshrl.u32 %v5461, 7
      %v5463 = vsub.s32 %v5460, %v5462
      %v5464 = vrot.slane %v5121, %v5463
      %v5466 = vunpack.c.l.s4 1983009808
      %v5467 = vunpack.c.0.s8 %v5466
      %v5468 = vlaneseq
      %v5469 = vshrl.u32 %v5468, 7
      %v5470 = vsub.s32 %v5467, %v5469
      %v5471 = vrot.slane %v5443, %v5470
      %v5472 = vcombine.low %v5450, %v5464
      %v5473 = vcombine.high %v5450, %v5464
      %v5474 = vcombine.low %v5457, %v5471
      %v5475 = vcombine.high %v5457, %v5471
      %v5476 = vcombine.low %v4818, %v4820
      %v5477 = vcombine.high %v4818, %v4820
      %v5478 = vcombine.low %v4921, %v4923
      %v5479 = vcombine.high %v4921, %v4923
      %v5481 = vunpack.c.l.s4 1983009808
      %v5482 = vunpack.c.0.s8 %v5481
      %v5483 = vlaneseq
      %v5484 = vshrl.u32 %v5483, 7
      %v5485 = vsub.s32 %v5482, %v5484
      %v5486 = vrot.slane %v5476, %v5485
      %v5488 = vunpack.c.l.s4 1983009808
      %v5489 = vunpack.c.0.s8 %v5488
      %v5490 = vlaneseq
      %v5491 = vshrl.u32 %v5490, 7
      %v5492 = vsub.s32 %v5489, %v5491
      %v5493 = vrot.slane %v5477, %v5492
      %v5495 = vunpack.c.l.s4 1983009808
      %v5496 = vunpack.c.0.s8 %v5495
      %v5497 = vlaneseq
      %v5498 = vshrl.u32 %v5497, 7
      %v5499 = vsub.s32 %v5496, %v5498
      %v5500 = vrot.slane %v5478, %v5499
      %v5502 = vunpack.c.l.s4 1983009808
      %v5503 = vunpack.c.0.s8 %v5502
      %v5504 = vlaneseq
      %v5505 = vshrl.u32 %v5504, 7
      %v5506 = vsub.s32 %v5503, %v5505
      %v5507 = vrot.slane %v5479, %v5506
      %v5508 = vcombine.low %v5486, %v5500
      %v5509 = vcombine.high %v5486, %v5500
      %v5510 = vcombine.low %v5493, %v5507
      %v5511 = vcombine.high %v5493, %v5507
      %v5512 = vcombine.low %v5024, %v5026
      %v5513 = vcombine.high %v5024, %v5026
      %v5514 = vcombine.high %v5124, %v5124
      %v5516 = vunpack.c.l.s4 1983009808
      %v5517 = vunpack.c.0.s8 %v5516
      %v5518 = vlaneseq
      %v5519 = vshrl.u32 %v5518, 7
      %v5520 = vsub.s32 %v5517, %v5519
      %v5521 = vrot.slane %v5512, %v5520
      %v5523 = vunpack.c.l.s4 1983009808
      %v5524 = vunpack.c.0.s8 %v5523
      %v5525 = vlaneseq
      %v5526 = vshrl.u32 %v5525, 7
      %v5527 = vsub.s32 %v5524, %v5526
      %v5528 = vrot.slane %v5513, %v5527
      %v5530 = vunpack.c.l.s4 1983009808
      %v5531 = vunpack.c.0.s8 %v5530
      %v5532 = vlaneseq
      %v5533 = vshrl.u32 %v5532, 7
      %v5534 = vsub.s32 %v5531, %v5533
      %v5535 = vrot.slane %v5124, %v5534
      %v5537 = vunpack.c.l.s4 1983009808
      %v5538 = vunpack.c.0.s8 %v5537
      %v5539 = vlaneseq
      %v5540 = vshrl.u32 %v5539, 7
      %v5541 = vsub.s32 %v5538, %v5540
      %v5542 = vrot.slane %v5514, %v5541
      %v5543 = vcombine.low %v5521, %v5535
      %v5544 = vcombine.high %v5521, %v5535
      %v5545 = vcombine.high %v5528, %v5542
      %v5546 = vcombine.low %v4824, %v4826
      %v5547 = vcombine.high %v4824, %v4826
      %v5548 = vcombine.low %v4927, %v4929
      %v5549 = vcombine.high %v4927, %v4929
      %v5551 = vunpack.c.l.s4 1983009808
      %v5552 = vunpack.c.0.s8 %v5551
      %v5553 = vlaneseq
      %v5554 = vshrl.u32 %v5553, 7
      %v5555 = vsub.s32 %v5552, %v5554
      %v5556 = vrot.slane %v5546, %v5555
      %v5558 = vunpack.c.l.s4 1983009808
      %v5559 = vunpack.c.0.s8 %v5558
      %v5560 = vlaneseq
      %v5561 = vshrl.u32 %v5560, 7
      %v5562 = vsub.s32 %v5559, %v5561
      %v5563 = vrot.slane %v5547, %v5562
      %v5565 = vunpack.c.l.s4 1983009808
      %v5566 = vunpack.c.0.s8 %v5565
      %v5567 = vlaneseq
      %v5568 = vshrl.u32 %v5567, 7
      %v5569 = vsub.s32 %v5566, %v5568
      %v5570 = vrot.slane %v5548, %v5569
      %v5572 = vunpack.c.l.s4 1983009808
      %v5573 = vunpack.c.0.s8 %v5572
      %v5574 = vlaneseq
      %v5575 = vshrl.u32 %v5574, 7
      %v5576 = vsub.s32 %v5573, %v5575
      %v5577 = vrot.slane %v5549, %v5576
      %v5578 = vcombine.low %v5556, %v5570
      %v5579 = vcombine.high %v5556, %v5570
      %v5580 = vcombine.low %v5563, %v5577
      %v5581 = vcombine.high %v5563, %v5577
      %v5582 = vcombine.low %v5030, %v5032
      %v5583 = vcombine.high %v5030, %v5032
      %v5584 = vcombine.high %v5129, %v5129
      %v5586 = vunpack.c.l.s4 1983009808
      %v5587 = vunpack.c.0.s8 %v5586
      %v5588 = vlaneseq
      %v5589 = vshrl.u32 %v5588, 7
      %v5590 = vsub.s32 %v5587, %v5589
      %v5591 = vrot.slane %v5582, %v5590
      %v5593 = vunpack.c.l.s4 1983009808
      %v5594 = vunpack.c.0.s8 %v5593
      %v5595 = vlaneseq
      %v5596 = vshrl.u32 %v5595, 7
      %v5597 = vsub.s32 %v5594, %v5596
      %v5598 = vrot.slane %v5583, %v5597
      %v5600 = vunpack.c.l.s4 1983009808
      %v5601 = vunpack.c.0.s8 %v5600
      %v5602 = vlaneseq
      %v5603 = vshrl.u32 %v5602, 7
      %v5604 = vsub.s32 %v5601, %v5603
      %v5605 = vrot.slane %v5129, %v5604
      %v5607 = vunpack.c.l.s4 1983009808
      %v5608 = vunpack.c.0.s8 %v5607
      %v5609 = vlaneseq
      %v5610 = vshrl.u32 %v5609, 7
      %v5611 = vsub.s32 %v5608, %v5610
      %v5612 = vrot.slane %v5584, %v5611
      %v5613 = vcombine.low %v5591, %v5605
      %v5614 = vcombine.high %v5591, %v5605
      %v5615 = vcombine.low %v5598, %v5612
      %v5616 = vcombine.high %v5598, %v5612
      %v5617 = vcombine.low %v4828, %v4830
      %v5618 = vcombine.high %v4828, %v4830
      %v5619 = vcombine.low %v4931, %v4933
      %v5620 = vcombine.high %v4931, %v4933
      %v5622 = vunpack.c.l.s4 1983009808
      %v5623 = vunpack.c.0.s8 %v5622
      %v5624 = vlaneseq
      %v5625 = vshrl.u32 %v5624, 7
      %v5626 = vsub.s32 %v5623, %v5625
      %v5627 = vrot.slane %v5617, %v5626
      %v5629 = vunpack.c.l.s4 1983009808
      %v5630 = vunpack.c.0.s8 %v5629
      %v5631 = vlaneseq
      %v5632 = vshrl.u32 %v5631, 7
      %v5633 = vsub.s32 %v5630, %v5632
      %v5634 = vrot.slane %v5618, %v5633
      %v5636 = vunpack.c.l.s4 1983009808
      %v5637 = vunpack.c.0.s8 %v5636
      %v5638 = vlaneseq
      %v5639 = vshrl.u32 %v5638, 7
      %v5640 = vsub.s32 %v5637, %v5639
      %v5641 = vrot.slane %v5619, %v5640
      %v5643 = vunpack.c.l.s4 1983009808
      %v5644 = vunpack.c.0.s8 %v5643
      %v5645 = vlaneseq
      %v5646 = vshrl.u32 %v5645, 7
      %v5647 = vsub.s32 %v5644, %v5646
      %v5648 = vrot.slane %v5620, %v5647
      %v5649 = vcombine.low %v5627, %v5641
      %v5650 = vcombine.high %v5627, %v5641
      %v5651 = vcombine.low %v5634, %v5648
      %v5652 = vcombine.high %v5634, %v5648
      %v5653 = vcombine.low %v5034, %v5036
      %v5654 = vcombine.high %v5034, %v5036
      %v5655 = vcombine.high %v5132, %v5132
      %v5657 = vunpack.c.l.s4 1983009808
      %v5658 = vunpack.c.0.s8 %v5657
      %v5659 = vlaneseq
      %v5660 = vshrl.u32 %v5659, 7
      %v5661 = vsub.s32 %v5658, %v5660
      %v5662 = vrot.slane %v5653, %v5661
      %v5664 = vunpack.c.l.s4 1983009808
      %v5665 = vunpack.c.0.s8 %v5664
      %v5666 = vlaneseq
      %v5667 = vshrl.u32 %v5666, 7
      %v5668 = vsub.s32 %v5665, %v5667
      %v5669 = vrot.slane %v5654, %v5668
      %v5671 = vunpack.c.l.s4 1983009808
      %v5672 = vunpack.c.0.s8 %v5671
      %v5673 = vlaneseq
      %v5674 = vshrl.u32 %v5673, 7
      %v5675 = vsub.s32 %v5672, %v5674
      %v5676 = vrot.slane %v5132, %v5675
      %v5678 = vunpack.c.l.s4 1983009808
      %v5679 = vunpack.c.0.s8 %v5678
      %v5680 = vlaneseq
      %v5681 = vshrl.u32 %v5680, 7
      %v5682 = vsub.s32 %v5679, %v5681
      %v5683 = vrot.slane %v5655, %v5682
      %v5684 = vcombine.low %v5662, %v5676
      %v5685 = vcombine.low %v5669, %v5683
      %v5686 = vcombine.high %v5669, %v5683
      %v5687 = vcombine.low %v4834, %v4836
      %v5688 = vcombine.high %v4834, %v4836
      %v5689 = vcombine.low %v4937, %v4939
      %v5690 = vcombine.high %v4937, %v4939
      %v5692 = vunpack.c.l.s4 1983009808
      %v5693 = vunpack.c.0.s8 %v5692
      %v5694 = vlaneseq
      %v5695 = vshrl.u32 %v5694, 7
      %v5696 = vsub.s32 %v5693, %v5695
      %v5697 = vrot.slane %v5687, %v5696
      %v5699 = vunpack.c.l.s4 1983009808
      %v5700 = vunpack.c.0.s8 %v5699
      %v5701 = vlaneseq
      %v5702 = vshrl.u32 %v5701, 7
      %v5703 = vsub.s32 %v5700, %v5702
      %v5704 = vrot.slane %v5688, %v5703
      %v5706 = vunpack.c.l.s4 1983009808
      %v5707 = vunpack.c.0.s8 %v5706
      %v5708 = vlaneseq
      %v5709 = vshrl.u32 %v5708, 7
      %v5710 = vsub.s32 %v5707, %v5709
      %v5711 = vrot.slane %v5689, %v5710
      %v5713 = vunpack.c.l.s4 1983009808
      %v5714 = vunpack.c.0.s8 %v5713
      %v5715 = vlaneseq
      %v5716 = vshrl.u32 %v5715, 7
      %v5717 = vsub.s32 %v5714, %v5716
      %v5718 = vrot.slane %v5690, %v5717
      %v5719 = vcombine.low %v5697, %v5711
      %v5720 = vcombine.high %v5697, %v5711
      %v5721 = vcombine.low %v5704, %v5718
      %v5722 = vcombine.high %v5704, %v5718
      %v5723 = vcombine.low %v5040, %v5042
      %v5724 = vcombine.high %v5040, %v5042
      %v5725 = vcombine.high %v5137, %v5137
      %v5727 = vunpack.c.l.s4 1983009808
      %v5728 = vunpack.c.0.s8 %v5727
      %v5729 = vlaneseq
      %v5730 = vshrl.u32 %v5729, 7
      %v5731 = vsub.s32 %v5728, %v5730
      %v5732 = vrot.slane %v5723, %v5731
      %v5734 = vunpack.c.l.s4 1983009808
      %v5735 = vunpack.c.0.s8 %v5734
      %v5736 = vlaneseq
      %v5737 = vshrl.u32 %v5736, 7
      %v5738 = vsub.s32 %v5735, %v5737
      %v5739 = vrot.slane %v5724, %v5738
      %v5741 = vunpack.c.l.s4 1983009808
      %v5742 = vunpack.c.0.s8 %v5741
      %v5743 = vlaneseq
      %v5744 = vshrl.u32 %v5743, 7
      %v5745 = vsub.s32 %v5742, %v5744
      %v5746 = vrot.slane %v5137, %v5745
      %v5748 = vunpack.c.l.s4 1983009808
      %v5749 = vunpack.c.0.s8 %v5748
      %v5750 = vlaneseq
      %v5751 = vshrl.u32 %v5750, 7
      %v5752 = vsub.s32 %v5749, %v5751
      %v5753 = vrot.slane %v5725, %v5752
      %v5754 = vcombine.low %v5732, %v5746
      %v5755 = vcombine.high %v5732, %v5746
      %v5756 = vcombine.low %v5739, %v5753
      %v5757 = vcombine.high %v5739, %v5753
      %v5758 = vcombine.low %v4838, %v4840
      %v5759 = vcombine.high %v4838, %v4840
      %v5760 = vcombine.low %v4941, %v4943
      %v5761 = vcombine.high %v4941, %v4943
      %v5763 = vunpack.c.l.s4 1983009808
      %v5764 = vunpack.c.0.s8 %v5763
      %v5765 = vlaneseq
      %v5766 = vshrl.u32 %v5765, 7
      %v5767 = vsub.s32 %v5764, %v5766
      %v5768 = vrot.slane %v5758, %v5767
      %v5770 = vunpack.c.l.s4 1983009808
      %v5771 = vunpack.c.0.s8 %v5770
      %v5772 = vlaneseq
      %v5773 = vshrl.u32 %v5772, 7
      %v5774 = vsub.s32 %v5771, %v5773
      %v5775 = vrot.slane %v5759, %v5774
      %v5777 = vunpack.c.l.s4 1983009808
      %v5778 = vunpack.c.0.s8 %v5777
      %v5779 = vlaneseq
      %v5780 = vshrl.u32 %v5779, 7
      %v5781 = vsub.s32 %v5778, %v5780
      %v5782 = vrot.slane %v5760, %v5781
      %v5784 = vunpack.c.l.s4 1983009808
      %v5785 = vunpack.c.0.s8 %v5784
      %v5786 = vlaneseq
      %v5787 = vshrl.u32 %v5786, 7
      %v5788 = vsub.s32 %v5785, %v5787
      %v5789 = vrot.slane %v5761, %v5788
      %v5790 = vcombine.low %v5768, %v5782
      %v5791 = vcombine.high %v5768, %v5782
      %v5792 = vcombine.low %v5775, %v5789
      %v5793 = vcombine.high %v5775, %v5789
      %v5794 = vcombine.low %v5044, %v5046
      %v5795 = vcombine.high %v5044, %v5046
      %v5796 = vcombine.high %v5140, %v5140
      %v5798 = vunpack.c.l.s4 1983009808
      %v5799 = vunpack.c.0.s8 %v5798
      %v5800 = vlaneseq
      %v5801 = vshrl.u32 %v5800, 7
      %v5802 = vsub.s32 %v5799, %v5801
      %v5803 = vrot.slane %v5794, %v5802
      %v5805 = vunpack.c.l.s4 1983009808
      %v5806 = vunpack.c.0.s8 %v5805
      %v5807 = vlaneseq
      %v5808 = vshrl.u32 %v5807, 7
      %v5809 = vsub.s32 %v5806, %v5808
      %v5810 = vrot.slane %v5795, %v5809
      %v5812 = vunpack.c.l.s4 1983009808
      %v5813 = vunpack.c.0.s8 %v5812
      %v5814 = vlaneseq
      %v5815 = vshrl.u32 %v5814, 7
      %v5816 = vsub.s32 %v5813, %v5815
      %v5817 = vrot.slane %v5140, %v5816
      %v5819 = vunpack.c.l.s4 1983009808
      %v5820 = vunpack.c.0.s8 %v5819
      %v5821 = vlaneseq
      %v5822 = vshrl.u32 %v5821, 7
      %v5823 = vsub.s32 %v5820, %v5822
      %v5824 = vrot.slane %v5796, %v5823
      %v5825 = vcombine.high %v5803, %v5817
      %v5826 = vcombine.low %v5810, %v5824
      %v5827 = vcombine.high %v5810, %v5824
      %v5828 = vcombine.low %v4844, %v4846
      %v5829 = vcombine.high %v4844, %v4846
      %v5830 = vcombine.low %v4947, %v4949
      %v5831 = vcombine.high %v4947, %v4949
      %v5833 = vunpack.c.l.s4 1983009808
      %v5834 = vunpack.c.0.s8 %v5833
      %v5835 = vlaneseq
      %v5836 = vshrl.u32 %v5835, 7
      %v5837 = vsub.s32 %v5834, %v5836
      %v5838 = vrot.slane %v5828, %v5837
      %v5840 = vunpack.c.l.s4 1983009808
      %v5841 = vunpack.c.0.s8 %v5840
      %v5842 = vlaneseq
      %v5843 = vshrl.u32 %v5842, 7
      %v5844 = vsub.s32 %v5841, %v5843
      %v5845 = vrot.slane %v5829, %v5844
      %v5847 = vunpack.c.l.s4 1983009808
      %v5848 = vunpack.c.0.s8 %v5847
      %v5849 = vlaneseq
      %v5850 = vshrl.u32 %v5849, 7
      %v5851 = vsub.s32 %v5848, %v5850
      %v5852 = vrot.slane %v5830, %v5851
      %v5854 = vunpack.c.l.s4 1983009808
      %v5855 = vunpack.c.0.s8 %v5854
      %v5856 = vlaneseq
      %v5857 = vshrl.u32 %v5856, 7
      %v5858 = vsub.s32 %v5855, %v5857
      %v5859 = vrot.slane %v5831, %v5858
      %v5860 = vcombine.low %v5838, %v5852
      %v5861 = vcombine.high %v5838, %v5852
      %v5862 = vcombine.low %v5845, %v5859
      %v5863 = vcombine.high %v5845, %v5859
      %v5864 = vcombine.low %v5050, %v5052
      %v5865 = vcombine.high %v5050, %v5052
      %v5866 = vcombine.high %v5145, %v5145
      %v5868 = vunpack.c.l.s4 1983009808
      %v5869 = vunpack.c.0.s8 %v5868
      %v5870 = vlaneseq
      %v5871 = vshrl.u32 %v5870, 7
      %v5872 = vsub.s32 %v5869, %v5871
      %v5873 = vrot.slane %v5864, %v5872
      %v5875 = vunpack.c.l.s4 1983009808
      %v5876 = vunpack.c.0.s8 %v5875
      %v5877 = vlaneseq
      %v5878 = vshrl.u32 %v5877, 7
      %v5879 = vsub.s32 %v5876, %v5878
      %v5880 = vrot.slane %v5865, %v5879
      %v5882 = vunpack.c.l.s4 1983009808
      %v5883 = vunpack.c.0.s8 %v5882
      %v5884 = vlaneseq
      %v5885 = vshrl.u32 %v5884, 7
      %v5886 = vsub.s32 %v5883, %v5885
      %v5887 = vrot.slane %v5145, %v5886
      %v5889 = vunpack.c.l.s4 1983009808
      %v5890 = vunpack.c.0.s8 %v5889
      %v5891 = vlaneseq
      %v5892 = vshrl.u32 %v5891, 7
      %v5893 = vsub.s32 %v5890, %v5892
      %v5894 = vrot.slane %v5866, %v5893
      %v5895 = vcombine.low %v5873, %v5887
      %v5896 = vcombine.high %v5873, %v5887
      %v5897 = vcombine.low %v5880, %v5894
      %v5898 = vcombine.low %v4848, %v4850
      %v5899 = vcombine.high %v4848, %v4850
      %v5900 = vcombine.low %v4951, %v4953
      %v5901 = vcombine.high %v4951, %v4953
      %v5903 = vunpack.c.l.s4 1983009808
      %v5904 = vunpack.c.0.s8 %v5903
      %v5905 = vlaneseq
      %v5906 = vshrl.u32 %v5905, 7
      %v5907 = vsub.s32 %v5904, %v5906
      %v5908 = vrot.slane %v5898, %v5907
      %v5910 = vunpack.c.l.s4 1983009808
      %v5911 = vunpack.c.0.s8 %v5910
      %v5912 = vlaneseq
      %v5913 = vshrl.u32 %v5912, 7
      %v5914 = vsub.s32 %v5911, %v5913
      %v5915 = vrot.slane %v5899, %v5914
      %v5917 = vunpack.c.l.s4 1983009808
      %v5918 = vunpack.c.0.s8 %v5917
      %v5919 = vlaneseq
      %v5920 = vshrl.u32 %v5919, 7
      %v5921 = vsub.s32 %v5918, %v5920
      %v5922 = vrot.slane %v5900, %v5921
      %v5924 = vunpack.c.l.s4 1983009808
      %v5925 = vunpack.c.0.s8 %v5924
      %v5926 = vlaneseq
      %v5927 = vshrl.u32 %v5926, 7
      %v5928 = vsub.s32 %v5925, %v5927
      %v5929 = vrot.slane %v5901, %v5928
      %v5930 = vcombine.low %v5908, %v5922
      %v5931 = vcombine.high %v5908, %v5922
      %v5932 = vcombine.low %v5915, %v5929
      %v5933 = vcombine.high %v5915, %v5929
      %v5934 = vcombine.low %v5054, %v5056
      %v5935 = vcombine.high %v5054, %v5056
      %v5936 = vcombine.high %v5148, %v5148
      %v5938 = vunpack.c.l.s4 1983009808
      %v5939 = vunpack.c.0.s8 %v5938
      %v5940 = vlaneseq
      %v5941 = vshrl.u32 %v5940, 7
      %v5942 = vsub.s32 %v5939, %v5941
      %v5943 = vrot.slane %v5934, %v5942
      %v5945 = vunpack.c.l.s4 1983009808
      %v5946 = vunpack.c.0.s8 %v5945
      %v5947 = vlaneseq
      %v5948 = vshrl.u32 %v5947, 7
      %v5949 = vsub.s32 %v5946, %v5948
      %v5950 = vrot.slane %v5935, %v5949
      %v5952 = vunpack.c.l.s4 1983009808
      %v5953 = vunpack.c.0.s8 %v5952
      %v5954 = vlaneseq
      %v5955 = vshrl.u32 %v5954, 7
      %v5956 = vsub.s32 %v5953, %v5955
      %v5957 = vrot.slane %v5148, %v5956
      %v5959 = vunpack.c.l.s4 1983009808
      %v5960 = vunpack.c.0.s8 %v5959
      %v5961 = vlaneseq
      %v5962 = vshrl.u32 %v5961, 7
      %v5963 = vsub.s32 %v5960, %v5962
      %v5964 = vrot.slane %v5936, %v5963
      %v5965 = vcombine.low %v5943, %v5957
      %v5966 = vcombine.high %v5943, %v5957
      %v5967 = vcombine.low %v5950, %v5964
      %v5968 = vcombine.high %v5950, %v5964
      %v5969 = vcombine.low %v4854, %v4856
      %v5970 = vcombine.high %v4854, %v4856
      %v5971 = vcombine.low %v4957, %v4959
      %v5972 = vcombine.high %v4957, %v4959
      %v5974 = vunpack.c.l.s4 1983009808
      %v5975 = vunpack.c.0.s8 %v5974
      %v5976 = vlaneseq
      %v5977 = vshrl.u32 %v5976, 7
      %v5978 = vsub.s32 %v5975, %v5977
      %v5979 = vrot.slane %v5969, %v5978
      %v5981 = vunpack.c.l.s4 1983009808
      %v5982 = vunpack.c.0.s8 %v5981
      %v5983 = vlaneseq
      %v5984 = vshrl.u32 %v5983, 7
      %v5985 = vsub.s32 %v5982, %v5984
      %v5986 = vrot.slane %v5970, %v5985
      %v5988 = vunpack.c.l.s4 1983009808
      %v5989 = vunpack.c.0.s8 %v5988
      %v5990 = vlaneseq
      %v5991 = vshrl.u32 %v5990, 7
      %v5992 = vsub.s32 %v5989, %v5991
      %v5993 = vrot.slane %v5971, %v5992
      %v5995 = vunpack.c.l.s4 1983009808
      %v5996 = vunpack.c.0.s8 %v5995
      %v5997 = vlaneseq
      %v5998 = vshrl.u32 %v5997, 7
      %v5999 = vsub.s32 %v5996, %v5998
      %v6000 = vrot.slane %v5972, %v5999
      %v6001 = vcombine.low %v5979, %v5993
      %v6002 = vcombine.high %v5979, %v5993
      %v6003 = vcombine.low %v5986, %v6000
      %v6004 = vcombine.high %v5986, %v6000
      %v6005 = vcombine.low %v5060, %v5062
      %v6006 = vcombine.high %v5060, %v5062
      %v6007 = vcombine.high %v5153, %v5153
      %v6009 = vunpack.c.l.s4 1983009808
      %v6010 = vunpack.c.0.s8 %v6009
      %v6011 = vlaneseq
      %v6012 = vshrl.u32 %v6011, 7
      %v6013 = vsub.s32 %v6010, %v6012
      %v6014 = vrot.slane %v6005, %v6013
      %v6016 = vunpack.c.l.s4 1983009808
      %v6017 = vunpack.c.0.s8 %v6016
      %v6018 = vlaneseq
      %v6019 = vshrl.u32 %v6018, 7
      %v6020 = vsub.s32 %v6017, %v6019
      %v6021 = vrot.slane %v6006, %v6020
      %v6023 = vunpack.c.l.s4 1983009808
      %v6024 = vunpack.c.0.s8 %v6023
      %v6025 = vlaneseq
      %v6026 = vshrl.u32 %v6025, 7
      %v6027 = vsub.s32 %v6024, %v6026
      %v6028 = vrot.slane %v5153, %v6027
      %v6030 = vunpack.c.l.s4 1983009808
      %v6031 = vunpack.c.0.s8 %v6030
      %v6032 = vlaneseq
      %v6033 = vshrl.u32 %v6032, 7
      %v6034 = vsub.s32 %v6031, %v6033
      %v6035 = vrot.slane %v6007, %v6034
      %v6036 = vcombine.low %v6014, %v6028
      %v6037 = vcombine.high %v6014, %v6028
      %v6038 = vcombine.high %v6021, %v6035
      %v6039 = vcombine.low %v4858, %v4860
      %v6040 = vcombine.high %v4858, %v4860
      %v6041 = vcombine.low %v4961, %v4963
      %v6042 = vcombine.high %v4961, %v4963
      %v6044 = vunpack.c.l.s4 1983009808
      %v6045 = vunpack.c.0.s8 %v6044
      %v6046 = vlaneseq
      %v6047 = vshrl.u32 %v6046, 7
      %v6048 = vsub.s32 %v6045, %v6047
      %v6049 = vrot.slane %v6039, %v6048
      %v6051 = vunpack.c.l.s4 1983009808
      %v6052 = vunpack.c.0.s8 %v6051
      %v6053 = vlaneseq
      %v6054 = vshrl.u32 %v6053, 7
      %v6055 = vsub.s32 %v6052, %v6054
      %v6056 = vrot.slane %v6040, %v6055
      %v6058 = vunpack.c.l.s4 1983009808
      %v6059 = vunpack.c.0.s8 %v6058
      %v6060 = vlaneseq
      %v6061 = vshrl.u32 %v6060, 7
      %v6062 = vsub.s32 %v6059, %v6061
      %v6063 = vrot.slane %v6041, %v6062
      %v6065 = vunpack.c.l.s4 1983009808
      %v6066 = vunpack.c.0.s8 %v6065
      %v6067 = vlaneseq
      %v6068 = vshrl.u32 %v6067, 7
      %v6069 = vsub.s32 %v6066, %v6068
      %v6070 = vrot.slane %v6042, %v6069
      %v6071 = vcombine.low %v6049, %v6063
      %v6072 = vcombine.high %v6049, %v6063
      %v6073 = vcombine.low %v6056, %v6070
      %v6074 = vcombine.high %v6056, %v6070
      %v6075 = vcombine.low %v5064, %v5066
      %v6076 = vcombine.high %v5064, %v5066
      %v6077 = vcombine.high %v5156, %v5156
      %v6079 = vunpack.c.l.s4 1983009808
      %v6080 = vunpack.c.0.s8 %v6079
      %v6081 = vlaneseq
      %v6082 = vshrl.u32 %v6081, 7
      %v6083 = vsub.s32 %v6080, %v6082
      %v6084 = vrot.slane %v6075, %v6083
      %v6086 = vunpack.c.l.s4 1983009808
      %v6087 = vunpack.c.0.s8 %v6086
      %v6088 = vlaneseq
      %v6089 = vshrl.u32 %v6088, 7
      %v6090 = vsub.s32 %v6087, %v6089
      %v6091 = vrot.slane %v6076, %v6090
      %v6093 = vunpack.c.l.s4 1983009808
      %v6094 = vunpack.c.0.s8 %v6093
      %v6095 = vlaneseq
      %v6096 = vshrl.u32 %v6095, 7
      %v6097 = vsub.s32 %v6094, %v6096
      %v6098 = vrot.slane %v5156, %v6097
      %v6100 = vunpack.c.l.s4 1983009808
      %v6101 = vunpack.c.0.s8 %v6100
      %v6102 = vlaneseq
      %v6103 = vshrl.u32 %v6102, 7
      %v6104 = vsub.s32 %v6101, %v6103
      %v6105 = vrot.slane %v6077, %v6104
      %v6106 = vcombine.low %v6084, %v6098
      %v6107 = vcombine.high %v6084, %v6098
      %v6108 = vcombine.low %v6091, %v6105
      %v6109 = vcombine.high %v6091, %v6105
      %v6110 = vcombine.low %v4864, %v4866
      %v6111 = vcombine.high %v4864, %v4866
      %v6112 = vcombine.low %v4967, %v4969
      %v6113 = vcombine.high %v4967, %v4969
      %v6115 = vunpack.c.l.s4 1983009808
      %v6116 = vunpack.c.0.s8 %v6115
      %v6117 = vlaneseq
      %v6118 = vshrl.u32 %v6117, 7
      %v6119 = vsub.s32 %v6116, %v6118
      %v6120 = vrot.slane %v6110, %v6119
      %v6122 = vunpack.c.l.s4 1983009808
      %v6123 = vunpack.c.0.s8 %v6122
      %v6124 = vlaneseq
      %v6125 = vshrl.u32 %v6124, 7
      %v6126 = vsub.s32 %v6123, %v6125
      %v6127 = vrot.slane %v6111, %v6126
      %v6129 = vunpack.c.l.s4 1983009808
      %v6130 = vunpack.c.0.s8 %v6129
      %v6131 = vlaneseq
      %v6132 = vshrl.u32 %v6131, 7
      %v6133 = vsub.s32 %v6130, %v6132
      %v6134 = vrot.slane %v6112, %v6133
      %v6136 = vunpack.c.l.s4 1983009808
      %v6137 = vunpack.c.0.s8 %v6136
      %v6138 = vlaneseq
      %v6139 = vshrl.u32 %v6138, 7
      %v6140 = vsub.s32 %v6137, %v6139
      %v6141 = vrot.slane %v6113, %v6140
      %v6142 = vcombine.low %v6120, %v6134
      %v6143 = vcombine.high %v6120, %v6134
      %v6144 = vcombine.low %v6127, %v6141
      %v6145 = vcombine.high %v6127, %v6141
      %v6146 = vcombine.low %v5070, %v5072
      %v6147 = vcombine.high %v5070, %v5072
      %v6148 = vcombine.high %v5161, %v5161
      %v6150 = vunpack.c.l.s4 1983009808
      %v6151 = vunpack.c.0.s8 %v6150
      %v6152 = vlaneseq
      %v6153 = vshrl.u32 %v6152, 7
      %v6154 = vsub.s32 %v6151, %v6153
      %v6155 = vrot.slane %v6146, %v6154
      %v6157 = vunpack.c.l.s4 1983009808
      %v6158 = vunpack.c.0.s8 %v6157
      %v6159 = vlaneseq
      %v6160 = vshrl.u32 %v6159, 7
      %v6161 = vsub.s32 %v6158, %v6160
      %v6162 = vrot.slane %v6147, %v6161
      %v6164 = vunpack.c.l.s4 1983009808
      %v6165 = vunpack.c.0.s8 %v6164
      %v6166 = vlaneseq
      %v6167 = vshrl.u32 %v6166, 7
      %v6168 = vsub.s32 %v6165, %v6167
      %v6169 = vrot.slane %v5161, %v6168
      %v6171 = vunpack.c.l.s4 1983009808
      %v6172 = vunpack.c.0.s8 %v6171
      %v6173 = vlaneseq
      %v6174 = vshrl.u32 %v6173, 7
      %v6175 = vsub.s32 %v6172, %v6174
      %v6176 = vrot.slane %v6148, %v6175
      %v6177 = vcombine.low %v6155, %v6169
      %v6178 = vcombine.low %v6162, %v6176
      %v6179 = vcombine.high %v6162, %v6176
      %v6180 = vcombine.low %v4868, %v4870
      %v6181 = vcombine.high %v4868, %v4870
      %v6182 = vcombine.low %v4971, %v4973
      %v6183 = vcombine.high %v4971, %v4973
      %v6185 = vunpack.c.l.s4 1983009808
      %v6186 = vunpack.c.0.s8 %v6185
      %v6187 = vlaneseq
      %v6188 = vshrl.u32 %v6187, 7
      %v6189 = vsub.s32 %v6186, %v6188
      %v6190 = vrot.slane %v6180, %v6189
      %v6192 = vunpack.c.l.s4 1983009808
      %v6193 = vunpack.c.0.s8 %v6192
      %v6194 = vlaneseq
      %v6195 = vshrl.u32 %v6194, 7
      %v6196 = vsub.s32 %v6193, %v6195
      %v6197 = vrot.slane %v6181, %v6196
      %v6199 = vunpack.c.l.s4 1983009808
      %v6200 = vunpack.c.0.s8 %v6199
      %v6201 = vlaneseq
      %v6202 = vshrl.u32 %v6201, 7
      %v6203 = vsub.s32 %v6200, %v6202
      %v6204 = vrot.slane %v6182, %v6203
      %v6206 = vunpack.c.l.s4 1983009808
      %v6207 = vunpack.c.0.s8 %v6206
      %v6208 = vlaneseq
      %v6209 = vshrl.u32 %v6208, 7
      %v6210 = vsub.s32 %v6207, %v6209
      %v6211 = vrot.slane %v6183, %v6210
      %v6212 = vcombine.low %v6190, %v6204
      %v6213 = vcombine.high %v6190, %v6204
      %v6214 = vcombine.low %v6197, %v6211
      %v6215 = vcombine.high %v6197, %v6211
      %v6216 = vcombine.low %v5074, %v5076
      %v6217 = vcombine.high %v5074, %v5076
      %v6218 = vcombine.high %v5164, %v5164
      %v6220 = vunpack.c.l.s4 1983009808
      %v6221 = vunpack.c.0.s8 %v6220
      %v6222 = vlaneseq
      %v6223 = vshrl.u32 %v6222, 7
      %v6224 = vsub.s32 %v6221, %v6223
      %v6225 = vrot.slane %v6216, %v6224
      %v6227 = vunpack.c.l.s4 1983009808
      %v6228 = vunpack.c.0.s8 %v6227
      %v6229 = vlaneseq
      %v6230 = vshrl.u32 %v6229, 7
      %v6231 = vsub.s32 %v6228, %v6230
      %v6232 = vrot.slane %v6217, %v6231
      %v6234 = vunpack.c.l.s4 1983009808
      %v6235 = vunpack.c.0.s8 %v6234
      %v6236 = vlaneseq
      %v6237 = vshrl.u32 %v6236, 7
      %v6238 = vsub.s32 %v6235, %v6237
      %v6239 = vrot.slane %v5164, %v6238
      %v6241 = vunpack.c.l.s4 1983009808
      %v6242 = vunpack.c.0.s8 %v6241
      %v6243 = vlaneseq
      %v6244 = vshrl.u32 %v6243, 7
      %v6245 = vsub.s32 %v6242, %v6244
      %v6246 = vrot.slane %v6218, %v6245
      %v6247 = vcombine.low %v6225, %v6239
      %v6248 = vcombine.high %v6225, %v6239
      %v6249 = vcombine.low %v6232, %v6246
      %v6250 = vcombine.high %v6232, %v6246
      %vm6291 = vcmask 1040384
      %vm6292 = vcmask 1042434
      %vm6293 = vmor %vm6291, %vm6292
      %vm6294 = vcmask 1044484
      %vm6295 = vmor %vm6293, %vm6294
      %vm6296 = vcmask 1046534
      %vm6297 = vmor %vm6295, %vm6296
      %v6298 = vrot.slane %v5297, 7
      %v6299 = vrot.slane %v6298, 2
      %v6300 = vrot.slane %v5298, 7
      %v6301 = vsel %vm6297, %v6299, %v6300
      %v6302 = vrot.slane %v6300, 2
      %v6303 = vrot.slane %v5299, 7
      %v6304 = vsel %vm6297, %v6302, %v6303
      %v6305 = vrot.slane %v6303, 2
      %v6306 = vrot.slane %v5300, 7
      %v6307 = vsel %vm6297, %v6305, %v6306
      %v6308 = vrot.slane %v6306, 2
      %v6309 = vrot.slane %v5367, 7
      %v6310 = vsel %vm6297, %v6308, %v6309
      %v6311 = vrot.slane %v6309, 2
      %v6312 = vrot.slane %v5368, 7
      %v6313 = vsel %vm6297, %v6311, %v6312
      %v6314 = vrot.slane %v5370, 7
      %v6315 = vrot.slane %v6314, 2
      %v6316 = vrot.slane %v5437, 7
      %v6317 = vsel %vm6297, %v6315, %v6316
      %v6318 = vrot.slane %v6316, 2
      %v6319 = vrot.slane %v5438, 7
      %v6320 = vsel %vm6297, %v6318, %v6319
      %v6321 = vrot.slane %v6319, 2
      %v6322 = vrot.slane %v5439, 7
      %v6323 = vsel %vm6297, %v6321, %v6322
      %v6324 = vrot.slane %v6322, 2
      %v6325 = vrot.slane %v5440, 7
      %v6326 = vsel %vm6297, %v6324, %v6325
      %v6327 = vrot.slane %v6325, 2
      %v6328 = vrot.slane %v5508, 7
      %v6329 = vsel %vm6297, %v6327, %v6328
      %v6330 = vrot.slane %v5510, 7
      %v6331 = vrot.slane %v6330, 2
      %v6332 = vrot.slane %v5511, 7
      %v6333 = vsel %vm6297, %v6331, %v6332
      %v6334 = vrot.slane %v6332, 2
      %v6335 = vrot.slane %v5578, 7
      %v6336 = vsel %vm6297, %v6334, %v6335
      %v6337 = vrot.slane %v6335, 2
      %v6338 = vrot.slane %v5579, 7
      %v6339 = vsel %vm6297, %v6337, %v6338
      %v6340 = vrot.slane %v6338, 2
      %v6341 = vrot.slane %v5580, 7
      %v6342 = vsel %vm6297, %v6340, %v6341
      %v6343 = vrot.slane %v6341, 2
      %v6344 = vrot.slane %v5581, 7
      %v6345 = vsel %vm6297, %v6343, %v6344
      %v6346 = vrot.slane %v5650, 7
      %v6347 = vrot.slane %v6346, 2
      %v6348 = vrot.slane %v5651, 7
      %v6349 = vsel %vm6297, %v6347, %v6348
      %v6350 = vrot.slane %v6348, 2
      %v6351 = vrot.slane %v5652, 7
      %v6352 = vsel %vm6297, %v6350, %v6351
      %v6353 = vrot.slane %v6351, 2
      %v6354 = vrot.slane %v5719, 7
      %v6355 = vsel %vm6297, %v6353, %v6354
      %v6356 = vrot.slane %v6354, 2
      %v6357 = vrot.slane %v5720, 7
      %v6358 = vsel %vm6297, %v6356, %v6357
      %v6359 = vrot.slane %v6357, 2
      %v6360 = vrot.slane %v5721, 7
      %v6361 = vsel %vm6297, %v6359, %v6360
      %v6362 = vrot.slane %v5790, 7
      %v6363 = vrot.slane %v6362, 2
      %v6364 = vrot.slane %v5791, 7
      %v6365 = vsel %vm6297, %v6363, %v6364
      %v6366 = vrot.slane %v6364, 2
      %v6367 = vrot.slane %v5792, 7
      %v6368 = vsel %vm6297, %v6366, %v6367
      %v6369 = vrot.slane %v6367, 2
      %v6370 = vrot.slane %v5793, 7
      %v6371 = vsel %vm6297, %v6369, %v6370
      %v6372 = vrot.slane %v6370, 2
      %v6373 = vrot.slane %v5860, 7
      %v6374 = vsel %vm6297, %v6372, %v6373
      %v6375 = vrot.slane %v6373, 2
      %v6376 = vrot.slane %v5861, 7
      %v6377 = vsel %vm6297, %v6375, %v6376
      %v6378 = vrot.slane %v5863, 7
      %v6379 = vrot.slane %v6378, 2
      %v6380 = vrot.slane %v5930, 7
      %v6381 = vsel %vm6297, %v6379, %v6380
      %v6382 = vrot.slane %v6380, 2
      %v6383 = vrot.slane %v5931, 7
      %v6384 = vsel %vm6297, %v6382, %v6383
      %v6385 = vrot.slane %v6383, 2
      %v6386 = vrot.slane %v5932, 7
      %v6387 = vsel %vm6297, %v6385, %v6386
      %v6388 = vrot.slane %v6386, 2
      %v6389 = vrot.slane %v5933, 7
      %v6390 = vsel %vm6297, %v6388, %v6389
      %v6391 = vrot.slane %v6389, 2
      %v6392 = vrot.slane %v6001, 7
      %v6393 = vsel %vm6297, %v6391, %v6392
      %v6394 = vrot.slane %v6003, 7
      %v6395 = vrot.slane %v6394, 2
      %v6396 = vrot.slane %v6004, 7
      %v6397 = vsel %vm6297, %v6395, %v6396
      %v6398 = vrot.slane %v6396, 2
      %v6399 = vrot.slane %v6071, 7
      %v6400 = vsel %vm6297, %v6398, %v6399
      %v6401 = vrot.slane %v6399, 2
      %v6402 = vrot.slane %v6072, 7
      %v6403 = vsel %vm6297, %v6401, %v6402
      %v6404 = vrot.slane %v6402, 2
      %v6405 = vrot.slane %v6073, 7
      %v6406 = vsel %vm6297, %v6404, %v6405
      %v6407 = vrot.slane %v6405, 2
      %v6408 = vrot.slane %v6074, 7
      %v6409 = vsel %vm6297, %v6407, %v6408
      %v6410 = vrot.slane %v6143, 7
      %v6411 = vrot.slane %v6410, 2
      %v6412 = vrot.slane %v6144, 7
      %v6413 = vsel %vm6297, %v6411, %v6412
      %v6414 = vrot.slane %v6412, 2
      %v6415 = vrot.slane %v6145, 7
      %v6416 = vsel %vm6297, %v6414, %v6415
      %v6417 = vrot.slane %v6415, 2
      %v6418 = vrot.slane %v6212, 7
      %v6419 = vsel %vm6297, %v6417, %v6418
      %v6420 = vrot.slane %v6418, 2
      %v6421 = vrot.slane %v6213, 7
      %v6422 = vsel %vm6297, %v6420, %v6421
      %v6423 = vrot.slane %v6421, 2
      %v6424 = vrot.slane %v6214, 7
      %v6425 = vsel %vm6297, %v6423, %v6424
      %6426 = vrot.lane.b32.xlu0 %v6301, 96
      %v6427 = vpop.permute.xlu0 %6426
      %6428 = vrot.lane.b32.xlu0 %v6304, 96
      %v6429 = vpop.permute.xlu0 %6428
      %6430 = vrot.lane.b32.xlu0 %v6307, 96
      %v6431 = vpop.permute.xlu0 %6430
      %6432 = vrot.lane.b32.xlu0 %v6310, 96
      %v6433 = vpop.permute.xlu0 %6432
      %6434 = vrot.lane.b32.xlu0 %v6313, 96
      %v6435 = vpop.permute.xlu0 %6434
      %6436 = vrot.lane.b32.xlu0 %v6317, 96
      %v6437 = vpop.permute.xlu0 %6436
      %6438 = vrot.lane.b32.xlu0 %v6320, 96
      %v6439 = vpop.permute.xlu0 %6438
      %6440 = vrot.lane.b32.xlu0 %v6323, 96
      %v6441 = vpop.permute.xlu0 %6440
      %6442 = vrot.lane.b32.xlu0 %v6326, 96
      %v6443 = vpop.permute.xlu0 %6442
      %6444 = vrot.lane.b32.xlu0 %v6329, 96
      %v6445 = vpop.permute.xlu0 %6444
      %6446 = vrot.lane.b32.xlu0 %v6333, 96
      %v6447 = vpop.permute.xlu0 %6446
      %6448 = vrot.lane.b32.xlu0 %v6336, 96
      %v6449 = vpop.permute.xlu0 %6448
      %6450 = vrot.lane.b32.xlu0 %v6339, 96
      %v6451 = vpop.permute.xlu0 %6450
      %6452 = vrot.lane.b32.xlu0 %v6342, 96
      %v6453 = vpop.permute.xlu0 %6452
      %6454 = vrot.lane.b32.xlu0 %v6345, 96
      %v6455 = vpop.permute.xlu0 %6454
      %6456 = vrot.lane.b32.xlu0 %v6349, 96
      %v6457 = vpop.permute.xlu0 %6456
      %6458 = vrot.lane.b32.xlu0 %v6352, 96
      %v6459 = vpop.permute.xlu0 %6458
      %6460 = vrot.lane.b32.xlu0 %v6355, 96
      %v6461 = vpop.permute.xlu0 %6460
      %6462 = vrot.lane.b32.xlu0 %v6358, 96
      %v6463 = vpop.permute.xlu0 %6462
      %6464 = vrot.lane.b32.xlu0 %v6361, 96
      %v6465 = vpop.permute.xlu0 %6464
      %6466 = vrot.lane.b32.xlu0 %v6365, 96
      %v6467 = vpop.permute.xlu0 %6466
      %6468 = vrot.lane.b32.xlu0 %v6368, 96
      %v6469 = vpop.permute.xlu0 %6468
      %6470 = vrot.lane.b32.xlu0 %v6371, 96
      %v6471 = vpop.permute.xlu0 %6470
      %6472 = vrot.lane.b32.xlu0 %v6374, 96
      %v6473 = vpop.permute.xlu0 %6472
      %6474 = vrot.lane.b32.xlu0 %v6377, 96
      %v6475 = vpop.permute.xlu0 %6474
      %6476 = vrot.lane.b32.xlu0 %v6381, 96
      %v6477 = vpop.permute.xlu0 %6476
      %6478 = vrot.lane.b32.xlu0 %v6384, 96
      %v6479 = vpop.permute.xlu0 %6478
      %6480 = vrot.lane.b32.xlu0 %v6387, 96
      %v6481 = vpop.permute.xlu0 %6480
      %6482 = vrot.lane.b32.xlu0 %v6390, 96
      %v6483 = vpop.permute.xlu0 %6482
      %6484 = vrot.lane.b32.xlu0 %v6393, 96
      %v6485 = vpop.permute.xlu0 %6484
      %6486 = vrot.lane.b32.xlu0 %v6397, 96
      %v6487 = vpop.permute.xlu0 %6486
      %6488 = vrot.lane.b32.xlu0 %v6400, 96
      %v6489 = vpop.permute.xlu0 %6488
      %6490 = vrot.lane.b32.xlu0 %v6403, 96
      %v6491 = vpop.permute.xlu0 %6490
      %6492 = vrot.lane.b32.xlu0 %v6406, 96
      %v6493 = vpop.permute.xlu0 %6492
      %6494 = vrot.lane.b32.xlu0 %v6409, 96
      %v6495 = vpop.permute.xlu0 %6494
      %6496 = vrot.lane.b32.xlu0 %v6413, 96
      %v6497 = vpop.permute.xlu0 %6496
      %6498 = vrot.lane.b32.xlu0 %v6416, 96
      %v6499 = vpop.permute.xlu0 %6498
      %6500 = vrot.lane.b32.xlu0 %v6419, 96
      %v6501 = vpop.permute.xlu0 %6500
      %6502 = vrot.lane.b32.xlu0 %v6422, 96
      %v6503 = vpop.permute.xlu0 %6502
      %6504 = vrot.lane.b32.xlu0 %v6425, 96
      %v6505 = vpop.permute.xlu0 %6504
      %v6506 = vrot.slane %v6427, 2
      %v6507 = vrot.slane %v6429, 2
      %v6508 = vrot.slane %v6431, 2
      %v6509 = vrot.slane %v6433, 2
      %v6510 = vrot.slane %v6435, 2
      %v6511 = vrot.slane %v6437, 2
      %v6512 = vrot.slane %v6439, 2
      %v6513 = vrot.slane %v6441, 2
      %v6514 = vrot.slane %v6443, 2
      %v6515 = vrot.slane %v6445, 2
      %v6516 = vrot.slane %v6447, 2
      %v6517 = vrot.slane %v6449, 2
      %v6518 = vrot.slane %v6451, 2
      %v6519 = vrot.slane %v6453, 2
      %v6520 = vrot.slane %v6455, 2
      %v6521 = vrot.slane %v6457, 2
      %v6522 = vrot.slane %v6459, 2
      %v6523 = vrot.slane %v6461, 2
      %v6524 = vrot.slane %v6463, 2
      %v6525 = vrot.slane %v6465, 2
      %v6526 = vrot.slane %v6467, 2
      %v6527 = vrot.slane %v6469, 2
      %v6528 = vrot.slane %v6471, 2
      %v6529 = vrot.slane %v6473, 2
      %v6530 = vrot.slane %v6475, 2
      %v6531 = vrot.slane %v6477, 2
      %v6532 = vrot.slane %v6479, 2
      %v6533 = vrot.slane %v6481, 2
      %v6534 = vrot.slane %v6483, 2
      %v6535 = vrot.slane %v6485, 2
      %v6536 = vrot.slane %v6487, 2
      %v6537 = vrot.slane %v6489, 2
      %v6538 = vrot.slane %v6491, 2
      %v6539 = vrot.slane %v6493, 2
      %v6540 = vrot.slane %v6495, 2
      %v6541 = vrot.slane %v6497, 2
      %v6542 = vrot.slane %v6499, 2
      %v6543 = vrot.slane %v6501, 2
      %v6544 = vrot.slane %v6503, 2
      %v6545 = vrot.slane %v6505, 2
      %v6546 = vrot.slane %v6427, 4
      %v6547 = vrot.slane %v6429, 4
      %v6548 = vrot.slane %v6431, 4
      %v6549 = vrot.slane %v6433, 4
      %v6550 = vrot.slane %v6435, 4
      %v6551 = vrot.slane %v6437, 4
      %v6552 = vrot.slane %v6439, 4
      %v6553 = vrot.slane %v6441, 4
      %v6554 = vrot.slane %v6443, 4
      %v6555 = vrot.slane %v6445, 4
      %v6556 = vrot.slane %v6447, 4
      %v6557 = vrot.slane %v6449, 4
      %v6558 = vrot.slane %v6451, 4
      %v6559 = vrot.slane %v6453, 4
      %v6560 = vrot.slane %v6455, 4
      %v6561 = vrot.slane %v6457, 4
      %v6562 = vrot.slane %v6459, 4
      %v6563 = vrot.slane %v6461, 4
      %v6564 = vrot.slane %v6463, 4
      %v6565 = vrot.slane %v6465, 4
      %v6566 = vrot.slane %v6467, 4
      %v6567 = vrot.slane %v6469, 4
      %v6568 = vrot.slane %v6471, 4
      %v6569 = vrot.slane %v6473, 4
      %v6570 = vrot.slane %v6475, 4
      %v6571 = vrot.slane %v6477, 4
      %v6572 = vrot.slane %v6479, 4
      %v6573 = vrot.slane %v6481, 4
      %v6574 = vrot.slane %v6483, 4
      %v6575 = vrot.slane %v6485, 4
      %v6576 = vrot.slane %v6487, 4
      %v6577 = vrot.slane %v6489, 4
      %v6578 = vrot.slane %v6491, 4
      %v6579 = vrot.slane %v6493, 4
      %v6580 = vrot.slane %v6495, 4
      %v6581 = vrot.slane %v6497, 4
      %v6582 = vrot.slane %v6499, 4
      %v6583 = vrot.slane %v6501, 4
      %v6584 = vrot.slane %v6503, 4
      %v6585 = vrot.slane %v6505, 4
      %v6586 = vsel %vm764, %v6506, %v6546
      %v6587 = vsel %vm764, %v6507, %v6547
      %v6588 = vsel %vm764, %v6508, %v6548
      %v6589 = vsel %vm764, %v6509, %v6549
      %v6590 = vsel %vm764, %v6510, %v6550
      %v6591 = vsel %vm764, %v6511, %v6551
      %v6592 = vsel %vm764, %v6512, %v6552
      %v6593 = vsel %vm764, %v6513, %v6553
      %v6594 = vsel %vm764, %v6514, %v6554
      %v6595 = vsel %vm764, %v6515, %v6555
      %v6596 = vsel %vm764, %v6516, %v6556
      %v6597 = vsel %vm764, %v6517, %v6557
      %v6598 = vsel %vm764, %v6518, %v6558
      %v6599 = vsel %vm764, %v6519, %v6559
      %v6600 = vsel %vm764, %v6520, %v6560
      %v6601 = vsel %vm764, %v6521, %v6561
      %v6602 = vsel %vm764, %v6522, %v6562
      %v6603 = vsel %vm764, %v6523, %v6563
      %v6604 = vsel %vm764, %v6524, %v6564
      %v6605 = vsel %vm764, %v6525, %v6565
      %v6606 = vsel %vm764, %v6526, %v6566
      %v6607 = vsel %vm764, %v6527, %v6567
      %v6608 = vsel %vm764, %v6528, %v6568
      %v6609 = vsel %vm764, %v6529, %v6569
      %v6610 = vsel %vm764, %v6530, %v6570
      %v6611 = vsel %vm764, %v6531, %v6571
      %v6612 = vsel %vm764, %v6532, %v6572
      %v6613 = vsel %vm764, %v6533, %v6573
      %v6614 = vsel %vm764, %v6534, %v6574
      %v6615 = vsel %vm764, %v6535, %v6575
      %v6616 = vsel %vm764, %v6536, %v6576
      %v6617 = vsel %vm764, %v6537, %v6577
      %v6618 = vsel %vm764, %v6538, %v6578
      %v6619 = vsel %vm764, %v6539, %v6579
      %v6620 = vsel %vm764, %v6540, %v6580
      %v6621 = vsel %vm764, %v6541, %v6581
      %v6622 = vsel %vm764, %v6542, %v6582
      %v6623 = vsel %vm764, %v6543, %v6583
      %v6624 = vsel %vm764, %v6544, %v6584
      %v6625 = vsel %vm764, %v6545, %v6585
      %v6666 = vadd.f32 %v5297, %v6586
      %v6667 = vadd.f32 %v5298, %v6587
      %v6668 = vadd.f32 %v5299, %v6588
      %v6669 = vadd.f32 %v5300, %v6589
      %v6670 = vadd.f32 %v5367, %v6590
      %v6671 = vadd.f32 %v5370, %v6591
      %v6672 = vadd.f32 %v5437, %v6592
      %v6673 = vadd.f32 %v5438, %v6593
      %v6674 = vadd.f32 %v5439, %v6594
      %v6675 = vadd.f32 %v5440, %v6595
      %v6676 = vadd.f32 %v5510, %v6596
      %v6677 = vadd.f32 %v5511, %v6597
      %v6678 = vadd.f32 %v5578, %v6598
      %v6679 = vadd.f32 %v5579, %v6599
      %v6680 = vadd.f32 %v5580, %v6600
      %v6681 = vadd.f32 %v5650, %v6601
      %v6682 = vadd.f32 %v5651, %v6602
      %v6683 = vadd.f32 %v5652, %v6603
      %v6684 = vadd.f32 %v5719, %v6604
      %v6685 = vadd.f32 %v5720, %v6605
      %v6686 = vadd.f32 %v5790, %v6606
      %v6687 = vadd.f32 %v5791, %v6607
      %v6688 = vadd.f32 %v5792, %v6608
      %v6689 = vadd.f32 %v5793, %v6609
      %v6690 = vadd.f32 %v5860, %v6610
      %v6691 = vadd.f32 %v5863, %v6611
      %v6692 = vadd.f32 %v5930, %v6612
      %v6693 = vadd.f32 %v5931, %v6613
      %v6694 = vadd.f32 %v5932, %v6614
      %v6695 = vadd.f32 %v5933, %v6615
      %v6696 = vadd.f32 %v6003, %v6616
      %v6697 = vadd.f32 %v6004, %v6617
      %v6698 = vadd.f32 %v6071, %v6618
      %v6699 = vadd.f32 %v6072, %v6619
      %v6700 = vadd.f32 %v6073, %v6620
      %v6701 = vadd.f32 %v6143, %v6621
      %v6702 = vadd.f32 %v6144, %v6622
      %v6703 = vadd.f32 %v6145, %v6623
      %v6704 = vadd.f32 %v6212, %v6624
      %v6705 = vadd.f32 %v6213, %v6625
      %6706 = vrot.lane.b32.xlu0 %v5298, 64
      %v6707 = vpop.permute.xlu0 %6706
      %6708 = vrot.lane.b32.xlu0 %v5299, 64
      %v6709 = vpop.permute.xlu0 %6708
      %6710 = vrot.lane.b32.xlu0 %v5300, 64
      %v6711 = vpop.permute.xlu0 %6710
      %6712 = vrot.lane.b32.xlu0 %v5367, 64
      %v6713 = vpop.permute.xlu0 %6712
      %6714 = vrot.lane.b32.xlu0 %v5368, 64
      %v6715 = vpop.permute.xlu0 %6714
      %6716 = vrot.lane.b32.xlu0 %v5437, 64
      %v6717 = vpop.permute.xlu0 %6716
      %6718 = vrot.lane.b32.xlu0 %v5438, 64
      %v6719 = vpop.permute.xlu0 %6718
      %6720 = vrot.lane.b32.xlu0 %v5439, 64
      %v6721 = vpop.permute.xlu0 %6720
      %6722 = vrot.lane.b32.xlu0 %v5440, 64
      %v6723 = vpop.permute.xlu0 %6722
      %6724 = vrot.lane.b32.xlu0 %v5508, 64
      %v6725 = vpop.permute.xlu0 %6724
      %6726 = vrot.lane.b32.xlu0 %v5511, 64
      %v6727 = vpop.permute.xlu0 %6726
      %6728 = vrot.lane.b32.xlu0 %v5578, 64
      %v6729 = vpop.permute.xlu0 %6728
      %6730 = vrot.lane.b32.xlu0 %v5579, 64
      %v6731 = vpop.permute.xlu0 %6730
      %6732 = vrot.lane.b32.xlu0 %v5580, 64
      %v6733 = vpop.permute.xlu0 %6732
      %6734 = vrot.lane.b32.xlu0 %v5581, 64
      %v6735 = vpop.permute.xlu0 %6734
      %6736 = vrot.lane.b32.xlu0 %v5651, 64
      %v6737 = vpop.permute.xlu0 %6736
      %6738 = vrot.lane.b32.xlu0 %v5652, 64
      %v6739 = vpop.permute.xlu0 %6738
      %6740 = vrot.lane.b32.xlu0 %v5719, 64
      %v6741 = vpop.permute.xlu0 %6740
      %6742 = vrot.lane.b32.xlu0 %v5720, 64
      %v6743 = vpop.permute.xlu0 %6742
      %6744 = vrot.lane.b32.xlu0 %v5721, 64
      %v6745 = vpop.permute.xlu0 %6744
      %6746 = vrot.lane.b32.xlu0 %v5791, 64
      %v6747 = vpop.permute.xlu0 %6746
      %6748 = vrot.lane.b32.xlu0 %v5792, 64
      %v6749 = vpop.permute.xlu0 %6748
      %6750 = vrot.lane.b32.xlu0 %v5793, 64
      %v6751 = vpop.permute.xlu0 %6750
      %6752 = vrot.lane.b32.xlu0 %v5860, 64
      %v6753 = vpop.permute.xlu0 %6752
      %6754 = vrot.lane.b32.xlu0 %v5861, 64
      %v6755 = vpop.permute.xlu0 %6754
      %6756 = vrot.lane.b32.xlu0 %v5930, 64
      %v6757 = vpop.permute.xlu0 %6756
      %6758 = vrot.lane.b32.xlu0 %v5931, 64
      %v6759 = vpop.permute.xlu0 %6758
      %6760 = vrot.lane.b32.xlu0 %v5932, 64
      %v6761 = vpop.permute.xlu0 %6760
      %6762 = vrot.lane.b32.xlu0 %v5933, 64
      %v6763 = vpop.permute.xlu0 %6762
      %6764 = vrot.lane.b32.xlu0 %v6001, 64
      %v6765 = vpop.permute.xlu0 %6764
      %6766 = vrot.lane.b32.xlu0 %v6004, 64
      %v6767 = vpop.permute.xlu0 %6766
      %6768 = vrot.lane.b32.xlu0 %v6071, 64
      %v6769 = vpop.permute.xlu0 %6768
      %6770 = vrot.lane.b32.xlu0 %v6072, 64
      %v6771 = vpop.permute.xlu0 %6770
      %6772 = vrot.lane.b32.xlu0 %v6073, 64
      %v6773 = vpop.permute.xlu0 %6772
      %6774 = vrot.lane.b32.xlu0 %v6074, 64
      %v6775 = vpop.permute.xlu0 %6774
      %6776 = vrot.lane.b32.xlu0 %v6144, 64
      %v6777 = vpop.permute.xlu0 %6776
      %6778 = vrot.lane.b32.xlu0 %v6145, 64
      %v6779 = vpop.permute.xlu0 %6778
      %6780 = vrot.lane.b32.xlu0 %v6212, 64
      %v6781 = vpop.permute.xlu0 %6780
      %6782 = vrot.lane.b32.xlu0 %v6213, 64
      %v6783 = vpop.permute.xlu0 %6782
      %6784 = vrot.lane.b32.xlu0 %v6214, 64
      %v6785 = vpop.permute.xlu0 %6784
      %v6786 = vrot.slane %v6707, 4
      %v6787 = vrot.slane %v6709, 4
      %v6788 = vrot.slane %v6711, 4
      %v6789 = vrot.slane %v6713, 4
      %v6790 = vrot.slane %v6715, 4
      %v6791 = vrot.slane %v6717, 4
      %v6792 = vrot.slane %v6719, 4
      %v6793 = vrot.slane %v6721, 4
      %v6794 = vrot.slane %v6723, 4
      %v6795 = vrot.slane %v6725, 4
      %v6796 = vrot.slane %v6727, 4
      %v6797 = vrot.slane %v6729, 4
      %v6798 = vrot.slane %v6731, 4
      %v6799 = vrot.slane %v6733, 4
      %v6800 = vrot.slane %v6735, 4
      %v6801 = vrot.slane %v6737, 4
      %v6802 = vrot.slane %v6739, 4
      %v6803 = vrot.slane %v6741, 4
      %v6804 = vrot.slane %v6743, 4
      %v6805 = vrot.slane %v6745, 4
      %v6806 = vrot.slane %v6747, 4
      %v6807 = vrot.slane %v6749, 4
      %v6808 = vrot.slane %v6751, 4
      %v6809 = vrot.slane %v6753, 4
      %v6810 = vrot.slane %v6755, 4
      %v6811 = vrot.slane %v6757, 4
      %v6812 = vrot.slane %v6759, 4
      %v6813 = vrot.slane %v6761, 4
      %v6814 = vrot.slane %v6763, 4
      %v6815 = vrot.slane %v6765, 4
      %v6816 = vrot.slane %v6767, 4
      %v6817 = vrot.slane %v6769, 4
      %v6818 = vrot.slane %v6771, 4
      %v6819 = vrot.slane %v6773, 4
      %v6820 = vrot.slane %v6775, 4
      %v6821 = vrot.slane %v6777, 4
      %v6822 = vrot.slane %v6779, 4
      %v6823 = vrot.slane %v6781, 4
      %v6824 = vrot.slane %v6783, 4
      %v6825 = vrot.slane %v6785, 4
      %v6826 = vrot.slane %v6707, 6
      %v6827 = vrot.slane %v6709, 6
      %v6828 = vrot.slane %v6711, 6
      %v6829 = vrot.slane %v6713, 6
      %v6830 = vrot.slane %v6715, 6
      %v6831 = vrot.slane %v6717, 6
      %v6832 = vrot.slane %v6719, 6
      %v6833 = vrot.slane %v6721, 6
      %v6834 = vrot.slane %v6723, 6
      %v6835 = vrot.slane %v6725, 6
      %v6836 = vrot.slane %v6727, 6
      %v6837 = vrot.slane %v6729, 6
      %v6838 = vrot.slane %v6731, 6
      %v6839 = vrot.slane %v6733, 6
      %v6840 = vrot.slane %v6735, 6
      %v6841 = vrot.slane %v6737, 6
      %v6842 = vrot.slane %v6739, 6
      %v6843 = vrot.slane %v6741, 6
      %v6844 = vrot.slane %v6743, 6
      %v6845 = vrot.slane %v6745, 6
      %v6846 = vrot.slane %v6747, 6
      %v6847 = vrot.slane %v6749, 6
      %v6848 = vrot.slane %v6751, 6
      %v6849 = vrot.slane %v6753, 6
      %v6850 = vrot.slane %v6755, 6
      %v6851 = vrot.slane %v6757, 6
      %v6852 = vrot.slane %v6759, 6
      %v6853 = vrot.slane %v6761, 6
      %v6854 = vrot.slane %v6763, 6
      %v6855 = vrot.slane %v6765, 6
      %v6856 = vrot.slane %v6767, 6
      %v6857 = vrot.slane %v6769, 6
      %v6858 = vrot.slane %v6771, 6
      %v6859 = vrot.slane %v6773, 6
      %v6860 = vrot.slane %v6775, 6
      %v6861 = vrot.slane %v6777, 6
      %v6862 = vrot.slane %v6779, 6
      %v6863 = vrot.slane %v6781, 6
      %v6864 = vrot.slane %v6783, 6
      %v6865 = vrot.slane %v6785, 6
      %vm6866 = vcmask 523264
      %v6867 = vsel %vm6866, %v6786, %v6826
      %v6868 = vsel %vm6866, %v6787, %v6827
      %v6869 = vsel %vm6866, %v6788, %v6828
      %v6870 = vsel %vm6866, %v6789, %v6829
      %v6871 = vsel %vm6866, %v6790, %v6830
      %v6872 = vsel %vm6866, %v6791, %v6831
      %v6873 = vsel %vm6866, %v6792, %v6832
      %v6874 = vsel %vm6866, %v6793, %v6833
      %v6875 = vsel %vm6866, %v6794, %v6834
      %v6876 = vsel %vm6866, %v6795, %v6835
      %v6877 = vsel %vm6866, %v6796, %v6836
      %v6878 = vsel %vm6866, %v6797, %v6837
      %v6879 = vsel %vm6866, %v6798, %v6838
      %v6880 = vsel %vm6866, %v6799, %v6839
      %v6881 = vsel %vm6866, %v6800, %v6840
      %v6882 = vsel %vm6866, %v6801, %v6841
      %v6883 = vsel %vm6866, %v6802, %v6842
      %v6884 = vsel %vm6866, %v6803, %v6843
      %v6885 = vsel %vm6866, %v6804, %v6844
      %v6886 = vsel %vm6866, %v6805, %v6845
      %v6887 = vsel %vm6866, %v6806, %v6846
      %v6888 = vsel %vm6866, %v6807, %v6847
      %v6889 = vsel %vm6866, %v6808, %v6848
      %v6890 = vsel %vm6866, %v6809, %v6849
      %v6891 = vsel %vm6866, %v6810, %v6850
      %v6892 = vsel %vm6866, %v6811, %v6851
      %v6893 = vsel %vm6866, %v6812, %v6852
      %v6894 = vsel %vm6866, %v6813, %v6853
      %v6895 = vsel %vm6866, %v6814, %v6854
      %v6896 = vsel %vm6866, %v6815, %v6855
      %v6897 = vsel %vm6866, %v6816, %v6856
      %v6898 = vsel %vm6866, %v6817, %v6857
      %v6899 = vsel %vm6866, %v6818, %v6858
      %v6900 = vsel %vm6866, %v6819, %v6859
      %v6901 = vsel %vm6866, %v6820, %v6860
      %v6902 = vsel %vm6866, %v6821, %v6861
      %v6903 = vsel %vm6866, %v6822, %v6862
      %v6904 = vsel %vm6866, %v6823, %v6863
      %v6905 = vsel %vm6866, %v6824, %v6864
      %v6906 = vsel %vm6866, %v6825, %v6865
      %v6947 = vadd.f32 %v6666, %v6867
      %v6948 = vadd.f32 %v6667, %v6868
      %v6949 = vadd.f32 %v6668, %v6869
      %v6950 = vadd.f32 %v6669, %v6870
      %v6951 = vadd.f32 %v6670, %v6871
      %v6952 = vadd.f32 %v6671, %v6872
      %v6953 = vadd.f32 %v6672, %v6873
      %v6954 = vadd.f32 %v6673, %v6874
      %v6955 = vadd.f32 %v6674, %v6875
      %v6956 = vadd.f32 %v6675, %v6876
      %v6957 = vadd.f32 %v6676, %v6877
      %v6958 = vadd.f32 %v6677, %v6878
      %v6959 = vadd.f32 %v6678, %v6879
      %v6960 = vadd.f32 %v6679, %v6880
      %v6961 = vadd.f32 %v6680, %v6881
      %v6962 = vadd.f32 %v6681, %v6882
      %v6963 = vadd.f32 %v6682, %v6883
      %v6964 = vadd.f32 %v6683, %v6884
      %v6965 = vadd.f32 %v6684, %v6885
      %v6966 = vadd.f32 %v6685, %v6886
      %v6967 = vadd.f32 %v6686, %v6887
      %v6968 = vadd.f32 %v6687, %v6888
      %v6969 = vadd.f32 %v6688, %v6889
      %v6970 = vadd.f32 %v6689, %v6890
      %v6971 = vadd.f32 %v6690, %v6891
      %v6972 = vadd.f32 %v6691, %v6892
      %v6973 = vadd.f32 %v6692, %v6893
      %v6974 = vadd.f32 %v6693, %v6894
      %v6975 = vadd.f32 %v6694, %v6895
      %v6976 = vadd.f32 %v6695, %v6896
      %v6977 = vadd.f32 %v6696, %v6897
      %v6978 = vadd.f32 %v6697, %v6898
      %v6979 = vadd.f32 %v6698, %v6899
      %v6980 = vadd.f32 %v6699, %v6900
      %v6981 = vadd.f32 %v6700, %v6901
      %v6982 = vadd.f32 %v6701, %v6902
      %v6983 = vadd.f32 %v6702, %v6903
      %v6984 = vadd.f32 %v6703, %v6904
      %v6985 = vadd.f32 %v6704, %v6905
      %v6986 = vadd.f32 %v6705, %v6906
      %v6987 = vrot.slane %v5332, 7
      %v6988 = vrot.slane %v6987, 2
      %v6989 = vrot.slane %v5333, 7
      %v6990 = vsel %vm6297, %v6988, %v6989
      %v6991 = vrot.slane %v6989, 2
      %v6992 = vrot.slane %v5334, 7
      %v6993 = vsel %vm6297, %v6991, %v6992
      %v6994 = vrot.slane %v6992, 2
      %v6995 = vrot.slane %v5402, 7
      %v6996 = vsel %vm6297, %v6994, %v6995
      %v6997 = vrot.slane %v6995, 2
      %v6998 = vrot.slane %v5403, 7
      %v6999 = vsel %vm6297, %v6997, %v6998
      %v7000 = vrot.slane %v6312, 2
      %v7001 = vrot.slane %v5369, 7
      %v7002 = vsel %vm6297, %v7000, %v7001
      %v7003 = vrot.slane %v6998, 2
      %v7004 = vrot.slane %v5404, 7
      %v7005 = vsel %vm6297, %v7003, %v7004
      %v7006 = vrot.slane %v5472, 7
      %v7007 = vrot.slane %v7006, 2
      %v7008 = vrot.slane %v5473, 7
      %v7009 = vsel %vm6297, %v7007, %v7008
      %v7010 = vrot.slane %v7008, 2
      %v7011 = vrot.slane %v5474, 7
      %v7012 = vsel %vm6297, %v7010, %v7011
      %v7013 = vrot.slane %v7011, 2
      %v7014 = vrot.slane %v5475, 7
      %v7015 = vsel %vm6297, %v7013, %v7014
      %v7016 = vrot.slane %v7014, 2
      %v7017 = vrot.slane %v5543, 7
      %v7018 = vsel %vm6297, %v7016, %v7017
      %v7019 = vrot.slane %v6328, 2
      %v7020 = vrot.slane %v5509, 7
      %v7021 = vsel %vm6297, %v7019, %v7020
      %v7022 = vrot.slane %v7017, 2
      %v7023 = vrot.slane %v5544, 7
      %v7024 = vsel %vm6297, %v7022, %v7023
      %v7025 = vrot.slane %v5545, 7
      %v7026 = vrot.slane %v7025, 2
      %v7027 = vrot.slane %v5613, 7
      %v7028 = vsel %vm6297, %v7026, %v7027
      %v7029 = vrot.slane %v7027, 2
      %v7030 = vrot.slane %v5614, 7
      %v7031 = vsel %vm6297, %v7029, %v7030
      %v7032 = vrot.slane %v7030, 2
      %v7033 = vrot.slane %v5615, 7
      %v7034 = vsel %vm6297, %v7032, %v7033
      %v7035 = vrot.slane %v7033, 2
      %v7036 = vrot.slane %v5616, 7
      %v7037 = vsel %vm6297, %v7035, %v7036
      %v7038 = vrot.slane %v6344, 2
      %v7039 = vrot.slane %v5649, 7
      %v7040 = vsel %vm6297, %v7038, %v7039
      %v7041 = vrot.slane %v7036, 2
      %v7042 = vrot.slane %v5684, 7
      %v7043 = vsel %vm6297, %v7041, %v7042
      %v7044 = vrot.slane %v5685, 7
      %v7045 = vrot.slane %v7044, 2
      %v7046 = vrot.slane %v5686, 7
      %v7047 = vsel %vm6297, %v7045, %v7046
      %v7048 = vrot.slane %v7046, 2
      %v7049 = vrot.slane %v5754, 7
      %v7050 = vsel %vm6297, %v7048, %v7049
      %v7051 = vrot.slane %v7049, 2
      %v7052 = vrot.slane %v5755, 7
      %v7053 = vsel %vm6297, %v7051, %v7052
      %v7054 = vrot.slane %v7052, 2
      %v7055 = vrot.slane %v5756, 7
      %v7056 = vsel %vm6297, %v7054, %v7055
      %v7057 = vrot.slane %v6360, 2
      %v7058 = vrot.slane %v5722, 7
      %v7059 = vsel %vm6297, %v7057, %v7058
      %v7060 = vrot.slane %v7055, 2
      %v7061 = vrot.slane %v5757, 7
      %v7062 = vsel %vm6297, %v7060, %v7061
      %v7063 = vrot.slane %v5825, 7
      %v7064 = vrot.slane %v7063, 2
      %v7065 = vrot.slane %v5826, 7
      %v7066 = vsel %vm6297, %v7064, %v7065
      %v7067 = vrot.slane %v7065, 2
      %v7068 = vrot.slane %v5827, 7
      %v7069 = vsel %vm6297, %v7067, %v7068
      %v7070 = vrot.slane %v7068, 2
      %v7071 = vrot.slane %v5895, 7
      %v7072 = vsel %vm6297, %v7070, %v7071
      %v7073 = vrot.slane %v7071, 2
      %v7074 = vrot.slane %v5896, 7
      %v7075 = vsel %vm6297, %v7073, %v7074
      %v7076 = vrot.slane %v6376, 2
      %v7077 = vrot.slane %v5862, 7
      %v7078 = vsel %vm6297, %v7076, %v7077
      %v7079 = vrot.slane %v7074, 2
      %v7080 = vrot.slane %v5897, 7
      %v7081 = vsel %vm6297, %v7079, %v7080
      %v7082 = vrot.slane %v5965, 7
      %v7083 = vrot.slane %v7082, 2
      %v7084 = vrot.slane %v5966, 7
      %v7085 = vsel %vm6297, %v7083, %v7084
      %v7086 = vrot.slane %v7084, 2
      %v7087 = vrot.slane %v5967, 7
      %v7088 = vsel %vm6297, %v7086, %v7087
      %v7089 = vrot.slane %v7087, 2
      %v7090 = vrot.slane %v5968, 7
      %v7091 = vsel %vm6297, %v7089, %v7090
      %v7092 = vrot.slane %v7090, 2
      %v7093 = vrot.slane %v6036, 7
      %v7094 = vsel %vm6297, %v7092, %v7093
      %v7095 = vrot.slane %v6392, 2
      %v7096 = vrot.slane %v6002, 7
      %v7097 = vsel %vm6297, %v7095, %v7096
      %v7098 = vrot.slane %v7093, 2
      %v7099 = vrot.slane %v6037, 7
      %v7100 = vsel %vm6297, %v7098, %v7099
      %v7101 = vrot.slane %v6038, 7
      %v7102 = vrot.slane %v7101, 2
      %v7103 = vrot.slane %v6106, 7
      %v7104 = vsel %vm6297, %v7102, %v7103
      %v7105 = vrot.slane %v7103, 2
      %v7106 = vrot.slane %v6107, 7
      %v7107 = vsel %vm6297, %v7105, %v7106
      %v7108 = vrot.slane %v7106, 2
      %v7109 = vrot.slane %v6108, 7
      %v7110 = vsel %vm6297, %v7108, %v7109
      %v7111 = vrot.slane %v7109, 2
      %v7112 = vrot.slane %v6109, 7
      %v7113 = vsel %vm6297, %v7111, %v7112
      %v7114 = vrot.slane %v6408, 2
      %v7115 = vrot.slane %v6142, 7
      %v7116 = vsel %vm6297, %v7114, %v7115
      %v7117 = vrot.slane %v7112, 2
      %v7118 = vrot.slane %v6177, 7
      %v7119 = vsel %vm6297, %v7117, %v7118
      %v7120 = vrot.slane %v6178, 7
      %v7121 = vrot.slane %v7120, 2
      %v7122 = vrot.slane %v6179, 7
      %v7123 = vsel %vm6297, %v7121, %v7122
      %v7124 = vrot.slane %v7122, 2
      %v7125 = vrot.slane %v6247, 7
      %v7126 = vsel %vm6297, %v7124, %v7125
      %v7127 = vrot.slane %v7125, 2
      %v7128 = vrot.slane %v6248, 7
      %v7129 = vsel %vm6297, %v7127, %v7128
      %v7130 = vrot.slane %v7128, 2
      %v7131 = vrot.slane %v6249, 7
      %v7132 = vsel %vm6297, %v7130, %v7131
      %v7133 = vrot.slane %v6424, 2
      %v7134 = vrot.slane %v6215, 7
      %v7135 = vsel %vm6297, %v7133, %v7134
      %v7136 = vrot.slane %v7131, 2
      %v7137 = vrot.slane %v6250, 7
      %v7138 = vsel %vm6297, %v7136, %v7137
      %7139 = vrot.lane.b32.xlu0 %v6304, 32
      %v7140 = vpop.permute.xlu0 %7139
      %7141 = vrot.lane.b32.xlu0 %v6990, 32
      %v7142 = vpop.permute.xlu0 %7141
      %7143 = vrot.lane.b32.xlu0 %v6307, 32
      %v7144 = vpop.permute.xlu0 %7143
      %7145 = vrot.lane.b32.xlu0 %v6993, 32
      %v7146 = vpop.permute.xlu0 %7145
      %7147 = vrot.lane.b32.xlu0 %v6310, 32
      %v7148 = vpop.permute.xlu0 %7147
      %7149 = vrot.lane.b32.xlu0 %v6996, 32
      %v7150 = vpop.permute.xlu0 %7149
      %7151 = vrot.lane.b32.xlu0 %v6313, 32
      %v7152 = vpop.permute.xlu0 %7151
      %7153 = vrot.lane.b32.xlu0 %v6999, 32
      %v7154 = vpop.permute.xlu0 %7153
      %7155 = vrot.lane.b32.xlu0 %v7002, 32
      %v7156 = vpop.permute.xlu0 %7155
      %7157 = vrot.lane.b32.xlu0 %v7005, 32
      %v7158 = vpop.permute.xlu0 %7157
      %7159 = vrot.lane.b32.xlu0 %v6320, 32
      %v7160 = vpop.permute.xlu0 %7159
      %7161 = vrot.lane.b32.xlu0 %v7009, 32
      %v7162 = vpop.permute.xlu0 %7161
      %7163 = vrot.lane.b32.xlu0 %v6323, 32
      %v7164 = vpop.permute.xlu0 %7163
      %7165 = vrot.lane.b32.xlu0 %v7012, 32
      %v7166 = vpop.permute.xlu0 %7165
      %7167 = vrot.lane.b32.xlu0 %v6326, 32
      %v7168 = vpop.permute.xlu0 %7167
      %7169 = vrot.lane.b32.xlu0 %v7015, 32
      %v7170 = vpop.permute.xlu0 %7169
      %7171 = vrot.lane.b32.xlu0 %v6329, 32
      %v7172 = vpop.permute.xlu0 %7171
      %7173 = vrot.lane.b32.xlu0 %v7018, 32
      %v7174 = vpop.permute.xlu0 %7173
      %7175 = vrot.lane.b32.xlu0 %v7021, 32
      %v7176 = vpop.permute.xlu0 %7175
      %7177 = vrot.lane.b32.xlu0 %v7024, 32
      %v7178 = vpop.permute.xlu0 %7177
      %7179 = vrot.lane.b32.xlu0 %v6336, 32
      %v7180 = vpop.permute.xlu0 %7179
      %7181 = vrot.lane.b32.xlu0 %v7028, 32
      %v7182 = vpop.permute.xlu0 %7181
      %7183 = vrot.lane.b32.xlu0 %v6339, 32
      %v7184 = vpop.permute.xlu0 %7183
      %7185 = vrot.lane.b32.xlu0 %v7031, 32
      %v7186 = vpop.permute.xlu0 %7185
      %7187 = vrot.lane.b32.xlu0 %v6342, 32
      %v7188 = vpop.permute.xlu0 %7187
      %7189 = vrot.lane.b32.xlu0 %v7034, 32
      %v7190 = vpop.permute.xlu0 %7189
      %7191 = vrot.lane.b32.xlu0 %v6345, 32
      %v7192 = vpop.permute.xlu0 %7191
      %7193 = vrot.lane.b32.xlu0 %v7037, 32
      %v7194 = vpop.permute.xlu0 %7193
      %7195 = vrot.lane.b32.xlu0 %v7040, 32
      %v7196 = vpop.permute.xlu0 %7195
      %7197 = vrot.lane.b32.xlu0 %v7043, 32
      %v7198 = vpop.permute.xlu0 %7197
      %7199 = vrot.lane.b32.xlu0 %v6352, 32
      %v7200 = vpop.permute.xlu0 %7199
      %7201 = vrot.lane.b32.xlu0 %v7047, 32
      %v7202 = vpop.permute.xlu0 %7201
      %7203 = vrot.lane.b32.xlu0 %v6355, 32
      %v7204 = vpop.permute.xlu0 %7203
      %7205 = vrot.lane.b32.xlu0 %v7050, 32
      %v7206 = vpop.permute.xlu0 %7205
      %7207 = vrot.lane.b32.xlu0 %v6358, 32
      %v7208 = vpop.permute.xlu0 %7207
      %7209 = vrot.lane.b32.xlu0 %v7053, 32
      %v7210 = vpop.permute.xlu0 %7209
      %7211 = vrot.lane.b32.xlu0 %v6361, 32
      %v7212 = vpop.permute.xlu0 %7211
      %7213 = vrot.lane.b32.xlu0 %v7056, 32
      %v7214 = vpop.permute.xlu0 %7213
      %7215 = vrot.lane.b32.xlu0 %v7059, 32
      %v7216 = vpop.permute.xlu0 %7215
      %7217 = vrot.lane.b32.xlu0 %v7062, 32
      %v7218 = vpop.permute.xlu0 %7217
      %7219 = vrot.lane.b32.xlu0 %v6368, 32
      %v7220 = vpop.permute.xlu0 %7219
      %7221 = vrot.lane.b32.xlu0 %v7066, 32
      %v7222 = vpop.permute.xlu0 %7221
      %7223 = vrot.lane.b32.xlu0 %v6371, 32
      %v7224 = vpop.permute.xlu0 %7223
      %7225 = vrot.lane.b32.xlu0 %v7069, 32
      %v7226 = vpop.permute.xlu0 %7225
      %7227 = vrot.lane.b32.xlu0 %v6374, 32
      %v7228 = vpop.permute.xlu0 %7227
      %7229 = vrot.lane.b32.xlu0 %v7072, 32
      %v7230 = vpop.permute.xlu0 %7229
      %7231 = vrot.lane.b32.xlu0 %v6377, 32
      %v7232 = vpop.permute.xlu0 %7231
      %7233 = vrot.lane.b32.xlu0 %v7075, 32
      %v7234 = vpop.permute.xlu0 %7233
      %7235 = vrot.lane.b32.xlu0 %v7078, 32
      %v7236 = vpop.permute.xlu0 %7235
      %7237 = vrot.lane.b32.xlu0 %v7081, 32
      %v7238 = vpop.permute.xlu0 %7237
      %7239 = vrot.lane.b32.xlu0 %v6384, 32
      %v7240 = vpop.permute.xlu0 %7239
      %7241 = vrot.lane.b32.xlu0 %v7085, 32
      %v7242 = vpop.permute.xlu0 %7241
      %7243 = vrot.lane.b32.xlu0 %v6387, 32
      %v7244 = vpop.permute.xlu0 %7243
      %7245 = vrot.lane.b32.xlu0 %v7088, 32
      %v7246 = vpop.permute.xlu0 %7245
      %7247 = vrot.lane.b32.xlu0 %v6390, 32
      %v7248 = vpop.permute.xlu0 %7247
      %7249 = vrot.lane.b32.xlu0 %v7091, 32
      %v7250 = vpop.permute.xlu0 %7249
      %7251 = vrot.lane.b32.xlu0 %v6393, 32
      %v7252 = vpop.permute.xlu0 %7251
      %7253 = vrot.lane.b32.xlu0 %v7094, 32
      %v7254 = vpop.permute.xlu0 %7253
      %7255 = vrot.lane.b32.xlu0 %v7097, 32
      %v7256 = vpop.permute.xlu0 %7255
      %7257 = vrot.lane.b32.xlu0 %v7100, 32
      %v7258 = vpop.permute.xlu0 %7257
      %7259 = vrot.lane.b32.xlu0 %v6400, 32
      %v7260 = vpop.permute.xlu0 %7259
      %7261 = vrot.lane.b32.xlu0 %v7104, 32
      %v7262 = vpop.permute.xlu0 %7261
      %7263 = vrot.lane.b32.xlu0 %v6403, 32
      %v7264 = vpop.permute.xlu0 %7263
      %7265 = vrot.lane.b32.xlu0 %v7107, 32
      %v7266 = vpop.permute.xlu0 %7265
      %7267 = vrot.lane.b32.xlu0 %v6406, 32
      %v7268 = vpop.permute.xlu0 %7267
      %7269 = vrot.lane.b32.xlu0 %v7110, 32
      %v7270 = vpop.permute.xlu0 %7269
      %7271 = vrot.lane.b32.xlu0 %v6409, 32
      %v7272 = vpop.permute.xlu0 %7271
      %7273 = vrot.lane.b32.xlu0 %v7113, 32
      %v7274 = vpop.permute.xlu0 %7273
      %7275 = vrot.lane.b32.xlu0 %v7116, 32
      %v7276 = vpop.permute.xlu0 %7275
      %7277 = vrot.lane.b32.xlu0 %v7119, 32
      %v7278 = vpop.permute.xlu0 %7277
      %7279 = vrot.lane.b32.xlu0 %v6416, 32
      %v7280 = vpop.permute.xlu0 %7279
      %7281 = vrot.lane.b32.xlu0 %v7123, 32
      %v7282 = vpop.permute.xlu0 %7281
      %7283 = vrot.lane.b32.xlu0 %v6419, 32
      %v7284 = vpop.permute.xlu0 %7283
      %7285 = vrot.lane.b32.xlu0 %v7126, 32
      %v7286 = vpop.permute.xlu0 %7285
      %7287 = vrot.lane.b32.xlu0 %v6422, 32
      %v7288 = vpop.permute.xlu0 %7287
      %7289 = vrot.lane.b32.xlu0 %v7129, 32
      %v7290 = vpop.permute.xlu0 %7289
      %7291 = vrot.lane.b32.xlu0 %v6425, 32
      %v7292 = vpop.permute.xlu0 %7291
      %7293 = vrot.lane.b32.xlu0 %v7132, 32
      %v7294 = vpop.permute.xlu0 %7293
      %7295 = vrot.lane.b32.xlu0 %v7135, 32
      %v7296 = vpop.permute.xlu0 %7295
      %7297 = vrot.lane.b32.xlu0 %v7138, 32
      %v7298 = vpop.permute.xlu0 %7297
      %v7299 = vrot.slane %v7140, 6
      %v7300 = vrot.slane %v7142, 6
      %v7301 = vrot.slane %v7144, 6
      %v7302 = vrot.slane %v7146, 6
      %v7303 = vrot.slane %v7148, 6
      %v7304 = vrot.slane %v7150, 6
      %v7305 = vrot.slane %v7152, 6
      %v7306 = vrot.slane %v7154, 6
      %v7307 = vrot.slane %v7156, 6
      %v7308 = vrot.slane %v7158, 6
      %v7309 = vrot.slane %v7160, 6
      %v7310 = vrot.slane %v7162, 6
      %v7311 = vrot.slane %v7164, 6
      %v7312 = vrot.slane %v7166, 6
      %v7313 = vrot.slane %v7168, 6
      %v7314 = vrot.slane %v7170, 6
      %v7315 = vrot.slane %v7172, 6
      %v7316 = vrot.slane %v7174, 6
      %v7317 = vrot.slane %v7176, 6
      %v7318 = vrot.slane %v7178, 6
      %v7319 = vrot.slane %v7180, 6
      %v7320 = vrot.slane %v7182, 6
      %v7321 = vrot.slane %v7184, 6
      %v7322 = vrot.slane %v7186, 6
      %v7323 = vrot.slane %v7188, 6
      %v7324 = vrot.slane %v7190, 6
      %v7325 = vrot.slane %v7192, 6
      %v7326 = vrot.slane %v7194, 6
      %v7327 = vrot.slane %v7196, 6
      %v7328 = vrot.slane %v7198, 6
      %v7329 = vrot.slane %v7200, 6
      %v7330 = vrot.slane %v7202, 6
      %v7331 = vrot.slane %v7204, 6
      %v7332 = vrot.slane %v7206, 6
      %v7333 = vrot.slane %v7208, 6
      %v7334 = vrot.slane %v7210, 6
      %v7335 = vrot.slane %v7212, 6
      %v7336 = vrot.slane %v7214, 6
      %v7337 = vrot.slane %v7216, 6
      %v7338 = vrot.slane %v7218, 6
      %v7339 = vrot.slane %v7220, 6
      %v7340 = vrot.slane %v7222, 6
      %v7341 = vrot.slane %v7224, 6
      %v7342 = vrot.slane %v7226, 6
      %v7343 = vrot.slane %v7228, 6
      %v7344 = vrot.slane %v7230, 6
      %v7345 = vrot.slane %v7232, 6
      %v7346 = vrot.slane %v7234, 6
      %v7347 = vrot.slane %v7236, 6
      %v7348 = vrot.slane %v7238, 6
      %v7349 = vrot.slane %v7240, 6
      %v7350 = vrot.slane %v7242, 6
      %v7351 = vrot.slane %v7244, 6
      %v7352 = vrot.slane %v7246, 6
      %v7353 = vrot.slane %v7248, 6
      %v7354 = vrot.slane %v7250, 6
      %v7355 = vrot.slane %v7252, 6
      %v7356 = vrot.slane %v7254, 6
      %v7357 = vrot.slane %v7256, 6
      %v7358 = vrot.slane %v7258, 6
      %v7359 = vrot.slane %v7260, 6
      %v7360 = vrot.slane %v7262, 6
      %v7361 = vrot.slane %v7264, 6
      %v7362 = vrot.slane %v7266, 6
      %v7363 = vrot.slane %v7268, 6
      %v7364 = vrot.slane %v7270, 6
      %v7365 = vrot.slane %v7272, 6
      %v7366 = vrot.slane %v7274, 6
      %v7367 = vrot.slane %v7276, 6
      %v7368 = vrot.slane %v7278, 6
      %v7369 = vrot.slane %v7280, 6
      %v7370 = vrot.slane %v7282, 6
      %v7371 = vrot.slane %v7284, 6
      %v7372 = vrot.slane %v7286, 6
      %v7373 = vrot.slane %v7288, 6
      %v7374 = vrot.slane %v7290, 6
      %v7375 = vrot.slane %v7292, 6
      %v7376 = vrot.slane %v7294, 6
      %v7377 = vrot.slane %v7296, 6
      %v7378 = vrot.slane %v7298, 6
      %v7379 = vsel %vm4747, %v7299, %v7300
      %vm7380 = vcmask 261120
      %v7381 = vsel %vm7380, %v7379, %v7142
      %v7382 = vsel %vm4747, %v7301, %v7302
      %v7383 = vsel %vm7380, %v7382, %v7146
      %v7384 = vsel %vm4747, %v7303, %v7304
      %v7385 = vsel %vm7380, %v7384, %v7150
      %v7386 = vsel %vm4747, %v7305, %v7306
      %v7387 = vsel %vm7380, %v7386, %v7154
      %v7388 = vsel %vm4747, %v7307, %v7308
      %v7389 = vsel %vm7380, %v7388, %v7158
      %v7390 = vsel %vm4747, %v7309, %v7310
      %v7391 = vsel %vm7380, %v7390, %v7162
      %v7392 = vsel %vm4747, %v7311, %v7312
      %v7393 = vsel %vm7380, %v7392, %v7166
      %v7394 = vsel %vm4747, %v7313, %v7314
      %v7395 = vsel %vm7380, %v7394, %v7170
      %v7396 = vsel %vm4747, %v7315, %v7316
      %v7397 = vsel %vm7380, %v7396, %v7174
      %v7398 = vsel %vm4747, %v7317, %v7318
      %v7399 = vsel %vm7380, %v7398, %v7178
      %v7400 = vsel %vm4747, %v7319, %v7320
      %v7401 = vsel %vm7380, %v7400, %v7182
      %v7402 = vsel %vm4747, %v7321, %v7322
      %v7403 = vsel %vm7380, %v7402, %v7186
      %v7404 = vsel %vm4747, %v7323, %v7324
      %v7405 = vsel %vm7380, %v7404, %v7190
      %v7406 = vsel %vm4747, %v7325, %v7326
      %v7407 = vsel %vm7380, %v7406, %v7194
      %v7408 = vsel %vm4747, %v7327, %v7328
      %v7409 = vsel %vm7380, %v7408, %v7198
      %v7410 = vsel %vm4747, %v7329, %v7330
      %v7411 = vsel %vm7380, %v7410, %v7202
      %v7412 = vsel %vm4747, %v7331, %v7332
      %v7413 = vsel %vm7380, %v7412, %v7206
      %v7414 = vsel %vm4747, %v7333, %v7334
      %v7415 = vsel %vm7380, %v7414, %v7210
      %v7416 = vsel %vm4747, %v7335, %v7336
      %v7417 = vsel %vm7380, %v7416, %v7214
      %v7418 = vsel %vm4747, %v7337, %v7338
      %v7419 = vsel %vm7380, %v7418, %v7218
      %v7420 = vsel %vm4747, %v7339, %v7340
      %v7421 = vsel %vm7380, %v7420, %v7222
      %v7422 = vsel %vm4747, %v7341, %v7342
      %v7423 = vsel %vm7380, %v7422, %v7226
      %v7424 = vsel %vm4747, %v7343, %v7344
      %v7425 = vsel %vm7380, %v7424, %v7230
      %v7426 = vsel %vm4747, %v7345, %v7346
      %v7427 = vsel %vm7380, %v7426, %v7234
      %v7428 = vsel %vm4747, %v7347, %v7348
      %v7429 = vsel %vm7380, %v7428, %v7238
      %v7430 = vsel %vm4747, %v7349, %v7350
      %v7431 = vsel %vm7380, %v7430, %v7242
      %v7432 = vsel %vm4747, %v7351, %v7352
      %v7433 = vsel %vm7380, %v7432, %v7246
      %v7434 = vsel %vm4747, %v7353, %v7354
      %v7435 = vsel %vm7380, %v7434, %v7250
      %v7436 = vsel %vm4747, %v7355, %v7356
      %v7437 = vsel %vm7380, %v7436, %v7254
      %v7438 = vsel %vm4747, %v7357, %v7358
      %v7439 = vsel %vm7380, %v7438, %v7258
      %v7440 = vsel %vm4747, %v7359, %v7360
      %v7441 = vsel %vm7380, %v7440, %v7262
      %v7442 = vsel %vm4747, %v7361, %v7362
      %v7443 = vsel %vm7380, %v7442, %v7266
      %v7444 = vsel %vm4747, %v7363, %v7364
      %v7445 = vsel %vm7380, %v7444, %v7270
      %v7446 = vsel %vm4747, %v7365, %v7366
      %v7447 = vsel %vm7380, %v7446, %v7274
      %v7448 = vsel %vm4747, %v7367, %v7368
      %v7449 = vsel %vm7380, %v7448, %v7278
      %v7450 = vsel %vm4747, %v7369, %v7370
      %v7451 = vsel %vm7380, %v7450, %v7282
      %v7452 = vsel %vm4747, %v7371, %v7372
      %v7453 = vsel %vm7380, %v7452, %v7286
      %v7454 = vsel %vm4747, %v7373, %v7374
      %v7455 = vsel %vm7380, %v7454, %v7290
      %v7456 = vsel %vm4747, %v7375, %v7376
      %v7457 = vsel %vm7380, %v7456, %v7294
      %v7458 = vsel %vm4747, %v7377, %v7378
      %v7459 = vsel %vm7380, %v7458, %v7298
      %v7500 = vadd.f32 %v6947, %v7381
      %v7501 = vadd.f32 %v6948, %v7383
      %v7502 = vadd.f32 %v6949, %v7385
      %v7503 = vadd.f32 %v6950, %v7387
      %v7504 = vadd.f32 %v6951, %v7389
      %v7505 = vadd.f32 %v6952, %v7391
      %v7506 = vadd.f32 %v6953, %v7393
      %v7507 = vadd.f32 %v6954, %v7395
      %v7508 = vadd.f32 %v6955, %v7397
      %v7509 = vadd.f32 %v6956, %v7399
      %v7510 = vadd.f32 %v6957, %v7401
      %v7511 = vadd.f32 %v6958, %v7403
      %v7512 = vadd.f32 %v6959, %v7405
      %v7513 = vadd.f32 %v6960, %v7407
      %v7514 = vadd.f32 %v6961, %v7409
      %v7515 = vadd.f32 %v6962, %v7411
      %v7516 = vadd.f32 %v6963, %v7413
      %v7517 = vadd.f32 %v6964, %v7415
      %v7518 = vadd.f32 %v6965, %v7417
      %v7519 = vadd.f32 %v6966, %v7419
      %v7520 = vadd.f32 %v6967, %v7421
      %v7521 = vadd.f32 %v6968, %v7423
      %v7522 = vadd.f32 %v6969, %v7425
      %v7523 = vadd.f32 %v6970, %v7427
      %v7524 = vadd.f32 %v6971, %v7429
      %v7525 = vadd.f32 %v6972, %v7431
      %v7526 = vadd.f32 %v6973, %v7433
      %v7527 = vadd.f32 %v6974, %v7435
      %v7528 = vadd.f32 %v6975, %v7437
      %v7529 = vadd.f32 %v6976, %v7439
      %v7530 = vadd.f32 %v6977, %v7441
      %v7531 = vadd.f32 %v6978, %v7443
      %v7532 = vadd.f32 %v6979, %v7445
      %v7533 = vadd.f32 %v6980, %v7447
      %v7534 = vadd.f32 %v6981, %v7449
      %v7535 = vadd.f32 %v6982, %v7451
      %v7536 = vadd.f32 %v6983, %v7453
      %v7537 = vadd.f32 %v6984, %v7455
      %v7538 = vadd.f32 %v6985, %v7457
      %v7539 = vadd.f32 %v6986, %v7459
      %v7540 = vrot.slane %v5333, 2
      %v7541 = vrot.slane %v5334, 2
      %v7542 = vrot.slane %v5402, 2
      %v7543 = vrot.slane %v5403, 2
      %v7544 = vrot.slane %v5404, 2
      %v7545 = vrot.slane %v5473, 2
      %v7546 = vrot.slane %v5474, 2
      %v7547 = vrot.slane %v5475, 2
      %v7548 = vrot.slane %v5543, 2
      %v7549 = vrot.slane %v5544, 2
      %v7550 = vrot.slane %v5613, 2
      %v7551 = vrot.slane %v5614, 2
      %v7552 = vrot.slane %v5615, 2
      %v7553 = vrot.slane %v5616, 2
      %v7554 = vrot.slane %v5684, 2
      %v7555 = vrot.slane %v5686, 2
      %v7556 = vrot.slane %v5754, 2
      %v7557 = vrot.slane %v5755, 2
      %v7558 = vrot.slane %v5756, 2
      %v7559 = vrot.slane %v5757, 2
      %v7560 = vrot.slane %v5826, 2
      %v7561 = vrot.slane %v5827, 2
      %v7562 = vrot.slane %v5895, 2
      %v7563 = vrot.slane %v5896, 2
      %v7564 = vrot.slane %v5897, 2
      %v7565 = vrot.slane %v5966, 2
      %v7566 = vrot.slane %v5967, 2
      %v7567 = vrot.slane %v5968, 2
      %v7568 = vrot.slane %v6036, 2
      %v7569 = vrot.slane %v6037, 2
      %v7570 = vrot.slane %v6106, 2
      %v7571 = vrot.slane %v6107, 2
      %v7572 = vrot.slane %v6108, 2
      %v7573 = vrot.slane %v6109, 2
      %v7574 = vrot.slane %v6177, 2
      %v7575 = vrot.slane %v6179, 2
      %v7576 = vrot.slane %v6247, 2
      %v7577 = vrot.slane %v6248, 2
      %v7578 = vrot.slane %v6249, 2
      %v7579 = vrot.slane %v6250, 2
      %v7620 = vadd.f32 %v7500, %v7540
      %v7621 = vadd.f32 %v7501, %v7541
      %v7622 = vadd.f32 %v7502, %v7542
      %v7623 = vadd.f32 %v7503, %v7543
      %v7624 = vadd.f32 %v7504, %v7544
      %v7625 = vadd.f32 %v7505, %v7545
      %v7626 = vadd.f32 %v7506, %v7546
      %v7627 = vadd.f32 %v7507, %v7547
      %v7628 = vadd.f32 %v7508, %v7548
      %v7629 = vadd.f32 %v7509, %v7549
      %v7630 = vadd.f32 %v7510, %v7550
      %v7631 = vadd.f32 %v7511, %v7551
      %v7632 = vadd.f32 %v7512, %v7552
      %v7633 = vadd.f32 %v7513, %v7553
      %v7634 = vadd.f32 %v7514, %v7554
      %v7635 = vadd.f32 %v7515, %v7555
      %v7636 = vadd.f32 %v7516, %v7556
      %v7637 = vadd.f32 %v7517, %v7557
      %v7638 = vadd.f32 %v7518, %v7558
      %v7639 = vadd.f32 %v7519, %v7559
      %v7640 = vadd.f32 %v7520, %v7560
      %v7641 = vadd.f32 %v7521, %v7561
      %v7642 = vadd.f32 %v7522, %v7562
      %v7643 = vadd.f32 %v7523, %v7563
      %v7644 = vadd.f32 %v7524, %v7564
      %v7645 = vadd.f32 %v7525, %v7565
      %v7646 = vadd.f32 %v7526, %v7566
      %v7647 = vadd.f32 %v7527, %v7567
      %v7648 = vadd.f32 %v7528, %v7568
      %v7649 = vadd.f32 %v7529, %v7569
      %v7650 = vadd.f32 %v7530, %v7570
      %v7651 = vadd.f32 %v7531, %v7571
      %v7652 = vadd.f32 %v7532, %v7572
      %v7653 = vadd.f32 %v7533, %v7573
      %v7654 = vadd.f32 %v7534, %v7574
      %v7655 = vadd.f32 %v7535, %v7575
      %v7656 = vadd.f32 %v7536, %v7576
      %v7657 = vadd.f32 %v7537, %v7577
      %v7658 = vadd.f32 %v7538, %v7578
      %v7659 = vadd.f32 %v7539, %v7579
      %7700 = vrot.lane.b32.xlu0 %v7620, 48
      %v7701 = vpop.permute.xlu0 %7700
      %7702 = vrot.lane.b32.xlu0 %v7621, 48
      %v7703 = vpop.permute.xlu0 %7702
      %7704 = vrot.lane.b32.xlu0 %v7622, 48
      %v7705 = vpop.permute.xlu0 %7704
      %7706 = vrot.lane.b32.xlu0 %v7623, 48
      %v7707 = vpop.permute.xlu0 %7706
      %7708 = vrot.lane.b32.xlu0 %v7624, 48
      %v7709 = vpop.permute.xlu0 %7708
      %7710 = vrot.lane.b32.xlu0 %v7625, 48
      %v7711 = vpop.permute.xlu0 %7710
      %7712 = vrot.lane.b32.xlu0 %v7626, 48
      %v7713 = vpop.permute.xlu0 %7712
      %7714 = vrot.lane.b32.xlu0 %v7627, 48
      %v7715 = vpop.permute.xlu0 %7714
      %7716 = vrot.lane.b32.xlu0 %v7628, 48
      %v7717 = vpop.permute.xlu0 %7716
      %7718 = vrot.lane.b32.xlu0 %v7629, 48
      %v7719 = vpop.permute.xlu0 %7718
      %7720 = vrot.lane.b32.xlu0 %v7630, 48
      %v7721 = vpop.permute.xlu0 %7720
      %7722 = vrot.lane.b32.xlu0 %v7631, 48
      %v7723 = vpop.permute.xlu0 %7722
      %7724 = vrot.lane.b32.xlu0 %v7632, 48
      %v7725 = vpop.permute.xlu0 %7724
      %7726 = vrot.lane.b32.xlu0 %v7633, 48
      %v7727 = vpop.permute.xlu0 %7726
      %7728 = vrot.lane.b32.xlu0 %v7634, 48
      %v7729 = vpop.permute.xlu0 %7728
      %7730 = vrot.lane.b32.xlu0 %v7635, 48
      %v7731 = vpop.permute.xlu0 %7730
      %7732 = vrot.lane.b32.xlu0 %v7636, 48
      %v7733 = vpop.permute.xlu0 %7732
      %7734 = vrot.lane.b32.xlu0 %v7637, 48
      %v7735 = vpop.permute.xlu0 %7734
      %7736 = vrot.lane.b32.xlu0 %v7638, 48
      %v7737 = vpop.permute.xlu0 %7736
      %7738 = vrot.lane.b32.xlu0 %v7639, 48
      %v7739 = vpop.permute.xlu0 %7738
      %7740 = vrot.lane.b32.xlu0 %v7640, 48
      %v7741 = vpop.permute.xlu0 %7740
      %7742 = vrot.lane.b32.xlu0 %v7641, 48
      %v7743 = vpop.permute.xlu0 %7742
      %7744 = vrot.lane.b32.xlu0 %v7642, 48
      %v7745 = vpop.permute.xlu0 %7744
      %7746 = vrot.lane.b32.xlu0 %v7643, 48
      %v7747 = vpop.permute.xlu0 %7746
      %7748 = vrot.lane.b32.xlu0 %v7644, 48
      %v7749 = vpop.permute.xlu0 %7748
      %7750 = vrot.lane.b32.xlu0 %v7645, 48
      %v7751 = vpop.permute.xlu0 %7750
      %7752 = vrot.lane.b32.xlu0 %v7646, 48
      %v7753 = vpop.permute.xlu0 %7752
      %7754 = vrot.lane.b32.xlu0 %v7647, 48
      %v7755 = vpop.permute.xlu0 %7754
      %7756 = vrot.lane.b32.xlu0 %v7648, 48
      %v7757 = vpop.permute.xlu0 %7756
      %7758 = vrot.lane.b32.xlu0 %v7649, 48
      %v7759 = vpop.permute.xlu0 %7758
      %7760 = vrot.lane.b32.xlu0 %v7650, 48
      %v7761 = vpop.permute.xlu0 %7760
      %7762 = vrot.lane.b32.xlu0 %v7651, 48
      %v7763 = vpop.permute.xlu0 %7762
      %7764 = vrot.lane.b32.xlu0 %v7652, 48
      %v7765 = vpop.permute.xlu0 %7764
      %7766 = vrot.lane.b32.xlu0 %v7653, 48
      %v7767 = vpop.permute.xlu0 %7766
      %7768 = vrot.lane.b32.xlu0 %v7654, 48
      %v7769 = vpop.permute.xlu0 %7768
      %7770 = vrot.lane.b32.xlu0 %v7655, 48
      %v7771 = vpop.permute.xlu0 %7770
      %7772 = vrot.lane.b32.xlu0 %v7656, 48
      %v7773 = vpop.permute.xlu0 %7772
      %7774 = vrot.lane.b32.xlu0 %v7657, 48
      %v7775 = vpop.permute.xlu0 %7774
      %7776 = vrot.lane.b32.xlu0 %v7658, 48
      %v7777 = vpop.permute.xlu0 %7776
      %7778 = vrot.lane.b32.xlu0 %v7659, 48
      %v7779 = vpop.permute.xlu0 %7778
      %v7780 = vrot.slane %v7701, 2
      %v7781 = vrot.slane %v7703, 2
      %v7782 = vrot.slane %v7705, 2
      %v7783 = vrot.slane %v7707, 2
      %v7784 = vrot.slane %v7709, 2
      %v7785 = vrot.slane %v7711, 2
      %v7786 = vrot.slane %v7713, 2
      %v7787 = vrot.slane %v7715, 2
      %v7788 = vrot.slane %v7717, 2
      %v7789 = vrot.slane %v7719, 2
      %v7790 = vrot.slane %v7721, 2
      %v7791 = vrot.slane %v7723, 2
      %v7792 = vrot.slane %v7725, 2
      %v7793 = vrot.slane %v7727, 2
      %v7794 = vrot.slane %v7729, 2
      %v7795 = vrot.slane %v7731, 2
      %v7796 = vrot.slane %v7733, 2
      %v7797 = vrot.slane %v7735, 2
      %v7798 = vrot.slane %v7737, 2
      %v7799 = vrot.slane %v7739, 2
      %v7800 = vrot.slane %v7741, 2
      %v7801 = vrot.slane %v7743, 2
      %v7802 = vrot.slane %v7745, 2
      %v7803 = vrot.slane %v7747, 2
      %v7804 = vrot.slane %v7749, 2
      %v7805 = vrot.slane %v7751, 2
      %v7806 = vrot.slane %v7753, 2
      %v7807 = vrot.slane %v7755, 2
      %v7808 = vrot.slane %v7757, 2
      %v7809 = vrot.slane %v7759, 2
      %v7810 = vrot.slane %v7761, 2
      %v7811 = vrot.slane %v7763, 2
      %v7812 = vrot.slane %v7765, 2
      %v7813 = vrot.slane %v7767, 2
      %v7814 = vrot.slane %v7769, 2
      %v7815 = vrot.slane %v7771, 2
      %v7816 = vrot.slane %v7773, 2
      %v7817 = vrot.slane %v7775, 2
      %v7818 = vrot.slane %v7777, 2
      %v7819 = vrot.slane %v7779, 2
      %v7820 = vsel %vm2292, %v7701, %v7780
      %v7821 = vsel %vm2292, %v7703, %v7781
      %v7822 = vsel %vm2292, %v7705, %v7782
      %v7823 = vsel %vm2292, %v7707, %v7783
      %v7824 = vsel %vm2292, %v7709, %v7784
      %v7825 = vsel %vm2292, %v7711, %v7785
      %v7826 = vsel %vm2292, %v7713, %v7786
      %v7827 = vsel %vm2292, %v7715, %v7787
      %v7828 = vsel %vm2292, %v7717, %v7788
      %v7829 = vsel %vm2292, %v7719, %v7789
      %v7830 = vsel %vm2292, %v7721, %v7790
      %v7831 = vsel %vm2292, %v7723, %v7791
      %v7832 = vsel %vm2292, %v7725, %v7792
      %v7833 = vsel %vm2292, %v7727, %v7793
      %v7834 = vsel %vm2292, %v7729, %v7794
      %v7835 = vsel %vm2292, %v7731, %v7795
      %v7836 = vsel %vm2292, %v7733, %v7796
      %v7837 = vsel %vm2292, %v7735, %v7797
      %v7838 = vsel %vm2292, %v7737, %v7798
      %v7839 = vsel %vm2292, %v7739, %v7799
      %v7840 = vsel %vm2292, %v7741, %v7800
      %v7841 = vsel %vm2292, %v7743, %v7801
      %v7842 = vsel %vm2292, %v7745, %v7802
      %v7843 = vsel %vm2292, %v7747, %v7803
      %v7844 = vsel %vm2292, %v7749, %v7804
      %v7845 = vsel %vm2292, %v7751, %v7805
      %v7846 = vsel %vm2292, %v7753, %v7806
      %v7847 = vsel %vm2292, %v7755, %v7807
      %v7848 = vsel %vm2292, %v7757, %v7808
      %v7849 = vsel %vm2292, %v7759, %v7809
      %v7850 = vsel %vm2292, %v7761, %v7810
      %v7851 = vsel %vm2292, %v7763, %v7811
      %v7852 = vsel %vm2292, %v7765, %v7812
      %v7853 = vsel %vm2292, %v7767, %v7813
      %v7854 = vsel %vm2292, %v7769, %v7814
      %v7855 = vsel %vm2292, %v7771, %v7815
      %v7856 = vsel %vm2292, %v7773, %v7816
      %v7857 = vsel %vm2292, %v7775, %v7817
      %v7858 = vsel %vm2292, %v7777, %v7818
      %v7859 = vsel %vm2292, %v7779, %v7819
      %v7900 = vmax.f32 %v7620, %v7820
      %v7901 = vmax.f32 %v7621, %v7821
      %v7902 = vmax.f32 %v7622, %v7822
      %v7903 = vmax.f32 %v7623, %v7823
      %v7904 = vmax.f32 %v7624, %v7824
      %v7905 = vmax.f32 %v7625, %v7825
      %v7906 = vmax.f32 %v7626, %v7826
      %v7907 = vmax.f32 %v7627, %v7827
      %v7908 = vmax.f32 %v7628, %v7828
      %v7909 = vmax.f32 %v7629, %v7829
      %v7910 = vmax.f32 %v7630, %v7830
      %v7911 = vmax.f32 %v7631, %v7831
      %v7912 = vmax.f32 %v7632, %v7832
      %v7913 = vmax.f32 %v7633, %v7833
      %v7914 = vmax.f32 %v7634, %v7834
      %v7915 = vmax.f32 %v7635, %v7835
      %v7916 = vmax.f32 %v7636, %v7836
      %v7917 = vmax.f32 %v7637, %v7837
      %v7918 = vmax.f32 %v7638, %v7838
      %v7919 = vmax.f32 %v7639, %v7839
      %v7920 = vmax.f32 %v7640, %v7840
      %v7921 = vmax.f32 %v7641, %v7841
      %v7922 = vmax.f32 %v7642, %v7842
      %v7923 = vmax.f32 %v7643, %v7843
      %v7924 = vmax.f32 %v7644, %v7844
      %v7925 = vmax.f32 %v7645, %v7845
      %v7926 = vmax.f32 %v7646, %v7846
      %v7927 = vmax.f32 %v7647, %v7847
      %v7928 = vmax.f32 %v7648, %v7848
      %v7929 = vmax.f32 %v7649, %v7849
      %v7930 = vmax.f32 %v7650, %v7850
      %v7931 = vmax.f32 %v7651, %v7851
      %v7932 = vmax.f32 %v7652, %v7852
      %v7933 = vmax.f32 %v7653, %v7853
      %v7934 = vmax.f32 %v7654, %v7854
      %v7935 = vmax.f32 %v7655, %v7855
      %v7936 = vmax.f32 %v7656, %v7856
      %v7937 = vmax.f32 %v7657, %v7857
      %v7938 = vmax.f32 %v7658, %v7858
      %v7939 = vmax.f32 %v7659, %v7859
      %v7980 = vcombine.low %v7900, %v7901
      %v7981 = vcombine.low %v7902, %v7903
      %v7983 = vunpack.c.l.s4 1983009808
      %v7984 = vunpack.c.0.s8 %v7983
      %v7985 = vlaneseq
      %v7986 = vshrl.u32 %v7985, 7
      %v7987 = vsub.s32 %v7984, %v7986
      %v7988 = vrot.slane %v7980, %v7987
      %v7990 = vunpack.c.l.s4 1983009808
      %v7991 = vunpack.c.0.s8 %v7990
      %v7992 = vlaneseq
      %v7993 = vshrl.u32 %v7992, 7
      %v7994 = vsub.s32 %v7991, %v7993
      %v7995 = vrot.slane %v7981, %v7994
      %v7996 = vcombine.low %v7988, %v7995
      %v7998 = vunpack.c.l.s4 1983009808
      %v7999 = vunpack.c.0.s8 %v7998
      %v8000 = vlaneseq
      %v8001 = vshrl.u32 %v8000, 7
      %v8002 = vsub.s32 %v7999, %v8001
      %v8003 = vrot.slane %v7904, %v8002
      %v8004 = vcombine.low %v7905, %v7906
      %v8005 = vcombine.low %v7907, %v7908
      %v8007 = vunpack.c.l.s4 1983009808
      %v8008 = vunpack.c.0.s8 %v8007
      %v8009 = vlaneseq
      %v8010 = vshrl.u32 %v8009, 7
      %v8011 = vsub.s32 %v8008, %v8010
      %v8012 = vrot.slane %v8004, %v8011
      %v8014 = vunpack.c.l.s4 1983009808
      %v8015 = vunpack.c.0.s8 %v8014
      %v8016 = vlaneseq
      %v8017 = vshrl.u32 %v8016, 7
      %v8018 = vsub.s32 %v8015, %v8017
      %v8019 = vrot.slane %v8005, %v8018
      %v8020 = vcombine.low %v8012, %v8019
      %v8022 = vunpack.c.l.s4 1983009808
      %v8023 = vunpack.c.0.s8 %v8022
      %v8024 = vlaneseq
      %v8025 = vshrl.u32 %v8024, 7
      %v8026 = vsub.s32 %v8023, %v8025
      %v8027 = vrot.slane %v7909, %v8026
      %v8028 = vcombine.low %v7910, %v7911
      %v8029 = vcombine.low %v7912, %v7913
      %v8031 = vunpack.c.l.s4 1983009808
      %v8032 = vunpack.c.0.s8 %v8031
      %v8033 = vlaneseq
      %v8034 = vshrl.u32 %v8033, 7
      %v8035 = vsub.s32 %v8032, %v8034
      %v8036 = vrot.slane %v8028, %v8035
      %v8038 = vunpack.c.l.s4 1983009808
      %v8039 = vunpack.c.0.s8 %v8038
      %v8040 = vlaneseq
      %v8041 = vshrl.u32 %v8040, 7
      %v8042 = vsub.s32 %v8039, %v8041
      %v8043 = vrot.slane %v8029, %v8042
      %v8044 = vcombine.low %v8036, %v8043
      %v8046 = vunpack.c.l.s4 1983009808
      %v8047 = vunpack.c.0.s8 %v8046
      %v8048 = vlaneseq
      %v8049 = vshrl.u32 %v8048, 7
      %v8050 = vsub.s32 %v8047, %v8049
      %v8051 = vrot.slane %v7914, %v8050
      %v8052 = vcombine.low %v7915, %v7916
      %v8053 = vcombine.low %v7917, %v7918
      %v8055 = vunpack.c.l.s4 1983009808
      %v8056 = vunpack.c.0.s8 %v8055
      %v8057 = vlaneseq
      %v8058 = vshrl.u32 %v8057, 7
      %v8059 = vsub.s32 %v8056, %v8058
      %v8060 = vrot.slane %v8052, %v8059
      %v8062 = vunpack.c.l.s4 1983009808
      %v8063 = vunpack.c.0.s8 %v8062
      %v8064 = vlaneseq
      %v8065 = vshrl.u32 %v8064, 7
      %v8066 = vsub.s32 %v8063, %v8065
      %v8067 = vrot.slane %v8053, %v8066
      %v8068 = vcombine.low %v8060, %v8067
      %v8070 = vunpack.c.l.s4 1983009808
      %v8071 = vunpack.c.0.s8 %v8070
      %v8072 = vlaneseq
      %v8073 = vshrl.u32 %v8072, 7
      %v8074 = vsub.s32 %v8071, %v8073
      %v8075 = vrot.slane %v7919, %v8074
      %v8076 = vcombine.low %v7920, %v7921
      %v8077 = vcombine.low %v7922, %v7923
      %v8079 = vunpack.c.l.s4 1983009808
      %v8080 = vunpack.c.0.s8 %v8079
      %v8081 = vlaneseq
      %v8082 = vshrl.u32 %v8081, 7
      %v8083 = vsub.s32 %v8080, %v8082
      %v8084 = vrot.slane %v8076, %v8083
      %v8086 = vunpack.c.l.s4 1983009808
      %v8087 = vunpack.c.0.s8 %v8086
      %v8088 = vlaneseq
      %v8089 = vshrl.u32 %v8088, 7
      %v8090 = vsub.s32 %v8087, %v8089
      %v8091 = vrot.slane %v8077, %v8090
      %v8092 = vcombine.low %v8084, %v8091
      %v8094 = vunpack.c.l.s4 1983009808
      %v8095 = vunpack.c.0.s8 %v8094
      %v8096 = vlaneseq
      %v8097 = vshrl.u32 %v8096, 7
      %v8098 = vsub.s32 %v8095, %v8097
      %v8099 = vrot.slane %v7924, %v8098
      %v8100 = vcombine.low %v7925, %v7926
      %v8101 = vcombine.low %v7927, %v7928
      %v8103 = vunpack.c.l.s4 1983009808
      %v8104 = vunpack.c.0.s8 %v8103
      %v8105 = vlaneseq
      %v8106 = vshrl.u32 %v8105, 7
      %v8107 = vsub.s32 %v8104, %v8106
      %v8108 = vrot.slane %v8100, %v8107
      %v8110 = vunpack.c.l.s4 1983009808
      %v8111 = vunpack.c.0.s8 %v8110
      %v8112 = vlaneseq
      %v8113 = vshrl.u32 %v8112, 7
      %v8114 = vsub.s32 %v8111, %v8113
      %v8115 = vrot.slane %v8101, %v8114
      %v8116 = vcombine.low %v8108, %v8115
      %v8118 = vunpack.c.l.s4 1983009808
      %v8119 = vunpack.c.0.s8 %v8118
      %v8120 = vlaneseq
      %v8121 = vshrl.u32 %v8120, 7
      %v8122 = vsub.s32 %v8119, %v8121
      %v8123 = vrot.slane %v7929, %v8122
      %v8124 = vcombine.low %v7930, %v7931
      %v8125 = vcombine.low %v7932, %v7933
      %v8127 = vunpack.c.l.s4 1983009808
      %v8128 = vunpack.c.0.s8 %v8127
      %v8129 = vlaneseq
      %v8130 = vshrl.u32 %v8129, 7
      %v8131 = vsub.s32 %v8128, %v8130
      %v8132 = vrot.slane %v8124, %v8131
      %v8134 = vunpack.c.l.s4 1983009808
      %v8135 = vunpack.c.0.s8 %v8134
      %v8136 = vlaneseq
      %v8137 = vshrl.u32 %v8136, 7
      %v8138 = vsub.s32 %v8135, %v8137
      %v8139 = vrot.slane %v8125, %v8138
      %v8140 = vcombine.low %v8132, %v8139
      %v8142 = vunpack.c.l.s4 1983009808
      %v8143 = vunpack.c.0.s8 %v8142
      %v8144 = vlaneseq
      %v8145 = vshrl.u32 %v8144, 7
      %v8146 = vsub.s32 %v8143, %v8145
      %v8147 = vrot.slane %v7934, %v8146
      %v8148 = vcombine.low %v7935, %v7936
      %v8149 = vcombine.low %v7937, %v7938
      %v8151 = vunpack.c.l.s4 1983009808
      %v8152 = vunpack.c.0.s8 %v8151
      %v8153 = vlaneseq
      %v8154 = vshrl.u32 %v8153, 7
      %v8155 = vsub.s32 %v8152, %v8154
      %v8156 = vrot.slane %v8148, %v8155
      %v8158 = vunpack.c.l.s4 1983009808
      %v8159 = vunpack.c.0.s8 %v8158
      %v8160 = vlaneseq
      %v8161 = vshrl.u32 %v8160, 7
      %v8162 = vsub.s32 %v8159, %v8161
      %v8163 = vrot.slane %v8149, %v8162
      %v8164 = vcombine.low %v8156, %v8163
      %v8166 = vunpack.c.l.s4 1983009808
      %v8167 = vunpack.c.0.s8 %v8166
      %v8168 = vlaneseq
      %v8169 = vshrl.u32 %v8168, 7
      %v8170 = vsub.s32 %v8167, %v8169
      %v8171 = vrot.slane %v7939, %v8170
      %vm8188 = vcmask 654336
      %8189 = vst.msk [vmem:[#allocation3] sm:$0xff] %vm8188, %v7996
      %vm8190 = vcmask 648192
      %8191 = vst.msk [vmem:[#allocation3 + $0x8] sm:$0x3] %vm8190, %v8003
      %8192 = vst.msk [vmem:[#allocation3 + $0x10] sm:$0xff] %vm8188, %v8020
      %8193 = vst.msk [vmem:[#allocation3 + $0x18] sm:$0x3] %vm8190, %v8027
      %8194 = vst.msk [vmem:[#allocation3 + $0x20] sm:$0xff] %vm8188, %v8044
      %8195 = vst.msk [vmem:[#allocation3 + $0x28] sm:$0x3] %vm8190, %v8051
      %8196 = vst.msk [vmem:[#allocation3 + $0x30] sm:$0xff] %vm8188, %v8068
      %8197 = vst.msk [vmem:[#allocation3 + $0x38] sm:$0x3] %vm8190, %v8075
      %8198 = vst.msk [vmem:[#allocation3 + $0x40] sm:$0xff] %vm8188, %v8092
      %8199 = vst.msk [vmem:[#allocation3 + $0x48] sm:$0x3] %vm8190, %v8099
      %8200 = vst.msk [vmem:[#allocation3 + $0x50] sm:$0xff] %vm8188, %v8116
      %8201 = vst.msk [vmem:[#allocation3 + $0x58] sm:$0x3] %vm8190, %v8123
      %8202 = vst.msk [vmem:[#allocation3 + $0x60] sm:$0xff] %vm8188, %v8140
      %8203 = vst.msk [vmem:[#allocation3 + $0x68] sm:$0x3] %vm8190, %v8147
      %8204 = vst.msk [vmem:[#allocation3 + $0x70] sm:$0xff] %vm8188, %v8164
      %8205 = vst.msk [vmem:[#allocation3 + $0x78] sm:$0x3] %vm8190, %v8171
      %v8206 = vld [vmem:[#allocation3] sm:$0x1]
      %v8207 = vld [vmem:[#allocation3 + $0x10] sm:$0x1]
      %v8208 = vld [vmem:[#allocation3 + $0x20] sm:$0x1]
      %v8209 = vld [vmem:[#allocation3 + $0x30] sm:$0x1]
      %v8210 = vld [vmem:[#allocation3 + $0x40] sm:$0x1]
      %v8211 = vld [vmem:[#allocation3 + $0x50] sm:$0x1]
      %v8212 = vld [vmem:[#allocation3 + $0x60] sm:$0x1]
      %v8213 = vld [vmem:[#allocation3 + $0x70] sm:$0x1]
      %v8214 = vld [vmem:[#allocation3 + $0x1] sm:$0x1]
      %v8215 = vld [vmem:[#allocation3 + $0x11] sm:$0x1]
      %v8216 = vld [vmem:[#allocation3 + $0x21] sm:$0x1]
      %v8217 = vld [vmem:[#allocation3 + $0x31] sm:$0x1]
      %v8218 = vld [vmem:[#allocation3 + $0x41] sm:$0x1]
      %v8219 = vld [vmem:[#allocation3 + $0x51] sm:$0x1]
      %v8220 = vld [vmem:[#allocation3 + $0x61] sm:$0x1]
      %v8221 = vld [vmem:[#allocation3 + $0x71] sm:$0x1]
      %v8222 = vmax.f32 %v8206, %v8214
      %v8223 = vmax.f32 %v8207, %v8215
      %v8224 = vmax.f32 %v8208, %v8216
      %v8225 = vmax.f32 %v8209, %v8217
      %v8226 = vmax.f32 %v8210, %v8218
      %v8227 = vmax.f32 %v8211, %v8219
      %v8228 = vmax.f32 %v8212, %v8220
      %v8229 = vmax.f32 %v8213, %v8221
      %v8230 = vld [vmem:[%s4] sm:$0x1]
      %v8232 = vlaneseq
      %v8233 = vshrl.u32 %v8232, 7
      %v8234 = vsub.s32 0, %v8233
      %v8235 = vrot.slane %v8230, %v8234
      %v8237 = vadd.f32 %v8222, %v8235
      %v8238 = vadd.f32 %v8223, %v8235
      %v8239 = vadd.f32 %v8224, %v8235
      %v8240 = vadd.f32 %v8225, %v8235
      %v8241 = vadd.f32 %v8226, %v8235
      %v8242 = vadd.f32 %v8227, %v8235
      %v8243 = vadd.f32 %v8228, %v8235
      %v8244 = vadd.f32 %v8229, %v8235
      %v8245 = vmax.f32 %v8237, 0.0
      %v8246 = vmax.f32 %v8238, 0.0
      %v8247 = vmax.f32 %v8239, 0.0
      %v8248 = vmax.f32 %v8240, 0.0
      %v8249 = vmax.f32 %v8241, 0.0
      %v8250 = vmax.f32 %v8242, 0.0
      %v8251 = vmax.f32 %v8243, 0.0
      %v8252 = vmax.f32 %v8244, 0.0
      %v8253 = vpack.c.bf16 %v8245, %v8245
      %v8254 = vpack.c.bf16 %v8246, %v8246
      %v8255 = vpack.c.bf16 %v8247, %v8247
      %v8256 = vpack.c.bf16 %v8248, %v8248
      %v8257 = vpack.c.bf16 %v8249, %v8249
      %v8258 = vpack.c.bf16 %v8250, %v8250
      %v8259 = vpack.c.bf16 %v8251, %v8251
      %v8260 = vpack.c.bf16 %v8252, %v8252
      %v8261 = vld [vmem:[%s5] sm:$0xf]
      %v8262 = vld [vmem:[%s5 + $0x4] sm:$0xf]
      %v8263 = vld [vmem:[%s5 + $0x8] sm:$0xf]
      %v8264 = vld [vmem:[%s5 + $0xc] sm:$0xf]
      %v8265 = vld [vmem:[%s5 + $0x10] sm:$0xf]
      %v8266 = vld [vmem:[%s5 + $0x14] sm:$0xf]
      %v8267 = vld [vmem:[%s5 + $0x18] sm:$0xf]
      %v8268 = vld [vmem:[%s5 + $0x1c] sm:$0xf]
      %v8269 = vld [vmem:[%s5 + $0x20] sm:$0xf]
      %v8270 = vld [vmem:[%s5 + $0x24] sm:$0xf]
      %v8271 = vld [vmem:[#allocation3 + $0x2] sm:$0x1]
      %v8272 = vld [vmem:[#allocation3 + $0x12] sm:$0x1]
      %v8273 = vld [vmem:[#allocation3 + $0x22] sm:$0x1]
      %v8274 = vld [vmem:[#allocation3 + $0x32] sm:$0x1]
      %v8275 = vld [vmem:[#allocation3 + $0x42] sm:$0x1]
      %v8276 = vld [vmem:[#allocation3 + $0x52] sm:$0x1]
      %v8277 = vld [vmem:[#allocation3 + $0x62] sm:$0x1]
      %v8278 = vld [vmem:[#allocation3 + $0x72] sm:$0x1]
      %v8279 = vld [vmem:[#allocation3 + $0x3] sm:$0x1]
      %v8280 = vld [vmem:[#allocation3 + $0x13] sm:$0x1]
      %v8281 = vld [vmem:[#allocation3 + $0x23] sm:$0x1]
      %v8282 = vld [vmem:[#allocation3 + $0x33] sm:$0x1]
      %v8283 = vld [vmem:[#allocation3 + $0x43] sm:$0x1]
      %v8284 = vld [vmem:[#allocation3 + $0x53] sm:$0x1]
      %v8285 = vld [vmem:[#allocation3 + $0x63] sm:$0x1]
      %v8286 = vld [vmem:[#allocation3 + $0x73] sm:$0x1]
      %v8287 = vmax.f32 %v8271, %v8279
      %v8288 = vmax.f32 %v8272, %v8280
      %v8289 = vmax.f32 %v8273, %v8281
      %v8290 = vmax.f32 %v8274, %v8282
      %v8291 = vmax.f32 %v8275, %v8283
      %v8292 = vmax.f32 %v8276, %v8284
      %v8293 = vmax.f32 %v8277, %v8285
      %v8294 = vmax.f32 %v8278, %v8286
      %v8295 = vadd.f32 %v8287, %v8235
      %v8296 = vadd.f32 %v8288, %v8235
      %v8297 = vadd.f32 %v8289, %v8235
      %v8298 = vadd.f32 %v8290, %v8235
      %v8299 = vadd.f32 %v8291, %v8235
      %v8300 = vadd.f32 %v8292, %v8235
      %v8301 = vadd.f32 %v8293, %v8235
      %v8302 = vadd.f32 %v8294, %v8235
      %v8303 = vmax.f32 %v8295, 0.0
      %v8304 = vmax.f32 %v8296, 0.0
      %v8305 = vmax.f32 %v8297, 0.0
      %v8306 = vmax.f32 %v8298, 0.0
      %v8307 = vmax.f32 %v8299, 0.0
      %v8308 = vmax.f32 %v8300, 0.0
      %v8309 = vmax.f32 %v8301, 0.0
      %v8310 = vmax.f32 %v8302, 0.0
      %v8311 = vpack.c.bf16 %v8303, %v8303
      %v8312 = vpack.c.bf16 %v8304, %v8304
      %v8313 = vpack.c.bf16 %v8305, %v8305
      %v8314 = vpack.c.bf16 %v8306, %v8306
      %v8315 = vpack.c.bf16 %v8307, %v8307
      %v8316 = vpack.c.bf16 %v8308, %v8308
      %v8317 = vpack.c.bf16 %v8309, %v8309
      %v8318 = vpack.c.bf16 %v8310, %v8310
      %v8319 = vld [vmem:[%s5 + $0x28] sm:$0xf]
      %v8320 = vld [vmem:[%s5 + $0x2c] sm:$0xf]
      %v8321 = vld [vmem:[%s5 + $0x30] sm:$0xf]
      %v8322 = vld [vmem:[%s5 + $0x34] sm:$0xf]
      %v8323 = vld [vmem:[%s5 + $0x38] sm:$0xf]
      %v8324 = vld [vmem:[%s5 + $0x3c] sm:$0xf]
      %v8325 = vld [vmem:[%s5 + $0x40] sm:$0xf]
      %v8326 = vld [vmem:[%s5 + $0x44] sm:$0xf]
      %v8327 = vld [vmem:[%s5 + $0x48] sm:$0xf]
      %v8328 = vld [vmem:[%s5 + $0x4c] sm:$0xf]
      %v8337 = vunpack.c.l.b16 %v8311
      %v8338 = vunpack.c.l.b16 %v8312
      %v8339 = vunpack.c.l.b16 %v8313
      %v8340 = vunpack.c.l.b16 %v8314
      %v8341 = vunpack.c.l.b16 %v8315
      %v8342 = vunpack.c.l.b16 %v8316
      %v8343 = vunpack.c.l.b16 %v8317
      %v8344 = vunpack.c.l.b16 %v8318
      %v8345 = vrot.slane %v8338, 7
      %vm8346 = vcmask 1041409
      %v8347 = vsel %vm8346, %v8345, %v8337
      %v8348 = vrot.slane %v8339, 6
      %v8349 = vsel %vm6292, %v8348, %v8347
      %v8350 = vrot.slane %v8340, 5
      %vm8351 = vcmask 1043459
      %v8352 = vsel %vm8351, %v8350, %v8349
      %v8353 = vrot.slane %v8341, 4
      %v8354 = vsel %vm6294, %v8353, %v8352
      %v8355 = vrot.slane %v8342, 3
      %vm8356 = vcmask 1045509
      %v8357 = vsel %vm8356, %v8355, %v8354
      %v8358 = vrot.slane %v8343, 2
      %v8359 = vsel %vm6296, %v8358, %v8357
      %v8360 = vrot.slane %v8344, 1
      %vm8361 = vcmask 1047559
      %v8362 = vsel %vm8361, %v8360, %v8359
      %v8363 = vpack.c.b16 %v8362, %v8362
      %v8374 = vunpack.c.l.b16 %v8319
      %v8375 = vunpack.c.l.b16 %v8320
      %v8376 = vunpack.c.l.b16 %v8321
      %v8377 = vunpack.c.l.b16 %v8322
      %v8378 = vunpack.c.l.b16 %v8323
      %v8379 = vunpack.c.l.b16 %v8324
      %v8380 = vunpack.c.l.b16 %v8325
      %v8381 = vunpack.c.l.b16 %v8326
      %v8382 = vunpack.c.l.b16 %v8327
      %v8383 = vunpack.c.l.b16 %v8328
      %v8384 = vpack.c.b16 %v8375, %v8374
      %v8385 = vpack.c.b16 %v8377, %v8376
      %v8386 = vpack.c.b16 %v8379, %v8378
      %v8387 = vpack.c.b16 %v8381, %v8380
      %v8388 = vpack.c.b16 %v8383, %v8382
      %v8395 = vsel %vm8188, %v8363, 0
      %8397 = vmatprep.subr.bf16.mxu0 0
      %8398 = vmatpush1.bf16.msra.mxu0 %v8384
      %8399 = vmatprep.subr.bf16.mxu0 0
      %8400 = vmatpush1.bf16.msra.mxu0 %v8385
      %8401 = vmatprep.subr.bf16.mxu0 0
      %8402 = vmatpush1.bf16.msra.mxu0 %v8386
      %8403 = vmatprep.subr.bf16.mxu0 0
      %8404 = vmatpush1.bf16.msra.mxu0 %v8387
      %8405 = vmatprep.subr.bf16.mxu0 0
      %8406 = vmatpush1.bf16.msra.mxu0 %v8388
      %8407 = vmatprep.subr.bf16.mxu0 0
      %8408 = vmatpush1.bf16.msra.mxu0 0
      %8409 = vmatprep.subr.bf16.mxu0 0
      %8410 = vmatpush1.bf16.msra.mxu0 0
      %8411 = vmatprep.subr.bf16.mxu0 0
      %8412 = vmatpush1.bf16.msra.mxu0 0
      %8413 = vmatprep.subr.bf16.mxu0 0
      %8414 = vmatpush1.bf16.msra.mxu0 0
      %8415 = vmatprep.subr.bf16.mxu0 0
      %8416 = vmatpush1.bf16.msra.mxu0 0
      %8417 = vmatprep.subr.bf16.mxu0 0
      %8418 = vmatpush1.bf16.msra.mxu0 0
      %8419 = vmatprep.subr.bf16.mxu0 0
      %8420 = vmatpush1.bf16.msra.mxu0 0
      %8421 = vmatprep.subr.bf16.mxu0 0
      %8422 = vmatpush1.bf16.msra.mxu0 0
      %8423 = vmatprep.subr.bf16.mxu0 0
      %8424 = vmatpush1.bf16.msra.mxu0 0
      %8425 = vmatprep.subr.bf16.mxu0 0
      %8426 = vmatpush1.bf16.msra.mxu0 0
      %8427 = vmatprep.subr.bf16.mxu0 0
      %8428 = vmatpush1.bf16.msra.mxu0 0
      %8429 = vmatprep.mubr.bf16.mxu0 0
      %8430 = vmatmul.mubr.bf16.gmra.mrb[0].mxu0 %v8395
      %v8431 = vpop.f32.mrb[0].mxu0
      %v8432 = vadd.f32 0.0, %v8431
      %v8433 = vpop.f32.mrb[0].mxu0
      %v8434 = vpop.f32.mrb[0].mxu0
      %v8435 = vpop.f32.mrb[0].mxu0
      %8436 = vdwg.mxu0
      %v8445 = vunpack.c.l.b16 %v8253
      %v8446 = vunpack.c.l.b16 %v8254
      %v8447 = vunpack.c.l.b16 %v8255
      %v8448 = vunpack.c.l.b16 %v8256
      %v8449 = vunpack.c.l.b16 %v8257
      %v8450 = vunpack.c.l.b16 %v8258
      %v8451 = vunpack.c.l.b16 %v8259
      %v8452 = vunpack.c.l.b16 %v8260
      %v8453 = vrot.slane %v8446, 7
      %v8454 = vsel %vm8346, %v8453, %v8445
      %v8455 = vrot.slane %v8447, 6
      %v8456 = vsel %vm6292, %v8455, %v8454
      %v8457 = vrot.slane %v8448, 5
      %v8458 = vsel %vm8351, %v8457, %v8456
      %v8459 = vrot.slane %v8449, 4
      %v8460 = vsel %vm6294, %v8459, %v8458
      %v8461 = vrot.slane %v8450, 3
      %v8462 = vsel %vm8356, %v8461, %v8460
      %v8463 = vrot.slane %v8451, 2
      %v8464 = vsel %vm6296, %v8463, %v8462
      %v8465 = vrot.slane %v8452, 1
      %v8466 = vsel %vm8361, %v8465, %v8464
      %v8467 = vpack.c.b16 %v8466, %v8466
      %v8478 = vunpack.c.l.b16 %v8261
      %v8479 = vunpack.c.l.b16 %v8262
      %v8480 = vunpack.c.l.b16 %v8263
      %v8481 = vunpack.c.l.b16 %v8264
      %v8482 = vunpack.c.l.b16 %v8265
      %v8483 = vunpack.c.l.b16 %v8266
      %v8484 = vunpack.c.l.b16 %v8267
      %v8485 = vunpack.c.l.b16 %v8268
      %v8486 = vunpack.c.l.b16 %v8269
      %v8487 = vunpack.c.l.b16 %v8270
      %v8488 = vpack.c.b16 %v8479, %v8478
      %v8489 = vpack.c.b16 %v8481, %v8480
      %v8490 = vpack.c.b16 %v8483, %v8482
      %v8491 = vpack.c.b16 %v8485, %v8484
      %v8492 = vpack.c.b16 %v8487, %v8486
      %v8499 = vsel %vm8188, %v8467, 0
      %8501 = vmatprep.subr.bf16.mxu0 0
      %8502 = vmatpush1.bf16.msra.mxu0 %v8488
      %8503 = vmatprep.subr.bf16.mxu0 0
      %8504 = vmatpush1.bf16.msra.mxu0 %v8489
      %8505 = vmatprep.subr.bf16.mxu0 0
      %8506 = vmatpush1.bf16.msra.mxu0 %v8490
      %8507 = vmatprep.subr.bf16.mxu0 0
      %8508 = vmatpush1.bf16.msra.mxu0 %v8491
      %8509 = vmatprep.subr.bf16.mxu0 0
      %8510 = vmatpush1.bf16.msra.mxu0 %v8492
      %8511 = vmatprep.subr.bf16.mxu0 0
      %8512 = vmatpush1.bf16.msra.mxu0 0
      %8513 = vmatprep.subr.bf16.mxu0 0
      %8514 = vmatpush1.bf16.msra.mxu0 0
      %8515 = vmatprep.subr.bf16.mxu0 0
      %8516 = vmatpush1.bf16.msra.mxu0 0
      %8517 = vmatprep.subr.bf16.mxu0 0
      %8518 = vmatpush1.bf16.msra.mxu0 0
      %8519 = vmatprep.subr.bf16.mxu0 0
      %8520 = vmatpush1.bf16.msra.mxu0 0
      %8521 = vmatprep.subr.bf16.mxu0 0
      %8522 = vmatpush1.bf16.msra.mxu0 0
      %8523 = vmatprep.subr.bf16.mxu0 0
      %8524 = vmatpush1.bf16.msra.mxu0 0
      %8525 = vmatprep.subr.bf16.mxu0 0
      %8526 = vmatpush1.bf16.msra.mxu0 0
      %8527 = vmatprep.subr.bf16.mxu0 0
      %8528 = vmatpush1.bf16.msra.mxu0 0
      %8529 = vmatprep.subr.bf16.mxu0 0
      %8530 = vmatpush1.bf16.msra.mxu0 0
      %8531 = vmatprep.subr.bf16.mxu0 0
      %8532 = vmatpush1.bf16.msra.mxu0 0
      %8533 = vmatprep.mubr.bf16.mxu0 0
      %8534 = vmatmul.mubr.bf16.gmra.mrb[0].mxu0 %v8499
      %v8535 = vpop.f32.mrb[0].mxu0
      %v8536 = vadd.f32 %v8432, %v8535
      %v8537 = vpop.f32.mrb[0].mxu0
      %v8538 = vpop.f32.mrb[0].mxu0
      %v8539 = vpop.f32.mrb[0].mxu0
      %8540 = vdwg.mxu0
      %v8541 = vld [vmem:[#allocation3 + $0x4] sm:$0x1]
      %v8542 = vld [vmem:[#allocation3 + $0x14] sm:$0x1]
      %v8543 = vld [vmem:[#allocation3 + $0x24] sm:$0x1]
      %v8544 = vld [vmem:[#allocation3 + $0x34] sm:$0x1]
      %v8545 = vld [vmem:[#allocation3 + $0x44] sm:$0x1]
      %v8546 = vld [vmem:[#allocation3 + $0x54] sm:$0x1]
      %v8547 = vld [vmem:[#allocation3 + $0x64] sm:$0x1]
      %v8548 = vld [vmem:[#allocation3 + $0x74] sm:$0x1]
      %v8549 = vld [vmem:[#allocation3 + $0x5] sm:$0x1]
      %v8550 = vld [vmem:[#allocation3 + $0x15] sm:$0x1]
      %v8551 = vld [vmem:[#allocation3 + $0x25] sm:$0x1]
      %v8552 = vld [vmem:[#allocation3 + $0x35] sm:$0x1]
      %v8553 = vld [vmem:[#allocation3 + $0x45] sm:$0x1]
      %v8554 = vld [vmem:[#allocation3 + $0x55] sm:$0x1]
      %v8555 = vld [vmem:[#allocation3 + $0x65] sm:$0x1]
      %v8556 = vld [vmem:[#allocation3 + $0x75] sm:$0x1]
      %v8557 = vmax.f32 %v8541, %v8549
      %v8558 = vmax.f32 %v8542, %v8550
      %v8559 = vmax.f32 %v8543, %v8551
      %v8560 = vmax.f32 %v8544, %v8552
      %v8561 = vmax.f32 %v8545, %v8553
      %v8562 = vmax.f32 %v8546, %v8554
      %v8563 = vmax.f32 %v8547, %v8555
      %v8564 = vmax.f32 %v8548, %v8556
      %v8565 = vadd.f32 %v8557, %v8235
      %v8566 = vadd.f32 %v8558, %v8235
      %v8567 = vadd.f32 %v8559, %v8235
      %v8568 = vadd.f32 %v8560, %v8235
      %v8569 = vadd.f32 %v8561, %v8235
      %v8570 = vadd.f32 %v8562, %v8235
      %v8571 = vadd.f32 %v8563, %v8235
      %v8572 = vadd.f32 %v8564, %v8235
      %v8573 = vmax.f32 %v8565, 0.0
      %v8574 = vmax.f32 %v8566, 0.0
      %v8575 = vmax.f32 %v8567, 0.0
      %v8576 = vmax.f32 %v8568, 0.0
      %v8577 = vmax.f32 %v8569, 0.0
      %v8578 = vmax.f32 %v8570, 0.0
      %v8579 = vmax.f32 %v8571, 0.0
      %v8580 = vmax.f32 %v8572, 0.0
      %v8581 = vpack.c.bf16 %v8573, %v8573
      %v8582 = vpack.c.bf16 %v8574, %v8574
      %v8583 = vpack.c.bf16 %v8575, %v8575
      %v8584 = vpack.c.bf16 %v8576, %v8576
      %v8585 = vpack.c.bf16 %v8577, %v8577
      %v8586 = vpack.c.bf16 %v8578, %v8578
      %v8587 = vpack.c.bf16 %v8579, %v8579
      %v8588 = vpack.c.bf16 %v8580, %v8580
      %v8589 = vld [vmem:[%s5 + $0x50] sm:$0xf]
      %v8590 = vld [vmem:[%s5 + $0x54] sm:$0xf]
      %v8591 = vld [vmem:[%s5 + $0x58] sm:$0xf]
      %v8592 = vld [vmem:[%s5 + $0x5c] sm:$0xf]
      %v8593 = vld [vmem:[%s5 + $0x60] sm:$0xf]
      %v8594 = vld [vmem:[%s5 + $0x64] sm:$0xf]
      %v8595 = vld [vmem:[%s5 + $0x68] sm:$0xf]
      %v8596 = vld [vmem:[%s5 + $0x6c] sm:$0xf]
      %v8597 = vld [vmem:[%s5 + $0x70] sm:$0xf]
      %v8598 = vld [vmem:[%s5 + $0x74] sm:$0xf]
      %v8607 = vunpack.c.l.b16 %v8581
      %v8608 = vunpack.c.l.b16 %v8582
      %v8609 = vunpack.c.l.b16 %v8583
      %v8610 = vunpack.c.l.b16 %v8584
      %v8611 = vunpack.c.l.b16 %v8585
      %v8612 = vunpack.c.l.b16 %v8586
      %v8613 = vunpack.c.l.b16 %v8587
      %v8614 = vunpack.c.l.b16 %v8588
      %v8615 = vrot.slane %v8608, 7
      %v8616 = vsel %vm8346, %v8615, %v8607
      %v8617 = vrot.slane %v8609, 6
      %v8618 = vsel %vm6292, %v8617, %v8616
      %v8619 = vrot.slane %v8610, 5
      %v8620 = vsel %vm8351, %v8619, %v8618
      %v8621 = vrot.slane %v8611, 4
      %v8622 = vsel %vm6294, %v8621, %v8620
      %v8623 = vrot.slane %v8612, 3
      %v8624 = vsel %vm8356, %v8623, %v8622
      %v8625 = vrot.slane %v8613, 2
      %v8626 = vsel %vm6296, %v8625, %v8624
      %v8627 = vrot.slane %v8614, 1
      %v8628 = vsel %vm8361, %v8627, %v8626
      %v8629 = vpack.c.b16 %v8628, %v8628
      %v8640 = vunpack.c.l.b16 %v8589
      %v8641 = vunpack.c.l.b16 %v8590
      %v8642 = vunpack.c.l.b16 %v8591
      %v8643 = vunpack.c.l.b16 %v8592
      %v8644 = vunpack.c.l.b16 %v8593
      %v8645 = vunpack.c.l.b16 %v8594
      %v8646 = vunpack.c.l.b16 %v8595
      %v8647 = vunpack.c.l.b16 %v8596
      %v8648 = vunpack.c.l.b16 %v8597
      %v8649 = vunpack.c.l.b16 %v8598
      %v8650 = vpack.c.b16 %v8641, %v8640
      %v8651 = vpack.c.b16 %v8643, %v8642
      %v8652 = vpack.c.b16 %v8645, %v8644
      %v8653 = vpack.c.b16 %v8647, %v8646
      %v8654 = vpack.c.b16 %v8649, %v8648
      %v8661 = vsel %vm8188, %v8629, 0
      %8663 = vmatprep.subr.bf16.mxu0 0
      %8664 = vmatpush1.bf16.msra.mxu0 %v8650
      %8665 = vmatprep.subr.bf16.mxu0 0
      %8666 = vmatpush1.bf16.msra.mxu0 %v8651
      %8667 = vmatprep.subr.bf16.mxu0 0
      %8668 = vmatpush1.bf16.msra.mxu0 %v8652
      %8669 = vmatprep.subr.bf16.mxu0 0
      %8670 = vmatpush1.bf16.msra.mxu0 %v8653
      %8671 = vmatprep.subr.bf16.mxu0 0
      %8672 = vmatpush1.bf16.msra.mxu0 %v8654
      %8673 = vmatprep.subr.bf16.mxu0 0
      %8674 = vmatpush1.bf16.msra.mxu0 0
      %8675 = vmatprep.subr.bf16.mxu0 0
      %8676 = vmatpush1.bf16.msra.mxu0 0
      %8677 = vmatprep.subr.bf16.mxu0 0
      %8678 = vmatpush1.bf16.msra.mxu0 0
      %8679 = vmatprep.subr.bf16.mxu0 0
      %8680 = vmatpush1.bf16.msra.mxu0 0
      %8681 = vmatprep.subr.bf16.mxu0 0
      %8682 = vmatpush1.bf16.msra.mxu0 0
      %8683 = vmatprep.subr.bf16.mxu0 0
      %8684 = vmatpush1.bf16.msra.mxu0 0
      %8685 = vmatprep.subr.bf16.mxu0 0
      %8686 = vmatpush1.bf16.msra.mxu0 0
      %8687 = vmatprep.subr.bf16.mxu0 0
      %8688 = vmatpush1.bf16.msra.mxu0 0
      %8689 = vmatprep.subr.bf16.mxu0 0
      %8690 = vmatpush1.bf16.msra.mxu0 0
      %8691 = vmatprep.subr.bf16.mxu0 0
      %8692 = vmatpush1.bf16.msra.mxu0 0
      %8693 = vmatprep.subr.bf16.mxu0 0
      %8694 = vmatpush1.bf16.msra.mxu0 0
      %8695 = vmatprep.mubr.bf16.mxu0 0
      %8696 = vmatmul.mubr.bf16.gmra.mrb[0].mxu0 %v8661
      %v8697 = vpop.f32.mrb[0].mxu0
      %v8698 = vadd.f32 0.0, %v8697
      %v8699 = vpop.f32.mrb[0].mxu0
      %v8700 = vpop.f32.mrb[0].mxu0
      %v8701 = vpop.f32.mrb[0].mxu0
      %8702 = vdwg.mxu0
      %v8703 = vadd.f32 %v8536, %v8698
      %v8704 = vld [vmem:[#allocation3 + $0x6] sm:$0x1]
      %v8705 = vld [vmem:[#allocation3 + $0x16] sm:$0x1]
      %v8706 = vld [vmem:[#allocation3 + $0x26] sm:$0x1]
      %v8707 = vld [vmem:[#allocation3 + $0x36] sm:$0x1]
      %v8708 = vld [vmem:[#allocation3 + $0x46] sm:$0x1]
      %v8709 = vld [vmem:[#allocation3 + $0x56] sm:$0x1]
      %v8710 = vld [vmem:[#allocation3 + $0x66] sm:$0x1]
      %v8711 = vld [vmem:[#allocation3 + $0x76] sm:$0x1]
      %v8712 = vld [vmem:[#allocation3 + $0x7] sm:$0x1]
      %v8713 = vld [vmem:[#allocation3 + $0x17] sm:$0x1]
      %v8714 = vld [vmem:[#allocation3 + $0x27] sm:$0x1]
      %v8715 = vld [vmem:[#allocation3 + $0x37] sm:$0x1]
      %v8716 = vld [vmem:[#allocation3 + $0x47] sm:$0x1]
      %v8717 = vld [vmem:[#allocation3 + $0x57] sm:$0x1]
      %v8718 = vld [vmem:[#allocation3 + $0x67] sm:$0x1]
      %v8719 = vld [vmem:[#allocation3 + $0x77] sm:$0x1]
      %v8720 = vmax.f32 %v8704, %v8712
      %v8721 = vmax.f32 %v8705, %v8713
      %v8722 = vmax.f32 %v8706, %v8714
      %v8723 = vmax.f32 %v8707, %v8715
      %v8724 = vmax.f32 %v8708, %v8716
      %v8725 = vmax.f32 %v8709, %v8717
      %v8726 = vmax.f32 %v8710, %v8718
      %v8727 = vmax.f32 %v8711, %v8719
      %v8728 = vadd.f32 %v8720, %v8235
      %v8729 = vadd.f32 %v8721, %v8235
      %v8730 = vadd.f32 %v8722, %v8235
      %v8731 = vadd.f32 %v8723, %v8235
      %v8732 = vadd.f32 %v8724, %v8235
      %v8733 = vadd.f32 %v8725, %v8235
      %v8734 = vadd.f32 %v8726, %v8235
      %v8735 = vadd.f32 %v8727, %v8235
      %v8736 = vmax.f32 %v8728, 0.0
      %v8737 = vmax.f32 %v8729, 0.0
      %v8738 = vmax.f32 %v8730, 0.0
      %v8739 = vmax.f32 %v8731, 0.0
      %v8740 = vmax.f32 %v8732, 0.0
      %v8741 = vmax.f32 %v8733, 0.0
      %v8742 = vmax.f32 %v8734, 0.0
      %v8743 = vmax.f32 %v8735, 0.0
      %v8744 = vpack.c.bf16 %v8736, %v8736
      %v8745 = vpack.c.bf16 %v8737, %v8737
      %v8746 = vpack.c.bf16 %v8738, %v8738
      %v8747 = vpack.c.bf16 %v8739, %v8739
      %v8748 = vpack.c.bf16 %v8740, %v8740
      %v8749 = vpack.c.bf16 %v8741, %v8741
      %v8750 = vpack.c.bf16 %v8742, %v8742
      %v8751 = vpack.c.bf16 %v8743, %v8743
      %v8752 = vld [vmem:[%s5 + $0x78] sm:$0xf]
      %v8753 = vld [vmem:[%s5 + $0x7c] sm:$0xf]
      %v8754 = vld [vmem:[%s5 + $0x80] sm:$0xf]
      %v8755 = vld [vmem:[%s5 + $0x84] sm:$0xf]
      %v8756 = vld [vmem:[%s5 + $0x88] sm:$0xf]
      %v8757 = vld [vmem:[%s5 + $0x8c] sm:$0xf]
      %v8758 = vld [vmem:[%s5 + $0x90] sm:$0xf]
      %v8759 = vld [vmem:[%s5 + $0x94] sm:$0xf]
      %v8760 = vld [vmem:[%s5 + $0x98] sm:$0xf]
      %v8761 = vld [vmem:[%s5 + $0x9c] sm:$0xf]
      %v8770 = vunpack.c.l.b16 %v8744
      %v8771 = vunpack.c.l.b16 %v8745
      %v8772 = vunpack.c.l.b16 %v8746
      %v8773 = vunpack.c.l.b16 %v8747
      %v8774 = vunpack.c.l.b16 %v8748
      %v8775 = vunpack.c.l.b16 %v8749
      %v8776 = vunpack.c.l.b16 %v8750
      %v8777 = vunpack.c.l.b16 %v8751
      %v8778 = vrot.slane %v8771, 7
      %v8779 = vsel %vm8346, %v8778, %v8770
      %v8780 = vrot.slane %v8772, 6
      %v8781 = vsel %vm6292, %v8780, %v8779
      %v8782 = vrot.slane %v8773, 5
      %v8783 = vsel %vm8351, %v8782, %v8781
      %v8784 = vrot.slane %v8774, 4
      %v8785 = vsel %vm6294, %v8784, %v8783
      %v8786 = vrot.slane %v8775, 3
      %v8787 = vsel %vm8356, %v8786, %v8785
      %v8788 = vrot.slane %v8776, 2
      %v8789 = vsel %vm6296, %v8788, %v8787
      %v8790 = vrot.slane %v8777, 1
      %v8791 = vsel %vm8361, %v8790, %v8789
      %v8792 = vpack.c.b16 %v8791, %v8791
      %v8803 = vunpack.c.l.b16 %v8752
      %v8804 = vunpack.c.l.b16 %v8753
      %v8805 = vunpack.c.l.b16 %v8754
      %v8806 = vunpack.c.l.b16 %v8755
      %v8807 = vunpack.c.l.b16 %v8756
      %v8808 = vunpack.c.l.b16 %v8757
      %v8809 = vunpack.c.l.b16 %v8758
      %v8810 = vunpack.c.l.b16 %v8759
      %v8811 = vunpack.c.l.b16 %v8760
      %v8812 = vunpack.c.l.b16 %v8761
      %v8813 = vpack.c.b16 %v8804, %v8803
      %v8814 = vpack.c.b16 %v8806, %v8805
      %v8815 = vpack.c.b16 %v8808, %v8807
      %v8816 = vpack.c.b16 %v8810, %v8809
      %v8817 = vpack.c.b16 %v8812, %v8811
      %v8824 = vsel %vm8188, %v8792, 0
      %8826 = vmatprep.subr.bf16.mxu0 0
      %8827 = vmatpush1.bf16.msra.mxu0 %v8813
      %8828 = vmatprep.subr.bf16.mxu0 0
      %8829 = vmatpush1.bf16.msra.mxu0 %v8814
      %8830 = vmatprep.subr.bf16.mxu0 0
      %8831 = vmatpush1.bf16.msra.mxu0 %v8815
      %8832 = vmatprep.subr.bf16.mxu0 0
      %8833 = vmatpush1.bf16.msra.mxu0 %v8816
      %8834 = vmatprep.subr.bf16.mxu0 0
      %8835 = vmatpush1.bf16.msra.mxu0 %v8817
      %8836 = vmatprep.subr.bf16.mxu0 0
      %8837 = vmatpush1.bf16.msra.mxu0 0
      %8838 = vmatprep.subr.bf16.mxu0 0
      %8839 = vmatpush1.bf16.msra.mxu0 0
      %8840 = vmatprep.subr.bf16.mxu0 0
      %8841 = vmatpush1.bf16.msra.mxu0 0
      %8842 = vmatprep.subr.bf16.mxu0 0
      %8843 = vmatpush1.bf16.msra.mxu0 0
      %8844 = vmatprep.subr.bf16.mxu0 0
      %8845 = vmatpush1.bf16.msra.mxu0 0
      %8846 = vmatprep.subr.bf16.mxu0 0
      %8847 = vmatpush1.bf16.msra.mxu0 0
      %8848 = vmatprep.subr.bf16.mxu0 0
      %8849 = vmatpush1.bf16.msra.mxu0 0
      %8850 = vmatprep.subr.bf16.mxu0 0
      %8851 = vmatpush1.bf16.msra.mxu0 0
      %8852 = vmatprep.subr.bf16.mxu0 0
      %8853 = vmatpush1.bf16.msra.mxu0 0
      %8854 = vmatprep.subr.bf16.mxu0 0
      %8855 = vmatpush1.bf16.msra.mxu0 0
      %8856 = vmatprep.subr.bf16.mxu0 0
      %8857 = vmatpush1.bf16.msra.mxu0 0
      %8858 = vmatprep.mubr.bf16.mxu0 0
      %8859 = vmatmul.mubr.bf16.gmra.mrb[0].mxu0 %v8824
      %v8860 = vpop.f32.mrb[0].mxu0
      %v8861 = vadd.f32 0.0, %v8860
      %v8862 = vpop.f32.mrb[0].mxu0
      %v8863 = vpop.f32.mrb[0].mxu0
      %v8864 = vpop.f32.mrb[0].mxu0
      %8865 = vdwg.mxu0
      %v8866 = vadd.f32 %v8703, %v8861
      %v8867 = vld [vmem:[#allocation3 + $0x8] sm:$0x1]
      %v8868 = vld [vmem:[#allocation3 + $0x18] sm:$0x1]
      %v8869 = vld [vmem:[#allocation3 + $0x28] sm:$0x1]
      %v8870 = vld [vmem:[#allocation3 + $0x38] sm:$0x1]
      %v8871 = vld [vmem:[#allocation3 + $0x48] sm:$0x1]
      %v8872 = vld [vmem:[#allocation3 + $0x58] sm:$0x1]
      %v8873 = vld [vmem:[#allocation3 + $0x68] sm:$0x1]
      %v8874 = vld [vmem:[#allocation3 + $0x78] sm:$0x1]
      %v8875 = vld [vmem:[#allocation3 + $0x9] sm:$0x1]
      %v8876 = vld [vmem:[#allocation3 + $0x19] sm:$0x1]
      %v8877 = vld [vmem:[#allocation3 + $0x29] sm:$0x1]
      %v8878 = vld [vmem:[#allocation3 + $0x39] sm:$0x1]
      %v8879 = vld [vmem:[#allocation3 + $0x49] sm:$0x1]
      %v8880 = vld [vmem:[#allocation3 + $0x59] sm:$0x1]
      %v8881 = vld [vmem:[#allocation3 + $0x69] sm:$0x1]
      %v8882 = vld [vmem:[#allocation3 + $0x79] sm:$0x1]
      %v8883 = vmax.f32 %v8867, %v8875
      %v8884 = vmax.f32 %v8868, %v8876
      %v8885 = vmax.f32 %v8869, %v8877
      %v8886 = vmax.f32 %v8870, %v8878
      %v8887 = vmax.f32 %v8871, %v8879
      %v8888 = vmax.f32 %v8872, %v8880
      %v8889 = vmax.f32 %v8873, %v8881
      %v8890 = vmax.f32 %v8874, %v8882
      %v8891 = vadd.f32 %v8883, %v8235
      %v8892 = vadd.f32 %v8884, %v8235
      %v8893 = vadd.f32 %v8885, %v8235
      %v8894 = vadd.f32 %v8886, %v8235
      %v8895 = vadd.f32 %v8887, %v8235
      %v8896 = vadd.f32 %v8888, %v8235
      %v8897 = vadd.f32 %v8889, %v8235
      %v8898 = vadd.f32 %v8890, %v8235
      %v8899 = vmax.f32 %v8891, 0.0
      %v8900 = vmax.f32 %v8892, 0.0
      %v8901 = vmax.f32 %v8893, 0.0
      %v8902 = vmax.f32 %v8894, 0.0
      %v8903 = vmax.f32 %v8895, 0.0
      %v8904 = vmax.f32 %v8896, 0.0
      %v8905 = vmax.f32 %v8897, 0.0
      %v8906 = vmax.f32 %v8898, 0.0
      %v8907 = vpack.c.bf16 %v8899, %v8899
      %v8908 = vpack.c.bf16 %v8900, %v8900
      %v8909 = vpack.c.bf16 %v8901, %v8901
      %v8910 = vpack.c.bf16 %v8902, %v8902
      %v8911 = vpack.c.bf16 %v8903, %v8903
      %v8912 = vpack.c.bf16 %v8904, %v8904
      %v8913 = vpack.c.bf16 %v8905, %v8905
      %v8914 = vpack.c.bf16 %v8906, %v8906
      %v8915 = vld [vmem:[%s5 + $0xa0] sm:$0xf]
      %v8916 = vld [vmem:[%s5 + $0xa4] sm:$0xf]
      %v8917 = vld [vmem:[%s5 + $0xa8] sm:$0xf]
      %v8918 = vld [vmem:[%s5 + $0xac] sm:$0xf]
      %v8919 = vld [vmem:[%s5 + $0xb0] sm:$0xf]
      %v8920 = vld [vmem:[%s5 + $0xb4] sm:$0xf]
      %v8921 = vld [vmem:[%s5 + $0xb8] sm:$0xf]
      %v8922 = vld [vmem:[%s5 + $0xbc] sm:$0xf]
      %v8923 = vld [vmem:[%s5 + $0xc0] sm:$0xf]
      %v8924 = vld [vmem:[%s5 + $0xc4] sm:$0xf]
      %v8933 = vunpack.c.l.b16 %v8907
      %v8934 = vunpack.c.l.b16 %v8908
      %v8935 = vunpack.c.l.b16 %v8909
      %v8936 = vunpack.c.l.b16 %v8910
      %v8937 = vunpack.c.l.b16 %v8911
      %v8938 = vunpack.c.l.b16 %v8912
      %v8939 = vunpack.c.l.b16 %v8913
      %v8940 = vunpack.c.l.b16 %v8914
      %v8941 = vrot.slane %v8934, 7
      %v8942 = vsel %vm8346, %v8941, %v8933
      %v8943 = vrot.slane %v8935, 6
      %v8944 = vsel %vm6292, %v8943, %v8942
      %v8945 = vrot.slane %v8936, 5
      %v8946 = vsel %vm8351, %v8945, %v8944
      %v8947 = vrot.slane %v8937, 4
      %v8948 = vsel %vm6294, %v8947, %v8946
      %v8949 = vrot.slane %v8938, 3
      %v8950 = vsel %vm8356, %v8949, %v8948
      %v8951 = vrot.slane %v8939, 2
      %v8952 = vsel %vm6296, %v8951, %v8950
      %v8953 = vrot.slane %v8940, 1
      %v8954 = vsel %vm8361, %v8953, %v8952
      %v8955 = vpack.c.b16 %v8954, %v8954
      %v8966 = vunpack.c.l.b16 %v8915
      %v8967 = vunpack.c.l.b16 %v8916
      %v8968 = vunpack.c.l.b16 %v8917
      %v8969 = vunpack.c.l.b16 %v8918
      %v8970 = vunpack.c.l.b16 %v8919
      %v8971 = vunpack.c.l.b16 %v8920
      %v8972 = vunpack.c.l.b16 %v8921
      %v8973 = vunpack.c.l.b16 %v8922
      %v8974 = vunpack.c.l.b16 %v8923
      %v8975 = vunpack.c.l.b16 %v8924
      %v8976 = vpack.c.b16 %v8967, %v8966
      %v8977 = vpack.c.b16 %v8969, %v8968
      %v8978 = vpack.c.b16 %v8971, %v8970
      %v8979 = vpack.c.b16 %v8973, %v8972
      %v8980 = vpack.c.b16 %v8975, %v8974
      %v8987 = vsel %vm8188, %v8955, 0
      %8989 = vmatprep.subr.bf16.mxu0 0
      %8990 = vmatpush1.bf16.msra.mxu0 %v8976
      %8991 = vmatprep.subr.bf16.mxu0 0
      %8992 = vmatpush1.bf16.msra.mxu0 %v8977
      %8993 = vmatprep.subr.bf16.mxu0 0
      %8994 = vmatpush1.bf16.msra.mxu0 %v8978
      %8995 = vmatprep.subr.bf16.mxu0 0
      %8996 = vmatpush1.bf16.msra.mxu0 %v8979
      %8997 = vmatprep.subr.bf16.mxu0 0
      %8998 = vmatpush1.bf16.msra.mxu0 %v8980
      %8999 = vmatprep.subr.bf16.mxu0 0
      %9000 = vmatpush1.bf16.msra.mxu0 0
      %9001 = vmatprep.subr.bf16.mxu0 0
      %9002 = vmatpush1.bf16.msra.mxu0 0
      %9003 = vmatprep.subr.bf16.mxu0 0
      %9004 = vmatpush1.bf16.msra.mxu0 0
      %9005 = vmatprep.subr.bf16.mxu0 0
      %9006 = vmatpush1.bf16.msra.mxu0 0
      %9007 = vmatprep.subr.bf16.mxu0 0
      %9008 = vmatpush1.bf16.msra.mxu0 0
      %9009 = vmatprep.subr.bf16.mxu0 0
      %9010 = vmatpush1.bf16.msra.mxu0 0
      %9011 = vmatprep.subr.bf16.mxu0 0
      %9012 = vmatpush1.bf16.msra.mxu0 0
      %9013 = vmatprep.subr.bf16.mxu0 0
      %9014 = vmatpush1.bf16.msra.mxu0 0
      %9015 = vmatprep.subr.bf16.mxu0 0
      %9016 = vmatpush1.bf16.msra.mxu0 0
      %9017 = vmatprep.subr.bf16.mxu0 0
      %9018 = vmatpush1.bf16.msra.mxu0 0
      %9019 = vmatprep.subr.bf16.mxu0 0
      %9020 = vmatpush1.bf16.msra.mxu0 0
      %9021 = vmatprep.mubr.bf16.mxu0 0
      %9022 = vmatmul.mubr.bf16.gmra.mrb[0].mxu0 %v8987
      %v9023 = vpop.f32.mrb[0].mxu0
      %v9024 = vadd.f32 0.0, %v9023
      %v9025 = vpop.f32.mrb[0].mxu0
      %v9026 = vpop.f32.mrb[0].mxu0
      %v9027 = vpop.f32.mrb[0].mxu0
      %9028 = vdwg.mxu0
      %v9029 = vadd.f32 %v8866, %v9024
      %v9030 = vld [vmem:[%s6] sm:$0x1]
      %v9032 = vlaneseq
      %v9033 = vshrl.u32 %v9032, 7
      %v9034 = vsub.s32 0, %v9033
      %v9035 = vrot.slane %v9030, %v9034
      %v9037 = vadd.f32 %v9029, %v9035
      %v9038 = vmax.f32 %v9037, 0.0
      %v9039 = vpack.c.bf16 %v9038, %v9038
      %v9040 = vld [vmem:[%s7] sm:$0xf]
      %v9041 = vld [vmem:[%s7 + $0x4] sm:$0xf]
      %v9042 = vld [vmem:[%s7 + $0x8] sm:$0xf]
      %v9043 = vld [vmem:[%s7 + $0xc] sm:$0xf]
      %v9044 = vld [vmem:[%s7 + $0x10] sm:$0xf]
      %v9045 = vld [vmem:[%s7 + $0x14] sm:$0xf]
      %v9046 = vld [vmem:[%s7 + $0x18] sm:$0xf]
      %v9047 = vld [vmem:[%s7 + $0x1c] sm:$0xf]
      %v9048 = vld [vmem:[%s7 + $0x20] sm:$0xf]
      %v9049 = vld [vmem:[%s7 + $0x24] sm:$0xf]
      %v9050 = vld [vmem:[%s7 + $0x28] sm:$0xf]
      %v9051 = vld [vmem:[%s7 + $0x2c] sm:$0xf]
      %v9052 = vld [vmem:[%s7 + $0x30] sm:$0xf]
      %v9053 = vld [vmem:[%s7 + $0x34] sm:$0xf]
      %v9054 = vld [vmem:[%s7 + $0x38] sm:$0xf]
      %v9055 = vld [vmem:[%s8] sm:$0x1]
      %v9057 = vlaneseq
      %v9058 = vshrl.u32 %v9057, 7
      %v9059 = vsub.s32 0, %v9058
      %v9060 = vrot.slane %v9055, %v9059
      %v9077 = vunpack.c.l.b16 %v9040
      %v9078 = vunpack.c.l.b16 %v9041
      %v9079 = vunpack.c.l.b16 %v9042
      %v9080 = vunpack.c.l.b16 %v9043
      %v9081 = vunpack.c.l.b16 %v9044
      %v9082 = vunpack.c.l.b16 %v9045
      %v9083 = vunpack.c.l.b16 %v9046
      %v9084 = vunpack.c.l.b16 %v9047
      %v9085 = vunpack.c.l.b16 %v9048
      %v9086 = vunpack.c.l.b16 %v9049
      %v9087 = vunpack.c.l.b16 %v9050
      %v9088 = vunpack.c.l.b16 %v9051
      %v9089 = vunpack.c.l.b16 %v9052
      %v9090 = vunpack.c.l.b16 %v9053
      %v9091 = vunpack.c.l.b16 %v9054
      %v9092 = vpack.c.b16 %v9078, %v9077
      %v9093 = vpack.c.b16 %v9080, %v9079
      %v9094 = vpack.c.b16 %v9082, %v9081
      %v9095 = vpack.c.b16 %v9084, %v9083
      %v9096 = vpack.c.b16 %v9086, %v9085
      %v9097 = vpack.c.b16 %v9088, %v9087
      %v9098 = vpack.c.b16 %v9090, %v9089
      %v9099 = vpack.c.b16 %v9091, %v9091
      %vm9107 = vcmask 982016
      %v9109 = vsel %vm9107, %v9039, 0
      %v9112 = vsel %vm3103, %v9099, 0
      %9114 = vmatprep.subr.bf16.mxu0 0
      %9115 = vmatpush1.bf16.msra.mxu0 %v9092
      %9116 = vmatprep.subr.bf16.mxu0 0
      %9117 = vmatpush1.bf16.msra.mxu0 %v9093
      %9118 = vmatprep.subr.bf16.mxu0 0
      %9119 = vmatpush1.bf16.msra.mxu0 %v9094
      %9120 = vmatprep.subr.bf16.mxu0 0
      %9121 = vmatpush1.bf16.msra.mxu0 %v9095
      %9122 = vmatprep.subr.bf16.mxu0 0
      %9123 = vmatpush1.bf16.msra.mxu0 %v9096
      %9124 = vmatprep.subr.bf16.mxu0 0
      %9125 = vmatpush1.bf16.msra.mxu0 %v9097
      %9126 = vmatprep.subr.bf16.mxu0 0
      %9127 = vmatpush1.bf16.msra.mxu0 %v9098
      %9128 = vmatprep.subr.bf16.mxu0 0
      %9129 = vmatpush1.bf16.msra.mxu0 %v9112
      %9130 = vmatprep.subr.bf16.mxu0 0
      %9131 = vmatpush1.bf16.msra.mxu0 0
      %9132 = vmatprep.subr.bf16.mxu0 0
      %9133 = vmatpush1.bf16.msra.mxu0 0
      %9134 = vmatprep.subr.bf16.mxu0 0
      %9135 = vmatpush1.bf16.msra.mxu0 0
      %9136 = vmatprep.subr.bf16.mxu0 0
      %9137 = vmatpush1.bf16.msra.mxu0 0
      %9138 = vmatprep.subr.bf16.mxu0 0
      %9139 = vmatpush1.bf16.msra.mxu0 0
      %9140 = vmatprep.subr.bf16.mxu0 0
      %9141 = vmatpush1.bf16.msra.mxu0 0
      %9142 = vmatprep.subr.bf16.mxu0 0
      %9143 = vmatpush1.bf16.msra.mxu0 0
      %9144 = vmatprep.subr.bf16.mxu0 0
      %9145 = vmatpush1.bf16.msra.mxu0 0
      %9146 = vmatprep.mubr.bf16.mxu0 0
      %9147 = vmatmul.mubr.bf16.gmra.mrb[0].mxu0 %v9109
      %v9148 = vpop.f32.mrb[0].mxu0
      %v9149 = vadd.f32 %v9060, %v9148
      %v9150 = vpop.f32.mrb[0].mxu0
      %v9151 = vpop.f32.mrb[0].mxu0
      %v9152 = vpop.f32.mrb[0].mxu0
      %9153 = vdwg.mxu0
      %v9154 = vmax.f32 %v9149, 0.0
      %v9155 = vpack.c.bf16 %v9154, %v9154
      %v9156 = vld [vmem:[%s9] sm:$0xf]
      %v9157 = vld [vmem:[%s9 + $0x4] sm:$0xf]
      %v9158 = vld [vmem:[%s9 + $0x8] sm:$0xf]
      %v9159 = vld [vmem:[%s9 + $0xc] sm:$0xf]
      %v9160 = vld [vmem:[%s9 + $0x10] sm:$0xf]
      %v9161 = vld [vmem:[%s9 + $0x14] sm:$0xf]
      %v9162 = vld [vmem:[%s9 + $0x18] sm:$0xf]
      %v9163 = vld [vmem:[%s9 + $0x1c] sm:$0xf]
      %v9164 = vld [vmem:[%s9 + $0x20] sm:$0xf]
      %v9165 = vld [vmem:[%s9 + $0x24] sm:$0xf]
      %v9166 = vld [vmem:[%s9 + $0x28] sm:$0x3]
      %v9167 = vld [vmem:[%s10] sm:$0x1]
      %v9169 = vlaneseq
      %v9170 = vshrl.u32 %v9169, 7
      %v9171 = vsub.s32 0, %v9170
      %v9172 = vrot.slane %v9167, %v9171
      %v9185 = vunpack.c.l.b16 %v9156
      %v9186 = vunpack.c.l.b16 %v9157
      %v9187 = vunpack.c.l.b16 %v9158
      %v9188 = vunpack.c.l.b16 %v9159
      %v9189 = vunpack.c.l.b16 %v9160
      %v9190 = vunpack.c.l.b16 %v9161
      %v9191 = vunpack.c.l.b16 %v9162
      %v9192 = vunpack.c.l.b16 %v9163
      %v9193 = vunpack.c.l.b16 %v9164
      %v9194 = vunpack.c.l.b16 %v9165
      %v9195 = vunpack.c.l.b16 %v9166
      %v9196 = vpack.c.b16 %v9186, %v9185
      %v9197 = vpack.c.b16 %v9188, %v9187
      %v9198 = vpack.c.b16 %v9190, %v9189
      %v9199 = vpack.c.b16 %v9192, %v9191
      %v9200 = vpack.c.b16 %v9194, %v9193
      %v9201 = vpack.c.b16 %v9195, %v9195
      %v9208 = vsel %vm3793, %v9155, 0
      %v9211 = vsel %vm4747, %v9201, 0
      %9213 = vmatprep.subr.bf16.mxu0 0
      %9214 = vmatpush1.bf16.msra.mxu0 %v9196
      %9215 = vmatprep.subr.bf16.mxu0 0
      %9216 = vmatpush1.bf16.msra.mxu0 %v9197
      %9217 = vmatprep.subr.bf16.mxu0 0
      %9218 = vmatpush1.bf16.msra.mxu0 %v9198
      %9219 = vmatprep.subr.bf16.mxu0 0
      %9220 = vmatpush1.bf16.msra.mxu0 %v9199
      %9221 = vmatprep.subr.bf16.mxu0 0
      %9222 = vmatpush1.bf16.msra.mxu0 %v9200
      %9223 = vmatprep.subr.bf16.mxu0 0
      %9224 = vmatpush1.bf16.msra.mxu0 %v9211
      %9225 = vmatprep.subr.bf16.mxu0 0
      %9226 = vmatpush1.bf16.msra.mxu0 0
      %9227 = vmatprep.subr.bf16.mxu0 0
      %9228 = vmatpush1.bf16.msra.mxu0 0
      %9229 = vmatprep.subr.bf16.mxu0 0
      %9230 = vmatpush1.bf16.msra.mxu0 0
      %9231 = vmatprep.subr.bf16.mxu0 0
      %9232 = vmatpush1.bf16.msra.mxu0 0
      %9233 = vmatprep.subr.bf16.mxu0 0
      %9234 = vmatpush1.bf16.msra.mxu0 0
      %9235 = vmatprep.subr.bf16.mxu0 0
      %9236 = vmatpush1.bf16.msra.mxu0 0
      %9237 = vmatprep.subr.bf16.mxu0 0
      %9238 = vmatpush1.bf16.msra.mxu0 0
      %9239 = vmatprep.subr.bf16.mxu0 0
      %9240 = vmatpush1.bf16.msra.mxu0 0
      %9241 = vmatprep.subr.bf16.mxu0 0
      %9242 = vmatpush1.bf16.msra.mxu0 0
      %9243 = vmatprep.subr.bf16.mxu0 0
      %9244 = vmatpush1.bf16.msra.mxu0 0
      %9245 = vmatprep.mubr.bf16.mxu0 0
      %9246 = vmatmul.mubr.bf16.gmra.mrb[0].mxu0 %v9208
      %v9247 = vpop.f32.mrb[0].mxu0
      %v9248 = vadd.f32 %v9172, %v9247
      %v9249 = vpop.f32.mrb[0].mxu0
      %v9250 = vpop.f32.mrb[0].mxu0
      %v9251 = vpop.f32.mrb[0].mxu0
      %9252 = vdwg.mxu0
      %vm9253 = vcmask 80896
      %9254 = vst.msk [vmem:[%s386] sm:$0xff] %vm9253, %v9248
      %p9255 = scmp.lt.s32.totalorder %s22, 2
      %s9256 = scalar_select %p9255, %s22, 2
      %s9257 = smul.addr %s9256, 8
      %s9258 = scalar_lea.vmem %s11, %s9257
      // Predicated region
      $region65: #{net_forward.1} parent=63 // pred_check
        %p9259 = pneg %p276
      $region66: #{net_forward.1} parent=63 // pred_check_branch
        %9261 = sbr.rel (%p9259) target = $region68
      $region67: #{net_forward.1} parent=63 // pred_region
        _
      $region68: #{net_forward.1} parent=63 // pred_fallthru
        _
    $region64: #{net_forward.1} parent=5 // pred_fallthru
      _
    %p9262 = scmp.le.s32.totalorder 2, %s17
    // Predicated region
    $region69: #{net_forward.1} parent=5 // pred_check
      %p9263 = pneg %p9262
    $region70: #{net_forward.1} parent=5 // pred_check_branch
      %9265 = sbr.rel (%p9263) target = $region72
    $region71: #{net_forward.1} parent=5 // pred_region
      %s9266 = ssub.s32 %s17, 2
      // Predicated region
      $region73: #{net_forward.1} parent=71 // pred_check
        %p9267 = pneg %p282
      $region74: #{net_forward.1} parent=71 // pred_check_branch
        %9269 = sbr.rel (%p9267) target = $region76
      $region75: #{net_forward.1} parent=71 // pred_region
        %p9270 = scmp.lt.s32.totalorder %s23, 2
        %s9271 = scalar_select %p9270, %s23, 2
        %s9272 = smul.addr %s9271, 8
        %s9273 = scalar_lea.vmem %s11, %s9272
      $region76: #{net_forward.1} parent=71 // pred_fallthru
        _
    $region72: #{net_forward.1} parent=5 // pred_fallthru
      _
  $region6: #{net_forward.1} parent=0 // loop_footer
    %s21 = sadd.s32 1, %s17
  $region7: #{net_forward.1} parent=0 // loop_footer_branch
    %16 = sbr.rel target = $region3
  $region8: #{net_forward.1} parent=0 // loop_exit
    _

</llo_original>
